<compile_context>
chip_gen: v6e
topology: v6e:2x2x1
jax: 0.10.0
libtpu: 0.0.40
codegen_flags: <defaults>
</compile_context>

<pallas_src>
import functools

import jax
import jax.numpy as jnp
from jax import lax
from jax.experimental import pallas as pl
from jax.experimental.pallas import tpu as pltpu


# ----------------------------------------------------------------------------
# Host-side weight folding helpers
# ----------------------------------------------------------------------------
def _fold_conv1_dx(w_part, W, Wo):
    """w_part: (3, 3, Ci, Co) HWIO slice of conv1.  Returns (3, W*Ci, Co):
    per-dy matrices with the avgpool's dx-window selection summed in, acting on
    merged-lane (1, W*Ci) dy-row-range sums."""
    _, _, Ci, Co = w_part.shape
    mats = []
    for dy in range(3):
        acc = jnp.zeros((W * Ci, Co), jnp.float32)
        for dx in range(3):
            ind = jnp.asarray(
                [1.0 if (max(0, x - (Wo - 1)) <= dx <= min(2, x)) else 0.0
                 for x in range(W)], jnp.float32).reshape(W, 1)
            acc = acc + jnp.kron(ind, w_part[dy, dx])
        mats.append(acc)
    return jnp.stack(mats)                                    # (3, W*Ci, Co)


def _band_conv2(w2_hwio, W, Wo):
    """(3,3,C,C) HWIO -> (3, W*C, Wo*C) block-banded matrices so the 3x3 VALID
    conv on a merged-lane (H, W*C) plane becomes 3 accumulated matmuls."""
    _, _, C, Co = w2_hwio.shape
    idx = jnp.arange(Wo)
    bands = []
    for dy in range(3):
        acc = jnp.zeros((W * C, Wo * Co), jnp.float32)
        for dx in range(3):
            sel = jnp.zeros((W, Wo), jnp.float32).at[idx + dx, idx].set(1.0)
            acc = acc + jnp.kron(sel, w2_hwio[dy, dx])
        bands.append(acc)
    return jnp.stack(bands)                                   # (3, W*C, Wo*C)


# ----------------------------------------------------------------------------
# K1: fused conv1+avgpool -> channel attention -> spatial attention -> dual conv2
# ----------------------------------------------------------------------------
def _fused_kernel(imgm_ref, evt_ref, m1i_ref, w1e_ref, b1_ref, wfc1_ref,
                  wfc2_ref, saw_ref, wband_ref, b2m_ref, o_ref, *, H, W, C):
    Ho, Wo = H - 2, W - 2

    def sigmoid(v):
        return 1.0 / (1.0 + jnp.exp(-v))

    img_m = imgm_ref[0]                                       # (H, W*C) merged
    evt = evt_ref[0]                                          # (H, W, C)

    # --- conv1(cat) + AdaptiveAvgPool2d((1,1)), folded by linearity ----------
    # img half (merged): dy-row-range sums x per-dy dx-folded matrices.
    col_i = jnp.sum(img_m, axis=0, keepdims=True)             # (1, W*C)
    i0, i1 = img_m[0:1, :], img_m[1:2, :]
    im2, im1 = img_m[H - 2:H - 1, :], img_m[H - 1:H, :]
    cs_img = (col_i - im2 - im1,                              # rows dy=0..H-3
              col_i - i0 - im1,                               # rows 1..H-2
              col_i - i0 - i1)                                # rows 2..H-1
    contrib = jnp.zeros((1, C), jnp.float32)
    for dy in range(3):
        contrib = contrib + jnp.dot(cs_img[dy], m1i_ref[dy],
                                    preferred_element_type=jnp.float32)

    # evt half (NHWC): partial-sum reuse -> 9 window sums -> one K=9C dot.
    col_e = jnp.sum(evt, axis=0)                              # (W, C)
    e0, e1, em2, em1 = evt[0], evt[1], evt[H - 2], evt[H - 1]
    cs_evt = (col_e - em2 - em1, col_e - e0 - em1, col_e - e0 - e1)
    pieces = []
    for dy in range(3):
        cs = cs_evt[dy]
        rs = jnp.sum(cs, axis=0, keepdims=True)               # (1, C)
        c0, c1 = cs[0:1], cs[1:2]
        cm2, cm1 = cs[W - 2:W - 1], cs[W - 1:W]
        pieces.append(rs - cm2 - cm1)                         # dx = 0
        pieces.append(rs - c0 - cm1)                          # dx = 1
        pieces.append(rs - c0 - c1)                           # dx = 2
    win_evt = jnp.concatenate(pieces, axis=-1)                # (1, 9*C)
    contrib = contrib + jnp.dot(win_evt, w1e_ref[...],
                                preferred_element_type=jnp.float32)
    cat_fea = contrib * (1.0 / (Ho * Wo)) + b1_ref[...]       # (1, C)

    # --- ChannelAttention(evt * cat_fea): fold the spatially-constant
    #     per-channel scale through the spatial mean / max (exact) ------------
    e_sum = jnp.sum(col_e, axis=0, keepdims=True)             # (1, C)
    e_max = jnp.max(jnp.max(evt, axis=0), axis=0, keepdims=True)
    e_min = jnp.min(jnp.min(evt, axis=0), axis=0, keepdims=True)
    avg_c = cat_fea * (e_sum * (1.0 / (H * W)))
    max_c = jnp.where(cat_fea >= 0.0, cat_fea * e_max, cat_fea * e_min)

    def mlp(v):                                               # (1, C) -> (1, C)
        h = jnp.maximum(
            jnp.dot(v, wfc1_ref[...], preferred_element_type=jnp.float32), 0.0)
        return jnp.dot(h, wfc2_ref[...], preferred_element_type=jnp.float32)

    ca = sigmoid(mlp(avg_c) + mlp(max_c))                     # (1, C)

    # --- SpatialAttention(ca): ca is spatially 1x1, so the padded 7x7 conv
    #     reduces to its two center taps --------------------------------------
    ca_avg = jnp.mean(ca, axis=1, keepdims=True)              # (1, 1)
    ca_max = jnp.max(ca, axis=1, keepdims=True)
    saw = saw_ref[...]                                        # (1, 2)
    sa = sigmoid(ca_avg * saw[0:1, 0:1] + ca_max * saw[0:1, 1:2])   # (1, 1)

    # --- conv2(x) + conv2(img_mul) == conv_lin(2*img_mul + sa) + 2*b2,
    #     merged-lane banded form: 3 accumulated matmuls, lane-dense store ----
    cat_t = jnp.concatenate([2.0 * cat_fea] * W, axis=-1)     # (1, W*C)
    s_m = img_m * cat_t + sa                                  # (H, W*C)
    out = (jnp.dot(s_m[0:Ho, :], wband_ref[0], preferred_element_type=jnp.float32)
           + jnp.dot(s_m[1:Ho + 1, :], wband_ref[1], preferred_element_type=jnp.float32)
           + jnp.dot(s_m[2:Ho + 2, :], wband_ref[2], preferred_element_type=jnp.float32)
           + b2m_ref[...])
    o_ref[0] = out                                            # (Ho, Wo*C)


def fused_attention_conv(img_m, evt, m1_img, w1_evt, b1, wfc1, wfc2, saw,
                         wband, b2m):
    B, H, WC = img_m.shape
    C = evt.shape[-1]
    W = WC // C
    Ho, Wo = H - 2, W - 2
    Cr = wfc1.shape[1]
    kern = functools.partial(_fused_kernel, H=H, W=W, C=C)
    flops = B * (2 * 3 * W * C * C                # img conv1 matmuls
                 + 2 * 9 * C * C                  # evt conv1 dot
                 + 8 * C * Cr                     # CA mlps
                 + 10 * H * W * C                 # reductions + s
                 + 3 * 2 * Ho * W * C * Wo * C)   # banded dual conv2
    bytes_acc = 4 * (B * (2 * H * W * C + Ho * Wo * C)
                     + 3 * W * C * C + 9 * C * C + 2 * C * Cr
                     + 3 * W * C * Wo * C + Wo * C + C + 2)
    return pl.pallas_call(
        kern,
        grid=(B,),
        in_specs=[
            pl.BlockSpec((1, H, W * C), lambda b: (b, 0, 0)),
            pl.BlockSpec((1, H, W, C), lambda b: (b, 0, 0, 0)),
            pl.BlockSpec((3, W * C, C), lambda b: (0, 0, 0)),
            pl.BlockSpec((9 * C, C), lambda b: (0, 0)),
            pl.BlockSpec((1, C), lambda b: (0, 0)),
            pl.BlockSpec((C, Cr), lambda b: (0, 0)),
            pl.BlockSpec((Cr, C), lambda b: (0, 0)),
            pl.BlockSpec((1, 2), lambda b: (0, 0)),
            pl.BlockSpec((3, W * C, Wo * C), lambda b: (0, 0, 0)),
            pl.BlockSpec((1, Wo * C), lambda b: (0, 0)),
        ],
        out_specs=pl.BlockSpec((1, Ho, Wo * C), lambda b: (b, 0, 0)),
        out_shape=jax.ShapeDtypeStruct((B, Ho, Wo * C), jnp.float32),
        compiler_params=pltpu.CompilerParams(
            dimension_semantics=("parallel",)),
        cost_estimate=pl.CostEstimate(
            flops=flops, transcendentals=B * (C + 2), bytes_accessed=bytes_acc),
    )(img_m, evt, m1_img, w1_evt, b1, wfc1, wfc2, saw, wband, b2m)


# ----------------------------------------------------------------------------
# K2: bilinear upsample (align_corners=False), reassociated, lane-dense NHWC
# ----------------------------------------------------------------------------
def _bilinear_matrix(out_size, in_size):
    # PyTorch bilinear, align_corners=False (half-pixel centers).
    o = jnp.arange(out_size, dtype=jnp.float32)
    src = (o + 0.5) * (in_size / out_size) - 0.5
    src = jnp.maximum(src, 0.0)
    i0 = jnp.floor(src)
    lam = src - i0
    i0 = jnp.minimum(i0.astype(jnp.int32), in_size - 1)
    i1 = jnp.minimum(i0 + 1, in_size - 1)
    w0 = jax.nn.one_hot(i0, in_size, dtype=jnp.float32) * (1.0 - lam)[:, None]
    w1 = jax.nn.one_hot(i1, in_size, dtype=jnp.float32) * lam[:, None]
    return w0 + w1                                            # (out_size, in_size)


def _upsample_kernel(x_ref, wy_ref, k_ref, o_ref):
    # Reassociated:  (Wy @ X) @ K  ==  Wy @ (X @ K); applying K to the small
    # 14-row plane first cuts MXU FLOPs ~8x and leaves the kernel store-bound.
    u = jnp.dot(x_ref[0], k_ref[...], preferred_element_type=jnp.float32)
    o_ref[0] = jnp.dot(wy_ref[...], u, preferred_element_type=jnp.float32)


def bilinear_upsample_merged(xm, C, out_h, out_w):
    B, Hi, WiC = xm.shape
    Wi = WiC // C
    wy = _bilinear_matrix(out_h, Hi)                          # (out_h, Hi)
    wxT = _bilinear_matrix(out_w, Wi).T                       # (Wi, out_w)
    kmat = jnp.kron(wxT, jnp.eye(C, dtype=jnp.float32))       # (Wi*C, out_w*C)
    # One tile per batch when B>=2 (2 parallel grid units for v7x's dual TC);
    # keep 2 row tiles when B==1 so a single chip still has 2 parallel units.
    row_t = out_h if B >= 2 else out_h // 2
    flops = B * (2 * Hi * WiC * out_w * C + 2 * out_h * Hi * out_w * C)
    bytes_acc = 4 * (B * Hi * WiC + B * out_h * out_w * C
                     + WiC * out_w * C + out_h * Hi)
    out = pl.pallas_call(
        _upsample_kernel,
        grid=(B, out_h // row_t),
        in_specs=[
            pl.BlockSpec((1, Hi, WiC), lambda b, t: (b, 0, 0)),
            pl.BlockSpec((row_t, Hi), lambda b, t: (t, 0)),
            pl.BlockSpec((WiC, out_w * C), lambda b, t: (0, 0)),
        ],
        out_specs=pl.BlockSpec((1, row_t, out_w * C), lambda b, t: (b, t, 0)),
        out_shape=jax.ShapeDtypeStruct((B, out_h, out_w * C), jnp.float32),
        compiler_params=pltpu.CompilerParams(
            dimension_semantics=("parallel", "parallel"),
            vmem_limit_bytes=32 * 1024 * 1024),
        cost_estimate=pl.CostEstimate(
            flops=flops, transcendentals=0, bytes_accessed=bytes_acc),
    )(xm, wy, kmat)
    return out.reshape(B, out_h, out_w, C)                    # free metadata reshape


# ----------------------------------------------------------------------------
# Full ACMF forward (wrapper glue: layout transposes, weight folding)
# ----------------------------------------------------------------------------
def acmf_forward(params, f_img_nchw, f_evt_nchw):
    B, C, H, W = f_img_nchw.shape
    # Like the PyTorch module's broadcast of cat_fea, this requires
    # in_channels_evt == in_channels_img.
    assert f_evt_nchw.shape == (B, C, H, W)
    Wo = W - 2

    img = jnp.transpose(f_img_nchw, (0, 2, 3, 1)).astype(jnp.float32)   # NHWC
    evt = jnp.transpose(f_evt_nchw, (0, 2, 3, 1)).astype(jnp.float32)   # NHWC
    img_m = img.reshape(B, H, W * C)          # lane-merged NHWC (free reshape)

    # conv1: OIHW (C, 2C, 3, 3) -> HWIO; input-channel order is [img, evt]
    # exactly as torch.cat((F_img_t, F_evt_t), dim=1).
    w1hwio = jnp.transpose(params["conv1_w"], (2, 3, 1, 0)).astype(jnp.float32)
    m1_img = _fold_conv1_dx(w1hwio[:, :, :C, :], W, Wo)       # (3, W*C, C)
    w1_evt = w1hwio[:, :, C:, :].reshape(9 * C, C)            # (9C, C)
    b1 = params["conv1_b"].reshape(1, C).astype(jnp.float32)
    wfc1 = params["ca_fc1_w"][:, :, 0, 0].T.astype(jnp.float32)          # (C, Cr)
    wfc2 = params["ca_fc2_w"][:, :, 0, 0].T.astype(jnp.float32)          # (Cr, C)
    saw = params["sa_conv_w"][0, :, 3, 3].reshape(1, 2).astype(jnp.float32)
    w2hwio = jnp.transpose(params["conv2_w"], (2, 3, 1, 0)).astype(jnp.float32)
    wband = _band_conv2(w2hwio, W, Wo)                        # (3, W*C, Wo*C)
    b2m = jnp.tile(2.0 * params["conv2_b"].reshape(1, C).astype(jnp.float32),
                   (1, Wo))                                   # (1, Wo*C)

    conv_m = fused_attention_conv(img_m, evt, m1_img, w1_evt, b1, wfc1, wfc2,
                                  saw, wband, b2m)            # (B, H-2, Wo*C)
    return bilinear_upsample_merged(conv_m, C, 224, 224)      # (B,224,224,C)


# ----------------------------------------------------------------------------
# Pure-JAX reference (for correctness check)
# ----------------------------------------------------------------------------
def acmf_reference(params, f_img, f_evt):
    dn = ("NCHW", "OIHW", "NCHW")
    conv = lambda x, w: lax.conv_general_dilated(x, w, (1, 1), "VALID",
                                                 dimension_numbers=dn)
    c1 = conv(jnp.concatenate([f_img, f_evt], axis=1), params["conv1_w"]) \
        + params["conv1_b"][None, :, None, None]
    cat_fea = jnp.mean(c1, axis=(2, 3), keepdims=True)
    evt_mul = f_evt * cat_fea
    img_mul = f_img * cat_fea

    w1 = params["ca_fc1_w"][:, :, 0, 0]      # (Cr, C)
    w2 = params["ca_fc2_w"][:, :, 0, 0]      # (C, Cr)

    def mlp(v):
        h = jnp.maximum(jnp.einsum("bcij,rc->brij", v, w1), 0.0)
        return jnp.einsum("brij,cr->bcij", h, w2)

    ca = jax.nn.sigmoid(mlp(jnp.mean(evt_mul, axis=(2, 3), keepdims=True))
                        + mlp(jnp.max(evt_mul, axis=(2, 3), keepdims=True)))
    ca_avg = jnp.mean(ca, axis=1, keepdims=True)
    ca_max = jnp.max(ca, axis=1, keepdims=True)
    wsa = params["sa_conv_w"]
    sa = jax.nn.sigmoid(ca_avg * wsa[0, 0, 3, 3] + ca_max * wsa[0, 1, 3, 3])

    x = img_mul + sa
    conv2 = lambda z: conv(z, params["conv2_w"]) + params["conv2_b"][None, :, None, None]
    out = conv2(x) + conv2(img_mul)

    wy = _bilinear_matrix(224, out.shape[2])
    wx = _bilinear_matrix(224, out.shape[3])
    up = jnp.einsum("oh,bchw,pw->bcop", wy, out, wx)
    return jnp.transpose(up, (0, 2, 3, 1))


if __name__ == "__main__":
    B, C, H, W = 2, 16, 16, 16          # in_channels_img == in_channels_evt == 16
    reduction = 4
    Cr = C // reduction

    key = jax.random.PRNGKey(0)
    ks = jax.random.split(key, 9)
    params = {
        "conv1_w": 0.1 * jax.random.normal(ks[0], (C, 2 * C, 3, 3), jnp.float32),
        "conv1_b": 0.1 * jax.random.normal(ks[1], (C,), jnp.float32),
        "ca_fc1_w": 0.1 * jax.random.normal(ks[2], (Cr, C, 1, 1), jnp.float32),
        "ca_fc2_w": 0.1 * jax.random.normal(ks[3], (C, Cr, 1, 1), jnp.float32),
        "sa_conv_w": 0.1 * jax.random.normal(ks[4], (1, 2, 7, 7), jnp.float32),
        "conv2_w": 0.1 * jax.random.normal(ks[5], (C, C, 3, 3), jnp.float32),
        "conv2_b": 0.1 * jax.random.normal(ks[6], (C,), jnp.float32),
    }
    f_img = jax.random.normal(ks[7], (B, C, H, W), jnp.float32)
    f_evt = jax.random.normal(ks[8], (B, C, H, W), jnp.float32)

    fwd = jax.jit(acmf_forward)
    out = fwd(params, f_img, f_evt)
    out = jax.block_until_ready(out)
    assert out.shape == (B, 224, 224, C), out.shape

    ref = acmf_reference(params, f_img, f_evt)
    max_err = float(jnp.max(jnp.abs(out - ref)))
    if max_err > 1e-3:
        raise AssertionError(f"mismatch vs reference: max abs err = {max_err}")

    print("KERNEL_OK")
</pallas_src>

<mosaic_0001>
module attributes {stable_mosaic.version = 11 : i64} {
  func.func @_fused_kernel(%arg0: i32, %arg1: memref<1x16x256xf32, #tpu.memory_space<vmem>>, %arg2: memref<1x16x16x16xf32, #tpu.memory_space<vmem>>, %arg3: memref<3x256x16xf32, #tpu.memory_space<vmem>>, %arg4: memref<144x16xf32, #tpu.memory_space<vmem>>, %arg5: memref<1x16xf32, #tpu.memory_space<vmem>>, %arg6: memref<16x4xf32, #tpu.memory_space<vmem>>, %arg7: memref<4x16xf32, #tpu.memory_space<vmem>>, %arg8: memref<1x2xf32, #tpu.memory_space<vmem>>, %arg9: memref<3x256x224xf32, #tpu.memory_space<vmem>>, %arg10: memref<1x224xf32, #tpu.memory_space<vmem>>, %arg11: memref<1x14x224xf32, #tpu.memory_space<vmem>>) attributes {dimension_semantics = [#tpu.dimension_semantics<parallel>], iteration_bounds = array<i64: 2>, scalar_prefetch = 0 : i64, scratch_operands = 0 : i64, tpu.core_type = #tpu.core_type<tc>, window_params = [{transform_indices = @transform_0, window_bounds = array<i64: 1, 16, 256>}, {transform_indices = @transform_1, window_bounds = array<i64: 1, 16, 16, 16>}, {pipeline_mode = #tpu.pipeline_mode<synchronous>, transform_indices = @transform_2, window_bounds = array<i64: 3, 256, 16>}, {pipeline_mode = #tpu.pipeline_mode<synchronous>, transform_indices = @transform_3, window_bounds = array<i64: 144, 16>}, {pipeline_mode = #tpu.pipeline_mode<synchronous>, transform_indices = @transform_4, window_bounds = array<i64: 1, 16>}, {pipeline_mode = #tpu.pipeline_mode<synchronous>, transform_indices = @transform_5, window_bounds = array<i64: 16, 4>}, {pipeline_mode = #tpu.pipeline_mode<synchronous>, transform_indices = @transform_6, window_bounds = array<i64: 4, 16>}, {pipeline_mode = #tpu.pipeline_mode<synchronous>, transform_indices = @transform_7, window_bounds = array<i64: 1, 2>}, {pipeline_mode = #tpu.pipeline_mode<synchronous>, transform_indices = @transform_8, window_bounds = array<i64: 3, 256, 224>}, {pipeline_mode = #tpu.pipeline_mode<synchronous>, transform_indices = @transform_9, window_bounds = array<i64: 1, 224>}, {transform_indices = @transform_10, window_bounds = array<i64: 1, 14, 224>}]} {
    %c0 = arith.constant 0 : index
    %c0_0 = arith.constant 0 : index
    %c0_1 = arith.constant 0 : index
    %0 = vector.load %arg1[%c0, %c0_0, %c0_1] : memref<1x16x256xf32, #tpu.memory_space<vmem>>, vector<1x16x256xf32>
    %1 = vector.shape_cast %0 : vector<1x16x256xf32> to vector<16x256xf32>
    %c0_2 = arith.constant 0 : index
    %c0_3 = arith.constant 0 : index
    %c0_4 = arith.constant 0 : index
    %c0_5 = arith.constant 0 : index
    %2 = vector.load %arg2[%c0_2, %c0_3, %c0_4, %c0_5] : memref<1x16x16x16xf32, #tpu.memory_space<vmem>>, vector<1x16x16x16xf32>
    %3 = vector.shape_cast %2 : vector<1x16x16x16xf32> to vector<16x16x16xf32>
    %cst = arith.constant dense<0.000000e+00> : vector<256xf32>
    %4 = vector.multi_reduction <add>, %1, %cst [0] : vector<16x256xf32> to vector<256xf32>
    %5 = vector.shape_cast %4 : vector<256xf32> to vector<1x256xf32>
    %6 = vector.extract_strided_slice %1 {offsets = [0, 0], sizes = [1, 256], strides = [1, 1]} : vector<16x256xf32> to vector<1x256xf32>
    %7 = vector.extract_strided_slice %1 {offsets = [1, 0], sizes = [1, 256], strides = [1, 1]} : vector<16x256xf32> to vector<1x256xf32>
    %8 = vector.extract_strided_slice %1 {offsets = [14, 0], sizes = [1, 256], strides = [1, 1]} : vector<16x256xf32> to vector<1x256xf32>
    %9 = vector.extract_strided_slice %1 {offsets = [15, 0], sizes = [1, 256], strides = [1, 1]} : vector<16x256xf32> to vector<1x256xf32>
    %10 = arith.subf %5, %8 : vector<1x256xf32>
    %11 = arith.subf %10, %9 : vector<1x256xf32>
    %12 = arith.subf %5, %6 : vector<1x256xf32>
    %13 = arith.subf %12, %9 : vector<1x256xf32>
    %14 = arith.subf %5, %6 : vector<1x256xf32>
    %15 = arith.subf %14, %7 : vector<1x256xf32>
    %cst_6 = arith.constant 0.000000e+00 : f32
    %16 = vector.broadcast %cst_6 : f32 to vector<1x16xf32>
    %c0_7 = arith.constant 0 : index
    %c0_8 = arith.constant 0 : index
    %c0_9 = arith.constant 0 : index
    %17 = vector.load %arg3[%c0_7, %c0_8, %c0_9] : memref<3x256x16xf32, #tpu.memory_space<vmem>>, vector<1x256x16xf32>
    %18 = vector.shape_cast %17 : vector<1x256x16xf32> to vector<256x16xf32>
    %cst_10 = arith.constant dense<0.000000e+00> : vector<1x16xf32>
    %19 = tpu.matmul %11, %18, %cst_10 {dimension_numbers = #tpu.dot_dimension_numbers<[1], [0], [0], [1], [0, 0, 1, 1], [], []>} : vector<1x256xf32>, vector<256x16xf32>, vector<1x16xf32> -> vector<1x16xf32>
    %20 = arith.addf %16, %19 : vector<1x16xf32>
    %c1 = arith.constant 1 : index
    %c0_11 = arith.constant 0 : index
    %c0_12 = arith.constant 0 : index
    %21 = vector.load %arg3[%c1, %c0_11, %c0_12] : memref<3x256x16xf32, #tpu.memory_space<vmem>>, vector<1x256x16xf32>
    %22 = vector.shape_cast %21 : vector<1x256x16xf32> to vector<256x16xf32>
    %cst_13 = arith.constant dense<0.000000e+00> : vector<1x16xf32>
    %23 = tpu.matmul %13, %22, %cst_13 {dimension_numbers = #tpu.dot_dimension_numbers<[1], [0], [0], [1], [0, 0, 1, 1], [], []>} : vector<1x256xf32>, vector<256x16xf32>, vector<1x16xf32> -> vector<1x16xf32>
    %24 = arith.addf %20, %23 : vector<1x16xf32>
    %c2 = arith.constant 2 : index
    %c0_14 = arith.constant 0 : index
    %c0_15 = arith.constant 0 : index
    %25 = vector.load %arg3[%c2, %c0_14, %c0_15] : memref<3x256x16xf32, #tpu.memory_space<vmem>>, vector<1x256x16xf32>
    %26 = vector.shape_cast %25 : vector<1x256x16xf32> to vector<256x16xf32>
    %cst_16 = arith.constant dense<0.000000e+00> : vector<1x16xf32>
    %27 = tpu.matmul %15, %26, %cst_16 {dimension_numbers = #tpu.dot_dimension_numbers<[1], [0], [0], [1], [0, 0, 1, 1], [], []>} : vector<1x256xf32>, vector<256x16xf32>, vector<1x16xf32> -> vector<1x16xf32>
    %28 = arith.addf %24, %27 : vector<1x16xf32>
    %cst_17 = arith.constant dense<0.000000e+00> : vector<16x16xf32>
    %29 = vector.multi_reduction <add>, %3, %cst_17 [0] : vector<16x16x16xf32> to vector<16x16xf32>
    %30 = vector.extract_strided_slice %3 {offsets = [0, 0, 0], sizes = [1, 16, 16], strides = [1, 1, 1]} : vector<16x16x16xf32> to vector<1x16x16xf32>
    %31 = vector.shape_cast %30 : vector<1x16x16xf32> to vector<16x16xf32>
    %32 = vector.extract_strided_slice %3 {offsets = [1, 0, 0], sizes = [1, 16, 16], strides = [1, 1, 1]} : vector<16x16x16xf32> to vector<1x16x16xf32>
    %33 = vector.shape_cast %32 : vector<1x16x16xf32> to vector<16x16xf32>
    %34 = vector.extract_strided_slice %3 {offsets = [14, 0, 0], sizes = [1, 16, 16], strides = [1, 1, 1]} : vector<16x16x16xf32> to vector<1x16x16xf32>
    %35 = vector.shape_cast %34 : vector<1x16x16xf32> to vector<16x16xf32>
    %36 = vector.extract_strided_slice %3 {offsets = [15, 0, 0], sizes = [1, 16, 16], strides = [1, 1, 1]} : vector<16x16x16xf32> to vector<1x16x16xf32>
    %37 = vector.shape_cast %36 : vector<1x16x16xf32> to vector<16x16xf32>
    %38 = arith.subf %29, %35 : vector<16x16xf32>
    %39 = arith.subf %38, %37 : vector<16x16xf32>
    %40 = arith.subf %29, %31 : vector<16x16xf32>
    %41 = arith.subf %40, %37 : vector<16x16xf32>
    %42 = arith.subf %29, %31 : vector<16x16xf32>
    %43 = arith.subf %42, %33 : vector<16x16xf32>
    %cst_18 = arith.constant dense<0.000000e+00> : vector<16xf32>
    %44 = vector.multi_reduction <add>, %39, %cst_18 [0] : vector<16x16xf32> to vector<16xf32>
    %45 = vector.shape_cast %44 : vector<16xf32> to vector<1x16xf32>
    %46 = vector.extract_strided_slice %39 {offsets = [0, 0], sizes = [1, 16], strides = [1, 1]} : vector<16x16xf32> to vector<1x16xf32>
    %47 = vector.extract_strided_slice %39 {offsets = [1, 0], sizes = [1, 16], strides = [1, 1]} : vector<16x16xf32> to vector<1x16xf32>
    %48 = vector.extract_strided_slice %39 {offsets = [14, 0], sizes = [1, 16], strides = [1, 1]} : vector<16x16xf32> to vector<1x16xf32>
    %49 = vector.extract_strided_slice %39 {offsets = [15, 0], sizes = [1, 16], strides = [1, 1]} : vector<16x16xf32> to vector<1x16xf32>
    %50 = arith.subf %45, %48 : vector<1x16xf32>
    %51 = arith.subf %50, %49 : vector<1x16xf32>
    %52 = arith.subf %45, %46 : vector<1x16xf32>
    %53 = arith.subf %52, %49 : vector<1x16xf32>
    %54 = arith.subf %45, %46 : vector<1x16xf32>
    %55 = arith.subf %54, %47 : vector<1x16xf32>
    %cst_19 = arith.constant dense<0.000000e+00> : vector<16xf32>
    %56 = vector.multi_reduction <add>, %41, %cst_19 [0] : vector<16x16xf32> to vector<16xf32>
    %57 = vector.shape_cast %56 : vector<16xf32> to vector<1x16xf32>
    %58 = vector.extract_strided_slice %41 {offsets = [0, 0], sizes = [1, 16], strides = [1, 1]} : vector<16x16xf32> to vector<1x16xf32>
    %59 = vector.extract_strided_slice %41 {offsets = [1, 0], sizes = [1, 16], strides = [1, 1]} : vector<16x16xf32> to vector<1x16xf32>
    %60 = vector.extract_strided_slice %41 {offsets = [14, 0], sizes = [1, 16], strides = [1, 1]} : vector<16x16xf32> to vector<1x16xf32>
    %61 = vector.extract_strided_slice %41 {offsets = [15, 0], sizes = [1, 16], strides = [1, 1]} : vector<16x16xf32> to vector<1x16xf32>
    %62 = arith.subf %57, %60 : vector<1x16xf32>
    %63 = arith.subf %62, %61 : vector<1x16xf32>
    %64 = arith.subf %57, %58 : vector<1x16xf32>
    %65 = arith.subf %64, %61 : vector<1x16xf32>
    %66 = arith.subf %57, %58 : vector<1x16xf32>
    %67 = arith.subf %66, %59 : vector<1x16xf32>
    %cst_20 = arith.constant dense<0.000000e+00> : vector<16xf32>
    %68 = vector.multi_reduction <add>, %43, %cst_20 [0] : vector<16x16xf32> to vector<16xf32>
    %69 = vector.shape_cast %68 : vector<16xf32> to vector<1x16xf32>
    %70 = vector.extract_strided_slice %43 {offsets = [0, 0], sizes = [1, 16], strides = [1, 1]} : vector<16x16xf32> to vector<1x16xf32>
    %71 = vector.extract_strided_slice %43 {offsets = [1, 0], sizes = [1, 16], strides = [1, 1]} : vector<16x16xf32> to vector<1x16xf32>
    %72 = vector.extract_strided_slice %43 {offsets = [14, 0], sizes = [1, 16], strides = [1, 1]} : vector<16x16xf32> to vector<1x16xf32>
    %73 = vector.extract_strided_slice %43 {offsets = [15, 0], sizes = [1, 16], strides = [1, 1]} : vector<16x16xf32> to vector<1x16xf32>
    %74 = arith.subf %69, %72 : vector<1x16xf32>
    %75 = arith.subf %74, %73 : vector<1x16xf32>
    %76 = arith.subf %69, %70 : vector<1x16xf32>
    %77 = arith.subf %76, %73 : vector<1x16xf32>
    %78 = arith.subf %69, %70 : vector<1x16xf32>
    %79 = arith.subf %78, %71 : vector<1x16xf32>
    %80 = tpu.concatenate %51, %53, %55, %63, %65, %67, %75, %77, %79 in 1 : vector<1x16xf32>, vector<1x16xf32>, vector<1x16xf32>, vector<1x16xf32>, vector<1x16xf32>, vector<1x16xf32>, vector<1x16xf32>, vector<1x16xf32>, vector<1x16xf32> -> vector<1x144xf32>
    %c0_21 = arith.constant 0 : index
    %c0_22 = arith.constant 0 : index
    %81 = vector.load %arg4[%c0_21, %c0_22] : memref<144x16xf32, #tpu.memory_space<vmem>>, vector<144x16xf32>
    %cst_23 = arith.constant dense<0.000000e+00> : vector<1x16xf32>
    %82 = tpu.matmul %80, %81, %cst_23 {dimension_numbers = #tpu.dot_dimension_numbers<[1], [0], [0], [1], [0, 0, 1, 1], [], []>} : vector<1x144xf32>, vector<144x16xf32>, vector<1x16xf32> -> vector<1x16xf32>
    %83 = arith.addf %28, %82 : vector<1x16xf32>
    %cst_24 = arith.constant 0.00510204071 : f32
    %84 = vector.broadcast %cst_24 : f32 to vector<1x16xf32>
    %85 = arith.mulf %83, %84 : vector<1x16xf32>
    %c0_25 = arith.constant 0 : index
    %c0_26 = arith.constant 0 : index
    %86 = vector.load %arg5[%c0_25, %c0_26] : memref<1x16xf32, #tpu.memory_space<vmem>>, vector<1x16xf32>
    %87 = arith.addf %85, %86 : vector<1x16xf32>
    %cst_27 = arith.constant dense<0.000000e+00> : vector<16xf32>
    %88 = vector.multi_reduction <add>, %29, %cst_27 [0] : vector<16x16xf32> to vector<16xf32>
    %89 = vector.shape_cast %88 : vector<16xf32> to vector<1x16xf32>
    %cst_28 = arith.constant dense<0xFF800000> : vector<16x16xf32>
    %90 = vector.multi_reduction <maximumf>, %3, %cst_28 [0] : vector<16x16x16xf32> to vector<16x16xf32>
    %cst_29 = arith.constant dense<0xFF800000> : vector<16xf32>
    %91 = vector.multi_reduction <maximumf>, %90, %cst_29 [0] : vector<16x16xf32> to vector<16xf32>
    %92 = vector.shape_cast %91 : vector<16xf32> to vector<1x16xf32>
    %cst_30 = arith.constant dense<0x7F800000> : vector<16x16xf32>
    %93 = vector.multi_reduction <minimumf>, %3, %cst_30 [0] : vector<16x16x16xf32> to vector<16x16xf32>
    %cst_31 = arith.constant dense<0x7F800000> : vector<16xf32>
    %94 = vector.multi_reduction <minimumf>, %93, %cst_31 [0] : vector<16x16xf32> to vector<16xf32>
    %95 = vector.shape_cast %94 : vector<16xf32> to vector<1x16xf32>
    %cst_32 = arith.constant 3.906250e-03 : f32
    %96 = vector.broadcast %cst_32 : f32 to vector<1x16xf32>
    %97 = arith.mulf %89, %96 : vector<1x16xf32>
    %98 = arith.mulf %87, %97 : vector<1x16xf32>
    %cst_33 = arith.constant 0.000000e+00 : f32
    %99 = vector.broadcast %cst_33 : f32 to vector<1x16xf32>
    %100 = arith.cmpf oge, %87, %99 : vector<1x16xf32>
    %101 = arith.mulf %87, %92 : vector<1x16xf32>
    %102 = arith.mulf %87, %95 : vector<1x16xf32>
    %103 = arith.select %100, %101, %102 : vector<1x16xi1>, vector<1x16xf32>
    %c0_34 = arith.constant 0 : index
    %c0_35 = arith.constant 0 : index
    %104 = vector.load %arg6[%c0_34, %c0_35] : memref<16x4xf32, #tpu.memory_space<vmem>>, vector<16x4xf32>
    %cst_36 = arith.constant dense<0.000000e+00> : vector<1x4xf32>
    %105 = tpu.matmul %98, %104, %cst_36 {dimension_numbers = #tpu.dot_dimension_numbers<[1], [0], [0], [1], [0, 0, 1, 1], [], []>} : vector<1x16xf32>, vector<16x4xf32>, vector<1x4xf32> -> vector<1x4xf32>
    %cst_37 = arith.constant 0.000000e+00 : f32
    %106 = vector.broadcast %cst_37 : f32 to vector<1x4xf32>
    %107 = arith.maximumf %105, %106 : vector<1x4xf32>
    %c0_38 = arith.constant 0 : index
    %c0_39 = arith.constant 0 : index
    %108 = vector.load %arg7[%c0_38, %c0_39] : memref<4x16xf32, #tpu.memory_space<vmem>>, vector<4x16xf32>
    %cst_40 = arith.constant dense<0.000000e+00> : vector<1x16xf32>
    %109 = tpu.matmul %107, %108, %cst_40 {dimension_numbers = #tpu.dot_dimension_numbers<[1], [0], [0], [1], [0, 0, 1, 1], [], []>} : vector<1x4xf32>, vector<4x16xf32>, vector<1x16xf32> -> vector<1x16xf32>
    %c0_41 = arith.constant 0 : index
    %c0_42 = arith.constant 0 : index
    %110 = vector.load %arg6[%c0_41, %c0_42] : memref<16x4xf32, #tpu.memory_space<vmem>>, vector<16x4xf32>
    %cst_43 = arith.constant dense<0.000000e+00> : vector<1x4xf32>
    %111 = tpu.matmul %103, %110, %cst_43 {dimension_numbers = #tpu.dot_dimension_numbers<[1], [0], [0], [1], [0, 0, 1, 1], [], []>} : vector<1x16xf32>, vector<16x4xf32>, vector<1x4xf32> -> vector<1x4xf32>
    %cst_44 = arith.constant 0.000000e+00 : f32
    %112 = vector.broadcast %cst_44 : f32 to vector<1x4xf32>
    %113 = arith.maximumf %111, %112 : vector<1x4xf32>
    %c0_45 = arith.constant 0 : index
    %c0_46 = arith.constant 0 : index
    %114 = vector.load %arg7[%c0_45, %c0_46] : memref<4x16xf32, #tpu.memory_space<vmem>>, vector<4x16xf32>
    %cst_47 = arith.constant dense<0.000000e+00> : vector<1x16xf32>
    %115 = tpu.matmul %113, %114, %cst_47 {dimension_numbers = #tpu.dot_dimension_numbers<[1], [0], [0], [1], [0, 0, 1, 1], [], []>} : vector<1x4xf32>, vector<4x16xf32>, vector<1x16xf32> -> vector<1x16xf32>
    %116 = arith.addf %109, %115 : vector<1x16xf32>
    %cst_48 = arith.constant 0.000000e+00 : f32
    %117 = vector.broadcast %cst_48 : f32 to vector<1x16xf32>
    %118 = arith.subf %117, %116 : vector<1x16xf32>
    %119 = math.exp %118 : vector<1x16xf32>
    %cst_49 = arith.constant 1.000000e+00 : f32
    %120 = vector.broadcast %cst_49 : f32 to vector<1x16xf32>
    %121 = arith.addf %120, %119 : vector<1x16xf32>
    %cst_50 = arith.constant 1.000000e+00 : f32
    %122 = vector.broadcast %cst_50 : f32 to vector<1x16xf32>
    %123 = arith.divf %122, %121 : vector<1x16xf32>
    %cst_51 = arith.constant dense<0.000000e+00> : vector<1xf32>
    %124 = vector.multi_reduction <add>, %123, %cst_51 [1] : vector<1x16xf32> to vector<1xf32>
    %125 = vector.shape_cast %124 : vector<1xf32> to vector<1x1xf32>
    %cst_52 = arith.constant 1.600000e+01 : f32
    %126 = vector.broadcast %cst_52 : f32 to vector<1x1xf32>
    %127 = arith.divf %125, %126 : vector<1x1xf32>
    %cst_53 = arith.constant dense<0xFF800000> : vector<1xf32>
    %128 = vector.multi_reduction <maximumf>, %123, %cst_53 [1] : vector<1x16xf32> to vector<1xf32>
    %129 = vector.shape_cast %128 : vector<1xf32> to vector<1x1xf32>
    %c0_54 = arith.constant 0 : index
    %c0_55 = arith.constant 0 : index
    %130 = vector.load %arg8[%c0_54, %c0_55] : memref<1x2xf32, #tpu.memory_space<vmem>>, vector<1x2xf32>
    %131 = vector.extract_strided_slice %130 {offsets = [0, 0], sizes = [1, 1], strides = [1, 1]} : vector<1x2xf32> to vector<1x1xf32>
    %132 = arith.mulf %127, %131 : vector<1x1xf32>
    %133 = vector.extract_strided_slice %130 {offsets = [0, 1], sizes = [1, 1], strides = [1, 1]} : vector<1x2xf32> to vector<1x1xf32>
    %134 = arith.mulf %129, %133 : vector<1x1xf32>
    %135 = arith.addf %132, %134 : vector<1x1xf32>
    %cst_56 = arith.constant 0.000000e+00 : f32
    %136 = vector.broadcast %cst_56 : f32 to vector<1x1xf32>
    %137 = arith.subf %136, %135 : vector<1x1xf32>
    %138 = math.exp %137 : vector<1x1xf32>
    %cst_57 = arith.constant 1.000000e+00 : f32
    %139 = vector.broadcast %cst_57 : f32 to vector<1x1xf32>
    %140 = arith.addf %139, %138 : vector<1x1xf32>
    %cst_58 = arith.constant 1.000000e+00 : f32
    %141 = vector.broadcast %cst_58 : f32 to vector<1x1xf32>
    %142 = arith.divf %141, %140 : vector<1x1xf32>
    %cst_59 = arith.constant 2.000000e+00 : f32
    %143 = vector.broadcast %cst_59 : f32 to vector<1x16xf32>
    %144 = arith.mulf %143, %87 : vector<1x16xf32>
    %145 = tpu.concatenate %144, %144, %144, %144, %144, %144, %144, %144, %144, %144, %144, %144, %144, %144, %144, %144 in 1 : vector<1x16xf32>, vector<1x16xf32>, vector<1x16xf32>, vector<1x16xf32>, vector<1x16xf32>, vector<1x16xf32>, vector<1x16xf32>, vector<1x16xf32>, vector<1x16xf32>, vector<1x16xf32>, vector<1x16xf32>, vector<1x16xf32>, vector<1x16xf32>, vector<1x16xf32>, vector<1x16xf32>, vector<1x16xf32> -> vector<1x256xf32>
    %146 = vector.broadcast %145 : vector<1x256xf32> to vector<16x256xf32>
    %147 = arith.mulf %1, %146 : vector<16x256xf32>
    %148 = vector.broadcast %142 : vector<1x1xf32> to vector<16x256xf32>
    %149 = arith.addf %147, %148 : vector<16x256xf32>
    %150 = vector.extract_strided_slice %149 {offsets = [0, 0], sizes = [14, 256], strides = [1, 1]} : vector<16x256xf32> to vector<14x256xf32>
    %c0_60 = arith.constant 0 : index
    %c0_61 = arith.constant 0 : index
    %c0_62 = arith.constant 0 : index
    %151 = vector.load %arg9[%c0_60, %c0_61, %c0_62] : memref<3x256x224xf32, #tpu.memory_space<vmem>>, vector<1x256x224xf32>
    %152 = vector.shape_cast %151 : vector<1x256x224xf32> to vector<256x224xf32>
    %cst_63 = arith.constant dense<0.000000e+00> : vector<14x224xf32>
    %153 = tpu.matmul %150, %152, %cst_63 {dimension_numbers = #tpu.dot_dimension_numbers<[1], [0], [0], [1], [0, 0, 1, 1], [], []>} : vector<14x256xf32>, vector<256x224xf32>, vector<14x224xf32> -> vector<14x224xf32>
    %154 = vector.extract_strided_slice %149 {offsets = [1, 0], sizes = [14, 256], strides = [1, 1]} : vector<16x256xf32> to vector<14x256xf32>
    %c1_64 = arith.constant 1 : index
    %c0_65 = arith.constant 0 : index
    %c0_66 = arith.constant 0 : index
    %155 = vector.load %arg9[%c1_64, %c0_65, %c0_66] : memref<3x256x224xf32, #tpu.memory_space<vmem>>, vector<1x256x224xf32>
    %156 = vector.shape_cast %155 : vector<1x256x224xf32> to vector<256x224xf32>
    %cst_67 = arith.constant dense<0.000000e+00> : vector<14x224xf32>
    %157 = tpu.matmul %154, %156, %cst_67 {dimension_numbers = #tpu.dot_dimension_numbers<[1], [0], [0], [1], [0, 0, 1, 1], [], []>} : vector<14x256xf32>, vector<256x224xf32>, vector<14x224xf32> -> vector<14x224xf32>
    %158 = arith.addf %153, %157 : vector<14x224xf32>
    %159 = vector.extract_strided_slice %149 {offsets = [2, 0], sizes = [14, 256], strides = [1, 1]} : vector<16x256xf32> to vector<14x256xf32>
    %c2_68 = arith.constant 2 : index
    %c0_69 = arith.constant 0 : index
    %c0_70 = arith.constant 0 : index
    %160 = vector.load %arg9[%c2_68, %c0_69, %c0_70] : memref<3x256x224xf32, #tpu.memory_space<vmem>>, vector<1x256x224xf32>
    %161 = vector.shape_cast %160 : vector<1x256x224xf32> to vector<256x224xf32>
    %cst_71 = arith.constant dense<0.000000e+00> : vector<14x224xf32>
    %162 = tpu.matmul %159, %161, %cst_71 {dimension_numbers = #tpu.dot_dimension_numbers<[1], [0], [0], [1], [0, 0, 1, 1], [], []>} : vector<14x256xf32>, vector<256x224xf32>, vector<14x224xf32> -> vector<14x224xf32>
    %163 = arith.addf %158, %162 : vector<14x224xf32>
    %c0_72 = arith.constant 0 : index
    %c0_73 = arith.constant 0 : index
    %164 = vector.load %arg10[%c0_72, %c0_73] : memref<1x224xf32, #tpu.memory_space<vmem>>, vector<1x224xf32>
    %165 = vector.broadcast %164 : vector<1x224xf32> to vector<14x224xf32>
    %166 = arith.addf %163, %165 : vector<14x224xf32>
    %c0_74 = arith.constant 0 : index
    %c0_75 = arith.constant 0 : index
    %c0_76 = arith.constant 0 : index
    %167 = vector.load %arg11[%c0_74, %c0_75, %c0_76] : memref<1x14x224xf32, #tpu.memory_space<vmem>>, vector<1x14x224xf32>
    %168 = vector.shape_cast %167 : vector<1x14x224xf32> to vector<14x224xf32>
    %169 = vector.shape_cast %166 : vector<14x224xf32> to vector<1x14x224xf32>
    tpu.vector_store %arg11[%c0_74, %c0_75, %c0_76], %169 {strides = array<i32>} : memref<1x14x224xf32, #tpu.memory_space<vmem>>, vector<1x14x224xf32>,
    return
  }
  func.func @transform_0(%arg0: i32) -> (i32, i32, i32) {
    %c0_i32 = arith.constant 0 : i32
    %c0_i32_0 = arith.constant 0 : i32
    %c0_i32_1 = arith.constant 0 : i32
    return %arg0, %c0_i32, %c0_i32_0 : i32, i32, i32
  }
  func.func @transform_1(%arg0: i32) -> (i32, i32, i32, i32) {
    %c0_i32 = arith.constant 0 : i32
    %c0_i32_0 = arith.constant 0 : i32
    %c0_i32_1 = arith.constant 0 : i32
    %c0_i32_2 = arith.constant 0 : i32
    return %arg0, %c0_i32, %c0_i32_0, %c0_i32_1 : i32, i32, i32, i32
  }
  func.func @transform_2(%arg0: i32) -> (i32, i32, i32) {
    %c0_i32 = arith.constant 0 : i32
    %c0_i32_0 = arith.constant 0 : i32
    %c0_i32_1 = arith.constant 0 : i32
    %c0_i32_2 = arith.constant 0 : i32
    return %c0_i32, %c0_i32_0, %c0_i32_1 : i32, i32, i32
  }
  func.func @transform_3(%arg0: i32) -> (i32, i32) {
    %c0_i32 = arith.constant 0 : i32
    %c0_i32_0 = arith.constant 0 : i32
    %c0_i32_1 = arith.constant 0 : i32
    return %c0_i32, %c0_i32_0 : i32, i32
  }
  func.func @transform_4(%arg0: i32) -> (i32, i32) {
    %c0_i32 = arith.constant 0 : i32
    %c0_i32_0 = arith.constant 0 : i32
    %c0_i32_1 = arith.constant 0 : i32
    return %c0_i32, %c0_i32_0 : i32, i32
  }
  func.func @transform_5(%arg0: i32) -> (i32, i32) {
    %c0_i32 = arith.constant 0 : i32
    %c0_i32_0 = arith.constant 0 : i32
    %c0_i32_1 = arith.constant 0 : i32
    return %c0_i32, %c0_i32_0 : i32, i32
  }
  func.func @transform_6(%arg0: i32) -> (i32, i32) {
    %c0_i32 = arith.constant 0 : i32
    %c0_i32_0 = arith.constant 0 : i32
    %c0_i32_1 = arith.constant 0 : i32
    return %c0_i32, %c0_i32_0 : i32, i32
  }
  func.func @transform_7(%arg0: i32) -> (i32, i32) {
    %c0_i32 = arith.constant 0 : i32
    %c0_i32_0 = arith.constant 0 : i32
    %c0_i32_1 = arith.constant 0 : i32
    return %c0_i32, %c0_i32_0 : i32, i32
  }
  func.func @transform_8(%arg0: i32) -> (i32, i32, i32) {
    %c0_i32 = arith.constant 0 : i32
    %c0_i32_0 = arith.constant 0 : i32
    %c0_i32_1 = arith.constant 0 : i32
    %c0_i32_2 = arith.constant 0 : i32
    return %c0_i32, %c0_i32_0, %c0_i32_1 : i32, i32, i32
  }
  func.func @transform_9(%arg0: i32) -> (i32, i32) {
    %c0_i32 = arith.constant 0 : i32
    %c0_i32_0 = arith.constant 0 : i32
    %c0_i32_1 = arith.constant 0 : i32
    return %c0_i32, %c0_i32_0 : i32, i32
  }
  func.func @transform_10(%arg0: i32) -> (i32, i32, i32) {
    %c0_i32 = arith.constant 0 : i32
    %c0_i32_0 = arith.constant 0 : i32
    %c0_i32_1 = arith.constant 0 : i32
    return %arg0, %c0_i32, %c0_i32_0 : i32, i32, i32
  }
}

module attributes {stable_mosaic.version = 11 : i64} {
  func.func @_upsample_kernel(%arg0: i32, %arg1: i32, %arg2: memref<1x14x224xf32, #tpu.memory_space<vmem>>, %arg3: memref<224x14xf32, #tpu.memory_space<vmem>>, %arg4: memref<224x3584xf32, #tpu.memory_space<vmem>>, %arg5: memref<1x224x3584xf32, #tpu.memory_space<vmem>>) attributes {dimension_semantics = [#tpu.dimension_semantics<parallel>, #tpu.dimension_semantics<parallel>], iteration_bounds = array<i64: 2, 1>, scalar_prefetch = 0 : i64, scratch_operands = 0 : i64, tpu.core_type = #tpu.core_type<tc>, window_params = [{transform_indices = @transform_0, window_bounds = array<i64: 1, 14, 224>}, {transform_indices = @transform_1, window_bounds = array<i64: 224, 14>}, {pipeline_mode = #tpu.pipeline_mode<synchronous>, transform_indices = @transform_2, window_bounds = array<i64: 224, 3584>}, {transform_indices = @transform_3, window_bounds = array<i64: 1, 224, 3584>}]} {
    %c0 = arith.constant 0 : index
    %c0_0 = arith.constant 0 : index
    %c0_1 = arith.constant 0 : index
    %0 = vector.load %arg2[%c0, %c0_0, %c0_1] : memref<1x14x224xf32, #tpu.memory_space<vmem>>, vector<1x14x224xf32>
    %1 = vector.shape_cast %0 : vector<1x14x224xf32> to vector<14x224xf32>
    %c0_2 = arith.constant 0 : index
    %c0_3 = arith.constant 0 : index
    %2 = vector.load %arg4[%c0_2, %c0_3] : memref<224x3584xf32, #tpu.memory_space<vmem>>, vector<224x3584xf32>
    %cst = arith.constant dense<0.000000e+00> : vector<14x3584xf32>
    %3 = tpu.matmul %1, %2, %cst {dimension_numbers = #tpu.dot_dimension_numbers<[1], [0], [0], [1], [0, 0, 1, 1], [], []>} : vector<14x224xf32>, vector<224x3584xf32>, vector<14x3584xf32> -> vector<14x3584xf32>
    %c0_4 = arith.constant 0 : index
    %c0_5 = arith.constant 0 : index
    %4 = vector.load %arg3[%c0_4, %c0_5] : memref<224x14xf32, #tpu.memory_space<vmem>>, vector<224x14xf32>
    %cst_6 = arith.constant dense<0.000000e+00> : vector<224x3584xf32>
    %5 = tpu.matmul %4, %3, %cst_6 {dimension_numbers = #tpu.dot_dimension_numbers<[1], [0], [0], [1], [0, 0, 1, 1], [], []>} : vector<224x14xf32>, vector<14x3584xf32>, vector<224x3584xf32> -> vector<224x3584xf32>
    %c0_7 = arith.constant 0 : index
    %c0_8 = arith.constant 0 : index
    %c0_9 = arith.constant 0 : index
    %6 = vector.load %arg5[%c0_7, %c0_8, %c0_9] : memref<1x224x3584xf32, #tpu.memory_space<vmem>>, vector<1x224x3584xf32>
    %7 = vector.shape_cast %6 : vector<1x224x3584xf32> to vector<224x3584xf32>
    %8 = vector.shape_cast %5 : vector<224x3584xf32> to vector<1x224x3584xf32>
    tpu.vector_store %arg5[%c0_7, %c0_8, %c0_9], %8 {strides = array<i32>} : memref<1x224x3584xf32, #tpu.memory_space<vmem>>, vector<1x224x3584xf32>,
    return
  }
  func.func @transform_0(%arg0: i32, %arg1: i32) -> (i32, i32, i32) {
    %c0_i32 = arith.constant 0 : i32
    %c0_i32_0 = arith.constant 0 : i32
    %c0_i32_1 = arith.constant 0 : i32
    return %arg0, %c0_i32, %c0_i32_0 : i32, i32, i32
  }
  func.func @transform_1(%arg0: i32, %arg1: i32) -> (i32, i32) {
    %c0_i32 = arith.constant 0 : i32
    %c0_i32_0 = arith.constant 0 : i32
    return %arg1, %c0_i32 : i32, i32
  }
  func.func @transform_2(%arg0: i32, %arg1: i32) -> (i32, i32) {
    %c0_i32 = arith.constant 0 : i32
    %c0_i32_0 = arith.constant 0 : i32
    %c0_i32_1 = arith.constant 0 : i32
    return %c0_i32, %c0_i32_0 : i32, i32
  }
  func.func @transform_3(%arg0: i32, %arg1: i32) -> (i32, i32, i32) {
    %c0_i32 = arith.constant 0 : i32
    %c0_i32_0 = arith.constant 0 : i32
    return %arg0, %arg1, %c0_i32 : i32, i32, i32
  }
}

</mosaic_0001>

<llo_original>
// kernel: acmf_forward.2
$region0: #{acmf_forward.2}
  #allocation0 [shape = 'u32[]', space=smem, size = 0x4, offset = 0x4, fixed_abs, tag = 'smem constant byte address 0x4 - core index']
  #allocation1 [shape = 'u32[144,128]{1,0:T(1,128)}', space=vmem, size = 0x12000, scoped, tag = 'internal scratch']
  %s0 = inlined_call_operand.vmem [shape: f32[2,16,256], index: 0, kind: input, shape index: {}]
  %s1 = inlined_call_operand.vmem [shape: f32[2,16,16,16], index: 1, kind: input, shape index: {}]
  %s2 = inlined_call_operand.vmem [shape: f32[3,256,16], index: 2, kind: input, shape index: {}]
  %s3 = inlined_call_operand.vmem [shape: f32[144,16], index: 3, kind: input, shape index: {}]
  %s4 = inlined_call_operand.vmem [shape: f32[1,16], index: 4, kind: input, shape index: {}]
  %s5 = inlined_call_operand.vmem [shape: f32[16,4], index: 5, kind: input, shape index: {}]
  %s6 = inlined_call_operand.vmem [shape: f32[4,16], index: 6, kind: input, shape index: {}]
  %s7 = inlined_call_operand.vmem [shape: f32[1,2], index: 7, kind: input, shape index: {}]
  %s8 = inlined_call_operand.vmem [shape: f32[3,256,224], index: 8, kind: input, shape index: {}]
  %s9 = inlined_call_operand.vmem [shape: f32[1,224], index: 9, kind: input, shape index: {}]
  %s10 = inlined_call_operand.vmem [shape: f32[2,14,224], index: 10, kind: output, shape index: {}]
  %s11 = sld [smem:[#allocation0]]
  $region73: #{acmf_forward.2} parent=0
    _
  %s13 = ssub.s32 1, %s11
  %s14 = scalar_select 0, %s13, %s11
  loop: start=0, step=1, limit=4
  $region2: #{acmf_forward.2} parent=0 // loop_pre_header
    _
  $region3: #{acmf_forward.2} parent=0 // loop_header
    %s16 = sphi 0, %s20
    %p17 = scmp.ge.s32.totalorder %s16, 4
    %s26 = sphi 0, %s28
    %s29 = sphi 0, %s26
    %s30 = sphi 0, %s29
    %s46 = sphi 0, %s30
    %s52 = sphi 0, %s54
    %s55 = sphi 0, %s52
    %s56 = sphi 0, %s55
    %s72 = sphi 0, %s56
    %s76 = sphi 0, %s76
    %s78 = sphi 0, %s76
    %s79 = sphi 0, %s78
    %s93 = sphi 0, %s79
    %s97 = sphi 0, %s97
    %s99 = sphi 0, %s97
    %s100 = sphi 0, %s99
    %s114 = sphi 0, %s100
    %s118 = sphi 0, %s118
    %s120 = sphi 0, %s118
    %s121 = sphi 0, %s120
    %s135 = sphi 0, %s121
    %s139 = sphi 0, %s139
    %s141 = sphi 0, %s139
    %s142 = sphi 0, %s141
    %s156 = sphi 0, %s142
    %s160 = sphi 0, %s160
    %s162 = sphi 0, %s160
    %s163 = sphi 0, %s162
    %s177 = sphi 0, %s163
    %s181 = sphi 0, %s181
    %s183 = sphi 0, %s181
    %s184 = sphi 0, %s183
    %s198 = sphi 0, %s184
    %s202 = sphi 0, %s202
    %s204 = sphi 0, %s202
    %s205 = sphi 0, %s204
    %s219 = sphi 0, %s205
    %s223 = sphi 0, %s223
    %s225 = sphi 0, %s223
    %s226 = sphi 0, %s225
    %s240 = sphi 0, %s226
    %s246 = sphi 0, %s248
    %s249 = sphi 0, %s246
    %s250 = sphi 0, %s249
    %s266 = sphi 0, %s250
  $region4: #{acmf_forward.2} parent=0 // loop_header_branch
    %19 = sbr.rel (%p17) target = $region8
  $region5: #{acmf_forward.2} parent=0 // loop_body
    %s21 = ssub.s32 %s16, 1
    %s22 = ssub.s32 %s16, 2
    %s23 = sadd.s32 %s16, 1
    %s24 = ssub.s32 %s16, %s23
    %p25 = scmp.eq.s32.totalorder %s24, 0
    %s27 = sadd.s32 %s26, 1
    %s28 = scalar_select %p25, %s26, %s27
    %p31 = pneg %p25
    %p32 = scmp.eq.s32.totalorder %s16, 1
    %p33 = por %p31, %p32
    %p34 = scmp.ne.s32.totalorder %s26, %s29
    %p35 = scmp.eq.s32.totalorder %s16, 0
    %p36 = por %p34, %p35
    %p37 = scmp.ne.s32.totalorder %s26, %s29
    %p38 = scmp.eq.s32.totalorder %s21, 1
    %p39 = por %p37, %p38
    %p40 = scmp.ne.s32.totalorder %s29, %s30
    %p41 = scmp.eq.s32.totalorder %s21, 0
    %p42 = por %p40, %p41
    %p43 = scmp.ne.s32.totalorder %s29, %s30
    %p44 = scmp.eq.s32.totalorder %s22, 1
    %p45 = por %p43, %p44
    %p47 = scmp.ne.s32.totalorder %s30, %s46
    %p48 = scmp.eq.s32.totalorder %s22, 0
    %p49 = por %p47, %p48
    %s50 = ssub.s32 %s16, %s23
    %p51 = scmp.eq.s32.totalorder %s50, 0
    %s53 = sadd.s32 %s52, 1
    %s54 = scalar_select %p51, %s52, %s53
    %p57 = pneg %p51
    %p58 = scmp.eq.s32.totalorder %s16, 1
    %p59 = por %p57, %p58
    %p60 = scmp.ne.s32.totalorder %s52, %s55
    %p61 = scmp.eq.s32.totalorder %s16, 0
    %p62 = por %p60, %p61
    %p63 = scmp.ne.s32.totalorder %s52, %s55
    %p64 = scmp.eq.s32.totalorder %s21, 1
    %p65 = por %p63, %p64
    %p66 = scmp.ne.s32.totalorder %s55, %s56
    %p67 = scmp.eq.s32.totalorder %s21, 0
    %p68 = por %p66, %p67
    %p69 = scmp.ne.s32.totalorder %s55, %s56
    %p70 = scmp.eq.s32.totalorder %s22, 1
    %p71 = por %p69, %p70
    %p73 = scmp.ne.s32.totalorder %s56, %s72
    %p74 = scmp.eq.s32.totalorder %s22, 0
    %p75 = por %p73, %p74
    %s77 = sadd.s32 %s76, 1
    %p80 = scmp.eq.s32.totalorder %s16, 1
    %p81 = scmp.ne.s32.totalorder %s76, %s78
    %p82 = scmp.eq.s32.totalorder %s16, 0
    %p83 = por %p81, %p82
    %p84 = scmp.ne.s32.totalorder %s76, %s78
    %p85 = scmp.eq.s32.totalorder %s21, 1
    %p86 = por %p84, %p85
    %p87 = scmp.ne.s32.totalorder %s78, %s79
    %p88 = scmp.eq.s32.totalorder %s21, 0
    %p89 = por %p87, %p88
    %p90 = scmp.ne.s32.totalorder %s78, %s79
    %p91 = scmp.eq.s32.totalorder %s22, 1
    %p92 = por %p90, %p91
    %p94 = scmp.ne.s32.totalorder %s79, %s93
    %p95 = scmp.eq.s32.totalorder %s22, 0
    %p96 = por %p94, %p95
    %s98 = sadd.s32 %s97, 1
    %p101 = scmp.eq.s32.totalorder %s16, 1
    %p102 = scmp.ne.s32.totalorder %s97, %s99
    %p103 = scmp.eq.s32.totalorder %s16, 0
    %p104 = por %p102, %p103
    %p105 = scmp.ne.s32.totalorder %s97, %s99
    %p106 = scmp.eq.s32.totalorder %s21, 1
    %p107 = por %p105, %p106
    %p108 = scmp.ne.s32.totalorder %s99, %s100
    %p109 = scmp.eq.s32.totalorder %s21, 0
    %p110 = por %p108, %p109
    %p111 = scmp.ne.s32.totalorder %s99, %s100
    %p112 = scmp.eq.s32.totalorder %s22, 1
    %p113 = por %p111, %p112
    %p115 = scmp.ne.s32.totalorder %s100, %s114
    %p116 = scmp.eq.s32.totalorder %s22, 0
    %p117 = por %p115, %p116
    %s119 = sadd.s32 %s118, 1
    %p122 = scmp.eq.s32.totalorder %s16, 1
    %p123 = scmp.ne.s32.totalorder %s118, %s120
    %p124 = scmp.eq.s32.totalorder %s16, 0
    %p125 = por %p123, %p124
    %p126 = scmp.ne.s32.totalorder %s118, %s120
    %p127 = scmp.eq.s32.totalorder %s21, 1
    %p128 = por %p126, %p127
    %p129 = scmp.ne.s32.totalorder %s120, %s121
    %p130 = scmp.eq.s32.totalorder %s21, 0
    %p131 = por %p129, %p130
    %p132 = scmp.ne.s32.totalorder %s120, %s121
    %p133 = scmp.eq.s32.totalorder %s22, 1
    %p134 = por %p132, %p133
    %p136 = scmp.ne.s32.totalorder %s121, %s135
    %p137 = scmp.eq.s32.totalorder %s22, 0
    %p138 = por %p136, %p137
    %s140 = sadd.s32 %s139, 1
    %p143 = scmp.eq.s32.totalorder %s16, 1
    %p144 = scmp.ne.s32.totalorder %s139, %s141
    %p145 = scmp.eq.s32.totalorder %s16, 0
    %p146 = por %p144, %p145
    %p147 = scmp.ne.s32.totalorder %s139, %s141
    %p148 = scmp.eq.s32.totalorder %s21, 1
    %p149 = por %p147, %p148
    %p150 = scmp.ne.s32.totalorder %s141, %s142
    %p151 = scmp.eq.s32.totalorder %s21, 0
    %p152 = por %p150, %p151
    %p153 = scmp.ne.s32.totalorder %s141, %s142
    %p154 = scmp.eq.s32.totalorder %s22, 1
    %p155 = por %p153, %p154
    %p157 = scmp.ne.s32.totalorder %s142, %s156
    %p158 = scmp.eq.s32.totalorder %s22, 0
    %p159 = por %p157, %p158
    %s161 = sadd.s32 %s160, 1
    %p164 = scmp.eq.s32.totalorder %s16, 1
    %p165 = scmp.ne.s32.totalorder %s160, %s162
    %p166 = scmp.eq.s32.totalorder %s16, 0
    %p167 = por %p165, %p166
    %p168 = scmp.ne.s32.totalorder %s160, %s162
    %p169 = scmp.eq.s32.totalorder %s21, 1
    %p170 = por %p168, %p169
    %p171 = scmp.ne.s32.totalorder %s162, %s163
    %p172 = scmp.eq.s32.totalorder %s21, 0
    %p173 = por %p171, %p172
    %p174 = scmp.ne.s32.totalorder %s162, %s163
    %p175 = scmp.eq.s32.totalorder %s22, 1
    %p176 = por %p174, %p175
    %p178 = scmp.ne.s32.totalorder %s163, %s177
    %p179 = scmp.eq.s32.totalorder %s22, 0
    %p180 = por %p178, %p179
    %s182 = sadd.s32 %s181, 1
    %p185 = scmp.eq.s32.totalorder %s16, 1
    %p186 = scmp.ne.s32.totalorder %s181, %s183
    %p187 = scmp.eq.s32.totalorder %s16, 0
    %p188 = por %p186, %p187
    %p189 = scmp.ne.s32.totalorder %s181, %s183
    %p190 = scmp.eq.s32.totalorder %s21, 1
    %p191 = por %p189, %p190
    %p192 = scmp.ne.s32.totalorder %s183, %s184
    %p193 = scmp.eq.s32.totalorder %s21, 0
    %p194 = por %p192, %p193
    %p195 = scmp.ne.s32.totalorder %s183, %s184
    %p196 = scmp.eq.s32.totalorder %s22, 1
    %p197 = por %p195, %p196
    %p199 = scmp.ne.s32.totalorder %s184, %s198
    %p200 = scmp.eq.s32.totalorder %s22, 0
    %p201 = por %p199, %p200
    %s203 = sadd.s32 %s202, 1
    %p206 = scmp.eq.s32.totalorder %s16, 1
    %p207 = scmp.ne.s32.totalorder %s202, %s204
    %p208 = scmp.eq.s32.totalorder %s16, 0
    %p209 = por %p207, %p208
    %p210 = scmp.ne.s32.totalorder %s202, %s204
    %p211 = scmp.eq.s32.totalorder %s21, 1
    %p212 = por %p210, %p211
    %p213 = scmp.ne.s32.totalorder %s204, %s205
    %p214 = scmp.eq.s32.totalorder %s21, 0
    %p215 = por %p213, %p214
    %p216 = scmp.ne.s32.totalorder %s204, %s205
    %p217 = scmp.eq.s32.totalorder %s22, 1
    %p218 = por %p216, %p217
    %p220 = scmp.ne.s32.totalorder %s205, %s219
    %p221 = scmp.eq.s32.totalorder %s22, 0
    %p222 = por %p220, %p221
    %s224 = sadd.s32 %s223, 1
    %p227 = scmp.eq.s32.totalorder %s16, 1
    %p228 = scmp.ne.s32.totalorder %s223, %s225
    %p229 = scmp.eq.s32.totalorder %s16, 0
    %p230 = por %p228, %p229
    %p231 = scmp.ne.s32.totalorder %s223, %s225
    %p232 = scmp.eq.s32.totalorder %s21, 1
    %p233 = por %p231, %p232
    %p234 = scmp.ne.s32.totalorder %s225, %s226
    %p235 = scmp.eq.s32.totalorder %s21, 0
    %p236 = por %p234, %p235
    %p237 = scmp.ne.s32.totalorder %s225, %s226
    %p238 = scmp.eq.s32.totalorder %s22, 1
    %p239 = por %p237, %p238
    %p241 = scmp.ne.s32.totalorder %s226, %s240
    %p242 = scmp.eq.s32.totalorder %s22, 0
    %p243 = por %p241, %p242
    %s244 = ssub.s32 %s16, %s23
    %p245 = scmp.eq.s32.totalorder %s244, 0
    %s247 = sadd.s32 %s246, 1
    %s248 = scalar_select %p245, %s246, %s247
    %p251 = pneg %p245
    %p252 = scmp.eq.s32.totalorder %s16, 1
    %p253 = por %p251, %p252
    %p254 = scmp.ne.s32.totalorder %s246, %s249
    %p255 = scmp.eq.s32.totalorder %s16, 0
    %p256 = por %p254, %p255
    %p257 = scmp.ne.s32.totalorder %s246, %s249
    %p258 = scmp.eq.s32.totalorder %s21, 1
    %p259 = por %p257, %p258
    %p260 = scmp.ne.s32.totalorder %s249, %s250
    %p261 = scmp.eq.s32.totalorder %s21, 0
    %p262 = por %p260, %p261
    %p263 = scmp.ne.s32.totalorder %s249, %s250
    %p264 = scmp.eq.s32.totalorder %s22, 1
    %p265 = por %p263, %p264
    %p267 = scmp.ne.s32.totalorder %s250, %s266
    %p268 = scmp.eq.s32.totalorder %s22, 0
    %p269 = por %p267, %p268
    %p270 = scmp.le.s32.totalorder 1, %s16
    %p271 = scmp.lt.s32.totalorder %s16, 3
    %p272 = pnand %p270, %p271
    %p273 = pneg %p272
    // Predicated region
    $region9: #{acmf_forward.2} parent=5 // pred_check
      _
    $region10: #{acmf_forward.2} parent=5 // pred_check_branch
      %275 = sbr.rel (%p272) target = $region12
    $region11: #{acmf_forward.2} parent=5 // pred_region
      %s276 = ssub.s32 %s16, 1
      // Predicated region
      $region13: #{acmf_forward.2} parent=11 // pred_check
        %p277 = pneg %p89
      $region14: #{acmf_forward.2} parent=11 // pred_check_branch
        %279 = sbr.rel (%p277) target = $region16
      $region15: #{acmf_forward.2} parent=11 // pred_region
        _
      $region16: #{acmf_forward.2} parent=11 // pred_fallthru
        _
      // Predicated region
      $region17: #{acmf_forward.2} parent=11 // pred_check
        %p280 = pneg %p110
      $region18: #{acmf_forward.2} parent=11 // pred_check_branch
        %282 = sbr.rel (%p280) target = $region20
      $region19: #{acmf_forward.2} parent=11 // pred_region
        _
      $region20: #{acmf_forward.2} parent=11 // pred_fallthru
        _
      // Predicated region
      $region21: #{acmf_forward.2} parent=11 // pred_check
        %p283 = pneg %p131
      $region22: #{acmf_forward.2} parent=11 // pred_check_branch
        %285 = sbr.rel (%p283) target = $region24
      $region23: #{acmf_forward.2} parent=11 // pred_region
        _
      $region24: #{acmf_forward.2} parent=11 // pred_fallthru
        _
      // Predicated region
      $region25: #{acmf_forward.2} parent=11 // pred_check
        %p286 = pneg %p152
      $region26: #{acmf_forward.2} parent=11 // pred_check_branch
        %288 = sbr.rel (%p286) target = $region28
      $region27: #{acmf_forward.2} parent=11 // pred_region
        _
      $region28: #{acmf_forward.2} parent=11 // pred_fallthru
        _
      // Predicated region
      $region29: #{acmf_forward.2} parent=11 // pred_check
        %p289 = pneg %p173
      $region30: #{acmf_forward.2} parent=11 // pred_check_branch
        %291 = sbr.rel (%p289) target = $region32
      $region31: #{acmf_forward.2} parent=11 // pred_region
        _
      $region32: #{acmf_forward.2} parent=11 // pred_fallthru
        _
      // Predicated region
      $region33: #{acmf_forward.2} parent=11 // pred_check
        %p292 = pneg %p194
      $region34: #{acmf_forward.2} parent=11 // pred_check_branch
        %294 = sbr.rel (%p292) target = $region36
      $region35: #{acmf_forward.2} parent=11 // pred_region
        _
      $region36: #{acmf_forward.2} parent=11 // pred_fallthru
        _
      // Predicated region
      $region37: #{acmf_forward.2} parent=11 // pred_check
        %p295 = pneg %p215
      $region38: #{acmf_forward.2} parent=11 // pred_check_branch
        %297 = sbr.rel (%p295) target = $region40
      $region39: #{acmf_forward.2} parent=11 // pred_region
        _
      $region40: #{acmf_forward.2} parent=11 // pred_fallthru
        _
      // Predicated region
      $region41: #{acmf_forward.2} parent=11 // pred_check
        %p298 = pneg %p236
      $region42: #{acmf_forward.2} parent=11 // pred_check_branch
        %300 = sbr.rel (%p298) target = $region44
      $region43: #{acmf_forward.2} parent=11 // pred_region
        _
      $region44: #{acmf_forward.2} parent=11 // pred_fallthru
        _
    $region12: #{acmf_forward.2} parent=5 // pred_fallthru
      _
    %p301 = scmp.lt.s32.totalorder %s16, 2
    // Predicated region
    $region45: #{acmf_forward.2} parent=5 // pred_check
      %p302 = pneg %p301
    $region46: #{acmf_forward.2} parent=5 // pred_check_branch
      %304 = sbr.rel (%p302) target = $region48
    $region47: #{acmf_forward.2} parent=5 // pred_region
      // Predicated region
      $region49: #{acmf_forward.2} parent=47 // pred_check
        %p305 = pneg %p36
      $region50: #{acmf_forward.2} parent=47 // pred_check_branch
        %307 = sbr.rel (%p305) target = $region52
      $region51: #{acmf_forward.2} parent=47 // pred_region
        %p308 = scmp.lt.s32.totalorder %s16, 1
        %s309 = scalar_select %p308, %s16, 1
        %s310 = smul.addr %s309, 4
        %s311 = smul.addr %s310, 8
        %s312 = scalar_lea.vmem %s0, %s311
      $region52: #{acmf_forward.2} parent=47 // pred_fallthru
        _
      // Predicated region
      $region53: #{acmf_forward.2} parent=47 // pred_check
        %p313 = pneg %p62
      $region54: #{acmf_forward.2} parent=47 // pred_check_branch
        %315 = sbr.rel (%p313) target = $region56
      $region55: #{acmf_forward.2} parent=47 // pred_region
        %p316 = scmp.lt.s32.totalorder %s16, 1
        %s317 = scalar_select %p316, %s16, 1
        %s318 = smul.addr %s317, 32
        %s319 = smul.addr %s318, 8
        %s320 = scalar_lea.vmem %s1, %s319
      $region56: #{acmf_forward.2} parent=47 // pred_fallthru
        _
    $region48: #{acmf_forward.2} parent=5 // pred_fallthru
      _
    %p321 = scmp.le.s32.totalorder 1, %s16
    %p322 = scmp.lt.s32.totalorder %s16, 3
    %p323 = pnand %p321, %p322
    %p324 = pneg %p323
    // Predicated region
    $region57: #{acmf_forward.2} parent=5 // pred_check
      _
    $region58: #{acmf_forward.2} parent=5 // pred_check_branch
      %326 = sbr.rel (%p323) target = $region60
    $region59: #{acmf_forward.2} parent=5 // pred_region
      %s327 = ssub.s32 %s16, 1
      %p328 = scmp.lt.s32.totalorder %s21, 1
      %s329 = scalar_select %p328, %s21, 1
      %s330 = smul.addr %s329, 4
      %s331 = smul.addr %s330, 8
      %s332 = scalar_lea.vmem %s0, %s331
      %p333 = pneg %p42
      %p334 = pneg %p39
      %p335 = scmp.lt.s32.totalorder %s21, 1
      %s336 = scalar_select %p335, %s21, 1
      %s337 = smul.addr %s336, 32
      %s338 = smul.addr %s337, 8
      %s339 = scalar_lea.vmem %s1, %s338
      %p340 = pneg %p68
      %p341 = pneg %p65
      %p342 = pneg %p89
      %p343 = pneg %p86
      %p344 = pneg %p110
      %p345 = pneg %p107
      %p346 = pneg %p131
      %p347 = pneg %p128
      %p348 = pneg %p152
      %p349 = pneg %p149
      %p350 = pneg %p173
      %p351 = pneg %p170
      %p352 = pneg %p194
      %p353 = pneg %p191
      %p354 = pneg %p215
      %p355 = pneg %p212
      %p356 = pneg %p236
      %p357 = pneg %p233
      %p358 = pneg %p262
      %p359 = pneg %p259
      %p360 = scmp.lt.s32.totalorder %s21, 1
      %s361 = scalar_select %p360, %s21, 1
      %s362 = smul.addr %s361, 4
      %s363 = smul.addr %s362, 8
      %s364 = scalar_lea.vmem %s10, %s363
      %p365 = scmp.lt.s32.totalorder %s21, 1
      %s366 = scalar_select %p365, %s21, 1
      %s367 = smul.addr %s366, 4
      %s368 = smul.addr %s367, 8
      %s369 = scalar_lea.vmem %s0, %s368
      %p370 = scmp.lt.s32.totalorder %s21, 1
      %s371 = scalar_select %p370, %s21, 1
      %s372 = smul.addr %s371, 32
      %s373 = smul.addr %s372, 8
      %s374 = scalar_lea.vmem %s1, %s373
      %p375 = scmp.lt.s32.totalorder %s21, 1
      %s376 = scalar_select %p375, %s21, 1
      %s377 = smul.addr %s376, 4
      %s378 = smul.addr %s377, 8
      %s379 = scalar_lea.vmem %s10, %s378
      %v380 = vld [vmem:[%s369] sm:$0xff]
      %v381 = vld [vmem:[%s369 + $0x8] sm:$0xff]
      %v382 = vld [vmem:[%s369 + $0x10] sm:$0xff]
      %v383 = vld [vmem:[%s369 + $0x18] sm:$0xff]
      %v384 = vld [vmem:[%s374] sm:$0xff]
      %v385 = vld [vmem:[%s374 + $0x8] sm:$0xff]
      %v386 = vld [vmem:[%s374 + $0x10] sm:$0xff]
      %v387 = vld [vmem:[%s374 + $0x18] sm:$0xff]
      %v388 = vld [vmem:[%s374 + $0x20] sm:$0xff]
      %v389 = vld [vmem:[%s374 + $0x28] sm:$0xff]
      %v390 = vld [vmem:[%s374 + $0x30] sm:$0xff]
      %v391 = vld [vmem:[%s374 + $0x38] sm:$0xff]
      %v392 = vld [vmem:[%s374 + $0x40] sm:$0xff]
      %v393 = vld [vmem:[%s374 + $0x48] sm:$0xff]
      %v394 = vld [vmem:[%s374 + $0x50] sm:$0xff]
      %v395 = vld [vmem:[%s374 + $0x58] sm:$0xff]
      %v396 = vld [vmem:[%s374 + $0x60] sm:$0xff]
      %v397 = vld [vmem:[%s374 + $0x68] sm:$0xff]
      %v398 = vld [vmem:[%s374 + $0x70] sm:$0xff]
      %v399 = vld [vmem:[%s374 + $0x78] sm:$0xff]
      %v400 = vld [vmem:[%s374 + $0x80] sm:$0xff]
      %v401 = vld [vmem:[%s374 + $0x88] sm:$0xff]
      %v402 = vld [vmem:[%s374 + $0x90] sm:$0xff]
      %v403 = vld [vmem:[%s374 + $0x98] sm:$0xff]
      %v404 = vld [vmem:[%s374 + $0xa0] sm:$0xff]
      %v405 = vld [vmem:[%s374 + $0xa8] sm:$0xff]
      %v406 = vld [vmem:[%s374 + $0xb0] sm:$0xff]
      %v407 = vld [vmem:[%s374 + $0xb8] sm:$0xff]
      %v408 = vld [vmem:[%s374 + $0xc0] sm:$0xff]
      %v409 = vld [vmem:[%s374 + $0xc8] sm:$0xff]
      %v410 = vld [vmem:[%s374 + $0xd0] sm:$0xff]
      %v411 = vld [vmem:[%s374 + $0xd8] sm:$0xff]
      %v412 = vld [vmem:[%s374 + $0xe0] sm:$0xff]
      %v413 = vld [vmem:[%s374 + $0xe8] sm:$0xff]
      %v414 = vld [vmem:[%s374 + $0xf0] sm:$0xff]
      %v415 = vld [vmem:[%s374 + $0xf8] sm:$0xff]
      %v416 = vadd.f32 %v380, %v382
      %v417 = vrot.slane %v416, 4
      %v418 = vadd.f32 %v416, %v417
      %v419 = vrot.slane %v418, 2
      %v420 = vadd.f32 %v418, %v419
      %v421 = vrot.slane %v420, 1
      %v422 = vadd.f32 %v420, %v421
      %v423 = vadd.f32 %v381, %v383
      %v424 = vrot.slane %v423, 4
      %v425 = vadd.f32 %v423, %v424
      %v426 = vrot.slane %v425, 2
      %v427 = vadd.f32 %v425, %v426
      %v428 = vrot.slane %v427, 1
      %v429 = vadd.f32 %v427, %v428
      %v430 = vsub.f32 %v422, %v382
      %v431 = vsub.f32 %v429, %v383
      %v434 = vrot.slane %v382, 1
      %v435 = vrot.slane %v383, 1
      %v438 = vsub.f32 %v430, %v434
      %v439 = vsub.f32 %v431, %v435
      %v440 = vsub.f32 %v422, %v380
      %v441 = vsub.f32 %v429, %v381
      %v442 = vrot.slane %v382, 7
      %v443 = vrot.slane %v383, 7
      %v446 = vsub.f32 %v440, %v442
      %v447 = vsub.f32 %v441, %v443
      %v450 = vrot.slane %v380, 1
      %v451 = vrot.slane %v381, 1
      %v454 = vsub.f32 %v440, %v450
      %v455 = vsub.f32 %v441, %v451
      %v456 = vld [vmem:[%s2] sm:$0xff]
      %v457 = vld [vmem:[%s2 + $0x8] sm:$0xff]
      %v458 = vld [vmem:[%s2 + $0x10] sm:$0xff]
      %v459 = vld [vmem:[%s2 + $0x18] sm:$0xff]
      %v460 = vld [vmem:[%s2 + $0x20] sm:$0xff]
      %v461 = vld [vmem:[%s2 + $0x28] sm:$0xff]
      %v462 = vld [vmem:[%s2 + $0x30] sm:$0xff]
      %v463 = vld [vmem:[%s2 + $0x38] sm:$0xff]
      %v464 = vld [vmem:[%s2 + $0x40] sm:$0xff]
      %v465 = vld [vmem:[%s2 + $0x48] sm:$0xff]
      %v466 = vld [vmem:[%s2 + $0x50] sm:$0xff]
      %v467 = vld [vmem:[%s2 + $0x58] sm:$0xff]
      %v468 = vld [vmem:[%s2 + $0x60] sm:$0xff]
      %v469 = vld [vmem:[%s2 + $0x68] sm:$0xff]
      %v470 = vld [vmem:[%s2 + $0x70] sm:$0xff]
      %v471 = vld [vmem:[%s2 + $0x78] sm:$0xff]
      %v472 = vld [vmem:[%s2 + $0x80] sm:$0xff]
      %v473 = vld [vmem:[%s2 + $0x88] sm:$0xff]
      %v474 = vld [vmem:[%s2 + $0x90] sm:$0xff]
      %v475 = vld [vmem:[%s2 + $0x98] sm:$0xff]
      %v476 = vld [vmem:[%s2 + $0xa0] sm:$0xff]
      %v477 = vld [vmem:[%s2 + $0xa8] sm:$0xff]
      %v478 = vld [vmem:[%s2 + $0xb0] sm:$0xff]
      %v479 = vld [vmem:[%s2 + $0xb8] sm:$0xff]
      %v480 = vld [vmem:[%s2 + $0xc0] sm:$0xff]
      %v481 = vld [vmem:[%s2 + $0xc8] sm:$0xff]
      %v482 = vld [vmem:[%s2 + $0xd0] sm:$0xff]
      %v483 = vld [vmem:[%s2 + $0xd8] sm:$0xff]
      %v484 = vld [vmem:[%s2 + $0xe0] sm:$0xff]
      %v485 = vld [vmem:[%s2 + $0xe8] sm:$0xff]
      %v486 = vld [vmem:[%s2 + $0xf0] sm:$0xff]
      %v487 = vld [vmem:[%s2 + $0xf8] sm:$0xff]
      %s488 = scalar_lea.vmem %s2, 256
      %v489 = vld [vmem:[%s488] sm:$0xff]
      %v490 = vld [vmem:[%s488 + $0x8] sm:$0xff]
      %v491 = vld [vmem:[%s488 + $0x10] sm:$0xff]
      %v492 = vld [vmem:[%s488 + $0x18] sm:$0xff]
      %v493 = vld [vmem:[%s488 + $0x20] sm:$0xff]
      %v494 = vld [vmem:[%s488 + $0x28] sm:$0xff]
      %v495 = vld [vmem:[%s488 + $0x30] sm:$0xff]
      %v496 = vld [vmem:[%s488 + $0x38] sm:$0xff]
      %v497 = vld [vmem:[%s488 + $0x40] sm:$0xff]
      %v498 = vld [vmem:[%s488 + $0x48] sm:$0xff]
      %v499 = vld [vmem:[%s488 + $0x50] sm:$0xff]
      %v500 = vld [vmem:[%s488 + $0x58] sm:$0xff]
      %v501 = vld [vmem:[%s488 + $0x60] sm:$0xff]
      %v502 = vld [vmem:[%s488 + $0x68] sm:$0xff]
      %v503 = vld [vmem:[%s488 + $0x70] sm:$0xff]
      %v504 = vld [vmem:[%s488 + $0x78] sm:$0xff]
      %v505 = vld [vmem:[%s488 + $0x80] sm:$0xff]
      %v506 = vld [vmem:[%s488 + $0x88] sm:$0xff]
      %v507 = vld [vmem:[%s488 + $0x90] sm:$0xff]
      %v508 = vld [vmem:[%s488 + $0x98] sm:$0xff]
      %v509 = vld [vmem:[%s488 + $0xa0] sm:$0xff]
      %v510 = vld [vmem:[%s488 + $0xa8] sm:$0xff]
      %v511 = vld [vmem:[%s488 + $0xb0] sm:$0xff]
      %v512 = vld [vmem:[%s488 + $0xb8] sm:$0xff]
      %v513 = vld [vmem:[%s488 + $0xc0] sm:$0xff]
      %v514 = vld [vmem:[%s488 + $0xc8] sm:$0xff]
      %v515 = vld [vmem:[%s488 + $0xd0] sm:$0xff]
      %v516 = vld [vmem:[%s488 + $0xd8] sm:$0xff]
      %v517 = vld [vmem:[%s488 + $0xe0] sm:$0xff]
      %v518 = vld [vmem:[%s488 + $0xe8] sm:$0xff]
      %v519 = vld [vmem:[%s488 + $0xf0] sm:$0xff]
      %v520 = vld [vmem:[%s488 + $0xf8] sm:$0xff]
      %521 = vmatprep.subr.mxu0 0.0
      %522 = vmatpush1.msra.mxu0 %v504
      %523 = vmatprep.subr.mxu0 0.0
      %524 = vmatpush1.msra.mxu0 %v503
      %525 = vmatprep.subr.mxu0 0.0
      %526 = vmatpush1.msra.mxu0 %v502
      %527 = vmatprep.subr.mxu0 0.0
      %528 = vmatpush1.msra.mxu0 %v501
      %529 = vmatprep.subr.mxu0 0.0
      %530 = vmatpush1.msra.mxu0 %v500
      %531 = vmatprep.subr.mxu0 0.0
      %532 = vmatpush1.msra.mxu0 %v499
      %533 = vmatprep.subr.mxu0 0.0
      %534 = vmatpush1.msra.mxu0 %v498
      %535 = vmatprep.subr.mxu0 0.0
      %536 = vmatpush1.msra.mxu0 %v497
      %537 = vmatprep.subr.mxu0 0.0
      %538 = vmatpush1.msra.mxu0 %v496
      %539 = vmatprep.subr.mxu0 0.0
      %540 = vmatpush1.msra.mxu0 %v495
      %541 = vmatprep.subr.mxu0 0.0
      %542 = vmatpush1.msra.mxu0 %v494
      %543 = vmatprep.subr.mxu0 0.0
      %544 = vmatpush1.msra.mxu0 %v493
      %545 = vmatprep.subr.mxu0 0.0
      %546 = vmatpush1.msra.mxu0 %v492
      %547 = vmatprep.subr.mxu0 0.0
      %548 = vmatpush1.msra.mxu0 %v491
      %549 = vmatprep.subr.mxu0 0.0
      %550 = vmatpush1.msra.mxu0 %v490
      %551 = vmatprep.subr.mxu0 0.0
      %552 = vmatpush1.msra.mxu0 %v489
      %553 = vmatprep.subr.mxu0 0.0
      %554 = vmatpush2.msra.mxu0 %v520
      %555 = vmatprep.subr.mxu0 0.0
      %556 = vmatpush2.msra.mxu0 %v519
      %557 = vmatprep.subr.mxu0 0.0
      %558 = vmatpush2.msra.mxu0 %v518
      %559 = vmatprep.subr.mxu0 0.0
      %560 = vmatpush2.msra.mxu0 %v517
      %561 = vmatprep.subr.mxu0 0.0
      %562 = vmatpush2.msra.mxu0 %v516
      %563 = vmatprep.subr.mxu0 0.0
      %564 = vmatpush2.msra.mxu0 %v515
      %565 = vmatprep.subr.mxu0 0.0
      %566 = vmatpush2.msra.mxu0 %v514
      %567 = vmatprep.subr.mxu0 0.0
      %568 = vmatpush2.msra.mxu0 %v513
      %569 = vmatprep.subr.mxu0 0.0
      %570 = vmatpush2.msra.mxu0 %v512
      %571 = vmatprep.subr.mxu0 0.0
      %572 = vmatpush2.msra.mxu0 %v511
      %573 = vmatprep.subr.mxu0 0.0
      %574 = vmatpush2.msra.mxu0 %v510
      %575 = vmatprep.subr.mxu0 0.0
      %576 = vmatpush2.msra.mxu0 %v509
      %577 = vmatprep.subr.mxu0 0.0
      %578 = vmatpush2.msra.mxu0 %v508
      %579 = vmatprep.subr.mxu0 0.0
      %580 = vmatpush2.msra.mxu0 %v507
      %581 = vmatprep.subr.mxu0 0.0
      %582 = vmatpush2.msra.mxu0 %v506
      %583 = vmatprep.subr.mxu0 0.0
      %584 = vmatpush2.msra.mxu0 %v505
      %585 = vmatprep.mubr.f32.mxu0 %v447
      %586 = vmatmul.mubr.f32.gmra.mxu0 %v446
      %v587 = vpop.f32.mrf.mxu0
      %v588 = vadd.f32 0.0, %v587
      %v589 = vpop.f32.mrf.mxu0
      %590 = vdwg.mxu0
      %v593 = vrot.slane %v438, 6
      %v594 = vrot.slane %v439, 6
      %597 = vmatprep.subr.mxu0 0.0
      %598 = vmatpush1.msra.mxu0 %v471
      %599 = vmatprep.subr.mxu0 0.0
      %600 = vmatpush1.msra.mxu0 %v470
      %601 = vmatprep.subr.mxu0 0.0
      %602 = vmatpush1.msra.mxu0 %v469
      %603 = vmatprep.subr.mxu0 0.0
      %604 = vmatpush1.msra.mxu0 %v468
      %605 = vmatprep.subr.mxu0 0.0
      %606 = vmatpush1.msra.mxu0 %v467
      %607 = vmatprep.subr.mxu0 0.0
      %608 = vmatpush1.msra.mxu0 %v466
      %609 = vmatprep.subr.mxu0 0.0
      %610 = vmatpush1.msra.mxu0 %v465
      %611 = vmatprep.subr.mxu0 0.0
      %612 = vmatpush1.msra.mxu0 %v464
      %613 = vmatprep.subr.mxu0 0.0
      %614 = vmatpush1.msra.mxu0 %v463
      %615 = vmatprep.subr.mxu0 0.0
      %616 = vmatpush1.msra.mxu0 %v462
      %617 = vmatprep.subr.mxu0 0.0
      %618 = vmatpush1.msra.mxu0 %v461
      %619 = vmatprep.subr.mxu0 0.0
      %620 = vmatpush1.msra.mxu0 %v460
      %621 = vmatprep.subr.mxu0 0.0
      %622 = vmatpush1.msra.mxu0 %v459
      %623 = vmatprep.subr.mxu0 0.0
      %624 = vmatpush1.msra.mxu0 %v458
      %625 = vmatprep.subr.mxu0 0.0
      %626 = vmatpush1.msra.mxu0 %v457
      %627 = vmatprep.subr.mxu0 0.0
      %628 = vmatpush1.msra.mxu0 %v456
      %629 = vmatprep.subr.mxu0 0.0
      %630 = vmatpush2.msra.mxu0 %v487
      %631 = vmatprep.subr.mxu0 0.0
      %632 = vmatpush2.msra.mxu0 %v486
      %633 = vmatprep.subr.mxu0 0.0
      %634 = vmatpush2.msra.mxu0 %v485
      %635 = vmatprep.subr.mxu0 0.0
      %636 = vmatpush2.msra.mxu0 %v484
      %637 = vmatprep.subr.mxu0 0.0
      %638 = vmatpush2.msra.mxu0 %v483
      %639 = vmatprep.subr.mxu0 0.0
      %640 = vmatpush2.msra.mxu0 %v482
      %641 = vmatprep.subr.mxu0 0.0
      %642 = vmatpush2.msra.mxu0 %v481
      %643 = vmatprep.subr.mxu0 0.0
      %644 = vmatpush2.msra.mxu0 %v480
      %645 = vmatprep.subr.mxu0 0.0
      %646 = vmatpush2.msra.mxu0 %v479
      %647 = vmatprep.subr.mxu0 0.0
      %648 = vmatpush2.msra.mxu0 %v478
      %649 = vmatprep.subr.mxu0 0.0
      %650 = vmatpush2.msra.mxu0 %v477
      %651 = vmatprep.subr.mxu0 0.0
      %652 = vmatpush2.msra.mxu0 %v476
      %653 = vmatprep.subr.mxu0 0.0
      %654 = vmatpush2.msra.mxu0 %v475
      %655 = vmatprep.subr.mxu0 0.0
      %656 = vmatpush2.msra.mxu0 %v474
      %657 = vmatprep.subr.mxu0 0.0
      %658 = vmatpush2.msra.mxu0 %v473
      %659 = vmatprep.subr.mxu0 0.0
      %660 = vmatpush2.msra.mxu0 %v472
      %661 = vmatprep.mubr.f32.mxu0 %v594
      %662 = vmatmul.mubr.f32.gmra.mxu0 %v593
      %v663 = vpop.f32.mrf.mxu0
      %v664 = vadd.f32 %v588, %v663
      %v665 = vpop.f32.mrf.mxu0
      %666 = vdwg.mxu0
      %s667 = scalar_lea.vmem %s2, 512
      %v668 = vld [vmem:[%s667] sm:$0xff]
      %v669 = vld [vmem:[%s667 + $0x8] sm:$0xff]
      %v670 = vld [vmem:[%s667 + $0x10] sm:$0xff]
      %v671 = vld [vmem:[%s667 + $0x18] sm:$0xff]
      %v672 = vld [vmem:[%s667 + $0x20] sm:$0xff]
      %v673 = vld [vmem:[%s667 + $0x28] sm:$0xff]
      %v674 = vld [vmem:[%s667 + $0x30] sm:$0xff]
      %v675 = vld [vmem:[%s667 + $0x38] sm:$0xff]
      %v676 = vld [vmem:[%s667 + $0x40] sm:$0xff]
      %v677 = vld [vmem:[%s667 + $0x48] sm:$0xff]
      %v678 = vld [vmem:[%s667 + $0x50] sm:$0xff]
      %v679 = vld [vmem:[%s667 + $0x58] sm:$0xff]
      %v680 = vld [vmem:[%s667 + $0x60] sm:$0xff]
      %v681 = vld [vmem:[%s667 + $0x68] sm:$0xff]
      %v682 = vld [vmem:[%s667 + $0x70] sm:$0xff]
      %v683 = vld [vmem:[%s667 + $0x78] sm:$0xff]
      %v684 = vld [vmem:[%s667 + $0x80] sm:$0xff]
      %v685 = vld [vmem:[%s667 + $0x88] sm:$0xff]
      %v686 = vld [vmem:[%s667 + $0x90] sm:$0xff]
      %v687 = vld [vmem:[%s667 + $0x98] sm:$0xff]
      %v688 = vld [vmem:[%s667 + $0xa0] sm:$0xff]
      %v689 = vld [vmem:[%s667 + $0xa8] sm:$0xff]
      %v690 = vld [vmem:[%s667 + $0xb0] sm:$0xff]
      %v691 = vld [vmem:[%s667 + $0xb8] sm:$0xff]
      %v692 = vld [vmem:[%s667 + $0xc0] sm:$0xff]
      %v693 = vld [vmem:[%s667 + $0xc8] sm:$0xff]
      %v694 = vld [vmem:[%s667 + $0xd0] sm:$0xff]
      %v695 = vld [vmem:[%s667 + $0xd8] sm:$0xff]
      %v696 = vld [vmem:[%s667 + $0xe0] sm:$0xff]
      %v697 = vld [vmem:[%s667 + $0xe8] sm:$0xff]
      %v698 = vld [vmem:[%s667 + $0xf0] sm:$0xff]
      %v699 = vld [vmem:[%s667 + $0xf8] sm:$0xff]
      %700 = vmatprep.subr.mxu0 0.0
      %701 = vmatpush1.msra.mxu0 %v683
      %702 = vmatprep.subr.mxu0 0.0
      %703 = vmatpush1.msra.mxu0 %v682
      %704 = vmatprep.subr.mxu0 0.0
      %705 = vmatpush1.msra.mxu0 %v681
      %706 = vmatprep.subr.mxu0 0.0
      %707 = vmatpush1.msra.mxu0 %v680
      %708 = vmatprep.subr.mxu0 0.0
      %709 = vmatpush1.msra.mxu0 %v679
      %710 = vmatprep.subr.mxu0 0.0
      %711 = vmatpush1.msra.mxu0 %v678
      %712 = vmatprep.subr.mxu0 0.0
      %713 = vmatpush1.msra.mxu0 %v677
      %714 = vmatprep.subr.mxu0 0.0
      %715 = vmatpush1.msra.mxu0 %v676
      %716 = vmatprep.subr.mxu0 0.0
      %717 = vmatpush1.msra.mxu0 %v675
      %718 = vmatprep.subr.mxu0 0.0
      %719 = vmatpush1.msra.mxu0 %v674
      %720 = vmatprep.subr.mxu0 0.0
      %721 = vmatpush1.msra.mxu0 %v673
      %722 = vmatprep.subr.mxu0 0.0
      %723 = vmatpush1.msra.mxu0 %v672
      %724 = vmatprep.subr.mxu0 0.0
      %725 = vmatpush1.msra.mxu0 %v671
      %726 = vmatprep.subr.mxu0 0.0
      %727 = vmatpush1.msra.mxu0 %v670
      %728 = vmatprep.subr.mxu0 0.0
      %729 = vmatpush1.msra.mxu0 %v669
      %730 = vmatprep.subr.mxu0 0.0
      %731 = vmatpush1.msra.mxu0 %v668
      %732 = vmatprep.subr.mxu0 0.0
      %733 = vmatpush2.msra.mxu0 %v699
      %734 = vmatprep.subr.mxu0 0.0
      %735 = vmatpush2.msra.mxu0 %v698
      %736 = vmatprep.subr.mxu0 0.0
      %737 = vmatpush2.msra.mxu0 %v697
      %738 = vmatprep.subr.mxu0 0.0
      %739 = vmatpush2.msra.mxu0 %v696
      %740 = vmatprep.subr.mxu0 0.0
      %741 = vmatpush2.msra.mxu0 %v695
      %742 = vmatprep.subr.mxu0 0.0
      %743 = vmatpush2.msra.mxu0 %v694
      %744 = vmatprep.subr.mxu0 0.0
      %745 = vmatpush2.msra.mxu0 %v693
      %746 = vmatprep.subr.mxu0 0.0
      %747 = vmatpush2.msra.mxu0 %v692
      %748 = vmatprep.subr.mxu0 0.0
      %749 = vmatpush2.msra.mxu0 %v691
      %750 = vmatprep.subr.mxu0 0.0
      %751 = vmatpush2.msra.mxu0 %v690
      %752 = vmatprep.subr.mxu0 0.0
      %753 = vmatpush2.msra.mxu0 %v689
      %754 = vmatprep.subr.mxu0 0.0
      %755 = vmatpush2.msra.mxu0 %v688
      %756 = vmatprep.subr.mxu0 0.0
      %757 = vmatpush2.msra.mxu0 %v687
      %758 = vmatprep.subr.mxu0 0.0
      %759 = vmatpush2.msra.mxu0 %v686
      %760 = vmatprep.subr.mxu0 0.0
      %761 = vmatpush2.msra.mxu0 %v685
      %762 = vmatprep.subr.mxu0 0.0
      %763 = vmatpush2.msra.mxu0 %v684
      %764 = vmatprep.mubr.f32.mxu0 %v455
      %765 = vmatmul.mubr.f32.gmra.mxu0 %v454
      %v766 = vpop.f32.mrf.mxu0
      %v767 = vadd.f32 0.0, %v766
      %v768 = vpop.f32.mrf.mxu0
      %769 = vdwg.mxu0
      %v770 = vadd.f32 %v664, %v767
      %vm771 = vcmask 130048
      %v772 = vsel %vm771, %v384, 0.0
      %v773 = vsel %vm771, %v386, 0.0
      %v774 = vadd.f32 %v772, %v773
      %v775 = vsel %vm771, %v388, 0.0
      %v776 = vadd.f32 %v774, %v775
      %v777 = vsel %vm771, %v390, 0.0
      %v778 = vadd.f32 %v776, %v777
      %v779 = vsel %vm771, %v392, 0.0
      %v780 = vadd.f32 %v778, %v779
      %v781 = vsel %vm771, %v394, 0.0
      %v782 = vadd.f32 %v780, %v781
      %v783 = vsel %vm771, %v396, 0.0
      %v784 = vadd.f32 %v782, %v783
      %v785 = vsel %vm771, %v398, 0.0
      %v786 = vadd.f32 %v784, %v785
      %v787 = vsel %vm771, %v400, 0.0
      %v788 = vadd.f32 %v786, %v787
      %v789 = vsel %vm771, %v402, 0.0
      %v790 = vadd.f32 %v788, %v789
      %v791 = vsel %vm771, %v404, 0.0
      %v792 = vadd.f32 %v790, %v791
      %v793 = vsel %vm771, %v406, 0.0
      %v794 = vadd.f32 %v792, %v793
      %v795 = vsel %vm771, %v408, 0.0
      %v796 = vadd.f32 %v794, %v795
      %v797 = vsel %vm771, %v410, 0.0
      %v798 = vadd.f32 %v796, %v797
      %v799 = vsel %vm771, %v412, 0.0
      %v800 = vadd.f32 %v798, %v799
      %v801 = vsel %vm771, %v414, 0.0
      %v802 = vadd.f32 %v800, %v801
      %v803 = vsel %vm771, %v385, 0.0
      %v804 = vsel %vm771, %v387, 0.0
      %v805 = vadd.f32 %v803, %v804
      %v806 = vsel %vm771, %v389, 0.0
      %v807 = vadd.f32 %v805, %v806
      %v808 = vsel %vm771, %v391, 0.0
      %v809 = vadd.f32 %v807, %v808
      %v810 = vsel %vm771, %v393, 0.0
      %v811 = vadd.f32 %v809, %v810
      %v812 = vsel %vm771, %v395, 0.0
      %v813 = vadd.f32 %v811, %v812
      %v814 = vsel %vm771, %v397, 0.0
      %v815 = vadd.f32 %v813, %v814
      %v816 = vsel %vm771, %v399, 0.0
      %v817 = vadd.f32 %v815, %v816
      %v818 = vsel %vm771, %v401, 0.0
      %v819 = vadd.f32 %v817, %v818
      %v820 = vsel %vm771, %v403, 0.0
      %v821 = vadd.f32 %v819, %v820
      %v822 = vsel %vm771, %v405, 0.0
      %v823 = vadd.f32 %v821, %v822
      %v824 = vsel %vm771, %v407, 0.0
      %v825 = vadd.f32 %v823, %v824
      %v826 = vsel %vm771, %v409, 0.0
      %v827 = vadd.f32 %v825, %v826
      %v828 = vsel %vm771, %v411, 0.0
      %v829 = vadd.f32 %v827, %v828
      %v830 = vsel %vm771, %v413, 0.0
      %v831 = vadd.f32 %v829, %v830
      %v832 = vsel %vm771, %v415, 0.0
      %v833 = vadd.f32 %v831, %v832
      %v834 = vsub.f32 %v802, %v412
      %v835 = vsub.f32 %v833, %v413
      %v836 = vsub.f32 %v834, %v414
      %v837 = vsub.f32 %v835, %v415
      %v838 = vsub.f32 %v802, %v384
      %v839 = vsub.f32 %v833, %v385
      %v840 = vsub.f32 %v838, %v414
      %v841 = vsub.f32 %v839, %v415
      %v842 = vsub.f32 %v838, %v386
      %v843 = vsub.f32 %v839, %v387
      %v844 = vsel %vm771, %v836, 0.0
      %v845 = vsel %vm771, %v837, 0.0
      %v846 = vadd.f32 %v844, %v845
      %v847 = vrot.slane %v846, 4
      %v848 = vadd.f32 %v846, %v847
      %v849 = vrot.slane %v848, 2
      %v850 = vadd.f32 %v848, %v849
      %v851 = vrot.slane %v850, 1
      %v852 = vadd.f32 %v850, %v851
      %v853 = vsub.f32 %v852, %v837
      %v855 = vrot.slane %v837, 1
      %v857 = vsub.f32 %v853, %v855
      %v858 = vsub.f32 %v852, %v836
      %v859 = vrot.slane %v837, 7
      %v861 = vsub.f32 %v858, %v859
      %v863 = vrot.slane %v836, 1
      %v865 = vsub.f32 %v858, %v863
      %v866 = vsel %vm771, %v840, 0.0
      %v867 = vsel %vm771, %v841, 0.0
      %v868 = vadd.f32 %v866, %v867
      %v869 = vrot.slane %v868, 4
      %v870 = vadd.f32 %v868, %v869
      %v871 = vrot.slane %v870, 2
      %v872 = vadd.f32 %v870, %v871
      %v873 = vrot.slane %v872, 1
      %v874 = vadd.f32 %v872, %v873
      %v875 = vsub.f32 %v874, %v841
      %v877 = vrot.slane %v841, 1
      %v879 = vsub.f32 %v875, %v877
      %v880 = vsub.f32 %v874, %v840
      %v881 = vrot.slane %v841, 7
      %v883 = vsub.f32 %v880, %v881
      %v885 = vrot.slane %v840, 1
      %v887 = vsub.f32 %v880, %v885
      %v888 = vsel %vm771, %v842, 0.0
      %v889 = vsel %vm771, %v843, 0.0
      %v890 = vadd.f32 %v888, %v889
      %v891 = vrot.slane %v890, 4
      %v892 = vadd.f32 %v890, %v891
      %v893 = vrot.slane %v892, 2
      %v894 = vadd.f32 %v892, %v893
      %v895 = vrot.slane %v894, 1
      %v896 = vadd.f32 %v894, %v895
      %v897 = vsub.f32 %v896, %v843
      %v899 = vrot.slane %v843, 1
      %v901 = vsub.f32 %v897, %v899
      %v902 = vsub.f32 %v896, %v842
      %v903 = vrot.slane %v843, 7
      %v905 = vsub.f32 %v902, %v903
      %v907 = vrot.slane %v842, 1
      %v909 = vsub.f32 %v902, %v907
      %v911 = vrot.slane %v861, 2
      %912 = vrot.lane.b32.xlu0 %v911, 16
      %v913 = vpop.permute.xlu0 %912
      %v916 = vrot.slane %v865, 2
      %917 = vrot.lane.b32.xlu0 %v916, 32
      %v918 = vpop.permute.xlu0 %917
      %921 = vrot.lane.b32.xlu0 %v879, 48
      %v922 = vpop.permute.xlu0 %921
      %v925 = vrot.slane %v883, 2
      %926 = vrot.lane.b32.xlu0 %v925, 64
      %v927 = vpop.permute.xlu0 %926
      %v930 = vrot.slane %v887, 2
      %931 = vrot.lane.b32.xlu0 %v930, 80
      %v932 = vpop.permute.xlu0 %931
      %935 = vrot.lane.b32.xlu0 %v901, 96
      %v936 = vpop.permute.xlu0 %935
      %v939 = vrot.slane %v905, 2
      %940 = vrot.lane.b32.xlu0 %v939, 112
      %v941 = vpop.permute.xlu0 %940
      %v944 = vrot.slane %v909, 2
      %v945 = vsel %vm771, %v857, %v913
      %vm946 = vcmask 261120
      %v947 = vsel %vm946, %v945, %v918
      %vm948 = vcmask 392192
      %v949 = vsel %vm948, %v947, %v922
      %vm950 = vcmask 523264
      %v951 = vsel %vm950, %v949, %v927
      %vm952 = vcmask 654336
      %v953 = vsel %vm952, %v951, %v932
      %vm954 = vcmask 785408
      %v955 = vsel %vm954, %v953, %v936
      %vm956 = vcmask 916480
      %v957 = vsel %vm956, %v955, %v941
      %v958 = vld [vmem:[%s3] sm:$0xff]
      %v959 = vld [vmem:[%s3 + $0x8] sm:$0xff]
      %v960 = vld [vmem:[%s3 + $0x10] sm:$0xff]
      %v961 = vld [vmem:[%s3 + $0x18] sm:$0xff]
      %v962 = vld [vmem:[%s3 + $0x20] sm:$0xff]
      %v963 = vld [vmem:[%s3 + $0x28] sm:$0xff]
      %v964 = vld [vmem:[%s3 + $0x30] sm:$0xff]
      %v965 = vld [vmem:[%s3 + $0x38] sm:$0xff]
      %v966 = vld [vmem:[%s3 + $0x40] sm:$0xff]
      %v967 = vld [vmem:[%s3 + $0x48] sm:$0xff]
      %v968 = vld [vmem:[%s3 + $0x50] sm:$0xff]
      %v969 = vld [vmem:[%s3 + $0x58] sm:$0xff]
      %v970 = vld [vmem:[%s3 + $0x60] sm:$0xff]
      %v971 = vld [vmem:[%s3 + $0x68] sm:$0xff]
      %v972 = vld [vmem:[%s3 + $0x70] sm:$0xff]
      %v973 = vld [vmem:[%s3 + $0x78] sm:$0xff]
      %v974 = vld [vmem:[%s3 + $0x80] sm:$0xff]
      %v975 = vld [vmem:[%s3 + $0x88] sm:$0xff]
      %v977 = vrot.slane %v957, 6
      %v978 = vrot.slane %v944, 6
      %v980 = vsel %vm771, %v978, 0
      %982 = vmatprep.subr.mxu0 0.0
      %983 = vmatpush1.msra.mxu0 %v973
      %984 = vmatprep.subr.mxu0 0.0
      %985 = vmatpush1.msra.mxu0 %v972
      %986 = vmatprep.subr.mxu0 0.0
      %987 = vmatpush1.msra.mxu0 %v971
      %988 = vmatprep.subr.mxu0 0.0
      %989 = vmatpush1.msra.mxu0 %v970
      %990 = vmatprep.subr.mxu0 0.0
      %991 = vmatpush1.msra.mxu0 %v969
      %992 = vmatprep.subr.mxu0 0.0
      %993 = vmatpush1.msra.mxu0 %v968
      %994 = vmatprep.subr.mxu0 0.0
      %995 = vmatpush1.msra.mxu0 %v967
      %996 = vmatprep.subr.mxu0 0.0
      %997 = vmatpush1.msra.mxu0 %v966
      %998 = vmatprep.subr.mxu0 0.0
      %999 = vmatpush1.msra.mxu0 %v965
      %1000 = vmatprep.subr.mxu0 0.0
      %1001 = vmatpush1.msra.mxu0 %v964
      %1002 = vmatprep.subr.mxu0 0.0
      %1003 = vmatpush1.msra.mxu0 %v963
      %1004 = vmatprep.subr.mxu0 0.0
      %1005 = vmatpush1.msra.mxu0 %v962
      %1006 = vmatprep.subr.mxu0 0.0
      %1007 = vmatpush1.msra.mxu0 %v961
      %1008 = vmatprep.subr.mxu0 0.0
      %1009 = vmatpush1.msra.mxu0 %v960
      %1010 = vmatprep.subr.mxu0 0.0
      %1011 = vmatpush1.msra.mxu0 %v959
      %1012 = vmatprep.subr.mxu0 0.0
      %1013 = vmatpush1.msra.mxu0 %v958
      %1014 = vmatprep.subr.mxu0 0.0
      %1015 = vmatpush2.msra.mxu0 0.0
      %1016 = vmatprep.subr.mxu0 0.0
      %1017 = vmatpush2.msra.mxu0 0.0
      %1018 = vmatprep.subr.mxu0 0.0
      %1019 = vmatpush2.msra.mxu0 0.0
      %1020 = vmatprep.subr.mxu0 0.0
      %1021 = vmatpush2.msra.mxu0 0.0
      %1022 = vmatprep.subr.mxu0 0.0
      %1023 = vmatpush2.msra.mxu0 0.0
      %1024 = vmatprep.subr.mxu0 0.0
      %1025 = vmatpush2.msra.mxu0 0.0
      %1026 = vmatprep.subr.mxu0 0.0
      %1027 = vmatpush2.msra.mxu0 0.0
      %1028 = vmatprep.subr.mxu0 0.0
      %1029 = vmatpush2.msra.mxu0 0.0
      %1030 = vmatprep.subr.mxu0 0.0
      %1031 = vmatpush2.msra.mxu0 0.0
      %1032 = vmatprep.subr.mxu0 0.0
      %1033 = vmatpush2.msra.mxu0 0.0
      %1034 = vmatprep.subr.mxu0 0.0
      %1035 = vmatpush2.msra.mxu0 0.0
      %1036 = vmatprep.subr.mxu0 0.0
      %1037 = vmatpush2.msra.mxu0 0.0
      %1038 = vmatprep.subr.mxu0 0.0
      %1039 = vmatpush2.msra.mxu0 0.0
      %1040 = vmatprep.subr.mxu0 0.0
      %1041 = vmatpush2.msra.mxu0 0.0
      %1042 = vmatprep.subr.mxu0 0.0
      %1043 = vmatpush2.msra.mxu0 %v975
      %1044 = vmatprep.subr.mxu0 0.0
      %1045 = vmatpush2.msra.mxu0 %v974
      %1046 = vmatprep.mubr.f32.mxu0 %v980
      %1047 = vmatmul.mubr.f32.gmra.mxu0 %v977
      %v1048 = vpop.f32.mrf.mxu0
      %v1049 = vadd.f32 0.0, %v1048
      %v1050 = vpop.f32.mrf.mxu0
      %1051 = vdwg.mxu0
      %v1052 = vadd.f32 %v770, %v1049
      %v1053 = vmul.f32 %v1052, 0.0051020407
      %v1054 = vld [vmem:[%s4] sm:$0x1]
      %v1055 = vadd.f32 %v1053, %v1054
      %v1056 = vsel %vm771, %v802, 0.0
      %v1057 = vsel %vm771, %v833, 0.0
      %v1058 = vadd.f32 %v1056, %v1057
      %v1059 = vrot.slane %v1058, 4
      %v1060 = vadd.f32 %v1058, %v1059
      %v1061 = vrot.slane %v1060, 2
      %v1062 = vadd.f32 %v1060, %v1061
      %v1063 = vrot.slane %v1062, 1
      %v1064 = vadd.f32 %v1062, %v1063
      %v1065 = vsel %vm771, %v384, -inf
      %v1066 = vsel %vm771, %v386, -inf
      %v1067 = vsel %vm771, %v388, -inf
      %v1068 = vmax.f32 %v1065, %v1067
      %v1069 = vsel %vm771, %v390, -inf
      %v1070 = vmax.f32 %v1066, %v1069
      %v1071 = vsel %vm771, %v392, -inf
      %v1072 = vmax.f32 %v1068, %v1071
      %v1073 = vsel %vm771, %v394, -inf
      %v1074 = vmax.f32 %v1070, %v1073
      %v1075 = vsel %vm771, %v396, -inf
      %v1076 = vmax.f32 %v1072, %v1075
      %v1077 = vsel %vm771, %v398, -inf
      %v1078 = vmax.f32 %v1074, %v1077
      %v1079 = vsel %vm771, %v400, -inf
      %v1080 = vmax.f32 %v1076, %v1079
      %v1081 = vsel %vm771, %v402, -inf
      %v1082 = vmax.f32 %v1078, %v1081
      %v1083 = vsel %vm771, %v404, -inf
      %v1084 = vmax.f32 %v1080, %v1083
      %v1085 = vsel %vm771, %v406, -inf
      %v1086 = vmax.f32 %v1082, %v1085
      %v1087 = vsel %vm771, %v408, -inf
      %v1088 = vmax.f32 %v1084, %v1087
      %v1089 = vsel %vm771, %v410, -inf
      %v1090 = vmax.f32 %v1086, %v1089
      %v1091 = vsel %vm771, %v412, -inf
      %v1092 = vmax.f32 %v1088, %v1091
      %v1093 = vsel %vm771, %v414, -inf
      %v1094 = vmax.f32 %v1090, %v1093
      %v1095 = vmax.f32 %v1092, %v1094
      %v1096 = vsel %vm771, %v385, -inf
      %v1097 = vsel %vm771, %v387, -inf
      %v1098 = vsel %vm771, %v389, -inf
      %v1099 = vmax.f32 %v1096, %v1098
      %v1100 = vsel %vm771, %v391, -inf
      %v1101 = vmax.f32 %v1097, %v1100
      %v1102 = vsel %vm771, %v393, -inf
      %v1103 = vmax.f32 %v1099, %v1102
      %v1104 = vsel %vm771, %v395, -inf
      %v1105 = vmax.f32 %v1101, %v1104
      %v1106 = vsel %vm771, %v397, -inf
      %v1107 = vmax.f32 %v1103, %v1106
      %v1108 = vsel %vm771, %v399, -inf
      %v1109 = vmax.f32 %v1105, %v1108
      %v1110 = vsel %vm771, %v401, -inf
      %v1111 = vmax.f32 %v1107, %v1110
      %v1112 = vsel %vm771, %v403, -inf
      %v1113 = vmax.f32 %v1109, %v1112
      %v1114 = vsel %vm771, %v405, -inf
      %v1115 = vmax.f32 %v1111, %v1114
      %v1116 = vsel %vm771, %v407, -inf
      %v1117 = vmax.f32 %v1113, %v1116
      %v1118 = vsel %vm771, %v409, -inf
      %v1119 = vmax.f32 %v1115, %v1118
      %v1120 = vsel %vm771, %v411, -inf
      %v1121 = vmax.f32 %v1117, %v1120
      %v1122 = vsel %vm771, %v413, -inf
      %v1123 = vmax.f32 %v1119, %v1122
      %v1124 = vsel %vm771, %v415, -inf
      %v1125 = vmax.f32 %v1121, %v1124
      %v1126 = vmax.f32 %v1123, %v1125
      %v1127 = vsel %vm771, %v1095, -inf
      %v1128 = vsel %vm771, %v1126, -inf
      %v1129 = vmax.f32 %v1127, %v1128
      %v1130 = vrot.slane %v1129, 4
      %v1131 = vmax.f32 %v1129, %v1130
      %v1132 = vrot.slane %v1131, 2
      %v1133 = vmax.f32 %v1131, %v1132
      %v1134 = vrot.slane %v1133, 1
      %v1135 = vmax.f32 %v1133, %v1134
      %v1136 = vsel %vm771, %v384, inf
      %v1137 = vsel %vm771, %v386, inf
      %v1138 = vsel %vm771, %v388, inf
      %v1139 = vmin.f32 %v1136, %v1138
      %v1140 = vsel %vm771, %v390, inf
      %v1141 = vmin.f32 %v1137, %v1140
      %v1142 = vsel %vm771, %v392, inf
      %v1143 = vmin.f32 %v1139, %v1142
      %v1144 = vsel %vm771, %v394, inf
      %v1145 = vmin.f32 %v1141, %v1144
      %v1146 = vsel %vm771, %v396, inf
      %v1147 = vmin.f32 %v1143, %v1146
      %v1148 = vsel %vm771, %v398, inf
      %v1149 = vmin.f32 %v1145, %v1148
      %v1150 = vsel %vm771, %v400, inf
      %v1151 = vmin.f32 %v1147, %v1150
      %v1152 = vsel %vm771, %v402, inf
      %v1153 = vmin.f32 %v1149, %v1152
      %v1154 = vsel %vm771, %v404, inf
      %v1155 = vmin.f32 %v1151, %v1154
      %v1156 = vsel %vm771, %v406, inf
      %v1157 = vmin.f32 %v1153, %v1156
      %v1158 = vsel %vm771, %v408, inf
      %v1159 = vmin.f32 %v1155, %v1158
      %v1160 = vsel %vm771, %v410, inf
      %v1161 = vmin.f32 %v1157, %v1160
      %v1162 = vsel %vm771, %v412, inf
      %v1163 = vmin.f32 %v1159, %v1162
      %v1164 = vsel %vm771, %v414, inf
      %v1165 = vmin.f32 %v1161, %v1164
      %v1166 = vmin.f32 %v1163, %v1165
      %v1167 = vsel %vm771, %v385, inf
      %v1168 = vsel %vm771, %v387, inf
      %v1169 = vsel %vm771, %v389, inf
      %v1170 = vmin.f32 %v1167, %v1169
      %v1171 = vsel %vm771, %v391, inf
      %v1172 = vmin.f32 %v1168, %v1171
      %v1173 = vsel %vm771, %v393, inf
      %v1174 = vmin.f32 %v1170, %v1173
      %v1175 = vsel %vm771, %v395, inf
      %v1176 = vmin.f32 %v1172, %v1175
      %v1177 = vsel %vm771, %v397, inf
      %v1178 = vmin.f32 %v1174, %v1177
      %v1179 = vsel %vm771, %v399, inf
      %v1180 = vmin.f32 %v1176, %v1179
      %v1181 = vsel %vm771, %v401, inf
      %v1182 = vmin.f32 %v1178, %v1181
      %v1183 = vsel %vm771, %v403, inf
      %v1184 = vmin.f32 %v1180, %v1183
      %v1185 = vsel %vm771, %v405, inf
      %v1186 = vmin.f32 %v1182, %v1185
      %v1187 = vsel %vm771, %v407, inf
      %v1188 = vmin.f32 %v1184, %v1187
      %v1189 = vsel %vm771, %v409, inf
      %v1190 = vmin.f32 %v1186, %v1189
      %v1191 = vsel %vm771, %v411, inf
      %v1192 = vmin.f32 %v1188, %v1191
      %v1193 = vsel %vm771, %v413, inf
      %v1194 = vmin.f32 %v1190, %v1193
      %v1195 = vsel %vm771, %v415, inf
      %v1196 = vmin.f32 %v1192, %v1195
      %v1197 = vmin.f32 %v1194, %v1196
      %v1198 = vsel %vm771, %v1166, inf
      %v1199 = vsel %vm771, %v1197, inf
      %v1200 = vmin.f32 %v1198, %v1199
      %v1201 = vrot.slane %v1200, 4
      %v1202 = vmin.f32 %v1200, %v1201
      %v1203 = vrot.slane %v1202, 2
      %v1204 = vmin.f32 %v1202, %v1203
      %v1205 = vrot.slane %v1204, 1
      %v1206 = vmin.f32 %v1204, %v1205
      %v1207 = vmul.f32 %v1064, 0.00390625
      %v1208 = vmul.f32 %v1055, %v1207
      %vm1209 = vcmp.ge.f32.partialorder %v1055, 0.0
      %v1210 = vmul.f32 %v1055, %v1135
      %v1211 = vmul.f32 %v1055, %v1206
      %v1212 = vsel %vm1209, %v1210, %v1211
      %v1213 = vld [vmem:[%s5] sm:$0xff]
      %v1214 = vld [vmem:[%s5 + $0x8] sm:$0xff]
      %v1216 = vsel %vm771, %v1208, 0
      %1218 = vmatprep.subr.mxu0 0.0
      %1219 = vmatpush1.msra.mxu0 0.0
      %1220 = vmatprep.subr.mxu0 0.0
      %1221 = vmatpush1.msra.mxu0 0.0
      %1222 = vmatprep.subr.mxu0 0.0
      %1223 = vmatpush1.msra.mxu0 0.0
      %1224 = vmatprep.subr.mxu0 0.0
      %1225 = vmatpush1.msra.mxu0 0.0
      %1226 = vmatprep.subr.mxu0 0.0
      %1227 = vmatpush1.msra.mxu0 0.0
      %1228 = vmatprep.subr.mxu0 0.0
      %1229 = vmatpush1.msra.mxu0 0.0
      %1230 = vmatprep.subr.mxu0 0.0
      %1231 = vmatpush1.msra.mxu0 0.0
      %1232 = vmatprep.subr.mxu0 0.0
      %1233 = vmatpush1.msra.mxu0 0.0
      %1234 = vmatprep.subr.mxu0 0.0
      %1235 = vmatpush1.msra.mxu0 0.0
      %1236 = vmatprep.subr.mxu0 0.0
      %1237 = vmatpush1.msra.mxu0 0.0
      %1238 = vmatprep.subr.mxu0 0.0
      %1239 = vmatpush1.msra.mxu0 0.0
      %1240 = vmatprep.subr.mxu0 0.0
      %1241 = vmatpush1.msra.mxu0 0.0
      %1242 = vmatprep.subr.mxu0 0.0
      %1243 = vmatpush1.msra.mxu0 0.0
      %1244 = vmatprep.subr.mxu0 0.0
      %1245 = vmatpush1.msra.mxu0 0.0
      %1246 = vmatprep.subr.mxu0 0.0
      %1247 = vmatpush1.msra.mxu0 %v1214
      %1248 = vmatprep.subr.mxu0 0.0
      %1249 = vmatpush1.msra.mxu0 %v1213
      %1250 = vmatprep.subr.mxu0 0.0
      %1251 = vmatpush2.msra.mxu0 0.0
      %1252 = vmatprep.subr.mxu0 0.0
      %1253 = vmatpush2.msra.mxu0 0.0
      %1254 = vmatprep.subr.mxu0 0.0
      %1255 = vmatpush2.msra.mxu0 0.0
      %1256 = vmatprep.subr.mxu0 0.0
      %1257 = vmatpush2.msra.mxu0 0.0
      %1258 = vmatprep.subr.mxu0 0.0
      %1259 = vmatpush2.msra.mxu0 0.0
      %1260 = vmatprep.subr.mxu0 0.0
      %1261 = vmatpush2.msra.mxu0 0.0
      %1262 = vmatprep.subr.mxu0 0.0
      %1263 = vmatpush2.msra.mxu0 0.0
      %1264 = vmatprep.subr.mxu0 0.0
      %1265 = vmatpush2.msra.mxu0 0.0
      %1266 = vmatprep.subr.mxu0 0.0
      %1267 = vmatpush2.msra.mxu0 0.0
      %1268 = vmatprep.subr.mxu0 0.0
      %1269 = vmatpush2.msra.mxu0 0.0
      %1270 = vmatprep.subr.mxu0 0.0
      %1271 = vmatpush2.msra.mxu0 0.0
      %1272 = vmatprep.subr.mxu0 0.0
      %1273 = vmatpush2.msra.mxu0 0.0
      %1274 = vmatprep.subr.mxu0 0.0
      %1275 = vmatpush2.msra.mxu0 0.0
      %1276 = vmatprep.subr.mxu0 0.0
      %1277 = vmatpush2.msra.mxu0 0.0
      %1278 = vmatprep.subr.mxu0 0.0
      %1279 = vmatpush2.msra.mxu0 0.0
      %1280 = vmatprep.subr.mxu0 0.0
      %1281 = vmatpush2.msra.mxu0 0.0
      %1282 = vmatprep.mubr.f32.mxu0 0.0
      %1283 = vmatmul.mubr.f32.gmra.mxu0 %v1216
      %v1284 = vpop.f32.mrf.mxu0
      %v1285 = vadd.f32 0.0, %v1284
      %v1286 = vpop.f32.mrf.mxu0
      %1287 = vdwg.mxu0
      %v1288 = vmax.f32 %v1285, 0.0
      %v1289 = vld [vmem:[%s6] sm:$0xf]
      %v1291 = vsel %vm771, %v1212, 0
      %1293 = vmatprep.subr.mxu0 0.0
      %1294 = vmatpush1.msra.mxu0 0.0
      %1295 = vmatprep.subr.mxu0 0.0
      %1296 = vmatpush1.msra.mxu0 0.0
      %1297 = vmatprep.subr.mxu0 0.0
      %1298 = vmatpush1.msra.mxu0 0.0
      %1299 = vmatprep.subr.mxu0 0.0
      %1300 = vmatpush1.msra.mxu0 0.0
      %1301 = vmatprep.subr.mxu0 0.0
      %1302 = vmatpush1.msra.mxu0 0.0
      %1303 = vmatprep.subr.mxu0 0.0
      %1304 = vmatpush1.msra.mxu0 0.0
      %1305 = vmatprep.subr.mxu0 0.0
      %1306 = vmatpush1.msra.mxu0 0.0
      %1307 = vmatprep.subr.mxu0 0.0
      %1308 = vmatpush1.msra.mxu0 0.0
      %1309 = vmatprep.subr.mxu0 0.0
      %1310 = vmatpush1.msra.mxu0 0.0
      %1311 = vmatprep.subr.mxu0 0.0
      %1312 = vmatpush1.msra.mxu0 0.0
      %1313 = vmatprep.subr.mxu0 0.0
      %1314 = vmatpush1.msra.mxu0 0.0
      %1315 = vmatprep.subr.mxu0 0.0
      %1316 = vmatpush1.msra.mxu0 0.0
      %1317 = vmatprep.subr.mxu0 0.0
      %1318 = vmatpush1.msra.mxu0 0.0
      %1319 = vmatprep.subr.mxu0 0.0
      %1320 = vmatpush1.msra.mxu0 0.0
      %1321 = vmatprep.subr.mxu0 0.0
      %1322 = vmatpush1.msra.mxu0 %v1214
      %1323 = vmatprep.subr.mxu0 0.0
      %1324 = vmatpush1.msra.mxu0 %v1213
      %1325 = vmatprep.subr.mxu0 0.0
      %1326 = vmatpush2.msra.mxu0 0.0
      %1327 = vmatprep.subr.mxu0 0.0
      %1328 = vmatpush2.msra.mxu0 0.0
      %1329 = vmatprep.subr.mxu0 0.0
      %1330 = vmatpush2.msra.mxu0 0.0
      %1331 = vmatprep.subr.mxu0 0.0
      %1332 = vmatpush2.msra.mxu0 0.0
      %1333 = vmatprep.subr.mxu0 0.0
      %1334 = vmatpush2.msra.mxu0 0.0
      %1335 = vmatprep.subr.mxu0 0.0
      %1336 = vmatpush2.msra.mxu0 0.0
      %1337 = vmatprep.subr.mxu0 0.0
      %1338 = vmatpush2.msra.mxu0 0.0
      %1339 = vmatprep.subr.mxu0 0.0
      %1340 = vmatpush2.msra.mxu0 0.0
      %1341 = vmatprep.subr.mxu0 0.0
      %1342 = vmatpush2.msra.mxu0 0.0
      %1343 = vmatprep.subr.mxu0 0.0
      %1344 = vmatpush2.msra.mxu0 0.0
      %1345 = vmatprep.subr.mxu0 0.0
      %1346 = vmatpush2.msra.mxu0 0.0
      %1347 = vmatprep.subr.mxu0 0.0
      %1348 = vmatpush2.msra.mxu0 0.0
      %1349 = vmatprep.subr.mxu0 0.0
      %1350 = vmatpush2.msra.mxu0 0.0
      %1351 = vmatprep.subr.mxu0 0.0
      %1352 = vmatpush2.msra.mxu0 0.0
      %1353 = vmatprep.subr.mxu0 0.0
      %1354 = vmatpush2.msra.mxu0 0.0
      %1355 = vmatprep.subr.mxu0 0.0
      %1356 = vmatpush2.msra.mxu0 0.0
      %1357 = vmatprep.mubr.f32.mxu0 0.0
      %1358 = vmatmul.mubr.f32.gmra.mxu0 %v1291
      %v1359 = vpop.f32.mrf.mxu0
      %v1360 = vadd.f32 0.0, %v1359
      %v1361 = vpop.f32.mrf.mxu0
      %1362 = vdwg.mxu0
      %v1363 = vmax.f32 %v1360, 0.0
      %vm1364 = vcmask 31744
      %v1366 = vsel %vm1364, %v1363, 0
      %vm1368 = vcmask 1043456
      %v1370 = vsel %vm1368, %v1289, 0
      %1372 = vmatprep.subr.mxu0 0.0
      %1373 = vmatpush1.msra.mxu0 0.0
      %1374 = vmatprep.subr.mxu0 0.0
      %1375 = vmatpush1.msra.mxu0 0.0
      %1376 = vmatprep.subr.mxu0 0.0
      %1377 = vmatpush1.msra.mxu0 0.0
      %1378 = vmatprep.subr.mxu0 0.0
      %1379 = vmatpush1.msra.mxu0 0.0
      %1380 = vmatprep.subr.mxu0 0.0
      %1381 = vmatpush1.msra.mxu0 0.0
      %1382 = vmatprep.subr.mxu0 0.0
      %1383 = vmatpush1.msra.mxu0 0.0
      %1384 = vmatprep.subr.mxu0 0.0
      %1385 = vmatpush1.msra.mxu0 0.0
      %1386 = vmatprep.subr.mxu0 0.0
      %1387 = vmatpush1.msra.mxu0 0.0
      %1388 = vmatprep.subr.mxu0 0.0
      %1389 = vmatpush1.msra.mxu0 0.0
      %1390 = vmatprep.subr.mxu0 0.0
      %1391 = vmatpush1.msra.mxu0 0.0
      %1392 = vmatprep.subr.mxu0 0.0
      %1393 = vmatpush1.msra.mxu0 0.0
      %1394 = vmatprep.subr.mxu0 0.0
      %1395 = vmatpush1.msra.mxu0 0.0
      %1396 = vmatprep.subr.mxu0 0.0
      %1397 = vmatpush1.msra.mxu0 0.0
      %1398 = vmatprep.subr.mxu0 0.0
      %1399 = vmatpush1.msra.mxu0 0.0
      %1400 = vmatprep.subr.mxu0 0.0
      %1401 = vmatpush1.msra.mxu0 0.0
      %1402 = vmatprep.subr.mxu0 0.0
      %1403 = vmatpush1.msra.mxu0 %v1370
      %1404 = vmatprep.subr.mxu0 0.0
      %1405 = vmatpush2.msra.mxu0 0.0
      %1406 = vmatprep.subr.mxu0 0.0
      %1407 = vmatpush2.msra.mxu0 0.0
      %1408 = vmatprep.subr.mxu0 0.0
      %1409 = vmatpush2.msra.mxu0 0.0
      %1410 = vmatprep.subr.mxu0 0.0
      %1411 = vmatpush2.msra.mxu0 0.0
      %1412 = vmatprep.subr.mxu0 0.0
      %1413 = vmatpush2.msra.mxu0 0.0
      %1414 = vmatprep.subr.mxu0 0.0
      %1415 = vmatpush2.msra.mxu0 0.0
      %1416 = vmatprep.subr.mxu0 0.0
      %1417 = vmatpush2.msra.mxu0 0.0
      %1418 = vmatprep.subr.mxu0 0.0
      %1419 = vmatpush2.msra.mxu0 0.0
      %1420 = vmatprep.subr.mxu0 0.0
      %1421 = vmatpush2.msra.mxu0 0.0
      %1422 = vmatprep.subr.mxu0 0.0
      %1423 = vmatpush2.msra.mxu0 0.0
      %1424 = vmatprep.subr.mxu0 0.0
      %1425 = vmatpush2.msra.mxu0 0.0
      %1426 = vmatprep.subr.mxu0 0.0
      %1427 = vmatpush2.msra.mxu0 0.0
      %1428 = vmatprep.subr.mxu0 0.0
      %1429 = vmatpush2.msra.mxu0 0.0
      %1430 = vmatprep.subr.mxu0 0.0
      %1431 = vmatpush2.msra.mxu0 0.0
      %1432 = vmatprep.subr.mxu0 0.0
      %1433 = vmatpush2.msra.mxu0 0.0
      %1434 = vmatprep.subr.mxu0 0.0
      %1435 = vmatpush2.msra.mxu0 0.0
      %1436 = vmatprep.mubr.f32.mxu0 0.0
      %1437 = vmatmul.mubr.f32.gmra.mxu0 %v1366
      %v1438 = vpop.f32.mrf.mxu0
      %v1439 = vadd.f32 0.0, %v1438
      %v1440 = vpop.f32.mrf.mxu0
      %1441 = vdwg.mxu0
      %v1443 = vsel %vm1364, %v1288, 0
      %1445 = vmatprep.subr.mxu0 0.0
      %1446 = vmatpush1.msra.mxu0 0.0
      %1447 = vmatprep.subr.mxu0 0.0
      %1448 = vmatpush1.msra.mxu0 0.0
      %1449 = vmatprep.subr.mxu0 0.0
      %1450 = vmatpush1.msra.mxu0 0.0
      %1451 = vmatprep.subr.mxu0 0.0
      %1452 = vmatpush1.msra.mxu0 0.0
      %1453 = vmatprep.subr.mxu0 0.0
      %1454 = vmatpush1.msra.mxu0 0.0
      %1455 = vmatprep.subr.mxu0 0.0
      %1456 = vmatpush1.msra.mxu0 0.0
      %1457 = vmatprep.subr.mxu0 0.0
      %1458 = vmatpush1.msra.mxu0 0.0
      %1459 = vmatprep.subr.mxu0 0.0
      %1460 = vmatpush1.msra.mxu0 0.0
      %1461 = vmatprep.subr.mxu0 0.0
      %1462 = vmatpush1.msra.mxu0 0.0
      %1463 = vmatprep.subr.mxu0 0.0
      %1464 = vmatpush1.msra.mxu0 0.0
      %1465 = vmatprep.subr.mxu0 0.0
      %1466 = vmatpush1.msra.mxu0 0.0
      %1467 = vmatprep.subr.mxu0 0.0
      %1468 = vmatpush1.msra.mxu0 0.0
      %1469 = vmatprep.subr.mxu0 0.0
      %1470 = vmatpush1.msra.mxu0 0.0
      %1471 = vmatprep.subr.mxu0 0.0
      %1472 = vmatpush1.msra.mxu0 0.0
      %1473 = vmatprep.subr.mxu0 0.0
      %1474 = vmatpush1.msra.mxu0 0.0
      %1475 = vmatprep.subr.mxu0 0.0
      %1476 = vmatpush1.msra.mxu0 %v1370
      %1477 = vmatprep.subr.mxu0 0.0
      %1478 = vmatpush2.msra.mxu0 0.0
      %1479 = vmatprep.subr.mxu0 0.0
      %1480 = vmatpush2.msra.mxu0 0.0
      %1481 = vmatprep.subr.mxu0 0.0
      %1482 = vmatpush2.msra.mxu0 0.0
      %1483 = vmatprep.subr.mxu0 0.0
      %1484 = vmatpush2.msra.mxu0 0.0
      %1485 = vmatprep.subr.mxu0 0.0
      %1486 = vmatpush2.msra.mxu0 0.0
      %1487 = vmatprep.subr.mxu0 0.0
      %1488 = vmatpush2.msra.mxu0 0.0
      %1489 = vmatprep.subr.mxu0 0.0
      %1490 = vmatpush2.msra.mxu0 0.0
      %1491 = vmatprep.subr.mxu0 0.0
      %1492 = vmatpush2.msra.mxu0 0.0
      %1493 = vmatprep.subr.mxu0 0.0
      %1494 = vmatpush2.msra.mxu0 0.0
      %1495 = vmatprep.subr.mxu0 0.0
      %1496 = vmatpush2.msra.mxu0 0.0
      %1497 = vmatprep.subr.mxu0 0.0
      %1498 = vmatpush2.msra.mxu0 0.0
      %1499 = vmatprep.subr.mxu0 0.0
      %1500 = vmatpush2.msra.mxu0 0.0
      %1501 = vmatprep.subr.mxu0 0.0
      %1502 = vmatpush2.msra.mxu0 0.0
      %1503 = vmatprep.subr.mxu0 0.0
      %1504 = vmatpush2.msra.mxu0 0.0
      %1505 = vmatprep.subr.mxu0 0.0
      %1506 = vmatpush2.msra.mxu0 0.0
      %1507 = vmatprep.subr.mxu0 0.0
      %1508 = vmatpush2.msra.mxu0 0.0
      %1509 = vmatprep.mubr.f32.mxu0 0.0
      %1510 = vmatmul.mubr.f32.gmra.mxu0 %v1443
      %v1511 = vpop.f32.mrf.mxu0
      %v1512 = vadd.f32 %v1439, %v1511
      %v1513 = vpop.f32.mrf.mxu0
      %1514 = vdwg.mxu0
      %v1515 = vsub.f32 0.0, %v1512
      %v1516 = vmul.f32 %v1515, 1.442695
      %v1517 = vpow.pop %v1516
      %v1518 = vadd.f32 %v1517, 1.0
      %v1519 = vrcp.pop %v1518
      %v1520 = vmul.f32 1.0, %v1519
      %vm1521 = vcmask 122880
      %v1522 = vsel %vm1521, %v1520, 0.0
      %1523 = vadd.xlane.f32.xlu0 %v1522
      %v1524 = vpop.xlane.xlu0 %1523
      %v1525 = vrcp.pop 16.0
      %v1526 = vmul.f32 %v1524, %v1525
      %v1527 = vsel %vm1521, %v1520, -inf
      %1528 = vmax.xlane.f32.xlu0 %v1527
      %v1529 = vpop.xlane.xlu0 %1528
      %v1530 = vld [vmem:[%s7] sm:$0x1]
      %v1531 = vmul.f32 %v1526, %v1530
      %v1533 = vlaneseq
      %v1534 = vshrl.u32 %v1533, 7
      %v1535 = vsub.s32 0, %v1534
      %v1536 = vrot.slane %v1530, %v1535
      %1537 = vrot.lane.b32.xlu0 %v1536, 127
      %v1538 = vpop.permute.xlu0 %1537
      %v1540 = vmul.f32 %v1529, %v1538
      %v1541 = vadd.f32 %v1531, %v1540
      %v1542 = vsub.f32 0.0, %v1541
      %v1543 = vmul.f32 %v1542, 1.442695
      %v1544 = vpow.pop %v1543
      %v1545 = vadd.f32 %v1544, 1.0
      %v1546 = vrcp.pop %v1545
      %v1547 = vmul.f32 1.0, %v1546
      %v1548 = vmul.f32 %v1055, 2.0
      %1550 = vrot.lane.b32.xlu0 %v1548, 16
      %v1551 = vpop.permute.xlu0 %1550
      %1553 = vrot.lane.b32.xlu0 %v1548, 32
      %v1554 = vpop.permute.xlu0 %1553
      %1556 = vrot.lane.b32.xlu0 %v1548, 48
      %v1557 = vpop.permute.xlu0 %1556
      %1559 = vrot.lane.b32.xlu0 %v1548, 64
      %v1560 = vpop.permute.xlu0 %1559
      %1562 = vrot.lane.b32.xlu0 %v1548, 80
      %v1563 = vpop.permute.xlu0 %1562
      %1565 = vrot.lane.b32.xlu0 %v1548, 96
      %v1566 = vpop.permute.xlu0 %1565
      %1568 = vrot.lane.b32.xlu0 %v1548, 112
      %v1569 = vpop.permute.xlu0 %1568
      %v1571 = vsel %vm771, %v1548, %v1551
      %v1572 = vsel %vm946, %v1571, %v1554
      %v1573 = vsel %vm948, %v1572, %v1557
      %v1574 = vsel %vm950, %v1573, %v1560
      %v1575 = vsel %vm952, %v1574, %v1563
      %v1576 = vsel %vm954, %v1575, %v1566
      %v1577 = vsel %vm956, %v1576, %v1569
      %v1578 = vlaneseq
      %v1579 = vshrl.u32 %v1578, 7
      %v1580 = vsub.s32 0, %v1579
      %v1581 = vrot.slane %v1577, %v1580
      %v1582 = vmul.f32 %v380, %v1581
      %v1583 = vmul.f32 %v381, %v1581
      %v1584 = vmul.f32 %v382, %v1581
      %v1585 = vmul.f32 %v383, %v1581
      %s1587 = vtos %v1547
      %v1588 = vstv %s1587
      %v1590 = vadd.f32 %v1582, %v1588
      %v1591 = vadd.f32 %v1583, %v1588
      %v1592 = vadd.f32 %v1584, %v1588
      %v1593 = vadd.f32 %v1585, %v1588
      %v1594 = vld [vmem:[%s8] sm:$0xff]
      %v1595 = vld [vmem:[%s8 + $0x8] sm:$0xff]
      %v1596 = vld [vmem:[%s8 + $0x10] sm:$0xff]
      %v1597 = vld [vmem:[%s8 + $0x18] sm:$0xff]
      %v1598 = vld [vmem:[%s8 + $0x20] sm:$0xff]
      %v1599 = vld [vmem:[%s8 + $0x28] sm:$0xff]
      %v1600 = vld [vmem:[%s8 + $0x30] sm:$0xff]
      %v1601 = vld [vmem:[%s8 + $0x38] sm:$0xff]
      %v1602 = vld [vmem:[%s8 + $0x40] sm:$0xff]
      %v1603 = vld [vmem:[%s8 + $0x48] sm:$0xff]
      %v1604 = vld [vmem:[%s8 + $0x50] sm:$0xff]
      %v1605 = vld [vmem:[%s8 + $0x58] sm:$0xff]
      %v1606 = vld [vmem:[%s8 + $0x60] sm:$0xff]
      %v1607 = vld [vmem:[%s8 + $0x68] sm:$0xff]
      %v1608 = vld [vmem:[%s8 + $0x70] sm:$0xff]
      %v1609 = vld [vmem:[%s8 + $0x78] sm:$0xff]
      %v1610 = vld [vmem:[%s8 + $0x80] sm:$0xff]
      %v1611 = vld [vmem:[%s8 + $0x88] sm:$0xff]
      %v1612 = vld [vmem:[%s8 + $0x90] sm:$0xff]
      %v1613 = vld [vmem:[%s8 + $0x98] sm:$0xff]
      %v1614 = vld [vmem:[%s8 + $0xa0] sm:$0xff]
      %v1615 = vld [vmem:[%s8 + $0xa8] sm:$0xff]
      %v1616 = vld [vmem:[%s8 + $0xb0] sm:$0xff]
      %v1617 = vld [vmem:[%s8 + $0xb8] sm:$0xff]
      %v1618 = vld [vmem:[%s8 + $0xc0] sm:$0xff]
      %v1619 = vld [vmem:[%s8 + $0xc8] sm:$0xff]
      %v1620 = vld [vmem:[%s8 + $0xd0] sm:$0xff]
      %v1621 = vld [vmem:[%s8 + $0xd8] sm:$0xff]
      %v1622 = vld [vmem:[%s8 + $0xe0] sm:$0xff]
      %v1623 = vld [vmem:[%s8 + $0xe8] sm:$0xff]
      %v1624 = vld [vmem:[%s8 + $0xf0] sm:$0xff]
      %v1625 = vld [vmem:[%s8 + $0xf8] sm:$0xff]
      %v1626 = vld [vmem:[%s8 + $0x100] sm:$0xff]
      %v1627 = vld [vmem:[%s8 + $0x108] sm:$0xff]
      %v1628 = vld [vmem:[%s8 + $0x110] sm:$0xff]
      %v1629 = vld [vmem:[%s8 + $0x118] sm:$0xff]
      %v1630 = vld [vmem:[%s8 + $0x120] sm:$0xff]
      %v1631 = vld [vmem:[%s8 + $0x128] sm:$0xff]
      %v1632 = vld [vmem:[%s8 + $0x130] sm:$0xff]
      %v1633 = vld [vmem:[%s8 + $0x138] sm:$0xff]
      %v1634 = vld [vmem:[%s8 + $0x140] sm:$0xff]
      %v1635 = vld [vmem:[%s8 + $0x148] sm:$0xff]
      %v1636 = vld [vmem:[%s8 + $0x150] sm:$0xff]
      %v1637 = vld [vmem:[%s8 + $0x158] sm:$0xff]
      %v1638 = vld [vmem:[%s8 + $0x160] sm:$0xff]
      %v1639 = vld [vmem:[%s8 + $0x168] sm:$0xff]
      %v1640 = vld [vmem:[%s8 + $0x170] sm:$0xff]
      %v1641 = vld [vmem:[%s8 + $0x178] sm:$0xff]
      %v1642 = vld [vmem:[%s8 + $0x180] sm:$0xff]
      %v1643 = vld [vmem:[%s8 + $0x188] sm:$0xff]
      %v1644 = vld [vmem:[%s8 + $0x190] sm:$0xff]
      %v1645 = vld [vmem:[%s8 + $0x198] sm:$0xff]
      %v1646 = vld [vmem:[%s8 + $0x1a0] sm:$0xff]
      %v1647 = vld [vmem:[%s8 + $0x1a8] sm:$0xff]
      %v1648 = vld [vmem:[%s8 + $0x1b0] sm:$0xff]
      %v1649 = vld [vmem:[%s8 + $0x1b8] sm:$0xff]
      %v1650 = vld [vmem:[%s8 + $0x1c0] sm:$0xff]
      %v1651 = vld [vmem:[%s8 + $0x1c8] sm:$0xff]
      %v1652 = vld [vmem:[%s8 + $0x1d0] sm:$0xff]
      %v1653 = vld [vmem:[%s8 + $0x1d8] sm:$0xff]
      %v1654 = vld [vmem:[%s8 + $0x1e0] sm:$0xff]
      %v1655 = vld [vmem:[%s8 + $0x1e8] sm:$0xff]
      %v1656 = vld [vmem:[%s8 + $0x1f0] sm:$0xff]
      %v1657 = vld [vmem:[%s8 + $0x1f8] sm:$0xff]
      %s1658 = scalar_lea.vmem %s8, 512
      %v1659 = vld [vmem:[%s1658] sm:$0xff]
      %v1660 = vld [vmem:[%s1658 + $0x8] sm:$0xff]
      %v1661 = vld [vmem:[%s1658 + $0x10] sm:$0xff]
      %v1662 = vld [vmem:[%s1658 + $0x18] sm:$0xff]
      %v1663 = vld [vmem:[%s1658 + $0x20] sm:$0xff]
      %v1664 = vld [vmem:[%s1658 + $0x28] sm:$0xff]
      %v1665 = vld [vmem:[%s1658 + $0x30] sm:$0xff]
      %v1666 = vld [vmem:[%s1658 + $0x38] sm:$0xff]
      %v1667 = vld [vmem:[%s1658 + $0x40] sm:$0xff]
      %v1668 = vld [vmem:[%s1658 + $0x48] sm:$0xff]
      %v1669 = vld [vmem:[%s1658 + $0x50] sm:$0xff]
      %v1670 = vld [vmem:[%s1658 + $0x58] sm:$0xff]
      %v1671 = vld [vmem:[%s1658 + $0x60] sm:$0xff]
      %v1672 = vld [vmem:[%s1658 + $0x68] sm:$0xff]
      %v1673 = vld [vmem:[%s1658 + $0x70] sm:$0xff]
      %v1674 = vld [vmem:[%s1658 + $0x78] sm:$0xff]
      %v1675 = vld [vmem:[%s1658 + $0x80] sm:$0xff]
      %v1676 = vld [vmem:[%s1658 + $0x88] sm:$0xff]
      %v1677 = vld [vmem:[%s1658 + $0x90] sm:$0xff]
      %v1678 = vld [vmem:[%s1658 + $0x98] sm:$0xff]
      %v1679 = vld [vmem:[%s1658 + $0xa0] sm:$0xff]
      %v1680 = vld [vmem:[%s1658 + $0xa8] sm:$0xff]
      %v1681 = vld [vmem:[%s1658 + $0xb0] sm:$0xff]
      %v1682 = vld [vmem:[%s1658 + $0xb8] sm:$0xff]
      %v1683 = vld [vmem:[%s1658 + $0xc0] sm:$0xff]
      %v1684 = vld [vmem:[%s1658 + $0xc8] sm:$0xff]
      %v1685 = vld [vmem:[%s1658 + $0xd0] sm:$0xff]
      %v1686 = vld [vmem:[%s1658 + $0xd8] sm:$0xff]
      %v1687 = vld [vmem:[%s1658 + $0xe0] sm:$0xff]
      %v1688 = vld [vmem:[%s1658 + $0xe8] sm:$0xff]
      %v1689 = vld [vmem:[%s1658 + $0xf0] sm:$0xff]
      %v1690 = vld [vmem:[%s1658 + $0xf8] sm:$0xff]
      %v1691 = vld [vmem:[%s1658 + $0x100] sm:$0xff]
      %v1692 = vld [vmem:[%s1658 + $0x108] sm:$0xff]
      %v1693 = vld [vmem:[%s1658 + $0x110] sm:$0xff]
      %v1694 = vld [vmem:[%s1658 + $0x118] sm:$0xff]
      %v1695 = vld [vmem:[%s1658 + $0x120] sm:$0xff]
      %v1696 = vld [vmem:[%s1658 + $0x128] sm:$0xff]
      %v1697 = vld [vmem:[%s1658 + $0x130] sm:$0xff]
      %v1698 = vld [vmem:[%s1658 + $0x138] sm:$0xff]
      %v1699 = vld [vmem:[%s1658 + $0x140] sm:$0xff]
      %v1700 = vld [vmem:[%s1658 + $0x148] sm:$0xff]
      %v1701 = vld [vmem:[%s1658 + $0x150] sm:$0xff]
      %v1702 = vld [vmem:[%s1658 + $0x158] sm:$0xff]
      %v1703 = vld [vmem:[%s1658 + $0x160] sm:$0xff]
      %v1704 = vld [vmem:[%s1658 + $0x168] sm:$0xff]
      %v1705 = vld [vmem:[%s1658 + $0x170] sm:$0xff]
      %v1706 = vld [vmem:[%s1658 + $0x178] sm:$0xff]
      %v1707 = vld [vmem:[%s1658 + $0x180] sm:$0xff]
      %v1708 = vld [vmem:[%s1658 + $0x188] sm:$0xff]
      %v1709 = vld [vmem:[%s1658 + $0x190] sm:$0xff]
      %v1710 = vld [vmem:[%s1658 + $0x198] sm:$0xff]
      %v1711 = vld [vmem:[%s1658 + $0x1a0] sm:$0xff]
      %v1712 = vld [vmem:[%s1658 + $0x1a8] sm:$0xff]
      %v1713 = vld [vmem:[%s1658 + $0x1b0] sm:$0xff]
      %v1714 = vld [vmem:[%s1658 + $0x1b8] sm:$0xff]
      %v1715 = vld [vmem:[%s1658 + $0x1c0] sm:$0xff]
      %v1716 = vld [vmem:[%s1658 + $0x1c8] sm:$0xff]
      %v1717 = vld [vmem:[%s1658 + $0x1d0] sm:$0xff]
      %v1718 = vld [vmem:[%s1658 + $0x1d8] sm:$0xff]
      %v1719 = vld [vmem:[%s1658 + $0x1e0] sm:$0xff]
      %v1720 = vld [vmem:[%s1658 + $0x1e8] sm:$0xff]
      %v1721 = vld [vmem:[%s1658 + $0x1f0] sm:$0xff]
      %v1722 = vld [vmem:[%s1658 + $0x1f8] sm:$0xff]
      %vm1727 = vcmask 1046528
      %v1728 = vrot.slane %v1590, 1
      %v1729 = vrot.slane %v1592, 1
      %v1730 = vsel %vm1727, %v1728, %v1729
      %v1731 = vrot.slane %v1591, 1
      %v1732 = vrot.slane %v1593, 1
      %v1733 = vsel %vm1727, %v1731, %v1732
      %1738 = vmatprep.subr.mxu0 %v1690
      %1739 = vmatpush1.msra.mxu0 %v1689
      %1740 = vmatprep.subr.mxu0 %v1688
      %1741 = vmatpush1.msra.mxu0 %v1687
      %1742 = vmatprep.subr.mxu0 %v1686
      %1743 = vmatpush1.msra.mxu0 %v1685
      %1744 = vmatprep.subr.mxu0 %v1684
      %1745 = vmatpush1.msra.mxu0 %v1683
      %1746 = vmatprep.subr.mxu0 %v1682
      %1747 = vmatpush1.msra.mxu0 %v1681
      %1748 = vmatprep.subr.mxu0 %v1680
      %1749 = vmatpush1.msra.mxu0 %v1679
      %1750 = vmatprep.subr.mxu0 %v1678
      %1751 = vmatpush1.msra.mxu0 %v1677
      %1752 = vmatprep.subr.mxu0 %v1676
      %1753 = vmatpush1.msra.mxu0 %v1675
      %1754 = vmatprep.subr.mxu0 %v1674
      %1755 = vmatpush1.msra.mxu0 %v1673
      %1756 = vmatprep.subr.mxu0 %v1672
      %1757 = vmatpush1.msra.mxu0 %v1671
      %1758 = vmatprep.subr.mxu0 %v1670
      %1759 = vmatpush1.msra.mxu0 %v1669
      %1760 = vmatprep.subr.mxu0 %v1668
      %1761 = vmatpush1.msra.mxu0 %v1667
      %1762 = vmatprep.subr.mxu0 %v1666
      %1763 = vmatpush1.msra.mxu0 %v1665
      %1764 = vmatprep.subr.mxu0 %v1664
      %1765 = vmatpush1.msra.mxu0 %v1663
      %1766 = vmatprep.subr.mxu0 %v1662
      %1767 = vmatpush1.msra.mxu0 %v1661
      %1768 = vmatprep.subr.mxu0 %v1660
      %1769 = vmatpush1.msra.mxu0 %v1659
      %1770 = vmatprep.subr.mxu0 %v1722
      %1771 = vmatpush2.msra.mxu0 %v1721
      %1772 = vmatprep.subr.mxu0 %v1720
      %1773 = vmatpush2.msra.mxu0 %v1719
      %1774 = vmatprep.subr.mxu0 %v1718
      %1775 = vmatpush2.msra.mxu0 %v1717
      %1776 = vmatprep.subr.mxu0 %v1716
      %1777 = vmatpush2.msra.mxu0 %v1715
      %1778 = vmatprep.subr.mxu0 %v1714
      %1779 = vmatpush2.msra.mxu0 %v1713
      %1780 = vmatprep.subr.mxu0 %v1712
      %1781 = vmatpush2.msra.mxu0 %v1711
      %1782 = vmatprep.subr.mxu0 %v1710
      %1783 = vmatpush2.msra.mxu0 %v1709
      %1784 = vmatprep.subr.mxu0 %v1708
      %1785 = vmatpush2.msra.mxu0 %v1707
      %1786 = vmatprep.subr.mxu0 %v1706
      %1787 = vmatpush2.msra.mxu0 %v1705
      %1788 = vmatprep.subr.mxu0 %v1704
      %1789 = vmatpush2.msra.mxu0 %v1703
      %1790 = vmatprep.subr.mxu0 %v1702
      %1791 = vmatpush2.msra.mxu0 %v1701
      %1792 = vmatprep.subr.mxu0 %v1700
      %1793 = vmatpush2.msra.mxu0 %v1699
      %1794 = vmatprep.subr.mxu0 %v1698
      %1795 = vmatpush2.msra.mxu0 %v1697
      %1796 = vmatprep.subr.mxu0 %v1696
      %1797 = vmatpush2.msra.mxu0 %v1695
      %1798 = vmatprep.subr.mxu0 %v1694
      %1799 = vmatpush2.msra.mxu0 %v1693
      %1800 = vmatprep.subr.mxu0 %v1692
      %1801 = vmatpush2.msra.mxu0 %v1691
      %1802 = vmatprep.mubr.f32.mxu0 %v1733
      %1803 = vmatmul.mubr.f32.gmra.mxu0 %v1730
      %v1804 = vpop.f32.mrf.mxu0
      %v1805 = vadd.f32 0.0, %v1804
      %v1806 = vpop.f32.mrf.mxu0
      %v1807 = vadd.f32 0.0, %v1806
      %1808 = vmatprep.mubr.f32.mxu0 %v1732
      %1809 = vmatmul.mubr.f32.gmra.mxu0 %v1729
      %v1810 = vpop.f32.mrf.mxu0
      %v1811 = vadd.f32 0.0, %v1810
      %v1812 = vpop.f32.mrf.mxu0
      %v1813 = vadd.f32 0.0, %v1812
      %1814 = vdwg.mxu0
      %1815 = vmatprep.subr.mxu0 %v1625
      %1816 = vmatpush1.msra.mxu0 %v1624
      %1817 = vmatprep.subr.mxu0 %v1623
      %1818 = vmatpush1.msra.mxu0 %v1622
      %1819 = vmatprep.subr.mxu0 %v1621
      %1820 = vmatpush1.msra.mxu0 %v1620
      %1821 = vmatprep.subr.mxu0 %v1619
      %1822 = vmatpush1.msra.mxu0 %v1618
      %1823 = vmatprep.subr.mxu0 %v1617
      %1824 = vmatpush1.msra.mxu0 %v1616
      %1825 = vmatprep.subr.mxu0 %v1615
      %1826 = vmatpush1.msra.mxu0 %v1614
      %1827 = vmatprep.subr.mxu0 %v1613
      %1828 = vmatpush1.msra.mxu0 %v1612
      %1829 = vmatprep.subr.mxu0 %v1611
      %1830 = vmatpush1.msra.mxu0 %v1610
      %1831 = vmatprep.subr.mxu0 %v1609
      %1832 = vmatpush1.msra.mxu0 %v1608
      %1833 = vmatprep.subr.mxu0 %v1607
      %1834 = vmatpush1.msra.mxu0 %v1606
      %1835 = vmatprep.subr.mxu0 %v1605
      %1836 = vmatpush1.msra.mxu0 %v1604
      %1837 = vmatprep.subr.mxu0 %v1603
      %1838 = vmatpush1.msra.mxu0 %v1602
      %1839 = vmatprep.subr.mxu0 %v1601
      %1840 = vmatpush1.msra.mxu0 %v1600
      %1841 = vmatprep.subr.mxu0 %v1599
      %1842 = vmatpush1.msra.mxu0 %v1598
      %1843 = vmatprep.subr.mxu0 %v1597
      %1844 = vmatpush1.msra.mxu0 %v1596
      %1845 = vmatprep.subr.mxu0 %v1595
      %1846 = vmatpush1.msra.mxu0 %v1594
      %1847 = vmatprep.subr.mxu0 %v1657
      %1848 = vmatpush2.msra.mxu0 %v1656
      %1849 = vmatprep.subr.mxu0 %v1655
      %1850 = vmatpush2.msra.mxu0 %v1654
      %1851 = vmatprep.subr.mxu0 %v1653
      %1852 = vmatpush2.msra.mxu0 %v1652
      %1853 = vmatprep.subr.mxu0 %v1651
      %1854 = vmatpush2.msra.mxu0 %v1650
      %1855 = vmatprep.subr.mxu0 %v1649
      %1856 = vmatpush2.msra.mxu0 %v1648
      %1857 = vmatprep.subr.mxu0 %v1647
      %1858 = vmatpush2.msra.mxu0 %v1646
      %1859 = vmatprep.subr.mxu0 %v1645
      %1860 = vmatpush2.msra.mxu0 %v1644
      %1861 = vmatprep.subr.mxu0 %v1643
      %1862 = vmatpush2.msra.mxu0 %v1642
      %1863 = vmatprep.subr.mxu0 %v1641
      %1864 = vmatpush2.msra.mxu0 %v1640
      %1865 = vmatprep.subr.mxu0 %v1639
      %1866 = vmatpush2.msra.mxu0 %v1638
      %1867 = vmatprep.subr.mxu0 %v1637
      %1868 = vmatpush2.msra.mxu0 %v1636
      %1869 = vmatprep.subr.mxu0 %v1635
      %1870 = vmatpush2.msra.mxu0 %v1634
      %1871 = vmatprep.subr.mxu0 %v1633
      %1872 = vmatpush2.msra.mxu0 %v1632
      %1873 = vmatprep.subr.mxu0 %v1631
      %1874 = vmatpush2.msra.mxu0 %v1630
      %1875 = vmatprep.subr.mxu0 %v1629
      %1876 = vmatpush2.msra.mxu0 %v1628
      %1877 = vmatprep.subr.mxu0 %v1627
      %1878 = vmatpush2.msra.mxu0 %v1626
      %1879 = vmatprep.mubr.f32.mxu0 %v1591
      %1880 = vmatmul.mubr.f32.gmra.mxu0 %v1590
      %v1881 = vpop.f32.mrf.mxu0
      %v1882 = vadd.f32 %v1805, %v1881
      %v1883 = vpop.f32.mrf.mxu0
      %v1884 = vadd.f32 %v1807, %v1883
      %1885 = vmatprep.mubr.f32.mxu0 %v1593
      %1886 = vmatmul.mubr.f32.gmra.mxu0 %v1592
      %v1887 = vpop.f32.mrf.mxu0
      %v1888 = vadd.f32 %v1811, %v1887
      %v1889 = vpop.f32.mrf.mxu0
      %v1890 = vadd.f32 %v1813, %v1889
      %1891 = vdwg.mxu0
      %s1892 = scalar_lea.vmem %s8, 1024
      %v1893 = vld [vmem:[%s1892] sm:$0xff]
      %v1894 = vld [vmem:[%s1892 + $0x8] sm:$0xff]
      %v1895 = vld [vmem:[%s1892 + $0x10] sm:$0xff]
      %v1896 = vld [vmem:[%s1892 + $0x18] sm:$0xff]
      %v1897 = vld [vmem:[%s1892 + $0x20] sm:$0xff]
      %v1898 = vld [vmem:[%s1892 + $0x28] sm:$0xff]
      %v1899 = vld [vmem:[%s1892 + $0x30] sm:$0xff]
      %v1900 = vld [vmem:[%s1892 + $0x38] sm:$0xff]
      %v1901 = vld [vmem:[%s1892 + $0x40] sm:$0xff]
      %v1902 = vld [vmem:[%s1892 + $0x48] sm:$0xff]
      %v1903 = vld [vmem:[%s1892 + $0x50] sm:$0xff]
      %v1904 = vld [vmem:[%s1892 + $0x58] sm:$0xff]
      %v1905 = vld [vmem:[%s1892 + $0x60] sm:$0xff]
      %v1906 = vld [vmem:[%s1892 + $0x68] sm:$0xff]
      %v1907 = vld [vmem:[%s1892 + $0x70] sm:$0xff]
      %v1908 = vld [vmem:[%s1892 + $0x78] sm:$0xff]
      %v1909 = vld [vmem:[%s1892 + $0x80] sm:$0xff]
      %v1910 = vld [vmem:[%s1892 + $0x88] sm:$0xff]
      %v1911 = vld [vmem:[%s1892 + $0x90] sm:$0xff]
      %v1912 = vld [vmem:[%s1892 + $0x98] sm:$0xff]
      %v1913 = vld [vmem:[%s1892 + $0xa0] sm:$0xff]
      %v1914 = vld [vmem:[%s1892 + $0xa8] sm:$0xff]
      %v1915 = vld [vmem:[%s1892 + $0xb0] sm:$0xff]
      %v1916 = vld [vmem:[%s1892 + $0xb8] sm:$0xff]
      %v1917 = vld [vmem:[%s1892 + $0xc0] sm:$0xff]
      %v1918 = vld [vmem:[%s1892 + $0xc8] sm:$0xff]
      %v1919 = vld [vmem:[%s1892 + $0xd0] sm:$0xff]
      %v1920 = vld [vmem:[%s1892 + $0xd8] sm:$0xff]
      %v1921 = vld [vmem:[%s1892 + $0xe0] sm:$0xff]
      %v1922 = vld [vmem:[%s1892 + $0xe8] sm:$0xff]
      %v1923 = vld [vmem:[%s1892 + $0xf0] sm:$0xff]
      %v1924 = vld [vmem:[%s1892 + $0xf8] sm:$0xff]
      %v1925 = vld [vmem:[%s1892 + $0x100] sm:$0xff]
      %v1926 = vld [vmem:[%s1892 + $0x108] sm:$0xff]
      %v1927 = vld [vmem:[%s1892 + $0x110] sm:$0xff]
      %v1928 = vld [vmem:[%s1892 + $0x118] sm:$0xff]
      %v1929 = vld [vmem:[%s1892 + $0x120] sm:$0xff]
      %v1930 = vld [vmem:[%s1892 + $0x128] sm:$0xff]
      %v1931 = vld [vmem:[%s1892 + $0x130] sm:$0xff]
      %v1932 = vld [vmem:[%s1892 + $0x138] sm:$0xff]
      %v1933 = vld [vmem:[%s1892 + $0x140] sm:$0xff]
      %v1934 = vld [vmem:[%s1892 + $0x148] sm:$0xff]
      %v1935 = vld [vmem:[%s1892 + $0x150] sm:$0xff]
      %v1936 = vld [vmem:[%s1892 + $0x158] sm:$0xff]
      %v1937 = vld [vmem:[%s1892 + $0x160] sm:$0xff]
      %v1938 = vld [vmem:[%s1892 + $0x168] sm:$0xff]
      %v1939 = vld [vmem:[%s1892 + $0x170] sm:$0xff]
      %v1940 = vld [vmem:[%s1892 + $0x178] sm:$0xff]
      %v1941 = vld [vmem:[%s1892 + $0x180] sm:$0xff]
      %v1942 = vld [vmem:[%s1892 + $0x188] sm:$0xff]
      %v1943 = vld [vmem:[%s1892 + $0x190] sm:$0xff]
      %v1944 = vld [vmem:[%s1892 + $0x198] sm:$0xff]
      %v1945 = vld [vmem:[%s1892 + $0x1a0] sm:$0xff]
      %v1946 = vld [vmem:[%s1892 + $0x1a8] sm:$0xff]
      %v1947 = vld [vmem:[%s1892 + $0x1b0] sm:$0xff]
      %v1948 = vld [vmem:[%s1892 + $0x1b8] sm:$0xff]
      %v1949 = vld [vmem:[%s1892 + $0x1c0] sm:$0xff]
      %v1950 = vld [vmem:[%s1892 + $0x1c8] sm:$0xff]
      %v1951 = vld [vmem:[%s1892 + $0x1d0] sm:$0xff]
      %v1952 = vld [vmem:[%s1892 + $0x1d8] sm:$0xff]
      %v1953 = vld [vmem:[%s1892 + $0x1e0] sm:$0xff]
      %v1954 = vld [vmem:[%s1892 + $0x1e8] sm:$0xff]
      %v1955 = vld [vmem:[%s1892 + $0x1f0] sm:$0xff]
      %v1956 = vld [vmem:[%s1892 + $0x1f8] sm:$0xff]
      %vm1957 = vcmask 1045504
      %v1958 = vrot.slane %v1590, 2
      %v1959 = vrot.slane %v1592, 2
      %v1960 = vsel %vm1957, %v1958, %v1959
      %v1961 = vrot.slane %v1591, 2
      %v1962 = vrot.slane %v1593, 2
      %v1963 = vsel %vm1957, %v1961, %v1962
      %1968 = vmatprep.subr.mxu0 %v1924
      %1969 = vmatpush1.msra.mxu0 %v1923
      %1970 = vmatprep.subr.mxu0 %v1922
      %1971 = vmatpush1.msra.mxu0 %v1921
      %1972 = vmatprep.subr.mxu0 %v1920
      %1973 = vmatpush1.msra.mxu0 %v1919
      %1974 = vmatprep.subr.mxu0 %v1918
      %1975 = vmatpush1.msra.mxu0 %v1917
      %1976 = vmatprep.subr.mxu0 %v1916
      %1977 = vmatpush1.msra.mxu0 %v1915
      %1978 = vmatprep.subr.mxu0 %v1914
      %1979 = vmatpush1.msra.mxu0 %v1913
      %1980 = vmatprep.subr.mxu0 %v1912
      %1981 = vmatpush1.msra.mxu0 %v1911
      %1982 = vmatprep.subr.mxu0 %v1910
      %1983 = vmatpush1.msra.mxu0 %v1909
      %1984 = vmatprep.subr.mxu0 %v1908
      %1985 = vmatpush1.msra.mxu0 %v1907
      %1986 = vmatprep.subr.mxu0 %v1906
      %1987 = vmatpush1.msra.mxu0 %v1905
      %1988 = vmatprep.subr.mxu0 %v1904
      %1989 = vmatpush1.msra.mxu0 %v1903
      %1990 = vmatprep.subr.mxu0 %v1902
      %1991 = vmatpush1.msra.mxu0 %v1901
      %1992 = vmatprep.subr.mxu0 %v1900
      %1993 = vmatpush1.msra.mxu0 %v1899
      %1994 = vmatprep.subr.mxu0 %v1898
      %1995 = vmatpush1.msra.mxu0 %v1897
      %1996 = vmatprep.subr.mxu0 %v1896
      %1997 = vmatpush1.msra.mxu0 %v1895
      %1998 = vmatprep.subr.mxu0 %v1894
      %1999 = vmatpush1.msra.mxu0 %v1893
      %2000 = vmatprep.subr.mxu0 %v1956
      %2001 = vmatpush2.msra.mxu0 %v1955
      %2002 = vmatprep.subr.mxu0 %v1954
      %2003 = vmatpush2.msra.mxu0 %v1953
      %2004 = vmatprep.subr.mxu0 %v1952
      %2005 = vmatpush2.msra.mxu0 %v1951
      %2006 = vmatprep.subr.mxu0 %v1950
      %2007 = vmatpush2.msra.mxu0 %v1949
      %2008 = vmatprep.subr.mxu0 %v1948
      %2009 = vmatpush2.msra.mxu0 %v1947
      %2010 = vmatprep.subr.mxu0 %v1946
      %2011 = vmatpush2.msra.mxu0 %v1945
      %2012 = vmatprep.subr.mxu0 %v1944
      %2013 = vmatpush2.msra.mxu0 %v1943
      %2014 = vmatprep.subr.mxu0 %v1942
      %2015 = vmatpush2.msra.mxu0 %v1941
      %2016 = vmatprep.subr.mxu0 %v1940
      %2017 = vmatpush2.msra.mxu0 %v1939
      %2018 = vmatprep.subr.mxu0 %v1938
      %2019 = vmatpush2.msra.mxu0 %v1937
      %2020 = vmatprep.subr.mxu0 %v1936
      %2021 = vmatpush2.msra.mxu0 %v1935
      %2022 = vmatprep.subr.mxu0 %v1934
      %2023 = vmatpush2.msra.mxu0 %v1933
      %2024 = vmatprep.subr.mxu0 %v1932
      %2025 = vmatpush2.msra.mxu0 %v1931
      %2026 = vmatprep.subr.mxu0 %v1930
      %2027 = vmatpush2.msra.mxu0 %v1929
      %2028 = vmatprep.subr.mxu0 %v1928
      %2029 = vmatpush2.msra.mxu0 %v1927
      %2030 = vmatprep.subr.mxu0 %v1926
      %2031 = vmatpush2.msra.mxu0 %v1925
      %2032 = vmatprep.mubr.f32.mxu0 %v1963
      %2033 = vmatmul.mubr.f32.gmra.mxu0 %v1960
      %v2034 = vpop.f32.mrf.mxu0
      %v2035 = vadd.f32 0.0, %v2034
      %v2036 = vpop.f32.mrf.mxu0
      %v2037 = vadd.f32 0.0, %v2036
      %2038 = vmatprep.mubr.f32.mxu0 %v1962
      %2039 = vmatmul.mubr.f32.gmra.mxu0 %v1959
      %v2040 = vpop.f32.mrf.mxu0
      %v2041 = vadd.f32 0.0, %v2040
      %v2042 = vpop.f32.mrf.mxu0
      %v2043 = vadd.f32 0.0, %v2042
      %2044 = vdwg.mxu0
      %v2045 = vadd.f32 %v1882, %v2035
      %v2046 = vadd.f32 %v1884, %v2037
      %v2047 = vadd.f32 %v1888, %v2041
      %v2048 = vadd.f32 %v1890, %v2043
      %v2049 = vld [vmem:[%s9] sm:$0x3]
      %v2051 = vlaneseq
      %v2052 = vshrl.u32 %v2051, 7
      %v2053 = vsub.s32 0, %v2052
      %v2054 = vrot.slane %v2049, %v2053
      %v2055 = vlaneseq
      %v2056 = vshrl.u32 %v2055, 7
      %v2057 = vsub.s32 1, %v2056
      %v2058 = vrot.slane %v2049, %v2057
      %v2061 = vadd.f32 %v2045, %v2054
      %v2062 = vadd.f32 %v2046, %v2058
      %v2063 = vadd.f32 %v2047, %v2054
      %v2064 = vadd.f32 %v2048, %v2058
      %2065 = vst [vmem:[%s379] sm:$0xff] %v2061
      %2066 = vst.msk [vmem:[%s379 + $0x8] sm:$0xff] %vm954, %v2062
      %2067 = vst [vmem:[%s379 + $0x10] sm:$0x3f] %v2063
      %vm2068 = vcmask 783360
      %2069 = vst.msk [vmem:[%s379 + $0x18] sm:$0x3f] %vm2068, %v2064
      %p2070 = scmp.lt.s32.totalorder %s21, 1
      %s2071 = scalar_select %p2070, %s21, 1
      %s2072 = smul.addr %s2071, 4
      %s2073 = smul.addr %s2072, 8
      %s2074 = scalar_lea.vmem %s10, %s2073
      // Predicated region
      $region61: #{acmf_forward.2} parent=59 // pred_check
        %p2075 = pneg %p259
      $region62: #{acmf_forward.2} parent=59 // pred_check_branch
        %2077 = sbr.rel (%p2075) target = $region64
      $region63: #{acmf_forward.2} parent=59 // pred_region
        _
      $region64: #{acmf_forward.2} parent=59 // pred_fallthru
        _
    $region60: #{acmf_forward.2} parent=5 // pred_fallthru
      _
    %p2078 = scmp.le.s32.totalorder 2, %s16
    // Predicated region
    $region65: #{acmf_forward.2} parent=5 // pred_check
      %p2079 = pneg %p2078
    $region66: #{acmf_forward.2} parent=5 // pred_check_branch
      %2081 = sbr.rel (%p2079) target = $region68
    $region67: #{acmf_forward.2} parent=5 // pred_region
      %s2082 = ssub.s32 %s16, 2
      // Predicated region
      $region69: #{acmf_forward.2} parent=67 // pred_check
        %p2083 = pneg %p265
      $region70: #{acmf_forward.2} parent=67 // pred_check_branch
        %2085 = sbr.rel (%p2083) target = $region72
      $region71: #{acmf_forward.2} parent=67 // pred_region
        %p2086 = scmp.lt.s32.totalorder %s22, 1
        %s2087 = scalar_select %p2086, %s22, 1
        %s2088 = smul.addr %s2087, 4
        %s2089 = smul.addr %s2088, 8
        %s2090 = scalar_lea.vmem %s10, %s2089
      $region72: #{acmf_forward.2} parent=67 // pred_fallthru
        _
    $region68: #{acmf_forward.2} parent=5 // pred_fallthru
      _
  $region6: #{acmf_forward.2} parent=0 // loop_footer
    %s20 = sadd.s32 1, %s16
  $region7: #{acmf_forward.2} parent=0 // loop_footer_branch
    %15 = sbr.rel target = $region3
  $region8: #{acmf_forward.2} parent=0 // loop_exit
    _

// kernel: acmf_forward.3
$region0: #{acmf_forward.3}
  #allocation0 [shape = 'u32[]', space=smem, size = 0x4, offset = 0x4, fixed_abs, tag = 'smem constant byte address 0x4 - core index']
  #allocation1 [shape = 'u32[144,128]{1,0:T(1,128)}', space=vmem, size = 0x12000, scoped, tag = 'internal scratch']
  %s0 = inlined_call_operand.vmem [shape: f32[2,14,224], index: 0, kind: input, shape index: {}]
  %s1 = inlined_call_operand.vmem [shape: f32[224,14], index: 1, kind: input, shape index: {}]
  %s2 = inlined_call_operand.vmem [shape: f32[224,3584], index: 2, kind: input, shape index: {}]
  %s3 = inlined_call_operand.vmem [shape: f32[2,224,3584], index: 3, kind: output, shape index: {}]
  %s4 = sld [smem:[#allocation0]]
  $region45: #{acmf_forward.3} parent=0
    _
  %s6 = ssub.s32 1, %s4
  %s7 = scalar_select 0, %s6, %s4
  loop: start=0, step=1, limit=4
  $region2: #{acmf_forward.3} parent=0 // loop_pre_header
    _
  $region3: #{acmf_forward.3} parent=0 // loop_header
    %s9 = sphi 0, %s13
    %p10 = scmp.ge.s32.totalorder %s9, 4
    %s16 = sphi 0, %s28
    %s17 = sphi 0, %s24
    %s18 = sphi 0, %s16
    %s19 = sphi 0, %s17
    %s20 = sphi 0, %s18
    %s21 = sphi 0, %s19
    %s31 = sphi 0, %s33
    %s34 = sphi 0, %s31
    %s35 = sphi 0, %s34
    %s51 = sphi 0, %s35
    %s57 = sphi 0, %s59
    %s60 = sphi 0, %s57
    %s61 = sphi 0, %s60
    %s77 = sphi 0, %s61
    %s81 = sphi 0, %s81
    %s83 = sphi 0, %s81
    %s84 = sphi 0, %s83
    %s98 = sphi 0, %s84
    %s106 = sphi 0, %s108
    %s109 = sphi 0, %s106
    %s110 = sphi 0, %s109
    %s126 = sphi 0, %s110
  $region4: #{acmf_forward.3} parent=0 // loop_header_branch
    %12 = sbr.rel (%p10) target = $region8
  $region5: #{acmf_forward.3} parent=0 // loop_body
    %s14 = ssub.s32 %s9, 1
    %s15 = ssub.s32 %s9, 2
    %s22 = sadd.s32 1, %s17
    %p23 = scmp.ge.s32.totalorder %s22, 1
    %s24 = scalar_select %p23, 0, %s22
    %s25 = sadd.s32 1, %s16
    %s26 = scalar_select %p23, %s25, %s16
    %p27 = scmp.ge.s32.totalorder %s26, 2
    %s28 = scalar_select %p27, 0, %s26
    %s29 = ssub.s32 %s16, %s28
    %p30 = scmp.eq.s32.totalorder %s29, 0
    %s32 = sadd.s32 %s31, 1
    %s33 = scalar_select %p30, %s31, %s32
    %p36 = pneg %p30
    %p37 = scmp.eq.s32.totalorder %s9, 1
    %p38 = por %p36, %p37
    %p39 = scmp.ne.s32.totalorder %s31, %s34
    %p40 = scmp.eq.s32.totalorder %s9, 0
    %p41 = por %p39, %p40
    %p42 = scmp.ne.s32.totalorder %s31, %s34
    %p43 = scmp.eq.s32.totalorder %s14, 1
    %p44 = por %p42, %p43
    %p45 = scmp.ne.s32.totalorder %s34, %s35
    %p46 = scmp.eq.s32.totalorder %s14, 0
    %p47 = por %p45, %p46
    %p48 = scmp.ne.s32.totalorder %s34, %s35
    %p49 = scmp.eq.s32.totalorder %s15, 1
    %p50 = por %p48, %p49
    %p52 = scmp.ne.s32.totalorder %s35, %s51
    %p53 = scmp.eq.s32.totalorder %s15, 0
    %p54 = por %p52, %p53
    %s55 = ssub.s32 %s17, %s24
    %p56 = scmp.eq.s32.totalorder %s55, 0
    %s58 = sadd.s32 %s57, 1
    %s59 = scalar_select %p56, %s57, %s58
    %p62 = pneg %p56
    %p63 = scmp.eq.s32.totalorder %s9, 1
    %p64 = por %p62, %p63
    %p65 = scmp.ne.s32.totalorder %s57, %s60
    %p66 = scmp.eq.s32.totalorder %s9, 0
    %p67 = por %p65, %p66
    %p68 = scmp.ne.s32.totalorder %s57, %s60
    %p69 = scmp.eq.s32.totalorder %s14, 1
    %p70 = por %p68, %p69
    %p71 = scmp.ne.s32.totalorder %s60, %s61
    %p72 = scmp.eq.s32.totalorder %s14, 0
    %p73 = por %p71, %p72
    %p74 = scmp.ne.s32.totalorder %s60, %s61
    %p75 = scmp.eq.s32.totalorder %s15, 1
    %p76 = por %p74, %p75
    %p78 = scmp.ne.s32.totalorder %s61, %s77
    %p79 = scmp.eq.s32.totalorder %s15, 0
    %p80 = por %p78, %p79
    %s82 = sadd.s32 %s81, 1
    %p85 = scmp.eq.s32.totalorder %s9, 1
    %p86 = scmp.ne.s32.totalorder %s81, %s83
    %p87 = scmp.eq.s32.totalorder %s9, 0
    %p88 = por %p86, %p87
    %p89 = scmp.ne.s32.totalorder %s81, %s83
    %p90 = scmp.eq.s32.totalorder %s14, 1
    %p91 = por %p89, %p90
    %p92 = scmp.ne.s32.totalorder %s83, %s84
    %p93 = scmp.eq.s32.totalorder %s14, 0
    %p94 = por %p92, %p93
    %p95 = scmp.ne.s32.totalorder %s83, %s84
    %p96 = scmp.eq.s32.totalorder %s15, 1
    %p97 = por %p95, %p96
    %p99 = scmp.ne.s32.totalorder %s84, %s98
    %p100 = scmp.eq.s32.totalorder %s15, 0
    %p101 = por %p99, %p100
    %s102 = ssub.s32 %s16, %s28
    %s103 = ssub.s32 %s17, %s24
    %s104 = sor.u32 %s102, %s103
    %p105 = scmp.eq.s32.totalorder %s104, 0
    %s107 = sadd.s32 %s106, 1
    %s108 = scalar_select %p105, %s106, %s107
    %p111 = pneg %p105
    %p112 = scmp.eq.s32.totalorder %s9, 1
    %p113 = por %p111, %p112
    %p114 = scmp.ne.s32.totalorder %s106, %s109
    %p115 = scmp.eq.s32.totalorder %s9, 0
    %p116 = por %p114, %p115
    %p117 = scmp.ne.s32.totalorder %s106, %s109
    %p118 = scmp.eq.s32.totalorder %s14, 1
    %p119 = por %p117, %p118
    %p120 = scmp.ne.s32.totalorder %s109, %s110
    %p121 = scmp.eq.s32.totalorder %s14, 0
    %p122 = por %p120, %p121
    %p123 = scmp.ne.s32.totalorder %s109, %s110
    %p124 = scmp.eq.s32.totalorder %s15, 1
    %p125 = por %p123, %p124
    %p127 = scmp.ne.s32.totalorder %s110, %s126
    %p128 = scmp.eq.s32.totalorder %s15, 0
    %p129 = por %p127, %p128
    %p130 = scmp.le.s32.totalorder 1, %s9
    %p131 = scmp.lt.s32.totalorder %s9, 3
    %p132 = pnand %p130, %p131
    %p133 = pneg %p132
    // Predicated region
    $region9: #{acmf_forward.3} parent=5 // pred_check
      _
    $region10: #{acmf_forward.3} parent=5 // pred_check_branch
      %135 = sbr.rel (%p132) target = $region12
    $region11: #{acmf_forward.3} parent=5 // pred_region
      %s136 = ssub.s32 %s9, 1
      // Predicated region
      $region13: #{acmf_forward.3} parent=11 // pred_check
        %p137 = pneg %p73
      $region14: #{acmf_forward.3} parent=11 // pred_check_branch
        %139 = sbr.rel (%p137) target = $region16
      $region15: #{acmf_forward.3} parent=11 // pred_region
        %s140 = smul.u32 28, %s19
        %p141 = scmp.lt.s32.totalorder %s140, 27
        %s142 = scalar_select %p141, %s140, 27
        %s143 = smul.addr %s142, 8
        %s144 = scalar_lea.vmem %s1, %s143
        %s145 = smul.u32 28, %s19
      $region16: #{acmf_forward.3} parent=11 // pred_fallthru
        _
      // Predicated region
      $region17: #{acmf_forward.3} parent=11 // pred_check
        %p146 = pneg %p94
      $region18: #{acmf_forward.3} parent=11 // pred_check_branch
        %148 = sbr.rel (%p146) target = $region20
      $region19: #{acmf_forward.3} parent=11 // pred_region
        _
      $region20: #{acmf_forward.3} parent=11 // pred_fallthru
        _
    $region12: #{acmf_forward.3} parent=5 // pred_fallthru
      _
    %p149 = scmp.lt.s32.totalorder %s9, 2
    // Predicated region
    $region21: #{acmf_forward.3} parent=5 // pred_check
      %p150 = pneg %p149
    $region22: #{acmf_forward.3} parent=5 // pred_check_branch
      %152 = sbr.rel (%p150) target = $region24
    $region23: #{acmf_forward.3} parent=5 // pred_region
      // Predicated region
      $region25: #{acmf_forward.3} parent=23 // pred_check
        %p153 = pneg %p41
      $region26: #{acmf_forward.3} parent=23 // pred_check_branch
        %155 = sbr.rel (%p153) target = $region28
      $region27: #{acmf_forward.3} parent=23 // pred_region
        %p156 = scmp.lt.s32.totalorder %s16, 1
        %s157 = scalar_select %p156, %s16, 1
        %s158 = smul.addr %s157, 4
        %s159 = smul.addr %s158, 8
        %s160 = scalar_lea.vmem %s0, %s159
      $region28: #{acmf_forward.3} parent=23 // pred_fallthru
        _
    $region24: #{acmf_forward.3} parent=5 // pred_fallthru
      _
    %p161 = scmp.le.s32.totalorder 1, %s9
    %p162 = scmp.lt.s32.totalorder %s9, 3
    %p163 = pnand %p161, %p162
    %p164 = pneg %p163
    // Predicated region
    $region29: #{acmf_forward.3} parent=5 // pred_check
      _
    $region30: #{acmf_forward.3} parent=5 // pred_check_branch
      %166 = sbr.rel (%p163) target = $region32
    $region31: #{acmf_forward.3} parent=5 // pred_region
      %s167 = ssub.s32 %s9, 1
      %p168 = scmp.lt.s32.totalorder %s18, 1
      %s169 = scalar_select %p168, %s18, 1
      %s170 = smul.addr %s169, 4
      %s171 = smul.addr %s170, 8
      %s172 = scalar_lea.vmem %s0, %s171
      %p173 = pneg %p47
      %p174 = pneg %p44
      %s175 = smul.u32 28, %s19
      %p176 = scmp.lt.s32.totalorder %s175, 27
      %s177 = scalar_select %p176, %s175, 27
      %s178 = smul.addr %s177, 8
      %s179 = scalar_lea.vmem %s1, %s178
      %p180 = pneg %p73
      %p181 = pneg %p70
      %p182 = pneg %p94
      %p183 = pneg %p91
      %p184 = pneg %p122
      %p185 = pneg %p119
      %s186 = smul.u32 28, %s19
      %p187 = scmp.lt.s32.totalorder %s18, 1
      %s188 = scalar_select %p187, %s18, 1
      %p189 = scmp.lt.s32.totalorder %s186, 27
      %s190 = scalar_select %p189, %s186, 27
      %s191 = smul.addr %s190, 28
      %s192 = smul.addr %s188, 784
      %s193 = sadd.s32 %s191, %s192
      %s194 = smul.addr %s193, 8
      %s195 = scalar_lea.vmem %s3, %s194
      %p196 = scmp.lt.s32.totalorder %s18, 1
      %s197 = scalar_select %p196, %s18, 1
      %s198 = smul.addr %s197, 4
      %s199 = smul.addr %s198, 8
      %s200 = scalar_lea.vmem %s0, %s199
      %s201 = smul.u32 28, %s19
      %p202 = scmp.lt.s32.totalorder %s201, 27
      %s203 = scalar_select %p202, %s201, 27
      %s204 = smul.addr %s203, 8
      %s205 = scalar_lea.vmem %s1, %s204
      %s206 = smul.u32 28, %s19
      %s207 = smul.u32 28, %s19
      %p208 = scmp.lt.s32.totalorder %s18, 1
      %s209 = scalar_select %p208, %s18, 1
      %p210 = scmp.lt.s32.totalorder %s207, 27
      %s211 = scalar_select %p210, %s207, 27
      %s212 = smul.addr %s211, 28
      %s213 = smul.addr %s209, 784
      %s214 = sadd.s32 %s212, %s213
      %s215 = smul.addr %s214, 8
      %s216 = scalar_lea.vmem %s3, %s215
      %s217 = smul.u32 28, %s19
      %v218 = vld [vmem:[%s200] sm:$0xff]
      %v219 = vld [vmem:[%s200 + $0x8] sm:$0xff]
      %v220 = vld [vmem:[%s200 + $0x10] sm:$0x3f]
      %v221 = vld [vmem:[%s200 + $0x18] sm:$0x3f]
      %v222 = vld [vmem:[%s2] sm:$0xff]
      %v223 = vld [vmem:[%s2 + $0x8] sm:$0xff]
      %v224 = vld [vmem:[%s2 + $0x10] sm:$0xff]
      %v225 = vld [vmem:[%s2 + $0x18] sm:$0xff]
      %v226 = vld [vmem:[%s2 + $0x20] sm:$0xff]
      %v227 = vld [vmem:[%s2 + $0x28] sm:$0xff]
      %v228 = vld [vmem:[%s2 + $0x30] sm:$0xff]
      %v229 = vld [vmem:[%s2 + $0x38] sm:$0xff]
      %v230 = vld [vmem:[%s2 + $0x40] sm:$0xff]
      %v231 = vld [vmem:[%s2 + $0x48] sm:$0xff]
      %v232 = vld [vmem:[%s2 + $0x50] sm:$0xff]
      %v233 = vld [vmem:[%s2 + $0x58] sm:$0xff]
      %v234 = vld [vmem:[%s2 + $0x60] sm:$0xff]
      %v235 = vld [vmem:[%s2 + $0x68] sm:$0xff]
      %v236 = vld [vmem:[%s2 + $0x70] sm:$0xff]
      %v237 = vld [vmem:[%s2 + $0x78] sm:$0xff]
      %v238 = vld [vmem:[%s2 + $0x80] sm:$0xff]
      %v239 = vld [vmem:[%s2 + $0x88] sm:$0xff]
      %v240 = vld [vmem:[%s2 + $0x90] sm:$0xff]
      %v241 = vld [vmem:[%s2 + $0x98] sm:$0xff]
      %v242 = vld [vmem:[%s2 + $0xa0] sm:$0xff]
      %v243 = vld [vmem:[%s2 + $0xa8] sm:$0xff]
      %v244 = vld [vmem:[%s2 + $0xb0] sm:$0xff]
      %v245 = vld [vmem:[%s2 + $0xb8] sm:$0xff]
      %v246 = vld [vmem:[%s2 + $0xc0] sm:$0xff]
      %v247 = vld [vmem:[%s2 + $0xc8] sm:$0xff]
      %v248 = vld [vmem:[%s2 + $0xd0] sm:$0xff]
      %v249 = vld [vmem:[%s2 + $0xd8] sm:$0xff]
      %v250 = vld [vmem:[%s2 + $0xe0] sm:$0xff]
      %v251 = vld [vmem:[%s2 + $0xe8] sm:$0xff]
      %v252 = vld [vmem:[%s2 + $0xf0] sm:$0xff]
      %v253 = vld [vmem:[%s2 + $0xf8] sm:$0xff]
      %v254 = vld [vmem:[%s2 + $0x100] sm:$0xff]
      %v255 = vld [vmem:[%s2 + $0x108] sm:$0xff]
      %v256 = vld [vmem:[%s2 + $0x110] sm:$0xff]
      %v257 = vld [vmem:[%s2 + $0x118] sm:$0xff]
      %v258 = vld [vmem:[%s2 + $0x120] sm:$0xff]
      %v259 = vld [vmem:[%s2 + $0x128] sm:$0xff]
      %v260 = vld [vmem:[%s2 + $0x130] sm:$0xff]
      %v261 = vld [vmem:[%s2 + $0x138] sm:$0xff]
      %v262 = vld [vmem:[%s2 + $0x140] sm:$0xff]
      %v263 = vld [vmem:[%s2 + $0x148] sm:$0xff]
      %v264 = vld [vmem:[%s2 + $0x150] sm:$0xff]
      %v265 = vld [vmem:[%s2 + $0x158] sm:$0xff]
      %v266 = vld [vmem:[%s2 + $0x160] sm:$0xff]
      %v267 = vld [vmem:[%s2 + $0x168] sm:$0xff]
      %v268 = vld [vmem:[%s2 + $0x170] sm:$0xff]
      %v269 = vld [vmem:[%s2 + $0x178] sm:$0xff]
      %v270 = vld [vmem:[%s2 + $0x180] sm:$0xff]
      %v271 = vld [vmem:[%s2 + $0x188] sm:$0xff]
      %v272 = vld [vmem:[%s2 + $0x190] sm:$0xff]
      %v273 = vld [vmem:[%s2 + $0x198] sm:$0xff]
      %v274 = vld [vmem:[%s2 + $0x1a0] sm:$0xff]
      %v275 = vld [vmem:[%s2 + $0x1a8] sm:$0xff]
      %v276 = vld [vmem:[%s2 + $0x1b0] sm:$0xff]
      %v277 = vld [vmem:[%s2 + $0x1b8] sm:$0xff]
      %v278 = vld [vmem:[%s2 + $0x1c0] sm:$0xff]
      %v279 = vld [vmem:[%s2 + $0x1c8] sm:$0xff]
      %v280 = vld [vmem:[%s2 + $0x1d0] sm:$0xff]
      %v281 = vld [vmem:[%s2 + $0x1d8] sm:$0xff]
      %v282 = vld [vmem:[%s2 + $0x1e0] sm:$0xff]
      %v283 = vld [vmem:[%s2 + $0x1e8] sm:$0xff]
      %v284 = vld [vmem:[%s2 + $0x1f0] sm:$0xff]
      %v285 = vld [vmem:[%s2 + $0x1f8] sm:$0xff]
      %v286 = vld [vmem:[%s2 + $0x200] sm:$0xff]
      %v287 = vld [vmem:[%s2 + $0x208] sm:$0xff]
      %v288 = vld [vmem:[%s2 + $0x210] sm:$0xff]
      %v289 = vld [vmem:[%s2 + $0x218] sm:$0xff]
      %v290 = vld [vmem:[%s2 + $0x220] sm:$0xff]
      %v291 = vld [vmem:[%s2 + $0x228] sm:$0xff]
      %v292 = vld [vmem:[%s2 + $0x230] sm:$0xff]
      %v293 = vld [vmem:[%s2 + $0x238] sm:$0xff]
      %v294 = vld [vmem:[%s2 + $0x240] sm:$0xff]
      %v295 = vld [vmem:[%s2 + $0x248] sm:$0xff]
      %v296 = vld [vmem:[%s2 + $0x250] sm:$0xff]
      %v297 = vld [vmem:[%s2 + $0x258] sm:$0xff]
      %v298 = vld [vmem:[%s2 + $0x260] sm:$0xff]
      %v299 = vld [vmem:[%s2 + $0x268] sm:$0xff]
      %v300 = vld [vmem:[%s2 + $0x270] sm:$0xff]
      %v301 = vld [vmem:[%s2 + $0x278] sm:$0xff]
      %v302 = vld [vmem:[%s2 + $0x280] sm:$0xff]
      %v303 = vld [vmem:[%s2 + $0x288] sm:$0xff]
      %v304 = vld [vmem:[%s2 + $0x290] sm:$0xff]
      %v305 = vld [vmem:[%s2 + $0x298] sm:$0xff]
      %v306 = vld [vmem:[%s2 + $0x2a0] sm:$0xff]
      %v307 = vld [vmem:[%s2 + $0x2a8] sm:$0xff]
      %v308 = vld [vmem:[%s2 + $0x2b0] sm:$0xff]
      %v309 = vld [vmem:[%s2 + $0x2b8] sm:$0xff]
      %v310 = vld [vmem:[%s2 + $0x2c0] sm:$0xff]
      %v311 = vld [vmem:[%s2 + $0x2c8] sm:$0xff]
      %v312 = vld [vmem:[%s2 + $0x2d0] sm:$0xff]
      %v313 = vld [vmem:[%s2 + $0x2d8] sm:$0xff]
      %v314 = vld [vmem:[%s2 + $0x2e0] sm:$0xff]
      %v315 = vld [vmem:[%s2 + $0x2e8] sm:$0xff]
      %v316 = vld [vmem:[%s2 + $0x2f0] sm:$0xff]
      %v317 = vld [vmem:[%s2 + $0x2f8] sm:$0xff]
      %v318 = vld [vmem:[%s2 + $0x300] sm:$0xff]
      %v319 = vld [vmem:[%s2 + $0x308] sm:$0xff]
      %v320 = vld [vmem:[%s2 + $0x310] sm:$0xff]
      %v321 = vld [vmem:[%s2 + $0x318] sm:$0xff]
      %v322 = vld [vmem:[%s2 + $0x320] sm:$0xff]
      %v323 = vld [vmem:[%s2 + $0x328] sm:$0xff]
      %v324 = vld [vmem:[%s2 + $0x330] sm:$0xff]
      %v325 = vld [vmem:[%s2 + $0x338] sm:$0xff]
      %v326 = vld [vmem:[%s2 + $0x340] sm:$0xff]
      %v327 = vld [vmem:[%s2 + $0x348] sm:$0xff]
      %v328 = vld [vmem:[%s2 + $0x350] sm:$0xff]
      %v329 = vld [vmem:[%s2 + $0x358] sm:$0xff]
      %v330 = vld [vmem:[%s2 + $0x360] sm:$0xff]
      %v331 = vld [vmem:[%s2 + $0x368] sm:$0xff]
      %v332 = vld [vmem:[%s2 + $0x370] sm:$0xff]
      %v333 = vld [vmem:[%s2 + $0x378] sm:$0xff]
      %v334 = vld [vmem:[%s2 + $0x380] sm:$0xff]
      %v335 = vld [vmem:[%s2 + $0x388] sm:$0xff]
      %v336 = vld [vmem:[%s2 + $0x390] sm:$0xff]
      %v337 = vld [vmem:[%s2 + $0x398] sm:$0xff]
      %v338 = vld [vmem:[%s2 + $0x3a0] sm:$0xff]
      %v339 = vld [vmem:[%s2 + $0x3a8] sm:$0xff]
      %v340 = vld [vmem:[%s2 + $0x3b0] sm:$0xff]
      %v341 = vld [vmem:[%s2 + $0x3b8] sm:$0xff]
      %v342 = vld [vmem:[%s2 + $0x3c0] sm:$0xff]
      %v343 = vld [vmem:[%s2 + $0x3c8] sm:$0xff]
      %v344 = vld [vmem:[%s2 + $0x3d0] sm:$0xff]
      %v345 = vld [vmem:[%s2 + $0x3d8] sm:$0xff]
      %v346 = vld [vmem:[%s2 + $0x3e0] sm:$0xff]
      %v347 = vld [vmem:[%s2 + $0x3e8] sm:$0xff]
      %v348 = vld [vmem:[%s2 + $0x3f0] sm:$0xff]
      %v349 = vld [vmem:[%s2 + $0x3f8] sm:$0xff]
      %v350 = vld [vmem:[%s2 + $0x400] sm:$0xff]
      %v351 = vld [vmem:[%s2 + $0x408] sm:$0xff]
      %v352 = vld [vmem:[%s2 + $0x410] sm:$0xff]
      %v353 = vld [vmem:[%s2 + $0x418] sm:$0xff]
      %v354 = vld [vmem:[%s2 + $0x420] sm:$0xff]
      %v355 = vld [vmem:[%s2 + $0x428] sm:$0xff]
      %v356 = vld [vmem:[%s2 + $0x430] sm:$0xff]
      %v357 = vld [vmem:[%s2 + $0x438] sm:$0xff]
      %v358 = vld [vmem:[%s2 + $0x440] sm:$0xff]
      %v359 = vld [vmem:[%s2 + $0x448] sm:$0xff]
      %v360 = vld [vmem:[%s2 + $0x450] sm:$0xff]
      %v361 = vld [vmem:[%s2 + $0x458] sm:$0xff]
      %v362 = vld [vmem:[%s2 + $0x460] sm:$0xff]
      %v363 = vld [vmem:[%s2 + $0x468] sm:$0xff]
      %v364 = vld [vmem:[%s2 + $0x470] sm:$0xff]
      %v365 = vld [vmem:[%s2 + $0x478] sm:$0xff]
      %v366 = vld [vmem:[%s2 + $0x480] sm:$0xff]
      %v367 = vld [vmem:[%s2 + $0x488] sm:$0xff]
      %v368 = vld [vmem:[%s2 + $0x490] sm:$0xff]
      %v369 = vld [vmem:[%s2 + $0x498] sm:$0xff]
      %v370 = vld [vmem:[%s2 + $0x4a0] sm:$0xff]
      %v371 = vld [vmem:[%s2 + $0x4a8] sm:$0xff]
      %v372 = vld [vmem:[%s2 + $0x4b0] sm:$0xff]
      %v373 = vld [vmem:[%s2 + $0x4b8] sm:$0xff]
      %v374 = vld [vmem:[%s2 + $0x4c0] sm:$0xff]
      %v375 = vld [vmem:[%s2 + $0x4c8] sm:$0xff]
      %v376 = vld [vmem:[%s2 + $0x4d0] sm:$0xff]
      %v377 = vld [vmem:[%s2 + $0x4d8] sm:$0xff]
      %v378 = vld [vmem:[%s2 + $0x4e0] sm:$0xff]
      %v379 = vld [vmem:[%s2 + $0x4e8] sm:$0xff]
      %v380 = vld [vmem:[%s2 + $0x4f0] sm:$0xff]
      %v381 = vld [vmem:[%s2 + $0x4f8] sm:$0xff]
      %v382 = vld [vmem:[%s2 + $0x500] sm:$0xff]
      %v383 = vld [vmem:[%s2 + $0x508] sm:$0xff]
      %v384 = vld [vmem:[%s2 + $0x510] sm:$0xff]
      %v385 = vld [vmem:[%s2 + $0x518] sm:$0xff]
      %v386 = vld [vmem:[%s2 + $0x520] sm:$0xff]
      %v387 = vld [vmem:[%s2 + $0x528] sm:$0xff]
      %v388 = vld [vmem:[%s2 + $0x530] sm:$0xff]
      %v389 = vld [vmem:[%s2 + $0x538] sm:$0xff]
      %v390 = vld [vmem:[%s2 + $0x540] sm:$0xff]
      %v391 = vld [vmem:[%s2 + $0x548] sm:$0xff]
      %v392 = vld [vmem:[%s2 + $0x550] sm:$0xff]
      %v393 = vld [vmem:[%s2 + $0x558] sm:$0xff]
      %v394 = vld [vmem:[%s2 + $0x560] sm:$0xff]
      %v395 = vld [vmem:[%s2 + $0x568] sm:$0xff]
      %v396 = vld [vmem:[%s2 + $0x570] sm:$0xff]
      %v397 = vld [vmem:[%s2 + $0x578] sm:$0xff]
      %v398 = vld [vmem:[%s2 + $0x580] sm:$0xff]
      %v399 = vld [vmem:[%s2 + $0x588] sm:$0xff]
      %v400 = vld [vmem:[%s2 + $0x590] sm:$0xff]
      %v401 = vld [vmem:[%s2 + $0x598] sm:$0xff]
      %v402 = vld [vmem:[%s2 + $0x5a0] sm:$0xff]
      %v403 = vld [vmem:[%s2 + $0x5a8] sm:$0xff]
      %v404 = vld [vmem:[%s2 + $0x5b0] sm:$0xff]
      %v405 = vld [vmem:[%s2 + $0x5b8] sm:$0xff]
      %v406 = vld [vmem:[%s2 + $0x5c0] sm:$0xff]
      %v407 = vld [vmem:[%s2 + $0x5c8] sm:$0xff]
      %v408 = vld [vmem:[%s2 + $0x5d0] sm:$0xff]
      %v409 = vld [vmem:[%s2 + $0x5d8] sm:$0xff]
      %v410 = vld [vmem:[%s2 + $0x5e0] sm:$0xff]
      %v411 = vld [vmem:[%s2 + $0x5e8] sm:$0xff]
      %v412 = vld [vmem:[%s2 + $0x5f0] sm:$0xff]
      %v413 = vld [vmem:[%s2 + $0x5f8] sm:$0xff]
      %v414 = vld [vmem:[%s2 + $0x600] sm:$0xff]
      %v415 = vld [vmem:[%s2 + $0x608] sm:$0xff]
      %v416 = vld [vmem:[%s2 + $0x610] sm:$0xff]
      %v417 = vld [vmem:[%s2 + $0x618] sm:$0xff]
      %v418 = vld [vmem:[%s2 + $0x620] sm:$0xff]
      %v419 = vld [vmem:[%s2 + $0x628] sm:$0xff]
      %v420 = vld [vmem:[%s2 + $0x630] sm:$0xff]
      %v421 = vld [vmem:[%s2 + $0x638] sm:$0xff]
      %v422 = vld [vmem:[%s2 + $0x640] sm:$0xff]
      %v423 = vld [vmem:[%s2 + $0x648] sm:$0xff]
      %v424 = vld [vmem:[%s2 + $0x650] sm:$0xff]
      %v425 = vld [vmem:[%s2 + $0x658] sm:$0xff]
      %v426 = vld [vmem:[%s2 + $0x660] sm:$0xff]
      %v427 = vld [vmem:[%s2 + $0x668] sm:$0xff]
      %v428 = vld [vmem:[%s2 + $0x670] sm:$0xff]
      %v429 = vld [vmem:[%s2 + $0x678] sm:$0xff]
      %v430 = vld [vmem:[%s2 + $0x680] sm:$0xff]
      %v431 = vld [vmem:[%s2 + $0x688] sm:$0xff]
      %v432 = vld [vmem:[%s2 + $0x690] sm:$0xff]
      %v433 = vld [vmem:[%s2 + $0x698] sm:$0xff]
      %v434 = vld [vmem:[%s2 + $0x6a0] sm:$0xff]
      %v435 = vld [vmem:[%s2 + $0x6a8] sm:$0xff]
      %v436 = vld [vmem:[%s2 + $0x6b0] sm:$0xff]
      %v437 = vld [vmem:[%s2 + $0x6b8] sm:$0xff]
      %v438 = vld [vmem:[%s2 + $0x6c0] sm:$0xff]
      %v439 = vld [vmem:[%s2 + $0x6c8] sm:$0xff]
      %v440 = vld [vmem:[%s2 + $0x6d0] sm:$0xff]
      %v441 = vld [vmem:[%s2 + $0x6d8] sm:$0xff]
      %v442 = vld [vmem:[%s2 + $0x6e0] sm:$0xff]
      %v443 = vld [vmem:[%s2 + $0x6e8] sm:$0xff]
      %v444 = vld [vmem:[%s2 + $0x6f0] sm:$0xff]
      %v445 = vld [vmem:[%s2 + $0x6f8] sm:$0xff]
      %v446 = vld [vmem:[%s2 + $0x700] sm:$0xff]
      %v447 = vld [vmem:[%s2 + $0x708] sm:$0xff]
      %v448 = vld [vmem:[%s2 + $0x710] sm:$0xff]
      %v449 = vld [vmem:[%s2 + $0x718] sm:$0xff]
      %v450 = vld [vmem:[%s2 + $0x720] sm:$0xff]
      %v451 = vld [vmem:[%s2 + $0x728] sm:$0xff]
      %v452 = vld [vmem:[%s2 + $0x730] sm:$0xff]
      %v453 = vld [vmem:[%s2 + $0x738] sm:$0xff]
      %v454 = vld [vmem:[%s2 + $0x740] sm:$0xff]
      %v455 = vld [vmem:[%s2 + $0x748] sm:$0xff]
      %v456 = vld [vmem:[%s2 + $0x750] sm:$0xff]
      %v457 = vld [vmem:[%s2 + $0x758] sm:$0xff]
      %v458 = vld [vmem:[%s2 + $0x760] sm:$0xff]
      %v459 = vld [vmem:[%s2 + $0x768] sm:$0xff]
      %v460 = vld [vmem:[%s2 + $0x770] sm:$0xff]
      %v461 = vld [vmem:[%s2 + $0x778] sm:$0xff]
      %v462 = vld [vmem:[%s2 + $0x780] sm:$0xff]
      %v463 = vld [vmem:[%s2 + $0x788] sm:$0xff]
      %v464 = vld [vmem:[%s2 + $0x790] sm:$0xff]
      %v465 = vld [vmem:[%s2 + $0x798] sm:$0xff]
      %v466 = vld [vmem:[%s2 + $0x7a0] sm:$0xff]
      %v467 = vld [vmem:[%s2 + $0x7a8] sm:$0xff]
      %v468 = vld [vmem:[%s2 + $0x7b0] sm:$0xff]
      %v469 = vld [vmem:[%s2 + $0x7b8] sm:$0xff]
      %v470 = vld [vmem:[%s2 + $0x7c0] sm:$0xff]
      %v471 = vld [vmem:[%s2 + $0x7c8] sm:$0xff]
      %v472 = vld [vmem:[%s2 + $0x7d0] sm:$0xff]
      %v473 = vld [vmem:[%s2 + $0x7d8] sm:$0xff]
      %v474 = vld [vmem:[%s2 + $0x7e0] sm:$0xff]
      %v475 = vld [vmem:[%s2 + $0x7e8] sm:$0xff]
      %v476 = vld [vmem:[%s2 + $0x7f0] sm:$0xff]
      %v477 = vld [vmem:[%s2 + $0x7f8] sm:$0xff]
      %v478 = vld [vmem:[%s2 + $0x800] sm:$0xff]
      %v479 = vld [vmem:[%s2 + $0x808] sm:$0xff]
      %v480 = vld [vmem:[%s2 + $0x810] sm:$0xff]
      %v481 = vld [vmem:[%s2 + $0x818] sm:$0xff]
      %v482 = vld [vmem:[%s2 + $0x820] sm:$0xff]
      %v483 = vld [vmem:[%s2 + $0x828] sm:$0xff]
      %v484 = vld [vmem:[%s2 + $0x830] sm:$0xff]
      %v485 = vld [vmem:[%s2 + $0x838] sm:$0xff]
      %v486 = vld [vmem:[%s2 + $0x840] sm:$0xff]
      %v487 = vld [vmem:[%s2 + $0x848] sm:$0xff]
      %v488 = vld [vmem:[%s2 + $0x850] sm:$0xff]
      %v489 = vld [vmem:[%s2 + $0x858] sm:$0xff]
      %v490 = vld [vmem:[%s2 + $0x860] sm:$0xff]
      %v491 = vld [vmem:[%s2 + $0x868] sm:$0xff]
      %v492 = vld [vmem:[%s2 + $0x870] sm:$0xff]
      %v493 = vld [vmem:[%s2 + $0x878] sm:$0xff]
      %v494 = vld [vmem:[%s2 + $0x880] sm:$0xff]
      %v495 = vld [vmem:[%s2 + $0x888] sm:$0xff]
      %v496 = vld [vmem:[%s2 + $0x890] sm:$0xff]
      %v497 = vld [vmem:[%s2 + $0x898] sm:$0xff]
      %v498 = vld [vmem:[%s2 + $0x8a0] sm:$0xff]
      %v499 = vld [vmem:[%s2 + $0x8a8] sm:$0xff]
      %v500 = vld [vmem:[%s2 + $0x8b0] sm:$0xff]
      %v501 = vld [vmem:[%s2 + $0x8b8] sm:$0xff]
      %v502 = vld [vmem:[%s2 + $0x8c0] sm:$0xff]
      %v503 = vld [vmem:[%s2 + $0x8c8] sm:$0xff]
      %v504 = vld [vmem:[%s2 + $0x8d0] sm:$0xff]
      %v505 = vld [vmem:[%s2 + $0x8d8] sm:$0xff]
      %v506 = vld [vmem:[%s2 + $0x8e0] sm:$0xff]
      %v507 = vld [vmem:[%s2 + $0x8e8] sm:$0xff]
      %v508 = vld [vmem:[%s2 + $0x8f0] sm:$0xff]
      %v509 = vld [vmem:[%s2 + $0x8f8] sm:$0xff]
      %v510 = vld [vmem:[%s2 + $0x900] sm:$0xff]
      %v511 = vld [vmem:[%s2 + $0x908] sm:$0xff]
      %v512 = vld [vmem:[%s2 + $0x910] sm:$0xff]
      %v513 = vld [vmem:[%s2 + $0x918] sm:$0xff]
      %v514 = vld [vmem:[%s2 + $0x920] sm:$0xff]
      %v515 = vld [vmem:[%s2 + $0x928] sm:$0xff]
      %v516 = vld [vmem:[%s2 + $0x930] sm:$0xff]
      %v517 = vld [vmem:[%s2 + $0x938] sm:$0xff]
      %v518 = vld [vmem:[%s2 + $0x940] sm:$0xff]
      %v519 = vld [vmem:[%s2 + $0x948] sm:$0xff]
      %v520 = vld [vmem:[%s2 + $0x950] sm:$0xff]
      %v521 = vld [vmem:[%s2 + $0x958] sm:$0xff]
      %v522 = vld [vmem:[%s2 + $0x960] sm:$0xff]
      %v523 = vld [vmem:[%s2 + $0x968] sm:$0xff]
      %v524 = vld [vmem:[%s2 + $0x970] sm:$0xff]
      %v525 = vld [vmem:[%s2 + $0x978] sm:$0xff]
      %v526 = vld [vmem:[%s2 + $0x980] sm:$0xff]
      %v527 = vld [vmem:[%s2 + $0x988] sm:$0xff]
      %v528 = vld [vmem:[%s2 + $0x990] sm:$0xff]
      %v529 = vld [vmem:[%s2 + $0x998] sm:$0xff]
      %v530 = vld [vmem:[%s2 + $0x9a0] sm:$0xff]
      %v531 = vld [vmem:[%s2 + $0x9a8] sm:$0xff]
      %v532 = vld [vmem:[%s2 + $0x9b0] sm:$0xff]
      %v533 = vld [vmem:[%s2 + $0x9b8] sm:$0xff]
      %v534 = vld [vmem:[%s2 + $0x9c0] sm:$0xff]
      %v535 = vld [vmem:[%s2 + $0x9c8] sm:$0xff]
      %v536 = vld [vmem:[%s2 + $0x9d0] sm:$0xff]
      %v537 = vld [vmem:[%s2 + $0x9d8] sm:$0xff]
      %v538 = vld [vmem:[%s2 + $0x9e0] sm:$0xff]
      %v539 = vld [vmem:[%s2 + $0x9e8] sm:$0xff]
      %v540 = vld [vmem:[%s2 + $0x9f0] sm:$0xff]
      %v541 = vld [vmem:[%s2 + $0x9f8] sm:$0xff]
      %v542 = vld [vmem:[%s2 + $0xa00] sm:$0xff]
      %v543 = vld [vmem:[%s2 + $0xa08] sm:$0xff]
      %v544 = vld [vmem:[%s2 + $0xa10] sm:$0xff]
      %v545 = vld [vmem:[%s2 + $0xa18] sm:$0xff]
      %v546 = vld [vmem:[%s2 + $0xa20] sm:$0xff]
      %v547 = vld [vmem:[%s2 + $0xa28] sm:$0xff]
      %v548 = vld [vmem:[%s2 + $0xa30] sm:$0xff]
      %v549 = vld [vmem:[%s2 + $0xa38] sm:$0xff]
      %v550 = vld [vmem:[%s2 + $0xa40] sm:$0xff]
      %v551 = vld [vmem:[%s2 + $0xa48] sm:$0xff]
      %v552 = vld [vmem:[%s2 + $0xa50] sm:$0xff]
      %v553 = vld [vmem:[%s2 + $0xa58] sm:$0xff]
      %v554 = vld [vmem:[%s2 + $0xa60] sm:$0xff]
      %v555 = vld [vmem:[%s2 + $0xa68] sm:$0xff]
      %v556 = vld [vmem:[%s2 + $0xa70] sm:$0xff]
      %v557 = vld [vmem:[%s2 + $0xa78] sm:$0xff]
      %v558 = vld [vmem:[%s2 + $0xa80] sm:$0xff]
      %v559 = vld [vmem:[%s2 + $0xa88] sm:$0xff]
      %v560 = vld [vmem:[%s2 + $0xa90] sm:$0xff]
      %v561 = vld [vmem:[%s2 + $0xa98] sm:$0xff]
      %v562 = vld [vmem:[%s2 + $0xaa0] sm:$0xff]
      %v563 = vld [vmem:[%s2 + $0xaa8] sm:$0xff]
      %v564 = vld [vmem:[%s2 + $0xab0] sm:$0xff]
      %v565 = vld [vmem:[%s2 + $0xab8] sm:$0xff]
      %v566 = vld [vmem:[%s2 + $0xac0] sm:$0xff]
      %v567 = vld [vmem:[%s2 + $0xac8] sm:$0xff]
      %v568 = vld [vmem:[%s2 + $0xad0] sm:$0xff]
      %v569 = vld [vmem:[%s2 + $0xad8] sm:$0xff]
      %v570 = vld [vmem:[%s2 + $0xae0] sm:$0xff]
      %v571 = vld [vmem:[%s2 + $0xae8] sm:$0xff]
      %v572 = vld [vmem:[%s2 + $0xaf0] sm:$0xff]
      %v573 = vld [vmem:[%s2 + $0xaf8] sm:$0xff]
      %v574 = vld [vmem:[%s2 + $0xb00] sm:$0xff]
      %v575 = vld [vmem:[%s2 + $0xb08] sm:$0xff]
      %v576 = vld [vmem:[%s2 + $0xb10] sm:$0xff]
      %v577 = vld [vmem:[%s2 + $0xb18] sm:$0xff]
      %v578 = vld [vmem:[%s2 + $0xb20] sm:$0xff]
      %v579 = vld [vmem:[%s2 + $0xb28] sm:$0xff]
      %v580 = vld [vmem:[%s2 + $0xb30] sm:$0xff]
      %v581 = vld [vmem:[%s2 + $0xb38] sm:$0xff]
      %v582 = vld [vmem:[%s2 + $0xb40] sm:$0xff]
      %v583 = vld [vmem:[%s2 + $0xb48] sm:$0xff]
      %v584 = vld [vmem:[%s2 + $0xb50] sm:$0xff]
      %v585 = vld [vmem:[%s2 + $0xb58] sm:$0xff]
      %v586 = vld [vmem:[%s2 + $0xb60] sm:$0xff]
      %v587 = vld [vmem:[%s2 + $0xb68] sm:$0xff]
      %v588 = vld [vmem:[%s2 + $0xb70] sm:$0xff]
      %v589 = vld [vmem:[%s2 + $0xb78] sm:$0xff]
      %v590 = vld [vmem:[%s2 + $0xb80] sm:$0xff]
      %v591 = vld [vmem:[%s2 + $0xb88] sm:$0xff]
      %v592 = vld [vmem:[%s2 + $0xb90] sm:$0xff]
      %v593 = vld [vmem:[%s2 + $0xb98] sm:$0xff]
      %v594 = vld [vmem:[%s2 + $0xba0] sm:$0xff]
      %v595 = vld [vmem:[%s2 + $0xba8] sm:$0xff]
      %v596 = vld [vmem:[%s2 + $0xbb0] sm:$0xff]
      %v597 = vld [vmem:[%s2 + $0xbb8] sm:$0xff]
      %v598 = vld [vmem:[%s2 + $0xbc0] sm:$0xff]
      %v599 = vld [vmem:[%s2 + $0xbc8] sm:$0xff]
      %v600 = vld [vmem:[%s2 + $0xbd0] sm:$0xff]
      %v601 = vld [vmem:[%s2 + $0xbd8] sm:$0xff]
      %v602 = vld [vmem:[%s2 + $0xbe0] sm:$0xff]
      %v603 = vld [vmem:[%s2 + $0xbe8] sm:$0xff]
      %v604 = vld [vmem:[%s2 + $0xbf0] sm:$0xff]
      %v605 = vld [vmem:[%s2 + $0xbf8] sm:$0xff]
      %v606 = vld [vmem:[%s2 + $0xc00] sm:$0xff]
      %v607 = vld [vmem:[%s2 + $0xc08] sm:$0xff]
      %v608 = vld [vmem:[%s2 + $0xc10] sm:$0xff]
      %v609 = vld [vmem:[%s2 + $0xc18] sm:$0xff]
      %v610 = vld [vmem:[%s2 + $0xc20] sm:$0xff]
      %v611 = vld [vmem:[%s2 + $0xc28] sm:$0xff]
      %v612 = vld [vmem:[%s2 + $0xc30] sm:$0xff]
      %v613 = vld [vmem:[%s2 + $0xc38] sm:$0xff]
      %v614 = vld [vmem:[%s2 + $0xc40] sm:$0xff]
      %v615 = vld [vmem:[%s2 + $0xc48] sm:$0xff]
      %v616 = vld [vmem:[%s2 + $0xc50] sm:$0xff]
      %v617 = vld [vmem:[%s2 + $0xc58] sm:$0xff]
      %v618 = vld [vmem:[%s2 + $0xc60] sm:$0xff]
      %v619 = vld [vmem:[%s2 + $0xc68] sm:$0xff]
      %v620 = vld [vmem:[%s2 + $0xc70] sm:$0xff]
      %v621 = vld [vmem:[%s2 + $0xc78] sm:$0xff]
      %v622 = vld [vmem:[%s2 + $0xc80] sm:$0xff]
      %v623 = vld [vmem:[%s2 + $0xc88] sm:$0xff]
      %v624 = vld [vmem:[%s2 + $0xc90] sm:$0xff]
      %v625 = vld [vmem:[%s2 + $0xc98] sm:$0xff]
      %v626 = vld [vmem:[%s2 + $0xca0] sm:$0xff]
      %v627 = vld [vmem:[%s2 + $0xca8] sm:$0xff]
      %v628 = vld [vmem:[%s2 + $0xcb0] sm:$0xff]
      %v629 = vld [vmem:[%s2 + $0xcb8] sm:$0xff]
      %v630 = vld [vmem:[%s2 + $0xcc0] sm:$0xff]
      %v631 = vld [vmem:[%s2 + $0xcc8] sm:$0xff]
      %v632 = vld [vmem:[%s2 + $0xcd0] sm:$0xff]
      %v633 = vld [vmem:[%s2 + $0xcd8] sm:$0xff]
      %v634 = vld [vmem:[%s2 + $0xce0] sm:$0xff]
      %v635 = vld [vmem:[%s2 + $0xce8] sm:$0xff]
      %v636 = vld [vmem:[%s2 + $0xcf0] sm:$0xff]
      %v637 = vld [vmem:[%s2 + $0xcf8] sm:$0xff]
      %v638 = vld [vmem:[%s2 + $0xd00] sm:$0xff]
      %v639 = vld [vmem:[%s2 + $0xd08] sm:$0xff]
      %v640 = vld [vmem:[%s2 + $0xd10] sm:$0xff]
      %v641 = vld [vmem:[%s2 + $0xd18] sm:$0xff]
      %v642 = vld [vmem:[%s2 + $0xd20] sm:$0xff]
      %v643 = vld [vmem:[%s2 + $0xd28] sm:$0xff]
      %v644 = vld [vmem:[%s2 + $0xd30] sm:$0xff]
      %v645 = vld [vmem:[%s2 + $0xd38] sm:$0xff]
      %v646 = vld [vmem:[%s2 + $0xd40] sm:$0xff]
      %v647 = vld [vmem:[%s2 + $0xd48] sm:$0xff]
      %v648 = vld [vmem:[%s2 + $0xd50] sm:$0xff]
      %v649 = vld [vmem:[%s2 + $0xd58] sm:$0xff]
      %v650 = vld [vmem:[%s2 + $0xd60] sm:$0xff]
      %v651 = vld [vmem:[%s2 + $0xd68] sm:$0xff]
      %v652 = vld [vmem:[%s2 + $0xd70] sm:$0xff]
      %v653 = vld [vmem:[%s2 + $0xd78] sm:$0xff]
      %v654 = vld [vmem:[%s2 + $0xd80] sm:$0xff]
      %v655 = vld [vmem:[%s2 + $0xd88] sm:$0xff]
      %v656 = vld [vmem:[%s2 + $0xd90] sm:$0xff]
      %v657 = vld [vmem:[%s2 + $0xd98] sm:$0xff]
      %v658 = vld [vmem:[%s2 + $0xda0] sm:$0xff]
      %v659 = vld [vmem:[%s2 + $0xda8] sm:$0xff]
      %v660 = vld [vmem:[%s2 + $0xdb0] sm:$0xff]
      %v661 = vld [vmem:[%s2 + $0xdb8] sm:$0xff]
      %v662 = vld [vmem:[%s2 + $0xdc0] sm:$0xff]
      %v663 = vld [vmem:[%s2 + $0xdc8] sm:$0xff]
      %v664 = vld [vmem:[%s2 + $0xdd0] sm:$0xff]
      %v665 = vld [vmem:[%s2 + $0xdd8] sm:$0xff]
      %v666 = vld [vmem:[%s2 + $0xde0] sm:$0xff]
      %v667 = vld [vmem:[%s2 + $0xde8] sm:$0xff]
      %v668 = vld [vmem:[%s2 + $0xdf0] sm:$0xff]
      %v669 = vld [vmem:[%s2 + $0xdf8] sm:$0xff]
      %v670 = vld [vmem:[%s2 + $0xe00] sm:$0xff]
      %v671 = vld [vmem:[%s2 + $0xe08] sm:$0xff]
      %v672 = vld [vmem:[%s2 + $0xe10] sm:$0xff]
      %v673 = vld [vmem:[%s2 + $0xe18] sm:$0xff]
      %v674 = vld [vmem:[%s2 + $0xe20] sm:$0xff]
      %v675 = vld [vmem:[%s2 + $0xe28] sm:$0xff]
      %v676 = vld [vmem:[%s2 + $0xe30] sm:$0xff]
      %v677 = vld [vmem:[%s2 + $0xe38] sm:$0xff]
      %v678 = vld [vmem:[%s2 + $0xe40] sm:$0xff]
      %v679 = vld [vmem:[%s2 + $0xe48] sm:$0xff]
      %v680 = vld [vmem:[%s2 + $0xe50] sm:$0xff]
      %v681 = vld [vmem:[%s2 + $0xe58] sm:$0xff]
      %v682 = vld [vmem:[%s2 + $0xe60] sm:$0xff]
      %v683 = vld [vmem:[%s2 + $0xe68] sm:$0xff]
      %v684 = vld [vmem:[%s2 + $0xe70] sm:$0xff]
      %v685 = vld [vmem:[%s2 + $0xe78] sm:$0xff]
      %v686 = vld [vmem:[%s2 + $0xe80] sm:$0xff]
      %v687 = vld [vmem:[%s2 + $0xe88] sm:$0xff]
      %v688 = vld [vmem:[%s2 + $0xe90] sm:$0xff]
      %v689 = vld [vmem:[%s2 + $0xe98] sm:$0xff]
      %v690 = vld [vmem:[%s2 + $0xea0] sm:$0xff]
      %v691 = vld [vmem:[%s2 + $0xea8] sm:$0xff]
      %v692 = vld [vmem:[%s2 + $0xeb0] sm:$0xff]
      %v693 = vld [vmem:[%s2 + $0xeb8] sm:$0xff]
      %v694 = vld [vmem:[%s2 + $0xec0] sm:$0xff]
      %v695 = vld [vmem:[%s2 + $0xec8] sm:$0xff]
      %v696 = vld [vmem:[%s2 + $0xed0] sm:$0xff]
      %v697 = vld [vmem:[%s2 + $0xed8] sm:$0xff]
      %v698 = vld [vmem:[%s2 + $0xee0] sm:$0xff]
      %v699 = vld [vmem:[%s2 + $0xee8] sm:$0xff]
      %v700 = vld [vmem:[%s2 + $0xef0] sm:$0xff]
      %v701 = vld [vmem:[%s2 + $0xef8] sm:$0xff]
      %v702 = vld [vmem:[%s2 + $0xf00] sm:$0xff]
      %v703 = vld [vmem:[%s2 + $0xf08] sm:$0xff]
      %v704 = vld [vmem:[%s2 + $0xf10] sm:$0xff]
      %v705 = vld [vmem:[%s2 + $0xf18] sm:$0xff]
      %v706 = vld [vmem:[%s2 + $0xf20] sm:$0xff]
      %v707 = vld [vmem:[%s2 + $0xf28] sm:$0xff]
      %v708 = vld [vmem:[%s2 + $0xf30] sm:$0xff]
      %v709 = vld [vmem:[%s2 + $0xf38] sm:$0xff]
      %v710 = vld [vmem:[%s2 + $0xf40] sm:$0xff]
      %v711 = vld [vmem:[%s2 + $0xf48] sm:$0xff]
      %v712 = vld [vmem:[%s2 + $0xf50] sm:$0xff]
      %v713 = vld [vmem:[%s2 + $0xf58] sm:$0xff]
      %v714 = vld [vmem:[%s2 + $0xf60] sm:$0xff]
      %v715 = vld [vmem:[%s2 + $0xf68] sm:$0xff]
      %v716 = vld [vmem:[%s2 + $0xf70] sm:$0xff]
      %v717 = vld [vmem:[%s2 + $0xf78] sm:$0xff]
      %v718 = vld [vmem:[%s2 + $0xf80] sm:$0xff]
      %v719 = vld [vmem:[%s2 + $0xf88] sm:$0xff]
      %v720 = vld [vmem:[%s2 + $0xf90] sm:$0xff]
      %v721 = vld [vmem:[%s2 + $0xf98] sm:$0xff]
      %v722 = vld [vmem:[%s2 + $0xfa0] sm:$0xff]
      %v723 = vld [vmem:[%s2 + $0xfa8] sm:$0xff]
      %v724 = vld [vmem:[%s2 + $0xfb0] sm:$0xff]
      %v725 = vld [vmem:[%s2 + $0xfb8] sm:$0xff]
      %v726 = vld [vmem:[%s2 + $0xfc0] sm:$0xff]
      %v727 = vld [vmem:[%s2 + $0xfc8] sm:$0xff]
      %v728 = vld [vmem:[%s2 + $0xfd0] sm:$0xff]
      %v729 = vld [vmem:[%s2 + $0xfd8] sm:$0xff]
      %v730 = vld [vmem:[%s2 + $0xfe0] sm:$0xff]
      %v731 = vld [vmem:[%s2 + $0xfe8] sm:$0xff]
      %v732 = vld [vmem:[%s2 + $0xff0] sm:$0xff]
      %v733 = vld [vmem:[%s2 + $0xff8] sm:$0xff]
      %v734 = vld [vmem:[%s2 + $0x1000] sm:$0xff]
      %v735 = vld [vmem:[%s2 + $0x1008] sm:$0xff]
      %v736 = vld [vmem:[%s2 + $0x1010] sm:$0xff]
      %v737 = vld [vmem:[%s2 + $0x1018] sm:$0xff]
      %v738 = vld [vmem:[%s2 + $0x1020] sm:$0xff]
      %v739 = vld [vmem:[%s2 + $0x1028] sm:$0xff]
      %v740 = vld [vmem:[%s2 + $0x1030] sm:$0xff]
      %v741 = vld [vmem:[%s2 + $0x1038] sm:$0xff]
      %v742 = vld [vmem:[%s2 + $0x1040] sm:$0xff]
      %v743 = vld [vmem:[%s2 + $0x1048] sm:$0xff]
      %v744 = vld [vmem:[%s2 + $0x1050] sm:$0xff]
      %v745 = vld [vmem:[%s2 + $0x1058] sm:$0xff]
      %v746 = vld [vmem:[%s2 + $0x1060] sm:$0xff]
      %v747 = vld [vmem:[%s2 + $0x1068] sm:$0xff]
      %v748 = vld [vmem:[%s2 + $0x1070] sm:$0xff]
      %v749 = vld [vmem:[%s2 + $0x1078] sm:$0xff]
      %v750 = vld [vmem:[%s2 + $0x1080] sm:$0xff]
      %v751 = vld [vmem:[%s2 + $0x1088] sm:$0xff]
      %v752 = vld [vmem:[%s2 + $0x1090] sm:$0xff]
      %v753 = vld [vmem:[%s2 + $0x1098] sm:$0xff]
      %v754 = vld [vmem:[%s2 + $0x10a0] sm:$0xff]
      %v755 = vld [vmem:[%s2 + $0x10a8] sm:$0xff]
      %v756 = vld [vmem:[%s2 + $0x10b0] sm:$0xff]
      %v757 = vld [vmem:[%s2 + $0x10b8] sm:$0xff]
      %v758 = vld [vmem:[%s2 + $0x10c0] sm:$0xff]
      %v759 = vld [vmem:[%s2 + $0x10c8] sm:$0xff]
      %v760 = vld [vmem:[%s2 + $0x10d0] sm:$0xff]
      %v761 = vld [vmem:[%s2 + $0x10d8] sm:$0xff]
      %v762 = vld [vmem:[%s2 + $0x10e0] sm:$0xff]
      %v763 = vld [vmem:[%s2 + $0x10e8] sm:$0xff]
      %v764 = vld [vmem:[%s2 + $0x10f0] sm:$0xff]
      %v765 = vld [vmem:[%s2 + $0x10f8] sm:$0xff]
      %v766 = vld [vmem:[%s2 + $0x1100] sm:$0xff]
      %v767 = vld [vmem:[%s2 + $0x1108] sm:$0xff]
      %v768 = vld [vmem:[%s2 + $0x1110] sm:$0xff]
      %v769 = vld [vmem:[%s2 + $0x1118] sm:$0xff]
      %v770 = vld [vmem:[%s2 + $0x1120] sm:$0xff]
      %v771 = vld [vmem:[%s2 + $0x1128] sm:$0xff]
      %v772 = vld [vmem:[%s2 + $0x1130] sm:$0xff]
      %v773 = vld [vmem:[%s2 + $0x1138] sm:$0xff]
      %v774 = vld [vmem:[%s2 + $0x1140] sm:$0xff]
      %v775 = vld [vmem:[%s2 + $0x1148] sm:$0xff]
      %v776 = vld [vmem:[%s2 + $0x1150] sm:$0xff]
      %v777 = vld [vmem:[%s2 + $0x1158] sm:$0xff]
      %v778 = vld [vmem:[%s2 + $0x1160] sm:$0xff]
      %v779 = vld [vmem:[%s2 + $0x1168] sm:$0xff]
      %v780 = vld [vmem:[%s2 + $0x1170] sm:$0xff]
      %v781 = vld [vmem:[%s2 + $0x1178] sm:$0xff]
      %v782 = vld [vmem:[%s2 + $0x1180] sm:$0xff]
      %v783 = vld [vmem:[%s2 + $0x1188] sm:$0xff]
      %v784 = vld [vmem:[%s2 + $0x1190] sm:$0xff]
      %v785 = vld [vmem:[%s2 + $0x1198] sm:$0xff]
      %v786 = vld [vmem:[%s2 + $0x11a0] sm:$0xff]
      %v787 = vld [vmem:[%s2 + $0x11a8] sm:$0xff]
      %v788 = vld [vmem:[%s2 + $0x11b0] sm:$0xff]
      %v789 = vld [vmem:[%s2 + $0x11b8] sm:$0xff]
      %v790 = vld [vmem:[%s2 + $0x11c0] sm:$0xff]
      %v791 = vld [vmem:[%s2 + $0x11c8] sm:$0xff]
      %v792 = vld [vmem:[%s2 + $0x11d0] sm:$0xff]
      %v793 = vld [vmem:[%s2 + $0x11d8] sm:$0xff]
      %v794 = vld [vmem:[%s2 + $0x11e0] sm:$0xff]
      %v795 = vld [vmem:[%s2 + $0x11e8] sm:$0xff]
      %v796 = vld [vmem:[%s2 + $0x11f0] sm:$0xff]
      %v797 = vld [vmem:[%s2 + $0x11f8] sm:$0xff]
      %v798 = vld [vmem:[%s2 + $0x1200] sm:$0xff]
      %v799 = vld [vmem:[%s2 + $0x1208] sm:$0xff]
      %v800 = vld [vmem:[%s2 + $0x1210] sm:$0xff]
      %v801 = vld [vmem:[%s2 + $0x1218] sm:$0xff]
      %v802 = vld [vmem:[%s2 + $0x1220] sm:$0xff]
      %v803 = vld [vmem:[%s2 + $0x1228] sm:$0xff]
      %v804 = vld [vmem:[%s2 + $0x1230] sm:$0xff]
      %v805 = vld [vmem:[%s2 + $0x1238] sm:$0xff]
      %v806 = vld [vmem:[%s2 + $0x1240] sm:$0xff]
      %v807 = vld [vmem:[%s2 + $0x1248] sm:$0xff]
      %v808 = vld [vmem:[%s2 + $0x1250] sm:$0xff]
      %v809 = vld [vmem:[%s2 + $0x1258] sm:$0xff]
      %v810 = vld [vmem:[%s2 + $0x1260] sm:$0xff]
      %v811 = vld [vmem:[%s2 + $0x1268] sm:$0xff]
      %v812 = vld [vmem:[%s2 + $0x1270] sm:$0xff]
      %v813 = vld [vmem:[%s2 + $0x1278] sm:$0xff]
      %v814 = vld [vmem:[%s2 + $0x1280] sm:$0xff]
      %v815 = vld [vmem:[%s2 + $0x1288] sm:$0xff]
      %v816 = vld [vmem:[%s2 + $0x1290] sm:$0xff]
      %v817 = vld [vmem:[%s2 + $0x1298] sm:$0xff]
      %v818 = vld [vmem:[%s2 + $0x12a0] sm:$0xff]
      %v819 = vld [vmem:[%s2 + $0x12a8] sm:$0xff]
      %v820 = vld [vmem:[%s2 + $0x12b0] sm:$0xff]
      %v821 = vld [vmem:[%s2 + $0x12b8] sm:$0xff]
      %v822 = vld [vmem:[%s2 + $0x12c0] sm:$0xff]
      %v823 = vld [vmem:[%s2 + $0x12c8] sm:$0xff]
      %v824 = vld [vmem:[%s2 + $0x12d0] sm:$0xff]
      %v825 = vld [vmem:[%s2 + $0x12d8] sm:$0xff]
      %v826 = vld [vmem:[%s2 + $0x12e0] sm:$0xff]
      %v827 = vld [vmem:[%s2 + $0x12e8] sm:$0xff]
      %v828 = vld [vmem:[%s2 + $0x12f0] sm:$0xff]
      %v829 = vld [vmem:[%s2 + $0x12f8] sm:$0xff]
      %v830 = vld [vmem:[%s2 + $0x1300] sm:$0xff]
      %v831 = vld [vmem:[%s2 + $0x1308] sm:$0xff]
      %v832 = vld [vmem:[%s2 + $0x1310] sm:$0xff]
      %v833 = vld [vmem:[%s2 + $0x1318] sm:$0xff]
      %v834 = vld [vmem:[%s2 + $0x1320] sm:$0xff]
      %v835 = vld [vmem:[%s2 + $0x1328] sm:$0xff]
      %v836 = vld [vmem:[%s2 + $0x1330] sm:$0xff]
      %v837 = vld [vmem:[%s2 + $0x1338] sm:$0xff]
      %v838 = vld [vmem:[%s2 + $0x1340] sm:$0xff]
      %v839 = vld [vmem:[%s2 + $0x1348] sm:$0xff]
      %v840 = vld [vmem:[%s2 + $0x1350] sm:$0xff]
      %v841 = vld [vmem:[%s2 + $0x1358] sm:$0xff]
      %v842 = vld [vmem:[%s2 + $0x1360] sm:$0xff]
      %v843 = vld [vmem:[%s2 + $0x1368] sm:$0xff]
      %v844 = vld [vmem:[%s2 + $0x1370] sm:$0xff]
      %v845 = vld [vmem:[%s2 + $0x1378] sm:$0xff]
      %v846 = vld [vmem:[%s2 + $0x1380] sm:$0xff]
      %v847 = vld [vmem:[%s2 + $0x1388] sm:$0xff]
      %v848 = vld [vmem:[%s2 + $0x1390] sm:$0xff]
      %v849 = vld [vmem:[%s2 + $0x1398] sm:$0xff]
      %v850 = vld [vmem:[%s2 + $0x13a0] sm:$0xff]
      %v851 = vld [vmem:[%s2 + $0x13a8] sm:$0xff]
      %v852 = vld [vmem:[%s2 + $0x13b0] sm:$0xff]
      %v853 = vld [vmem:[%s2 + $0x13b8] sm:$0xff]
      %v854 = vld [vmem:[%s2 + $0x13c0] sm:$0xff]
      %v855 = vld [vmem:[%s2 + $0x13c8] sm:$0xff]
      %v856 = vld [vmem:[%s2 + $0x13d0] sm:$0xff]
      %v857 = vld [vmem:[%s2 + $0x13d8] sm:$0xff]
      %v858 = vld [vmem:[%s2 + $0x13e0] sm:$0xff]
      %v859 = vld [vmem:[%s2 + $0x13e8] sm:$0xff]
      %v860 = vld [vmem:[%s2 + $0x13f0] sm:$0xff]
      %v861 = vld [vmem:[%s2 + $0x13f8] sm:$0xff]
      %v862 = vld [vmem:[%s2 + $0x1400] sm:$0xff]
      %v863 = vld [vmem:[%s2 + $0x1408] sm:$0xff]
      %v864 = vld [vmem:[%s2 + $0x1410] sm:$0xff]
      %v865 = vld [vmem:[%s2 + $0x1418] sm:$0xff]
      %v866 = vld [vmem:[%s2 + $0x1420] sm:$0xff]
      %v867 = vld [vmem:[%s2 + $0x1428] sm:$0xff]
      %v868 = vld [vmem:[%s2 + $0x1430] sm:$0xff]
      %v869 = vld [vmem:[%s2 + $0x1438] sm:$0xff]
      %v870 = vld [vmem:[%s2 + $0x1440] sm:$0xff]
      %v871 = vld [vmem:[%s2 + $0x1448] sm:$0xff]
      %v872 = vld [vmem:[%s2 + $0x1450] sm:$0xff]
      %v873 = vld [vmem:[%s2 + $0x1458] sm:$0xff]
      %v874 = vld [vmem:[%s2 + $0x1460] sm:$0xff]
      %v875 = vld [vmem:[%s2 + $0x1468] sm:$0xff]
      %v876 = vld [vmem:[%s2 + $0x1470] sm:$0xff]
      %v877 = vld [vmem:[%s2 + $0x1478] sm:$0xff]
      %v878 = vld [vmem:[%s2 + $0x1480] sm:$0xff]
      %v879 = vld [vmem:[%s2 + $0x1488] sm:$0xff]
      %v880 = vld [vmem:[%s2 + $0x1490] sm:$0xff]
      %v881 = vld [vmem:[%s2 + $0x1498] sm:$0xff]
      %v882 = vld [vmem:[%s2 + $0x14a0] sm:$0xff]
      %v883 = vld [vmem:[%s2 + $0x14a8] sm:$0xff]
      %v884 = vld [vmem:[%s2 + $0x14b0] sm:$0xff]
      %v885 = vld [vmem:[%s2 + $0x14b8] sm:$0xff]
      %v886 = vld [vmem:[%s2 + $0x14c0] sm:$0xff]
      %v887 = vld [vmem:[%s2 + $0x14c8] sm:$0xff]
      %v888 = vld [vmem:[%s2 + $0x14d0] sm:$0xff]
      %v889 = vld [vmem:[%s2 + $0x14d8] sm:$0xff]
      %v890 = vld [vmem:[%s2 + $0x14e0] sm:$0xff]
      %v891 = vld [vmem:[%s2 + $0x14e8] sm:$0xff]
      %v892 = vld [vmem:[%s2 + $0x14f0] sm:$0xff]
      %v893 = vld [vmem:[%s2 + $0x14f8] sm:$0xff]
      %v894 = vld [vmem:[%s2 + $0x1500] sm:$0xff]
      %v895 = vld [vmem:[%s2 + $0x1508] sm:$0xff]
      %v896 = vld [vmem:[%s2 + $0x1510] sm:$0xff]
      %v897 = vld [vmem:[%s2 + $0x1518] sm:$0xff]
      %v898 = vld [vmem:[%s2 + $0x1520] sm:$0xff]
      %v899 = vld [vmem:[%s2 + $0x1528] sm:$0xff]
      %v900 = vld [vmem:[%s2 + $0x1530] sm:$0xff]
      %v901 = vld [vmem:[%s2 + $0x1538] sm:$0xff]
      %v902 = vld [vmem:[%s2 + $0x1540] sm:$0xff]
      %v903 = vld [vmem:[%s2 + $0x1548] sm:$0xff]
      %v904 = vld [vmem:[%s2 + $0x1550] sm:$0xff]
      %v905 = vld [vmem:[%s2 + $0x1558] sm:$0xff]
      %v906 = vld [vmem:[%s2 + $0x1560] sm:$0xff]
      %v907 = vld [vmem:[%s2 + $0x1568] sm:$0xff]
      %v908 = vld [vmem:[%s2 + $0x1570] sm:$0xff]
      %v909 = vld [vmem:[%s2 + $0x1578] sm:$0xff]
      %v910 = vld [vmem:[%s2 + $0x1580] sm:$0xff]
      %v911 = vld [vmem:[%s2 + $0x1588] sm:$0xff]
      %v912 = vld [vmem:[%s2 + $0x1590] sm:$0xff]
      %v913 = vld [vmem:[%s2 + $0x1598] sm:$0xff]
      %v914 = vld [vmem:[%s2 + $0x15a0] sm:$0xff]
      %v915 = vld [vmem:[%s2 + $0x15a8] sm:$0xff]
      %v916 = vld [vmem:[%s2 + $0x15b0] sm:$0xff]
      %v917 = vld [vmem:[%s2 + $0x15b8] sm:$0xff]
      %v918 = vld [vmem:[%s2 + $0x15c0] sm:$0xff]
      %v919 = vld [vmem:[%s2 + $0x15c8] sm:$0xff]
      %v920 = vld [vmem:[%s2 + $0x15d0] sm:$0xff]
      %v921 = vld [vmem:[%s2 + $0x15d8] sm:$0xff]
      %v922 = vld [vmem:[%s2 + $0x15e0] sm:$0xff]
      %v923 = vld [vmem:[%s2 + $0x15e8] sm:$0xff]
      %v924 = vld [vmem:[%s2 + $0x15f0] sm:$0xff]
      %v925 = vld [vmem:[%s2 + $0x15f8] sm:$0xff]
      %v926 = vld [vmem:[%s2 + $0x1600] sm:$0xff]
      %v927 = vld [vmem:[%s2 + $0x1608] sm:$0xff]
      %v928 = vld [vmem:[%s2 + $0x1610] sm:$0xff]
      %v929 = vld [vmem:[%s2 + $0x1618] sm:$0xff]
      %v930 = vld [vmem:[%s2 + $0x1620] sm:$0xff]
      %v931 = vld [vmem:[%s2 + $0x1628] sm:$0xff]
      %v932 = vld [vmem:[%s2 + $0x1630] sm:$0xff]
      %v933 = vld [vmem:[%s2 + $0x1638] sm:$0xff]
      %v934 = vld [vmem:[%s2 + $0x1640] sm:$0xff]
      %v935 = vld [vmem:[%s2 + $0x1648] sm:$0xff]
      %v936 = vld [vmem:[%s2 + $0x1650] sm:$0xff]
      %v937 = vld [vmem:[%s2 + $0x1658] sm:$0xff]
      %v938 = vld [vmem:[%s2 + $0x1660] sm:$0xff]
      %v939 = vld [vmem:[%s2 + $0x1668] sm:$0xff]
      %v940 = vld [vmem:[%s2 + $0x1670] sm:$0xff]
      %v941 = vld [vmem:[%s2 + $0x1678] sm:$0xff]
      %v942 = vld [vmem:[%s2 + $0x1680] sm:$0xff]
      %v943 = vld [vmem:[%s2 + $0x1688] sm:$0xff]
      %v944 = vld [vmem:[%s2 + $0x1690] sm:$0xff]
      %v945 = vld [vmem:[%s2 + $0x1698] sm:$0xff]
      %v946 = vld [vmem:[%s2 + $0x16a0] sm:$0xff]
      %v947 = vld [vmem:[%s2 + $0x16a8] sm:$0xff]
      %v948 = vld [vmem:[%s2 + $0x16b0] sm:$0xff]
      %v949 = vld [vmem:[%s2 + $0x16b8] sm:$0xff]
      %v950 = vld [vmem:[%s2 + $0x16c0] sm:$0xff]
      %v951 = vld [vmem:[%s2 + $0x16c8] sm:$0xff]
      %v952 = vld [vmem:[%s2 + $0x16d0] sm:$0xff]
      %v953 = vld [vmem:[%s2 + $0x16d8] sm:$0xff]
      %v954 = vld [vmem:[%s2 + $0x16e0] sm:$0xff]
      %v955 = vld [vmem:[%s2 + $0x16e8] sm:$0xff]
      %v956 = vld [vmem:[%s2 + $0x16f0] sm:$0xff]
      %v957 = vld [vmem:[%s2 + $0x16f8] sm:$0xff]
      %v958 = vld [vmem:[%s2 + $0x1700] sm:$0xff]
      %v959 = vld [vmem:[%s2 + $0x1708] sm:$0xff]
      %v960 = vld [vmem:[%s2 + $0x1710] sm:$0xff]
      %v961 = vld [vmem:[%s2 + $0x1718] sm:$0xff]
      %v962 = vld [vmem:[%s2 + $0x1720] sm:$0xff]
      %v963 = vld [vmem:[%s2 + $0x1728] sm:$0xff]
      %v964 = vld [vmem:[%s2 + $0x1730] sm:$0xff]
      %v965 = vld [vmem:[%s2 + $0x1738] sm:$0xff]
      %v966 = vld [vmem:[%s2 + $0x1740] sm:$0xff]
      %v967 = vld [vmem:[%s2 + $0x1748] sm:$0xff]
      %v968 = vld [vmem:[%s2 + $0x1750] sm:$0xff]
      %v969 = vld [vmem:[%s2 + $0x1758] sm:$0xff]
      %v970 = vld [vmem:[%s2 + $0x1760] sm:$0xff]
      %v971 = vld [vmem:[%s2 + $0x1768] sm:$0xff]
      %v972 = vld [vmem:[%s2 + $0x1770] sm:$0xff]
      %v973 = vld [vmem:[%s2 + $0x1778] sm:$0xff]
      %v974 = vld [vmem:[%s2 + $0x1780] sm:$0xff]
      %v975 = vld [vmem:[%s2 + $0x1788] sm:$0xff]
      %v976 = vld [vmem:[%s2 + $0x1790] sm:$0xff]
      %v977 = vld [vmem:[%s2 + $0x1798] sm:$0xff]
      %v978 = vld [vmem:[%s2 + $0x17a0] sm:$0xff]
      %v979 = vld [vmem:[%s2 + $0x17a8] sm:$0xff]
      %v980 = vld [vmem:[%s2 + $0x17b0] sm:$0xff]
      %v981 = vld [vmem:[%s2 + $0x17b8] sm:$0xff]
      %v982 = vld [vmem:[%s2 + $0x17c0] sm:$0xff]
      %v983 = vld [vmem:[%s2 + $0x17c8] sm:$0xff]
      %v984 = vld [vmem:[%s2 + $0x17d0] sm:$0xff]
      %v985 = vld [vmem:[%s2 + $0x17d8] sm:$0xff]
      %v986 = vld [vmem:[%s2 + $0x17e0] sm:$0xff]
      %v987 = vld [vmem:[%s2 + $0x17e8] sm:$0xff]
      %v988 = vld [vmem:[%s2 + $0x17f0] sm:$0xff]
      %v989 = vld [vmem:[%s2 + $0x17f8] sm:$0xff]
      %v990 = vld [vmem:[%s2 + $0x1800] sm:$0xff]
      %v991 = vld [vmem:[%s2 + $0x1808] sm:$0xff]
      %v992 = vld [vmem:[%s2 + $0x1810] sm:$0xff]
      %v993 = vld [vmem:[%s2 + $0x1818] sm:$0xff]
      %v994 = vld [vmem:[%s2 + $0x1820] sm:$0xff]
      %v995 = vld [vmem:[%s2 + $0x1828] sm:$0xff]
      %v996 = vld [vmem:[%s2 + $0x1830] sm:$0xff]
      %v997 = vld [vmem:[%s2 + $0x1838] sm:$0xff]
      %v998 = vld [vmem:[%s2 + $0x1840] sm:$0xff]
      %v999 = vld [vmem:[%s2 + $0x1848] sm:$0xff]
      %v1000 = vld [vmem:[%s2 + $0x1850] sm:$0xff]
      %v1001 = vld [vmem:[%s2 + $0x1858] sm:$0xff]
      %v1002 = vld [vmem:[%s2 + $0x1860] sm:$0xff]
      %v1003 = vld [vmem:[%s2 + $0x1868] sm:$0xff]
      %v1004 = vld [vmem:[%s2 + $0x1870] sm:$0xff]
      %v1005 = vld [vmem:[%s2 + $0x1878] sm:$0xff]
      %vm1006 = vcmask 785408
      %v1008 = vsel %vm1006, %v219, 0
      %v1011 = vsel %vm1006, %v221, 0
      %1013 = vmatprep.subr.mxu0 %v643
      %1014 = vmatpush1.msra.mxu0 %v642
      %1015 = vmatprep.subr.mxu0 %v615
      %1016 = vmatpush1.msra.mxu0 %v614
      %1017 = vmatprep.subr.mxu0 %v587
      %1018 = vmatpush1.msra.mxu0 %v586
      %1019 = vmatprep.subr.mxu0 %v559
      %1020 = vmatpush1.msra.mxu0 %v558
      %1021 = vmatprep.subr.mxu0 %v531
      %1022 = vmatpush1.msra.mxu0 %v530
      %1023 = vmatprep.subr.mxu0 %v503
      %1024 = vmatpush1.msra.mxu0 %v502
      %1025 = vmatprep.subr.mxu0 %v475
      %1026 = vmatpush1.msra.mxu0 %v474
      %1027 = vmatprep.subr.mxu0 %v447
      %1028 = vmatpush1.msra.mxu0 %v446
      %1029 = vmatprep.subr.mxu0 %v419
      %1030 = vmatpush1.msra.mxu0 %v418
      %1031 = vmatprep.subr.mxu0 %v391
      %1032 = vmatpush1.msra.mxu0 %v390
      %1033 = vmatprep.subr.mxu0 %v363
      %1034 = vmatpush1.msra.mxu0 %v362
      %1035 = vmatprep.subr.mxu0 %v335
      %1036 = vmatpush1.msra.mxu0 %v334
      %1037 = vmatprep.subr.mxu0 %v307
      %1038 = vmatpush1.msra.mxu0 %v306
      %1039 = vmatprep.subr.mxu0 %v279
      %1040 = vmatpush1.msra.mxu0 %v278
      %1041 = vmatprep.subr.mxu0 %v251
      %1042 = vmatpush1.msra.mxu0 %v250
      %1043 = vmatprep.subr.mxu0 %v223
      %1044 = vmatpush1.msra.mxu0 %v222
      %1045 = vmatprep.subr.mxu0 0.0
      %1046 = vmatpush2.msra.mxu0 0.0
      %1047 = vmatprep.subr.mxu0 0.0
      %1048 = vmatpush2.msra.mxu0 0.0
      %1049 = vmatprep.subr.mxu0 0.0
      %1050 = vmatpush2.msra.mxu0 0.0
      %1051 = vmatprep.subr.mxu0 0.0
      %1052 = vmatpush2.msra.mxu0 0.0
      %1053 = vmatprep.subr.mxu0 %v979
      %1054 = vmatpush2.msra.mxu0 %v978
      %1055 = vmatprep.subr.mxu0 %v951
      %1056 = vmatpush2.msra.mxu0 %v950
      %1057 = vmatprep.subr.mxu0 %v923
      %1058 = vmatpush2.msra.mxu0 %v922
      %1059 = vmatprep.subr.mxu0 %v895
      %1060 = vmatpush2.msra.mxu0 %v894
      %1061 = vmatprep.subr.mxu0 %v867
      %1062 = vmatpush2.msra.mxu0 %v866
      %1063 = vmatprep.subr.mxu0 %v839
      %1064 = vmatpush2.msra.mxu0 %v838
      %1065 = vmatprep.subr.mxu0 %v811
      %1066 = vmatpush2.msra.mxu0 %v810
      %1067 = vmatprep.subr.mxu0 %v783
      %1068 = vmatpush2.msra.mxu0 %v782
      %1069 = vmatprep.subr.mxu0 %v755
      %1070 = vmatpush2.msra.mxu0 %v754
      %1071 = vmatprep.subr.mxu0 %v727
      %1072 = vmatpush2.msra.mxu0 %v726
      %1073 = vmatprep.subr.mxu0 %v699
      %1074 = vmatpush2.msra.mxu0 %v698
      %1075 = vmatprep.subr.mxu0 %v671
      %1076 = vmatpush2.msra.mxu0 %v670
      %1077 = vmatprep.mubr.f32.mxu0 %v1008
      %1078 = vmatmul.mubr.f32.gmra.mxu0 %v218
      %v1079 = vpop.f32.mrf.mxu0
      %v1080 = vadd.f32 0.0, %v1079
      %v1081 = vpop.f32.mrf.mxu0
      %v1082 = vadd.f32 0.0, %v1081
      %1083 = vmatprep.mubr.f32.mxu0 %v1011
      %1084 = vmatmul.mubr.f32.gmra.mxu0 %v220
      %v1085 = vpop.f32.mrf.mxu0
      %v1086 = vadd.f32 0.0, %v1085
      %v1087 = vpop.f32.mrf.mxu0
      %v1088 = vadd.f32 0.0, %v1087
      %1089 = vdwg.mxu0
      %1090 = vmatprep.subr.mxu0 %v645
      %1091 = vmatpush1.msra.mxu0 %v644
      %1092 = vmatprep.subr.mxu0 %v617
      %1093 = vmatpush1.msra.mxu0 %v616
      %1094 = vmatprep.subr.mxu0 %v589
      %1095 = vmatpush1.msra.mxu0 %v588
      %1096 = vmatprep.subr.mxu0 %v561
      %1097 = vmatpush1.msra.mxu0 %v560
      %1098 = vmatprep.subr.mxu0 %v533
      %1099 = vmatpush1.msra.mxu0 %v532
      %1100 = vmatprep.subr.mxu0 %v505
      %1101 = vmatpush1.msra.mxu0 %v504
      %1102 = vmatprep.subr.mxu0 %v477
      %1103 = vmatpush1.msra.mxu0 %v476
      %1104 = vmatprep.subr.mxu0 %v449
      %1105 = vmatpush1.msra.mxu0 %v448
      %1106 = vmatprep.subr.mxu0 %v421
      %1107 = vmatpush1.msra.mxu0 %v420
      %1108 = vmatprep.subr.mxu0 %v393
      %1109 = vmatpush1.msra.mxu0 %v392
      %1110 = vmatprep.subr.mxu0 %v365
      %1111 = vmatpush1.msra.mxu0 %v364
      %1112 = vmatprep.subr.mxu0 %v337
      %1113 = vmatpush1.msra.mxu0 %v336
      %1114 = vmatprep.subr.mxu0 %v309
      %1115 = vmatpush1.msra.mxu0 %v308
      %1116 = vmatprep.subr.mxu0 %v281
      %1117 = vmatpush1.msra.mxu0 %v280
      %1118 = vmatprep.subr.mxu0 %v253
      %1119 = vmatpush1.msra.mxu0 %v252
      %1120 = vmatprep.subr.mxu0 %v225
      %1121 = vmatpush1.msra.mxu0 %v224
      %1122 = vmatprep.subr.mxu0 0.0
      %1123 = vmatpush2.msra.mxu0 0.0
      %1124 = vmatprep.subr.mxu0 0.0
      %1125 = vmatpush2.msra.mxu0 0.0
      %1126 = vmatprep.subr.mxu0 0.0
      %1127 = vmatpush2.msra.mxu0 0.0
      %1128 = vmatprep.subr.mxu0 0.0
      %1129 = vmatpush2.msra.mxu0 0.0
      %1130 = vmatprep.subr.mxu0 %v981
      %1131 = vmatpush2.msra.mxu0 %v980
      %1132 = vmatprep.subr.mxu0 %v953
      %1133 = vmatpush2.msra.mxu0 %v952
      %1134 = vmatprep.subr.mxu0 %v925
      %1135 = vmatpush2.msra.mxu0 %v924
      %1136 = vmatprep.subr.mxu0 %v897
      %1137 = vmatpush2.msra.mxu0 %v896
      %1138 = vmatprep.subr.mxu0 %v869
      %1139 = vmatpush2.msra.mxu0 %v868
      %1140 = vmatprep.subr.mxu0 %v841
      %1141 = vmatpush2.msra.mxu0 %v840
      %1142 = vmatprep.subr.mxu0 %v813
      %1143 = vmatpush2.msra.mxu0 %v812
      %1144 = vmatprep.subr.mxu0 %v785
      %1145 = vmatpush2.msra.mxu0 %v784
      %1146 = vmatprep.subr.mxu0 %v757
      %1147 = vmatpush2.msra.mxu0 %v756
      %1148 = vmatprep.subr.mxu0 %v729
      %1149 = vmatpush2.msra.mxu0 %v728
      %1150 = vmatprep.subr.mxu0 %v701
      %1151 = vmatpush2.msra.mxu0 %v700
      %1152 = vmatprep.subr.mxu0 %v673
      %1153 = vmatpush2.msra.mxu0 %v672
      %1154 = vmatprep.mubr.f32.mxu0 %v1008
      %1155 = vmatmul.mubr.f32.gmra.mxu0 %v218
      %v1156 = vpop.f32.mrf.mxu0
      %v1157 = vadd.f32 0.0, %v1156
      %v1158 = vpop.f32.mrf.mxu0
      %v1159 = vadd.f32 0.0, %v1158
      %1160 = vmatprep.mubr.f32.mxu0 %v1011
      %1161 = vmatmul.mubr.f32.gmra.mxu0 %v220
      %v1162 = vpop.f32.mrf.mxu0
      %v1163 = vadd.f32 0.0, %v1162
      %v1164 = vpop.f32.mrf.mxu0
      %v1165 = vadd.f32 0.0, %v1164
      %1166 = vdwg.mxu0
      %1167 = vmatprep.subr.mxu0 %v647
      %1168 = vmatpush1.msra.mxu0 %v646
      %1169 = vmatprep.subr.mxu0 %v619
      %1170 = vmatpush1.msra.mxu0 %v618
      %1171 = vmatprep.subr.mxu0 %v591
      %1172 = vmatpush1.msra.mxu0 %v590
      %1173 = vmatprep.subr.mxu0 %v563
      %1174 = vmatpush1.msra.mxu0 %v562
      %1175 = vmatprep.subr.mxu0 %v535
      %1176 = vmatpush1.msra.mxu0 %v534
      %1177 = vmatprep.subr.mxu0 %v507
      %1178 = vmatpush1.msra.mxu0 %v506
      %1179 = vmatprep.subr.mxu0 %v479
      %1180 = vmatpush1.msra.mxu0 %v478
      %1181 = vmatprep.subr.mxu0 %v451
      %1182 = vmatpush1.msra.mxu0 %v450
      %1183 = vmatprep.subr.mxu0 %v423
      %1184 = vmatpush1.msra.mxu0 %v422
      %1185 = vmatprep.subr.mxu0 %v395
      %1186 = vmatpush1.msra.mxu0 %v394
      %1187 = vmatprep.subr.mxu0 %v367
      %1188 = vmatpush1.msra.mxu0 %v366
      %1189 = vmatprep.subr.mxu0 %v339
      %1190 = vmatpush1.msra.mxu0 %v338
      %1191 = vmatprep.subr.mxu0 %v311
      %1192 = vmatpush1.msra.mxu0 %v310
      %1193 = vmatprep.subr.mxu0 %v283
      %1194 = vmatpush1.msra.mxu0 %v282
      %1195 = vmatprep.subr.mxu0 %v255
      %1196 = vmatpush1.msra.mxu0 %v254
      %1197 = vmatprep.subr.mxu0 %v227
      %1198 = vmatpush1.msra.mxu0 %v226
      %1199 = vmatprep.subr.mxu0 0.0
      %1200 = vmatpush2.msra.mxu0 0.0
      %1201 = vmatprep.subr.mxu0 0.0
      %1202 = vmatpush2.msra.mxu0 0.0
      %1203 = vmatprep.subr.mxu0 0.0
      %1204 = vmatpush2.msra.mxu0 0.0
      %1205 = vmatprep.subr.mxu0 0.0
      %1206 = vmatpush2.msra.mxu0 0.0
      %1207 = vmatprep.subr.mxu0 %v983
      %1208 = vmatpush2.msra.mxu0 %v982
      %1209 = vmatprep.subr.mxu0 %v955
      %1210 = vmatpush2.msra.mxu0 %v954
      %1211 = vmatprep.subr.mxu0 %v927
      %1212 = vmatpush2.msra.mxu0 %v926
      %1213 = vmatprep.subr.mxu0 %v899
      %1214 = vmatpush2.msra.mxu0 %v898
      %1215 = vmatprep.subr.mxu0 %v871
      %1216 = vmatpush2.msra.mxu0 %v870
      %1217 = vmatprep.subr.mxu0 %v843
      %1218 = vmatpush2.msra.mxu0 %v842
      %1219 = vmatprep.subr.mxu0 %v815
      %1220 = vmatpush2.msra.mxu0 %v814
      %1221 = vmatprep.subr.mxu0 %v787
      %1222 = vmatpush2.msra.mxu0 %v786
      %1223 = vmatprep.subr.mxu0 %v759
      %1224 = vmatpush2.msra.mxu0 %v758
      %1225 = vmatprep.subr.mxu0 %v731
      %1226 = vmatpush2.msra.mxu0 %v730
      %1227 = vmatprep.subr.mxu0 %v703
      %1228 = vmatpush2.msra.mxu0 %v702
      %1229 = vmatprep.subr.mxu0 %v675
      %1230 = vmatpush2.msra.mxu0 %v674
      %1231 = vmatprep.mubr.f32.mxu0 %v1008
      %1232 = vmatmul.mubr.f32.gmra.mxu0 %v218
      %v1233 = vpop.f32.mrf.mxu0
      %v1234 = vadd.f32 0.0, %v1233
      %v1235 = vpop.f32.mrf.mxu0
      %v1236 = vadd.f32 0.0, %v1235
      %1237 = vmatprep.mubr.f32.mxu0 %v1011
      %1238 = vmatmul.mubr.f32.gmra.mxu0 %v220
      %v1239 = vpop.f32.mrf.mxu0
      %v1240 = vadd.f32 0.0, %v1239
      %v1241 = vpop.f32.mrf.mxu0
      %v1242 = vadd.f32 0.0, %v1241
      %1243 = vdwg.mxu0
      %1244 = vmatprep.subr.mxu0 %v649
      %1245 = vmatpush1.msra.mxu0 %v648
      %1246 = vmatprep.subr.mxu0 %v621
      %1247 = vmatpush1.msra.mxu0 %v620
      %1248 = vmatprep.subr.mxu0 %v593
      %1249 = vmatpush1.msra.mxu0 %v592
      %1250 = vmatprep.subr.mxu0 %v565
      %1251 = vmatpush1.msra.mxu0 %v564
      %1252 = vmatprep.subr.mxu0 %v537
      %1253 = vmatpush1.msra.mxu0 %v536
      %1254 = vmatprep.subr.mxu0 %v509
      %1255 = vmatpush1.msra.mxu0 %v508
      %1256 = vmatprep.subr.mxu0 %v481
      %1257 = vmatpush1.msra.mxu0 %v480
      %1258 = vmatprep.subr.mxu0 %v453
      %1259 = vmatpush1.msra.mxu0 %v452
      %1260 = vmatprep.subr.mxu0 %v425
      %1261 = vmatpush1.msra.mxu0 %v424
      %1262 = vmatprep.subr.mxu0 %v397
      %1263 = vmatpush1.msra.mxu0 %v396
      %1264 = vmatprep.subr.mxu0 %v369
      %1265 = vmatpush1.msra.mxu0 %v368
      %1266 = vmatprep.subr.mxu0 %v341
      %1267 = vmatpush1.msra.mxu0 %v340
      %1268 = vmatprep.subr.mxu0 %v313
      %1269 = vmatpush1.msra.mxu0 %v312
      %1270 = vmatprep.subr.mxu0 %v285
      %1271 = vmatpush1.msra.mxu0 %v284
      %1272 = vmatprep.subr.mxu0 %v257
      %1273 = vmatpush1.msra.mxu0 %v256
      %1274 = vmatprep.subr.mxu0 %v229
      %1275 = vmatpush1.msra.mxu0 %v228
      %1276 = vmatprep.subr.mxu0 0.0
      %1277 = vmatpush2.msra.mxu0 0.0
      %1278 = vmatprep.subr.mxu0 0.0
      %1279 = vmatpush2.msra.mxu0 0.0
      %1280 = vmatprep.subr.mxu0 0.0
      %1281 = vmatpush2.msra.mxu0 0.0
      %1282 = vmatprep.subr.mxu0 0.0
      %1283 = vmatpush2.msra.mxu0 0.0
      %1284 = vmatprep.subr.mxu0 %v985
      %1285 = vmatpush2.msra.mxu0 %v984
      %1286 = vmatprep.subr.mxu0 %v957
      %1287 = vmatpush2.msra.mxu0 %v956
      %1288 = vmatprep.subr.mxu0 %v929
      %1289 = vmatpush2.msra.mxu0 %v928
      %1290 = vmatprep.subr.mxu0 %v901
      %1291 = vmatpush2.msra.mxu0 %v900
      %1292 = vmatprep.subr.mxu0 %v873
      %1293 = vmatpush2.msra.mxu0 %v872
      %1294 = vmatprep.subr.mxu0 %v845
      %1295 = vmatpush2.msra.mxu0 %v844
      %1296 = vmatprep.subr.mxu0 %v817
      %1297 = vmatpush2.msra.mxu0 %v816
      %1298 = vmatprep.subr.mxu0 %v789
      %1299 = vmatpush2.msra.mxu0 %v788
      %1300 = vmatprep.subr.mxu0 %v761
      %1301 = vmatpush2.msra.mxu0 %v760
      %1302 = vmatprep.subr.mxu0 %v733
      %1303 = vmatpush2.msra.mxu0 %v732
      %1304 = vmatprep.subr.mxu0 %v705
      %1305 = vmatpush2.msra.mxu0 %v704
      %1306 = vmatprep.subr.mxu0 %v677
      %1307 = vmatpush2.msra.mxu0 %v676
      %1308 = vmatprep.mubr.f32.mxu0 %v1008
      %1309 = vmatmul.mubr.f32.gmra.mxu0 %v218
      %v1310 = vpop.f32.mrf.mxu0
      %v1311 = vadd.f32 0.0, %v1310
      %v1312 = vpop.f32.mrf.mxu0
      %v1313 = vadd.f32 0.0, %v1312
      %1314 = vmatprep.mubr.f32.mxu0 %v1011
      %1315 = vmatmul.mubr.f32.gmra.mxu0 %v220
      %v1316 = vpop.f32.mrf.mxu0
      %v1317 = vadd.f32 0.0, %v1316
      %v1318 = vpop.f32.mrf.mxu0
      %v1319 = vadd.f32 0.0, %v1318
      %1320 = vdwg.mxu0
      %1321 = vmatprep.subr.mxu0 %v651
      %1322 = vmatpush1.msra.mxu0 %v650
      %1323 = vmatprep.subr.mxu0 %v623
      %1324 = vmatpush1.msra.mxu0 %v622
      %1325 = vmatprep.subr.mxu0 %v595
      %1326 = vmatpush1.msra.mxu0 %v594
      %1327 = vmatprep.subr.mxu0 %v567
      %1328 = vmatpush1.msra.mxu0 %v566
      %1329 = vmatprep.subr.mxu0 %v539
      %1330 = vmatpush1.msra.mxu0 %v538
      %1331 = vmatprep.subr.mxu0 %v511
      %1332 = vmatpush1.msra.mxu0 %v510
      %1333 = vmatprep.subr.mxu0 %v483
      %1334 = vmatpush1.msra.mxu0 %v482
      %1335 = vmatprep.subr.mxu0 %v455
      %1336 = vmatpush1.msra.mxu0 %v454
      %1337 = vmatprep.subr.mxu0 %v427
      %1338 = vmatpush1.msra.mxu0 %v426
      %1339 = vmatprep.subr.mxu0 %v399
      %1340 = vmatpush1.msra.mxu0 %v398
      %1341 = vmatprep.subr.mxu0 %v371
      %1342 = vmatpush1.msra.mxu0 %v370
      %1343 = vmatprep.subr.mxu0 %v343
      %1344 = vmatpush1.msra.mxu0 %v342
      %1345 = vmatprep.subr.mxu0 %v315
      %1346 = vmatpush1.msra.mxu0 %v314
      %1347 = vmatprep.subr.mxu0 %v287
      %1348 = vmatpush1.msra.mxu0 %v286
      %1349 = vmatprep.subr.mxu0 %v259
      %1350 = vmatpush1.msra.mxu0 %v258
      %1351 = vmatprep.subr.mxu0 %v231
      %1352 = vmatpush1.msra.mxu0 %v230
      %1353 = vmatprep.subr.mxu0 0.0
      %1354 = vmatpush2.msra.mxu0 0.0
      %1355 = vmatprep.subr.mxu0 0.0
      %1356 = vmatpush2.msra.mxu0 0.0
      %1357 = vmatprep.subr.mxu0 0.0
      %1358 = vmatpush2.msra.mxu0 0.0
      %1359 = vmatprep.subr.mxu0 0.0
      %1360 = vmatpush2.msra.mxu0 0.0
      %1361 = vmatprep.subr.mxu0 %v987
      %1362 = vmatpush2.msra.mxu0 %v986
      %1363 = vmatprep.subr.mxu0 %v959
      %1364 = vmatpush2.msra.mxu0 %v958
      %1365 = vmatprep.subr.mxu0 %v931
      %1366 = vmatpush2.msra.mxu0 %v930
      %1367 = vmatprep.subr.mxu0 %v903
      %1368 = vmatpush2.msra.mxu0 %v902
      %1369 = vmatprep.subr.mxu0 %v875
      %1370 = vmatpush2.msra.mxu0 %v874
      %1371 = vmatprep.subr.mxu0 %v847
      %1372 = vmatpush2.msra.mxu0 %v846
      %1373 = vmatprep.subr.mxu0 %v819
      %1374 = vmatpush2.msra.mxu0 %v818
      %1375 = vmatprep.subr.mxu0 %v791
      %1376 = vmatpush2.msra.mxu0 %v790
      %1377 = vmatprep.subr.mxu0 %v763
      %1378 = vmatpush2.msra.mxu0 %v762
      %1379 = vmatprep.subr.mxu0 %v735
      %1380 = vmatpush2.msra.mxu0 %v734
      %1381 = vmatprep.subr.mxu0 %v707
      %1382 = vmatpush2.msra.mxu0 %v706
      %1383 = vmatprep.subr.mxu0 %v679
      %1384 = vmatpush2.msra.mxu0 %v678
      %1385 = vmatprep.mubr.f32.mxu0 %v1008
      %1386 = vmatmul.mubr.f32.gmra.mxu0 %v218
      %v1387 = vpop.f32.mrf.mxu0
      %v1388 = vadd.f32 0.0, %v1387
      %v1389 = vpop.f32.mrf.mxu0
      %v1390 = vadd.f32 0.0, %v1389
      %1391 = vmatprep.mubr.f32.mxu0 %v1011
      %1392 = vmatmul.mubr.f32.gmra.mxu0 %v220
      %v1393 = vpop.f32.mrf.mxu0
      %v1394 = vadd.f32 0.0, %v1393
      %v1395 = vpop.f32.mrf.mxu0
      %v1396 = vadd.f32 0.0, %v1395
      %1397 = vdwg.mxu0
      %1398 = vmatprep.subr.mxu0 %v653
      %1399 = vmatpush1.msra.mxu0 %v652
      %1400 = vmatprep.subr.mxu0 %v625
      %1401 = vmatpush1.msra.mxu0 %v624
      %1402 = vmatprep.subr.mxu0 %v597
      %1403 = vmatpush1.msra.mxu0 %v596
      %1404 = vmatprep.subr.mxu0 %v569
      %1405 = vmatpush1.msra.mxu0 %v568
      %1406 = vmatprep.subr.mxu0 %v541
      %1407 = vmatpush1.msra.mxu0 %v540
      %1408 = vmatprep.subr.mxu0 %v513
      %1409 = vmatpush1.msra.mxu0 %v512
      %1410 = vmatprep.subr.mxu0 %v485
      %1411 = vmatpush1.msra.mxu0 %v484
      %1412 = vmatprep.subr.mxu0 %v457
      %1413 = vmatpush1.msra.mxu0 %v456
      %1414 = vmatprep.subr.mxu0 %v429
      %1415 = vmatpush1.msra.mxu0 %v428
      %1416 = vmatprep.subr.mxu0 %v401
      %1417 = vmatpush1.msra.mxu0 %v400
      %1418 = vmatprep.subr.mxu0 %v373
      %1419 = vmatpush1.msra.mxu0 %v372
      %1420 = vmatprep.subr.mxu0 %v345
      %1421 = vmatpush1.msra.mxu0 %v344
      %1422 = vmatprep.subr.mxu0 %v317
      %1423 = vmatpush1.msra.mxu0 %v316
      %1424 = vmatprep.subr.mxu0 %v289
      %1425 = vmatpush1.msra.mxu0 %v288
      %1426 = vmatprep.subr.mxu0 %v261
      %1427 = vmatpush1.msra.mxu0 %v260
      %1428 = vmatprep.subr.mxu0 %v233
      %1429 = vmatpush1.msra.mxu0 %v232
      %1430 = vmatprep.subr.mxu0 0.0
      %1431 = vmatpush2.msra.mxu0 0.0
      %1432 = vmatprep.subr.mxu0 0.0
      %1433 = vmatpush2.msra.mxu0 0.0
      %1434 = vmatprep.subr.mxu0 0.0
      %1435 = vmatpush2.msra.mxu0 0.0
      %1436 = vmatprep.subr.mxu0 0.0
      %1437 = vmatpush2.msra.mxu0 0.0
      %1438 = vmatprep.subr.mxu0 %v989
      %1439 = vmatpush2.msra.mxu0 %v988
      %1440 = vmatprep.subr.mxu0 %v961
      %1441 = vmatpush2.msra.mxu0 %v960
      %1442 = vmatprep.subr.mxu0 %v933
      %1443 = vmatpush2.msra.mxu0 %v932
      %1444 = vmatprep.subr.mxu0 %v905
      %1445 = vmatpush2.msra.mxu0 %v904
      %1446 = vmatprep.subr.mxu0 %v877
      %1447 = vmatpush2.msra.mxu0 %v876
      %1448 = vmatprep.subr.mxu0 %v849
      %1449 = vmatpush2.msra.mxu0 %v848
      %1450 = vmatprep.subr.mxu0 %v821
      %1451 = vmatpush2.msra.mxu0 %v820
      %1452 = vmatprep.subr.mxu0 %v793
      %1453 = vmatpush2.msra.mxu0 %v792
      %1454 = vmatprep.subr.mxu0 %v765
      %1455 = vmatpush2.msra.mxu0 %v764
      %1456 = vmatprep.subr.mxu0 %v737
      %1457 = vmatpush2.msra.mxu0 %v736
      %1458 = vmatprep.subr.mxu0 %v709
      %1459 = vmatpush2.msra.mxu0 %v708
      %1460 = vmatprep.subr.mxu0 %v681
      %1461 = vmatpush2.msra.mxu0 %v680
      %1462 = vmatprep.mubr.f32.mxu0 %v1008
      %1463 = vmatmul.mubr.f32.gmra.mxu0 %v218
      %v1464 = vpop.f32.mrf.mxu0
      %v1465 = vadd.f32 0.0, %v1464
      %v1466 = vpop.f32.mrf.mxu0
      %v1467 = vadd.f32 0.0, %v1466
      %1468 = vmatprep.mubr.f32.mxu0 %v1011
      %1469 = vmatmul.mubr.f32.gmra.mxu0 %v220
      %v1470 = vpop.f32.mrf.mxu0
      %v1471 = vadd.f32 0.0, %v1470
      %v1472 = vpop.f32.mrf.mxu0
      %v1473 = vadd.f32 0.0, %v1472
      %1474 = vdwg.mxu0
      %1475 = vmatprep.subr.mxu0 %v655
      %1476 = vmatpush1.msra.mxu0 %v654
      %1477 = vmatprep.subr.mxu0 %v627
      %1478 = vmatpush1.msra.mxu0 %v626
      %1479 = vmatprep.subr.mxu0 %v599
      %1480 = vmatpush1.msra.mxu0 %v598
      %1481 = vmatprep.subr.mxu0 %v571
      %1482 = vmatpush1.msra.mxu0 %v570
      %1483 = vmatprep.subr.mxu0 %v543
      %1484 = vmatpush1.msra.mxu0 %v542
      %1485 = vmatprep.subr.mxu0 %v515
      %1486 = vmatpush1.msra.mxu0 %v514
      %1487 = vmatprep.subr.mxu0 %v487
      %1488 = vmatpush1.msra.mxu0 %v486
      %1489 = vmatprep.subr.mxu0 %v459
      %1490 = vmatpush1.msra.mxu0 %v458
      %1491 = vmatprep.subr.mxu0 %v431
      %1492 = vmatpush1.msra.mxu0 %v430
      %1493 = vmatprep.subr.mxu0 %v403
      %1494 = vmatpush1.msra.mxu0 %v402
      %1495 = vmatprep.subr.mxu0 %v375
      %1496 = vmatpush1.msra.mxu0 %v374
      %1497 = vmatprep.subr.mxu0 %v347
      %1498 = vmatpush1.msra.mxu0 %v346
      %1499 = vmatprep.subr.mxu0 %v319
      %1500 = vmatpush1.msra.mxu0 %v318
      %1501 = vmatprep.subr.mxu0 %v291
      %1502 = vmatpush1.msra.mxu0 %v290
      %1503 = vmatprep.subr.mxu0 %v263
      %1504 = vmatpush1.msra.mxu0 %v262
      %1505 = vmatprep.subr.mxu0 %v235
      %1506 = vmatpush1.msra.mxu0 %v234
      %1507 = vmatprep.subr.mxu0 0.0
      %1508 = vmatpush2.msra.mxu0 0.0
      %1509 = vmatprep.subr.mxu0 0.0
      %1510 = vmatpush2.msra.mxu0 0.0
      %1511 = vmatprep.subr.mxu0 0.0
      %1512 = vmatpush2.msra.mxu0 0.0
      %1513 = vmatprep.subr.mxu0 0.0
      %1514 = vmatpush2.msra.mxu0 0.0
      %1515 = vmatprep.subr.mxu0 %v991
      %1516 = vmatpush2.msra.mxu0 %v990
      %1517 = vmatprep.subr.mxu0 %v963
      %1518 = vmatpush2.msra.mxu0 %v962
      %1519 = vmatprep.subr.mxu0 %v935
      %1520 = vmatpush2.msra.mxu0 %v934
      %1521 = vmatprep.subr.mxu0 %v907
      %1522 = vmatpush2.msra.mxu0 %v906
      %1523 = vmatprep.subr.mxu0 %v879
      %1524 = vmatpush2.msra.mxu0 %v878
      %1525 = vmatprep.subr.mxu0 %v851
      %1526 = vmatpush2.msra.mxu0 %v850
      %1527 = vmatprep.subr.mxu0 %v823
      %1528 = vmatpush2.msra.mxu0 %v822
      %1529 = vmatprep.subr.mxu0 %v795
      %1530 = vmatpush2.msra.mxu0 %v794
      %1531 = vmatprep.subr.mxu0 %v767
      %1532 = vmatpush2.msra.mxu0 %v766
      %1533 = vmatprep.subr.mxu0 %v739
      %1534 = vmatpush2.msra.mxu0 %v738
      %1535 = vmatprep.subr.mxu0 %v711
      %1536 = vmatpush2.msra.mxu0 %v710
      %1537 = vmatprep.subr.mxu0 %v683
      %1538 = vmatpush2.msra.mxu0 %v682
      %1539 = vmatprep.mubr.f32.mxu0 %v1008
      %1540 = vmatmul.mubr.f32.gmra.mxu0 %v218
      %v1541 = vpop.f32.mrf.mxu0
      %v1542 = vadd.f32 0.0, %v1541
      %v1543 = vpop.f32.mrf.mxu0
      %v1544 = vadd.f32 0.0, %v1543
      %1545 = vmatprep.mubr.f32.mxu0 %v1011
      %1546 = vmatmul.mubr.f32.gmra.mxu0 %v220
      %v1547 = vpop.f32.mrf.mxu0
      %v1548 = vadd.f32 0.0, %v1547
      %v1549 = vpop.f32.mrf.mxu0
      %v1550 = vadd.f32 0.0, %v1549
      %1551 = vdwg.mxu0
      %1552 = vmatprep.subr.mxu0 %v657
      %1553 = vmatpush1.msra.mxu0 %v656
      %1554 = vmatprep.subr.mxu0 %v629
      %1555 = vmatpush1.msra.mxu0 %v628
      %1556 = vmatprep.subr.mxu0 %v601
      %1557 = vmatpush1.msra.mxu0 %v600
      %1558 = vmatprep.subr.mxu0 %v573
      %1559 = vmatpush1.msra.mxu0 %v572
      %1560 = vmatprep.subr.mxu0 %v545
      %1561 = vmatpush1.msra.mxu0 %v544
      %1562 = vmatprep.subr.mxu0 %v517
      %1563 = vmatpush1.msra.mxu0 %v516
      %1564 = vmatprep.subr.mxu0 %v489
      %1565 = vmatpush1.msra.mxu0 %v488
      %1566 = vmatprep.subr.mxu0 %v461
      %1567 = vmatpush1.msra.mxu0 %v460
      %1568 = vmatprep.subr.mxu0 %v433
      %1569 = vmatpush1.msra.mxu0 %v432
      %1570 = vmatprep.subr.mxu0 %v405
      %1571 = vmatpush1.msra.mxu0 %v404
      %1572 = vmatprep.subr.mxu0 %v377
      %1573 = vmatpush1.msra.mxu0 %v376
      %1574 = vmatprep.subr.mxu0 %v349
      %1575 = vmatpush1.msra.mxu0 %v348
      %1576 = vmatprep.subr.mxu0 %v321
      %1577 = vmatpush1.msra.mxu0 %v320
      %1578 = vmatprep.subr.mxu0 %v293
      %1579 = vmatpush1.msra.mxu0 %v292
      %1580 = vmatprep.subr.mxu0 %v265
      %1581 = vmatpush1.msra.mxu0 %v264
      %1582 = vmatprep.subr.mxu0 %v237
      %1583 = vmatpush1.msra.mxu0 %v236
      %1584 = vmatprep.subr.mxu0 0.0
      %1585 = vmatpush2.msra.mxu0 0.0
      %1586 = vmatprep.subr.mxu0 0.0
      %1587 = vmatpush2.msra.mxu0 0.0
      %1588 = vmatprep.subr.mxu0 0.0
      %1589 = vmatpush2.msra.mxu0 0.0
      %1590 = vmatprep.subr.mxu0 0.0
      %1591 = vmatpush2.msra.mxu0 0.0
      %1592 = vmatprep.subr.mxu0 %v993
      %1593 = vmatpush2.msra.mxu0 %v992
      %1594 = vmatprep.subr.mxu0 %v965
      %1595 = vmatpush2.msra.mxu0 %v964
      %1596 = vmatprep.subr.mxu0 %v937
      %1597 = vmatpush2.msra.mxu0 %v936
      %1598 = vmatprep.subr.mxu0 %v909
      %1599 = vmatpush2.msra.mxu0 %v908
      %1600 = vmatprep.subr.mxu0 %v881
      %1601 = vmatpush2.msra.mxu0 %v880
      %1602 = vmatprep.subr.mxu0 %v853
      %1603 = vmatpush2.msra.mxu0 %v852
      %1604 = vmatprep.subr.mxu0 %v825
      %1605 = vmatpush2.msra.mxu0 %v824
      %1606 = vmatprep.subr.mxu0 %v797
      %1607 = vmatpush2.msra.mxu0 %v796
      %1608 = vmatprep.subr.mxu0 %v769
      %1609 = vmatpush2.msra.mxu0 %v768
      %1610 = vmatprep.subr.mxu0 %v741
      %1611 = vmatpush2.msra.mxu0 %v740
      %1612 = vmatprep.subr.mxu0 %v713
      %1613 = vmatpush2.msra.mxu0 %v712
      %1614 = vmatprep.subr.mxu0 %v685
      %1615 = vmatpush2.msra.mxu0 %v684
      %1616 = vmatprep.mubr.f32.mxu0 %v1008
      %1617 = vmatmul.mubr.f32.gmra.mxu0 %v218
      %v1618 = vpop.f32.mrf.mxu0
      %v1619 = vadd.f32 0.0, %v1618
      %v1620 = vpop.f32.mrf.mxu0
      %v1621 = vadd.f32 0.0, %v1620
      %1622 = vmatprep.mubr.f32.mxu0 %v1011
      %1623 = vmatmul.mubr.f32.gmra.mxu0 %v220
      %v1624 = vpop.f32.mrf.mxu0
      %v1625 = vadd.f32 0.0, %v1624
      %v1626 = vpop.f32.mrf.mxu0
      %v1627 = vadd.f32 0.0, %v1626
      %1628 = vdwg.mxu0
      %1629 = vmatprep.subr.mxu0 %v659
      %1630 = vmatpush1.msra.mxu0 %v658
      %1631 = vmatprep.subr.mxu0 %v631
      %1632 = vmatpush1.msra.mxu0 %v630
      %1633 = vmatprep.subr.mxu0 %v603
      %1634 = vmatpush1.msra.mxu0 %v602
      %1635 = vmatprep.subr.mxu0 %v575
      %1636 = vmatpush1.msra.mxu0 %v574
      %1637 = vmatprep.subr.mxu0 %v547
      %1638 = vmatpush1.msra.mxu0 %v546
      %1639 = vmatprep.subr.mxu0 %v519
      %1640 = vmatpush1.msra.mxu0 %v518
      %1641 = vmatprep.subr.mxu0 %v491
      %1642 = vmatpush1.msra.mxu0 %v490
      %1643 = vmatprep.subr.mxu0 %v463
      %1644 = vmatpush1.msra.mxu0 %v462
      %1645 = vmatprep.subr.mxu0 %v435
      %1646 = vmatpush1.msra.mxu0 %v434
      %1647 = vmatprep.subr.mxu0 %v407
      %1648 = vmatpush1.msra.mxu0 %v406
      %1649 = vmatprep.subr.mxu0 %v379
      %1650 = vmatpush1.msra.mxu0 %v378
      %1651 = vmatprep.subr.mxu0 %v351
      %1652 = vmatpush1.msra.mxu0 %v350
      %1653 = vmatprep.subr.mxu0 %v323
      %1654 = vmatpush1.msra.mxu0 %v322
      %1655 = vmatprep.subr.mxu0 %v295
      %1656 = vmatpush1.msra.mxu0 %v294
      %1657 = vmatprep.subr.mxu0 %v267
      %1658 = vmatpush1.msra.mxu0 %v266
      %1659 = vmatprep.subr.mxu0 %v239
      %1660 = vmatpush1.msra.mxu0 %v238
      %1661 = vmatprep.subr.mxu0 0.0
      %1662 = vmatpush2.msra.mxu0 0.0
      %1663 = vmatprep.subr.mxu0 0.0
      %1664 = vmatpush2.msra.mxu0 0.0
      %1665 = vmatprep.subr.mxu0 0.0
      %1666 = vmatpush2.msra.mxu0 0.0
      %1667 = vmatprep.subr.mxu0 0.0
      %1668 = vmatpush2.msra.mxu0 0.0
      %1669 = vmatprep.subr.mxu0 %v995
      %1670 = vmatpush2.msra.mxu0 %v994
      %1671 = vmatprep.subr.mxu0 %v967
      %1672 = vmatpush2.msra.mxu0 %v966
      %1673 = vmatprep.subr.mxu0 %v939
      %1674 = vmatpush2.msra.mxu0 %v938
      %1675 = vmatprep.subr.mxu0 %v911
      %1676 = vmatpush2.msra.mxu0 %v910
      %1677 = vmatprep.subr.mxu0 %v883
      %1678 = vmatpush2.msra.mxu0 %v882
      %1679 = vmatprep.subr.mxu0 %v855
      %1680 = vmatpush2.msra.mxu0 %v854
      %1681 = vmatprep.subr.mxu0 %v827
      %1682 = vmatpush2.msra.mxu0 %v826
      %1683 = vmatprep.subr.mxu0 %v799
      %1684 = vmatpush2.msra.mxu0 %v798
      %1685 = vmatprep.subr.mxu0 %v771
      %1686 = vmatpush2.msra.mxu0 %v770
      %1687 = vmatprep.subr.mxu0 %v743
      %1688 = vmatpush2.msra.mxu0 %v742
      %1689 = vmatprep.subr.mxu0 %v715
      %1690 = vmatpush2.msra.mxu0 %v714
      %1691 = vmatprep.subr.mxu0 %v687
      %1692 = vmatpush2.msra.mxu0 %v686
      %1693 = vmatprep.mubr.f32.mxu0 %v1008
      %1694 = vmatmul.mubr.f32.gmra.mxu0 %v218
      %v1695 = vpop.f32.mrf.mxu0
      %v1696 = vadd.f32 0.0, %v1695
      %v1697 = vpop.f32.mrf.mxu0
      %v1698 = vadd.f32 0.0, %v1697
      %1699 = vmatprep.mubr.f32.mxu0 %v1011
      %1700 = vmatmul.mubr.f32.gmra.mxu0 %v220
      %v1701 = vpop.f32.mrf.mxu0
      %v1702 = vadd.f32 0.0, %v1701
      %v1703 = vpop.f32.mrf.mxu0
      %v1704 = vadd.f32 0.0, %v1703
      %1705 = vdwg.mxu0
      %1706 = vmatprep.subr.mxu0 %v661
      %1707 = vmatpush1.msra.mxu0 %v660
      %1708 = vmatprep.subr.mxu0 %v633
      %1709 = vmatpush1.msra.mxu0 %v632
      %1710 = vmatprep.subr.mxu0 %v605
      %1711 = vmatpush1.msra.mxu0 %v604
      %1712 = vmatprep.subr.mxu0 %v577
      %1713 = vmatpush1.msra.mxu0 %v576
      %1714 = vmatprep.subr.mxu0 %v549
      %1715 = vmatpush1.msra.mxu0 %v548
      %1716 = vmatprep.subr.mxu0 %v521
      %1717 = vmatpush1.msra.mxu0 %v520
      %1718 = vmatprep.subr.mxu0 %v493
      %1719 = vmatpush1.msra.mxu0 %v492
      %1720 = vmatprep.subr.mxu0 %v465
      %1721 = vmatpush1.msra.mxu0 %v464
      %1722 = vmatprep.subr.mxu0 %v437
      %1723 = vmatpush1.msra.mxu0 %v436
      %1724 = vmatprep.subr.mxu0 %v409
      %1725 = vmatpush1.msra.mxu0 %v408
      %1726 = vmatprep.subr.mxu0 %v381
      %1727 = vmatpush1.msra.mxu0 %v380
      %1728 = vmatprep.subr.mxu0 %v353
      %1729 = vmatpush1.msra.mxu0 %v352
      %1730 = vmatprep.subr.mxu0 %v325
      %1731 = vmatpush1.msra.mxu0 %v324
      %1732 = vmatprep.subr.mxu0 %v297
      %1733 = vmatpush1.msra.mxu0 %v296
      %1734 = vmatprep.subr.mxu0 %v269
      %1735 = vmatpush1.msra.mxu0 %v268
      %1736 = vmatprep.subr.mxu0 %v241
      %1737 = vmatpush1.msra.mxu0 %v240
      %1738 = vmatprep.subr.mxu0 0.0
      %1739 = vmatpush2.msra.mxu0 0.0
      %1740 = vmatprep.subr.mxu0 0.0
      %1741 = vmatpush2.msra.mxu0 0.0
      %1742 = vmatprep.subr.mxu0 0.0
      %1743 = vmatpush2.msra.mxu0 0.0
      %1744 = vmatprep.subr.mxu0 0.0
      %1745 = vmatpush2.msra.mxu0 0.0
      %1746 = vmatprep.subr.mxu0 %v997
      %1747 = vmatpush2.msra.mxu0 %v996
      %1748 = vmatprep.subr.mxu0 %v969
      %1749 = vmatpush2.msra.mxu0 %v968
      %1750 = vmatprep.subr.mxu0 %v941
      %1751 = vmatpush2.msra.mxu0 %v940
      %1752 = vmatprep.subr.mxu0 %v913
      %1753 = vmatpush2.msra.mxu0 %v912
      %1754 = vmatprep.subr.mxu0 %v885
      %1755 = vmatpush2.msra.mxu0 %v884
      %1756 = vmatprep.subr.mxu0 %v857
      %1757 = vmatpush2.msra.mxu0 %v856
      %1758 = vmatprep.subr.mxu0 %v829
      %1759 = vmatpush2.msra.mxu0 %v828
      %1760 = vmatprep.subr.mxu0 %v801
      %1761 = vmatpush2.msra.mxu0 %v800
      %1762 = vmatprep.subr.mxu0 %v773
      %1763 = vmatpush2.msra.mxu0 %v772
      %1764 = vmatprep.subr.mxu0 %v745
      %1765 = vmatpush2.msra.mxu0 %v744
      %1766 = vmatprep.subr.mxu0 %v717
      %1767 = vmatpush2.msra.mxu0 %v716
      %1768 = vmatprep.subr.mxu0 %v689
      %1769 = vmatpush2.msra.mxu0 %v688
      %1770 = vmatprep.mubr.f32.mxu0 %v1008
      %1771 = vmatmul.mubr.f32.gmra.mxu0 %v218
      %v1772 = vpop.f32.mrf.mxu0
      %v1773 = vadd.f32 0.0, %v1772
      %v1774 = vpop.f32.mrf.mxu0
      %v1775 = vadd.f32 0.0, %v1774
      %1776 = vmatprep.mubr.f32.mxu0 %v1011
      %1777 = vmatmul.mubr.f32.gmra.mxu0 %v220
      %v1778 = vpop.f32.mrf.mxu0
      %v1779 = vadd.f32 0.0, %v1778
      %v1780 = vpop.f32.mrf.mxu0
      %v1781 = vadd.f32 0.0, %v1780
      %1782 = vdwg.mxu0
      %1783 = vmatprep.subr.mxu0 %v663
      %1784 = vmatpush1.msra.mxu0 %v662
      %1785 = vmatprep.subr.mxu0 %v635
      %1786 = vmatpush1.msra.mxu0 %v634
      %1787 = vmatprep.subr.mxu0 %v607
      %1788 = vmatpush1.msra.mxu0 %v606
      %1789 = vmatprep.subr.mxu0 %v579
      %1790 = vmatpush1.msra.mxu0 %v578
      %1791 = vmatprep.subr.mxu0 %v551
      %1792 = vmatpush1.msra.mxu0 %v550
      %1793 = vmatprep.subr.mxu0 %v523
      %1794 = vmatpush1.msra.mxu0 %v522
      %1795 = vmatprep.subr.mxu0 %v495
      %1796 = vmatpush1.msra.mxu0 %v494
      %1797 = vmatprep.subr.mxu0 %v467
      %1798 = vmatpush1.msra.mxu0 %v466
      %1799 = vmatprep.subr.mxu0 %v439
      %1800 = vmatpush1.msra.mxu0 %v438
      %1801 = vmatprep.subr.mxu0 %v411
      %1802 = vmatpush1.msra.mxu0 %v410
      %1803 = vmatprep.subr.mxu0 %v383
      %1804 = vmatpush1.msra.mxu0 %v382
      %1805 = vmatprep.subr.mxu0 %v355
      %1806 = vmatpush1.msra.mxu0 %v354
      %1807 = vmatprep.subr.mxu0 %v327
      %1808 = vmatpush1.msra.mxu0 %v326
      %1809 = vmatprep.subr.mxu0 %v299
      %1810 = vmatpush1.msra.mxu0 %v298
      %1811 = vmatprep.subr.mxu0 %v271
      %1812 = vmatpush1.msra.mxu0 %v270
      %1813 = vmatprep.subr.mxu0 %v243
      %1814 = vmatpush1.msra.mxu0 %v242
      %1815 = vmatprep.subr.mxu0 0.0
      %1816 = vmatpush2.msra.mxu0 0.0
      %1817 = vmatprep.subr.mxu0 0.0
      %1818 = vmatpush2.msra.mxu0 0.0
      %1819 = vmatprep.subr.mxu0 0.0
      %1820 = vmatpush2.msra.mxu0 0.0
      %1821 = vmatprep.subr.mxu0 0.0
      %1822 = vmatpush2.msra.mxu0 0.0
      %1823 = vmatprep.subr.mxu0 %v999
      %1824 = vmatpush2.msra.mxu0 %v998
      %1825 = vmatprep.subr.mxu0 %v971
      %1826 = vmatpush2.msra.mxu0 %v970
      %1827 = vmatprep.subr.mxu0 %v943
      %1828 = vmatpush2.msra.mxu0 %v942
      %1829 = vmatprep.subr.mxu0 %v915
      %1830 = vmatpush2.msra.mxu0 %v914
      %1831 = vmatprep.subr.mxu0 %v887
      %1832 = vmatpush2.msra.mxu0 %v886
      %1833 = vmatprep.subr.mxu0 %v859
      %1834 = vmatpush2.msra.mxu0 %v858
      %1835 = vmatprep.subr.mxu0 %v831
      %1836 = vmatpush2.msra.mxu0 %v830
      %1837 = vmatprep.subr.mxu0 %v803
      %1838 = vmatpush2.msra.mxu0 %v802
      %1839 = vmatprep.subr.mxu0 %v775
      %1840 = vmatpush2.msra.mxu0 %v774
      %1841 = vmatprep.subr.mxu0 %v747
      %1842 = vmatpush2.msra.mxu0 %v746
      %1843 = vmatprep.subr.mxu0 %v719
      %1844 = vmatpush2.msra.mxu0 %v718
      %1845 = vmatprep.subr.mxu0 %v691
      %1846 = vmatpush2.msra.mxu0 %v690
      %1847 = vmatprep.mubr.f32.mxu0 %v1008
      %1848 = vmatmul.mubr.f32.gmra.mxu0 %v218
      %v1849 = vpop.f32.mrf.mxu0
      %v1850 = vadd.f32 0.0, %v1849
      %v1851 = vpop.f32.mrf.mxu0
      %v1852 = vadd.f32 0.0, %v1851
      %1853 = vmatprep.mubr.f32.mxu0 %v1011
      %1854 = vmatmul.mubr.f32.gmra.mxu0 %v220
      %v1855 = vpop.f32.mrf.mxu0
      %v1856 = vadd.f32 0.0, %v1855
      %v1857 = vpop.f32.mrf.mxu0
      %v1858 = vadd.f32 0.0, %v1857
      %1859 = vdwg.mxu0
      %1860 = vmatprep.subr.mxu0 %v665
      %1861 = vmatpush1.msra.mxu0 %v664
      %1862 = vmatprep.subr.mxu0 %v637
      %1863 = vmatpush1.msra.mxu0 %v636
      %1864 = vmatprep.subr.mxu0 %v609
      %1865 = vmatpush1.msra.mxu0 %v608
      %1866 = vmatprep.subr.mxu0 %v581
      %1867 = vmatpush1.msra.mxu0 %v580
      %1868 = vmatprep.subr.mxu0 %v553
      %1869 = vmatpush1.msra.mxu0 %v552
      %1870 = vmatprep.subr.mxu0 %v525
      %1871 = vmatpush1.msra.mxu0 %v524
      %1872 = vmatprep.subr.mxu0 %v497
      %1873 = vmatpush1.msra.mxu0 %v496
      %1874 = vmatprep.subr.mxu0 %v469
      %1875 = vmatpush1.msra.mxu0 %v468
      %1876 = vmatprep.subr.mxu0 %v441
      %1877 = vmatpush1.msra.mxu0 %v440
      %1878 = vmatprep.subr.mxu0 %v413
      %1879 = vmatpush1.msra.mxu0 %v412
      %1880 = vmatprep.subr.mxu0 %v385
      %1881 = vmatpush1.msra.mxu0 %v384
      %1882 = vmatprep.subr.mxu0 %v357
      %1883 = vmatpush1.msra.mxu0 %v356
      %1884 = vmatprep.subr.mxu0 %v329
      %1885 = vmatpush1.msra.mxu0 %v328
      %1886 = vmatprep.subr.mxu0 %v301
      %1887 = vmatpush1.msra.mxu0 %v300
      %1888 = vmatprep.subr.mxu0 %v273
      %1889 = vmatpush1.msra.mxu0 %v272
      %1890 = vmatprep.subr.mxu0 %v245
      %1891 = vmatpush1.msra.mxu0 %v244
      %1892 = vmatprep.subr.mxu0 0.0
      %1893 = vmatpush2.msra.mxu0 0.0
      %1894 = vmatprep.subr.mxu0 0.0
      %1895 = vmatpush2.msra.mxu0 0.0
      %1896 = vmatprep.subr.mxu0 0.0
      %1897 = vmatpush2.msra.mxu0 0.0
      %1898 = vmatprep.subr.mxu0 0.0
      %1899 = vmatpush2.msra.mxu0 0.0
      %1900 = vmatprep.subr.mxu0 %v1001
      %1901 = vmatpush2.msra.mxu0 %v1000
      %1902 = vmatprep.subr.mxu0 %v973
      %1903 = vmatpush2.msra.mxu0 %v972
      %1904 = vmatprep.subr.mxu0 %v945
      %1905 = vmatpush2.msra.mxu0 %v944
      %1906 = vmatprep.subr.mxu0 %v917
      %1907 = vmatpush2.msra.mxu0 %v916
      %1908 = vmatprep.subr.mxu0 %v889
      %1909 = vmatpush2.msra.mxu0 %v888
      %1910 = vmatprep.subr.mxu0 %v861
      %1911 = vmatpush2.msra.mxu0 %v860
      %1912 = vmatprep.subr.mxu0 %v833
      %1913 = vmatpush2.msra.mxu0 %v832
      %1914 = vmatprep.subr.mxu0 %v805
      %1915 = vmatpush2.msra.mxu0 %v804
      %1916 = vmatprep.subr.mxu0 %v777
      %1917 = vmatpush2.msra.mxu0 %v776
      %1918 = vmatprep.subr.mxu0 %v749
      %1919 = vmatpush2.msra.mxu0 %v748
      %1920 = vmatprep.subr.mxu0 %v721
      %1921 = vmatpush2.msra.mxu0 %v720
      %1922 = vmatprep.subr.mxu0 %v693
      %1923 = vmatpush2.msra.mxu0 %v692
      %1924 = vmatprep.mubr.f32.mxu0 %v1008
      %1925 = vmatmul.mubr.f32.gmra.mxu0 %v218
      %v1926 = vpop.f32.mrf.mxu0
      %v1927 = vadd.f32 0.0, %v1926
      %v1928 = vpop.f32.mrf.mxu0
      %v1929 = vadd.f32 0.0, %v1928
      %1930 = vmatprep.mubr.f32.mxu0 %v1011
      %1931 = vmatmul.mubr.f32.gmra.mxu0 %v220
      %v1932 = vpop.f32.mrf.mxu0
      %v1933 = vadd.f32 0.0, %v1932
      %v1934 = vpop.f32.mrf.mxu0
      %v1935 = vadd.f32 0.0, %v1934
      %1936 = vdwg.mxu0
      %1937 = vmatprep.subr.mxu0 %v667
      %1938 = vmatpush1.msra.mxu0 %v666
      %1939 = vmatprep.subr.mxu0 %v639
      %1940 = vmatpush1.msra.mxu0 %v638
      %1941 = vmatprep.subr.mxu0 %v611
      %1942 = vmatpush1.msra.mxu0 %v610
      %1943 = vmatprep.subr.mxu0 %v583
      %1944 = vmatpush1.msra.mxu0 %v582
      %1945 = vmatprep.subr.mxu0 %v555
      %1946 = vmatpush1.msra.mxu0 %v554
      %1947 = vmatprep.subr.mxu0 %v527
      %1948 = vmatpush1.msra.mxu0 %v526
      %1949 = vmatprep.subr.mxu0 %v499
      %1950 = vmatpush1.msra.mxu0 %v498
      %1951 = vmatprep.subr.mxu0 %v471
      %1952 = vmatpush1.msra.mxu0 %v470
      %1953 = vmatprep.subr.mxu0 %v443
      %1954 = vmatpush1.msra.mxu0 %v442
      %1955 = vmatprep.subr.mxu0 %v415
      %1956 = vmatpush1.msra.mxu0 %v414
      %1957 = vmatprep.subr.mxu0 %v387
      %1958 = vmatpush1.msra.mxu0 %v386
      %1959 = vmatprep.subr.mxu0 %v359
      %1960 = vmatpush1.msra.mxu0 %v358
      %1961 = vmatprep.subr.mxu0 %v331
      %1962 = vmatpush1.msra.mxu0 %v330
      %1963 = vmatprep.subr.mxu0 %v303
      %1964 = vmatpush1.msra.mxu0 %v302
      %1965 = vmatprep.subr.mxu0 %v275
      %1966 = vmatpush1.msra.mxu0 %v274
      %1967 = vmatprep.subr.mxu0 %v247
      %1968 = vmatpush1.msra.mxu0 %v246
      %1969 = vmatprep.subr.mxu0 0.0
      %1970 = vmatpush2.msra.mxu0 0.0
      %1971 = vmatprep.subr.mxu0 0.0
      %1972 = vmatpush2.msra.mxu0 0.0
      %1973 = vmatprep.subr.mxu0 0.0
      %1974 = vmatpush2.msra.mxu0 0.0
      %1975 = vmatprep.subr.mxu0 0.0
      %1976 = vmatpush2.msra.mxu0 0.0
      %1977 = vmatprep.subr.mxu0 %v1003
      %1978 = vmatpush2.msra.mxu0 %v1002
      %1979 = vmatprep.subr.mxu0 %v975
      %1980 = vmatpush2.msra.mxu0 %v974
      %1981 = vmatprep.subr.mxu0 %v947
      %1982 = vmatpush2.msra.mxu0 %v946
      %1983 = vmatprep.subr.mxu0 %v919
      %1984 = vmatpush2.msra.mxu0 %v918
      %1985 = vmatprep.subr.mxu0 %v891
      %1986 = vmatpush2.msra.mxu0 %v890
      %1987 = vmatprep.subr.mxu0 %v863
      %1988 = vmatpush2.msra.mxu0 %v862
      %1989 = vmatprep.subr.mxu0 %v835
      %1990 = vmatpush2.msra.mxu0 %v834
      %1991 = vmatprep.subr.mxu0 %v807
      %1992 = vmatpush2.msra.mxu0 %v806
      %1993 = vmatprep.subr.mxu0 %v779
      %1994 = vmatpush2.msra.mxu0 %v778
      %1995 = vmatprep.subr.mxu0 %v751
      %1996 = vmatpush2.msra.mxu0 %v750
      %1997 = vmatprep.subr.mxu0 %v723
      %1998 = vmatpush2.msra.mxu0 %v722
      %1999 = vmatprep.subr.mxu0 %v695
      %2000 = vmatpush2.msra.mxu0 %v694
      %2001 = vmatprep.mubr.f32.mxu0 %v1008
      %2002 = vmatmul.mubr.f32.gmra.mxu0 %v218
      %v2003 = vpop.f32.mrf.mxu0
      %v2004 = vadd.f32 0.0, %v2003
      %v2005 = vpop.f32.mrf.mxu0
      %v2006 = vadd.f32 0.0, %v2005
      %2007 = vmatprep.mubr.f32.mxu0 %v1011
      %2008 = vmatmul.mubr.f32.gmra.mxu0 %v220
      %v2009 = vpop.f32.mrf.mxu0
      %v2010 = vadd.f32 0.0, %v2009
      %v2011 = vpop.f32.mrf.mxu0
      %v2012 = vadd.f32 0.0, %v2011
      %2013 = vdwg.mxu0
      %2014 = vmatprep.subr.mxu0 %v669
      %2015 = vmatpush1.msra.mxu0 %v668
      %2016 = vmatprep.subr.mxu0 %v641
      %2017 = vmatpush1.msra.mxu0 %v640
      %2018 = vmatprep.subr.mxu0 %v613
      %2019 = vmatpush1.msra.mxu0 %v612
      %2020 = vmatprep.subr.mxu0 %v585
      %2021 = vmatpush1.msra.mxu0 %v584
      %2022 = vmatprep.subr.mxu0 %v557
      %2023 = vmatpush1.msra.mxu0 %v556
      %2024 = vmatprep.subr.mxu0 %v529
      %2025 = vmatpush1.msra.mxu0 %v528
      %2026 = vmatprep.subr.mxu0 %v501
      %2027 = vmatpush1.msra.mxu0 %v500
      %2028 = vmatprep.subr.mxu0 %v473
      %2029 = vmatpush1.msra.mxu0 %v472
      %2030 = vmatprep.subr.mxu0 %v445
      %2031 = vmatpush1.msra.mxu0 %v444
      %2032 = vmatprep.subr.mxu0 %v417
      %2033 = vmatpush1.msra.mxu0 %v416
      %2034 = vmatprep.subr.mxu0 %v389
      %2035 = vmatpush1.msra.mxu0 %v388
      %2036 = vmatprep.subr.mxu0 %v361
      %2037 = vmatpush1.msra.mxu0 %v360
      %2038 = vmatprep.subr.mxu0 %v333
      %2039 = vmatpush1.msra.mxu0 %v332
      %2040 = vmatprep.subr.mxu0 %v305
      %2041 = vmatpush1.msra.mxu0 %v304
      %2042 = vmatprep.subr.mxu0 %v277
      %2043 = vmatpush1.msra.mxu0 %v276
      %2044 = vmatprep.subr.mxu0 %v249
      %2045 = vmatpush1.msra.mxu0 %v248
      %2046 = vmatprep.subr.mxu0 0.0
      %2047 = vmatpush2.msra.mxu0 0.0
      %2048 = vmatprep.subr.mxu0 0.0
      %2049 = vmatpush2.msra.mxu0 0.0
      %2050 = vmatprep.subr.mxu0 0.0
      %2051 = vmatpush2.msra.mxu0 0.0
      %2052 = vmatprep.subr.mxu0 0.0
      %2053 = vmatpush2.msra.mxu0 0.0
      %2054 = vmatprep.subr.mxu0 %v1005
      %2055 = vmatpush2.msra.mxu0 %v1004
      %2056 = vmatprep.subr.mxu0 %v977
      %2057 = vmatpush2.msra.mxu0 %v976
      %2058 = vmatprep.subr.mxu0 %v949
      %2059 = vmatpush2.msra.mxu0 %v948
      %2060 = vmatprep.subr.mxu0 %v921
      %2061 = vmatpush2.msra.mxu0 %v920
      %2062 = vmatprep.subr.mxu0 %v893
      %2063 = vmatpush2.msra.mxu0 %v892
      %2064 = vmatprep.subr.mxu0 %v865
      %2065 = vmatpush2.msra.mxu0 %v864
      %2066 = vmatprep.subr.mxu0 %v837
      %2067 = vmatpush2.msra.mxu0 %v836
      %2068 = vmatprep.subr.mxu0 %v809
      %2069 = vmatpush2.msra.mxu0 %v808
      %2070 = vmatprep.subr.mxu0 %v781
      %2071 = vmatpush2.msra.mxu0 %v780
      %2072 = vmatprep.subr.mxu0 %v753
      %2073 = vmatpush2.msra.mxu0 %v752
      %2074 = vmatprep.subr.mxu0 %v725
      %2075 = vmatpush2.msra.mxu0 %v724
      %2076 = vmatprep.subr.mxu0 %v697
      %2077 = vmatpush2.msra.mxu0 %v696
      %2078 = vmatprep.mubr.f32.mxu0 %v1008
      %2079 = vmatmul.mubr.f32.gmra.mxu0 %v218
      %v2080 = vpop.f32.mrf.mxu0
      %v2081 = vadd.f32 0.0, %v2080
      %v2082 = vpop.f32.mrf.mxu0
      %v2083 = vadd.f32 0.0, %v2082
      %2084 = vmatprep.mubr.f32.mxu0 %v1011
      %2085 = vmatmul.mubr.f32.gmra.mxu0 %v220
      %v2086 = vpop.f32.mrf.mxu0
      %v2087 = vadd.f32 0.0, %v2086
      %v2088 = vpop.f32.mrf.mxu0
      %v2089 = vadd.f32 0.0, %v2088
      %2090 = vdwg.mxu0
      %v2091 = vld [vmem:[%s205] sm:$0xff]
      %v2092 = vld [vmem:[%s205 + $0x8] sm:$0xff]
      %v2093 = vld [vmem:[%s205 + $0x10] sm:$0xff]
      %v2094 = vld [vmem:[%s205 + $0x18] sm:$0xff]
      %v2095 = vld [vmem:[%s205 + $0x20] sm:$0xff]
      %v2096 = vld [vmem:[%s205 + $0x28] sm:$0xff]
      %v2097 = vld [vmem:[%s205 + $0x30] sm:$0xff]
      %v2098 = vld [vmem:[%s205 + $0x38] sm:$0xff]
      %v2099 = vld [vmem:[%s205 + $0x40] sm:$0xff]
      %v2100 = vld [vmem:[%s205 + $0x48] sm:$0xff]
      %v2101 = vld [vmem:[%s205 + $0x50] sm:$0xff]
      %v2102 = vld [vmem:[%s205 + $0x58] sm:$0xff]
      %v2103 = vld [vmem:[%s205 + $0x60] sm:$0xff]
      %v2104 = vld [vmem:[%s205 + $0x68] sm:$0xff]
      %v2105 = vld [vmem:[%s205 + $0x70] sm:$0xff]
      %v2106 = vld [vmem:[%s205 + $0x78] sm:$0xff]
      %v2107 = vld [vmem:[%s205 + $0x80] sm:$0xff]
      %v2108 = vld [vmem:[%s205 + $0x88] sm:$0xff]
      %v2109 = vld [vmem:[%s205 + $0x90] sm:$0xff]
      %v2110 = vld [vmem:[%s205 + $0x98] sm:$0xff]
      %v2111 = vld [vmem:[%s205 + $0xa0] sm:$0xff]
      %v2112 = vld [vmem:[%s205 + $0xa8] sm:$0xff]
      %v2113 = vld [vmem:[%s205 + $0xb0] sm:$0xff]
      %v2114 = vld [vmem:[%s205 + $0xb8] sm:$0xff]
      %v2115 = vld [vmem:[%s205 + $0xc0] sm:$0xff]
      %v2116 = vld [vmem:[%s205 + $0xc8] sm:$0xff]
      %v2117 = vld [vmem:[%s205 + $0xd0] sm:$0xff]
      %v2118 = vld [vmem:[%s205 + $0xd8] sm:$0xff]
      %vm2119 = vcmask 113664
      %v2121 = vsel %vm2119, %v2091, 0
      %v2124 = vsel %vm2119, %v2092, 0
      %v2127 = vsel %vm2119, %v2093, 0
      %v2130 = vsel %vm2119, %v2094, 0
      %v2133 = vsel %vm2119, %v2095, 0
      %v2136 = vsel %vm2119, %v2096, 0
      %v2139 = vsel %vm2119, %v2097, 0
      %v2142 = vsel %vm2119, %v2098, 0
      %v2145 = vsel %vm2119, %v2099, 0
      %v2148 = vsel %vm2119, %v2100, 0
      %v2151 = vsel %vm2119, %v2101, 0
      %v2154 = vsel %vm2119, %v2102, 0
      %v2157 = vsel %vm2119, %v2103, 0
      %v2160 = vsel %vm2119, %v2104, 0
      %v2163 = vsel %vm2119, %v2105, 0
      %v2166 = vsel %vm2119, %v2106, 0
      %v2169 = vsel %vm2119, %v2107, 0
      %v2172 = vsel %vm2119, %v2108, 0
      %v2175 = vsel %vm2119, %v2109, 0
      %v2178 = vsel %vm2119, %v2110, 0
      %v2181 = vsel %vm2119, %v2111, 0
      %v2184 = vsel %vm2119, %v2112, 0
      %v2187 = vsel %vm2119, %v2113, 0
      %v2190 = vsel %vm2119, %v2114, 0
      %v2193 = vsel %vm2119, %v2115, 0
      %v2196 = vsel %vm2119, %v2116, 0
      %v2199 = vsel %vm2119, %v2117, 0
      %v2202 = vsel %vm2119, %v2118, 0
      %vm2204 = vcmask 1045504
      %v2206 = vsel %vm2204, %v1086, 0
      %v2209 = vsel %vm2204, %v1088, 0
      %v2212 = vsel %vm2204, %v1163, 0
      %v2215 = vsel %vm2204, %v1165, 0
      %v2218 = vsel %vm2204, %v1240, 0
      %v2221 = vsel %vm2204, %v1242, 0
      %v2224 = vsel %vm2204, %v1317, 0
      %v2227 = vsel %vm2204, %v1319, 0
      %v2230 = vsel %vm2204, %v1394, 0
      %v2233 = vsel %vm2204, %v1396, 0
      %v2236 = vsel %vm2204, %v1471, 0
      %v2239 = vsel %vm2204, %v1473, 0
      %v2242 = vsel %vm2204, %v1548, 0
      %v2245 = vsel %vm2204, %v1550, 0
      %v2248 = vsel %vm2204, %v1625, 0
      %v2251 = vsel %vm2204, %v1627, 0
      %v2254 = vsel %vm2204, %v1702, 0
      %v2257 = vsel %vm2204, %v1704, 0
      %v2260 = vsel %vm2204, %v1779, 0
      %v2263 = vsel %vm2204, %v1781, 0
      %v2266 = vsel %vm2204, %v1856, 0
      %v2269 = vsel %vm2204, %v1858, 0
      %v2272 = vsel %vm2204, %v1933, 0
      %v2275 = vsel %vm2204, %v1935, 0
      %v2278 = vsel %vm2204, %v2010, 0
      %v2281 = vsel %vm2204, %v2012, 0
      %v2284 = vsel %vm2204, %v2087, 0
      %v2287 = vsel %vm2204, %v2089, 0
      %2289 = vmatprep.subr.mxu0 0.0
      %2290 = vmatpush1.msra.mxu0 0.0
      %2291 = vmatprep.subr.mxu0 0.0
      %2292 = vmatpush1.msra.mxu0 0.0
      %2293 = vmatprep.subr.mxu0 0.0
      %2294 = vmatpush1.msra.mxu0 0.0
      %2295 = vmatprep.subr.mxu0 0.0
      %2296 = vmatpush1.msra.mxu0 0.0
      %2297 = vmatprep.subr.mxu0 0.0
      %2298 = vmatpush1.msra.mxu0 0.0
      %2299 = vmatprep.subr.mxu0 0.0
      %2300 = vmatpush1.msra.mxu0 0.0
      %2301 = vmatprep.subr.mxu0 0.0
      %2302 = vmatpush1.msra.mxu0 0.0
      %2303 = vmatprep.subr.mxu0 0.0
      %2304 = vmatpush1.msra.mxu0 0.0
      %2305 = vmatprep.subr.mxu0 0.0
      %2306 = vmatpush1.msra.mxu0 0.0
      %2307 = vmatprep.subr.mxu0 0.0
      %2308 = vmatpush1.msra.mxu0 0.0
      %2309 = vmatprep.subr.mxu0 0.0
      %2310 = vmatpush1.msra.mxu0 0.0
      %2311 = vmatprep.subr.mxu0 0.0
      %2312 = vmatpush1.msra.mxu0 0.0
      %2313 = vmatprep.subr.mxu0 0.0
      %2314 = vmatpush1.msra.mxu0 0.0
      %2315 = vmatprep.subr.mxu0 0.0
      %2316 = vmatpush1.msra.mxu0 0.0
      %2317 = vmatprep.subr.mxu0 %v2209
      %2318 = vmatpush1.msra.mxu0 %v2206
      %2319 = vmatprep.subr.mxu0 %v1082
      %2320 = vmatpush1.msra.mxu0 %v1080
      %2321 = vmatprep.subr.mxu0 0.0
      %2322 = vmatpush2.msra.mxu0 0.0
      %2323 = vmatprep.subr.mxu0 0.0
      %2324 = vmatpush2.msra.mxu0 0.0
      %2325 = vmatprep.subr.mxu0 0.0
      %2326 = vmatpush2.msra.mxu0 0.0
      %2327 = vmatprep.subr.mxu0 0.0
      %2328 = vmatpush2.msra.mxu0 0.0
      %2329 = vmatprep.subr.mxu0 0.0
      %2330 = vmatpush2.msra.mxu0 0.0
      %2331 = vmatprep.subr.mxu0 0.0
      %2332 = vmatpush2.msra.mxu0 0.0
      %2333 = vmatprep.subr.mxu0 0.0
      %2334 = vmatpush2.msra.mxu0 0.0
      %2335 = vmatprep.subr.mxu0 0.0
      %2336 = vmatpush2.msra.mxu0 0.0
      %2337 = vmatprep.subr.mxu0 0.0
      %2338 = vmatpush2.msra.mxu0 0.0
      %2339 = vmatprep.subr.mxu0 0.0
      %2340 = vmatpush2.msra.mxu0 0.0
      %2341 = vmatprep.subr.mxu0 0.0
      %2342 = vmatpush2.msra.mxu0 0.0
      %2343 = vmatprep.subr.mxu0 0.0
      %2344 = vmatpush2.msra.mxu0 0.0
      %2345 = vmatprep.subr.mxu0 0.0
      %2346 = vmatpush2.msra.mxu0 0.0
      %2347 = vmatprep.subr.mxu0 0.0
      %2348 = vmatpush2.msra.mxu0 0.0
      %2349 = vmatprep.subr.mxu0 0.0
      %2350 = vmatpush2.msra.mxu0 0.0
      %2351 = vmatprep.subr.mxu0 0.0
      %2352 = vmatpush2.msra.mxu0 0.0
      %2353 = vmatprep.mubr.f32.mxu0 0.0
      %2354 = vmatmul.mubr.f32.gmra.mxu0 %v2121
      %v2355 = vpop.f32.mrf.mxu0
      %v2356 = vadd.f32 0.0, %v2355
      %v2357 = vpop.f32.mrf.mxu0
      %v2358 = vadd.f32 0.0, %v2357
      %2359 = vmatprep.mubr.f32.mxu0 0.0
      %2360 = vmatmul.mubr.f32.gmra.mxu0 %v2124
      %v2361 = vpop.f32.mrf.mxu0
      %v2362 = vadd.f32 0.0, %v2361
      %v2363 = vpop.f32.mrf.mxu0
      %v2364 = vadd.f32 0.0, %v2363
      %2365 = vmatprep.mubr.f32.mxu0 0.0
      %2366 = vmatmul.mubr.f32.gmra.mxu0 %v2127
      %v2367 = vpop.f32.mrf.mxu0
      %v2368 = vadd.f32 0.0, %v2367
      %v2369 = vpop.f32.mrf.mxu0
      %v2370 = vadd.f32 0.0, %v2369
      %2371 = vmatprep.mubr.f32.mxu0 0.0
      %2372 = vmatmul.mubr.f32.gmra.mxu0 %v2130
      %v2373 = vpop.f32.mrf.mxu0
      %v2374 = vadd.f32 0.0, %v2373
      %v2375 = vpop.f32.mrf.mxu0
      %v2376 = vadd.f32 0.0, %v2375
      %2377 = vmatprep.mubr.f32.mxu0 0.0
      %2378 = vmatmul.mubr.f32.gmra.mxu0 %v2133
      %v2379 = vpop.f32.mrf.mxu0
      %v2380 = vadd.f32 0.0, %v2379
      %v2381 = vpop.f32.mrf.mxu0
      %v2382 = vadd.f32 0.0, %v2381
      %2383 = vmatprep.mubr.f32.mxu0 0.0
      %2384 = vmatmul.mubr.f32.gmra.mxu0 %v2136
      %v2385 = vpop.f32.mrf.mxu0
      %v2386 = vadd.f32 0.0, %v2385
      %v2387 = vpop.f32.mrf.mxu0
      %v2388 = vadd.f32 0.0, %v2387
      %2389 = vmatprep.mubr.f32.mxu0 0.0
      %2390 = vmatmul.mubr.f32.gmra.mxu0 %v2139
      %v2391 = vpop.f32.mrf.mxu0
      %v2392 = vadd.f32 0.0, %v2391
      %v2393 = vpop.f32.mrf.mxu0
      %v2394 = vadd.f32 0.0, %v2393
      %2395 = vmatprep.mubr.f32.mxu0 0.0
      %2396 = vmatmul.mubr.f32.gmra.mxu0 %v2142
      %v2397 = vpop.f32.mrf.mxu0
      %v2398 = vadd.f32 0.0, %v2397
      %v2399 = vpop.f32.mrf.mxu0
      %v2400 = vadd.f32 0.0, %v2399
      %2401 = vmatprep.mubr.f32.mxu0 0.0
      %2402 = vmatmul.mubr.f32.gmra.mxu0 %v2145
      %v2403 = vpop.f32.mrf.mxu0
      %v2404 = vadd.f32 0.0, %v2403
      %v2405 = vpop.f32.mrf.mxu0
      %v2406 = vadd.f32 0.0, %v2405
      %2407 = vmatprep.mubr.f32.mxu0 0.0
      %2408 = vmatmul.mubr.f32.gmra.mxu0 %v2148
      %v2409 = vpop.f32.mrf.mxu0
      %v2410 = vadd.f32 0.0, %v2409
      %v2411 = vpop.f32.mrf.mxu0
      %v2412 = vadd.f32 0.0, %v2411
      %2413 = vmatprep.mubr.f32.mxu0 0.0
      %2414 = vmatmul.mubr.f32.gmra.mxu0 %v2151
      %v2415 = vpop.f32.mrf.mxu0
      %v2416 = vadd.f32 0.0, %v2415
      %v2417 = vpop.f32.mrf.mxu0
      %v2418 = vadd.f32 0.0, %v2417
      %2419 = vmatprep.mubr.f32.mxu0 0.0
      %2420 = vmatmul.mubr.f32.gmra.mxu0 %v2154
      %v2421 = vpop.f32.mrf.mxu0
      %v2422 = vadd.f32 0.0, %v2421
      %v2423 = vpop.f32.mrf.mxu0
      %v2424 = vadd.f32 0.0, %v2423
      %2425 = vmatprep.mubr.f32.mxu0 0.0
      %2426 = vmatmul.mubr.f32.gmra.mxu0 %v2157
      %v2427 = vpop.f32.mrf.mxu0
      %v2428 = vadd.f32 0.0, %v2427
      %v2429 = vpop.f32.mrf.mxu0
      %v2430 = vadd.f32 0.0, %v2429
      %2431 = vmatprep.mubr.f32.mxu0 0.0
      %2432 = vmatmul.mubr.f32.gmra.mxu0 %v2160
      %v2433 = vpop.f32.mrf.mxu0
      %v2434 = vadd.f32 0.0, %v2433
      %v2435 = vpop.f32.mrf.mxu0
      %v2436 = vadd.f32 0.0, %v2435
      %2437 = vmatprep.mubr.f32.mxu0 0.0
      %2438 = vmatmul.mubr.f32.gmra.mxu0 %v2163
      %v2439 = vpop.f32.mrf.mxu0
      %v2440 = vadd.f32 0.0, %v2439
      %v2441 = vpop.f32.mrf.mxu0
      %v2442 = vadd.f32 0.0, %v2441
      %2443 = vmatprep.mubr.f32.mxu0 0.0
      %2444 = vmatmul.mubr.f32.gmra.mxu0 %v2166
      %v2445 = vpop.f32.mrf.mxu0
      %v2446 = vadd.f32 0.0, %v2445
      %v2447 = vpop.f32.mrf.mxu0
      %v2448 = vadd.f32 0.0, %v2447
      %2449 = vmatprep.mubr.f32.mxu0 0.0
      %2450 = vmatmul.mubr.f32.gmra.mxu0 %v2169
      %v2451 = vpop.f32.mrf.mxu0
      %v2452 = vadd.f32 0.0, %v2451
      %v2453 = vpop.f32.mrf.mxu0
      %v2454 = vadd.f32 0.0, %v2453
      %2455 = vmatprep.mubr.f32.mxu0 0.0
      %2456 = vmatmul.mubr.f32.gmra.mxu0 %v2172
      %v2457 = vpop.f32.mrf.mxu0
      %v2458 = vadd.f32 0.0, %v2457
      %v2459 = vpop.f32.mrf.mxu0
      %v2460 = vadd.f32 0.0, %v2459
      %2461 = vmatprep.mubr.f32.mxu0 0.0
      %2462 = vmatmul.mubr.f32.gmra.mxu0 %v2175
      %v2463 = vpop.f32.mrf.mxu0
      %v2464 = vadd.f32 0.0, %v2463
      %v2465 = vpop.f32.mrf.mxu0
      %v2466 = vadd.f32 0.0, %v2465
      %2467 = vmatprep.mubr.f32.mxu0 0.0
      %2468 = vmatmul.mubr.f32.gmra.mxu0 %v2178
      %v2469 = vpop.f32.mrf.mxu0
      %v2470 = vadd.f32 0.0, %v2469
      %v2471 = vpop.f32.mrf.mxu0
      %v2472 = vadd.f32 0.0, %v2471
      %2473 = vmatprep.mubr.f32.mxu0 0.0
      %2474 = vmatmul.mubr.f32.gmra.mxu0 %v2181
      %v2475 = vpop.f32.mrf.mxu0
      %v2476 = vadd.f32 0.0, %v2475
      %v2477 = vpop.f32.mrf.mxu0
      %v2478 = vadd.f32 0.0, %v2477
      %2479 = vmatprep.mubr.f32.mxu0 0.0
      %2480 = vmatmul.mubr.f32.gmra.mxu0 %v2184
      %v2481 = vpop.f32.mrf.mxu0
      %v2482 = vadd.f32 0.0, %v2481
      %v2483 = vpop.f32.mrf.mxu0
      %v2484 = vadd.f32 0.0, %v2483
      %2485 = vmatprep.mubr.f32.mxu0 0.0
      %2486 = vmatmul.mubr.f32.gmra.mxu0 %v2187
      %v2487 = vpop.f32.mrf.mxu0
      %v2488 = vadd.f32 0.0, %v2487
      %v2489 = vpop.f32.mrf.mxu0
      %v2490 = vadd.f32 0.0, %v2489
      %2491 = vmatprep.mubr.f32.mxu0 0.0
      %2492 = vmatmul.mubr.f32.gmra.mxu0 %v2190
      %v2493 = vpop.f32.mrf.mxu0
      %v2494 = vadd.f32 0.0, %v2493
      %v2495 = vpop.f32.mrf.mxu0
      %v2496 = vadd.f32 0.0, %v2495
      %2497 = vmatprep.mubr.f32.mxu0 0.0
      %2498 = vmatmul.mubr.f32.gmra.mxu0 %v2193
      %v2499 = vpop.f32.mrf.mxu0
      %v2500 = vadd.f32 0.0, %v2499
      %v2501 = vpop.f32.mrf.mxu0
      %v2502 = vadd.f32 0.0, %v2501
      %2503 = vmatprep.mubr.f32.mxu0 0.0
      %2504 = vmatmul.mubr.f32.gmra.mxu0 %v2196
      %v2505 = vpop.f32.mrf.mxu0
      %v2506 = vadd.f32 0.0, %v2505
      %v2507 = vpop.f32.mrf.mxu0
      %v2508 = vadd.f32 0.0, %v2507
      %2509 = vmatprep.mubr.f32.mxu0 0.0
      %2510 = vmatmul.mubr.f32.gmra.mxu0 %v2199
      %v2511 = vpop.f32.mrf.mxu0
      %v2512 = vadd.f32 0.0, %v2511
      %v2513 = vpop.f32.mrf.mxu0
      %v2514 = vadd.f32 0.0, %v2513
      %2515 = vmatprep.mubr.f32.mxu0 0.0
      %2516 = vmatmul.mubr.f32.gmra.mxu0 %v2202
      %v2517 = vpop.f32.mrf.mxu0
      %v2518 = vadd.f32 0.0, %v2517
      %v2519 = vpop.f32.mrf.mxu0
      %v2520 = vadd.f32 0.0, %v2519
      %2521 = vdwg.mxu0
      %2522 = vmatprep.subr.mxu0 0.0
      %2523 = vmatpush1.msra.mxu0 0.0
      %2524 = vmatprep.subr.mxu0 0.0
      %2525 = vmatpush1.msra.mxu0 0.0
      %2526 = vmatprep.subr.mxu0 0.0
      %2527 = vmatpush1.msra.mxu0 0.0
      %2528 = vmatprep.subr.mxu0 0.0
      %2529 = vmatpush1.msra.mxu0 0.0
      %2530 = vmatprep.subr.mxu0 0.0
      %2531 = vmatpush1.msra.mxu0 0.0
      %2532 = vmatprep.subr.mxu0 0.0
      %2533 = vmatpush1.msra.mxu0 0.0
      %2534 = vmatprep.subr.mxu0 0.0
      %2535 = vmatpush1.msra.mxu0 0.0
      %2536 = vmatprep.subr.mxu0 0.0
      %2537 = vmatpush1.msra.mxu0 0.0
      %2538 = vmatprep.subr.mxu0 0.0
      %2539 = vmatpush1.msra.mxu0 0.0
      %2540 = vmatprep.subr.mxu0 0.0
      %2541 = vmatpush1.msra.mxu0 0.0
      %2542 = vmatprep.subr.mxu0 0.0
      %2543 = vmatpush1.msra.mxu0 0.0
      %2544 = vmatprep.subr.mxu0 0.0
      %2545 = vmatpush1.msra.mxu0 0.0
      %2546 = vmatprep.subr.mxu0 0.0
      %2547 = vmatpush1.msra.mxu0 0.0
      %2548 = vmatprep.subr.mxu0 0.0
      %2549 = vmatpush1.msra.mxu0 0.0
      %2550 = vmatprep.subr.mxu0 %v2215
      %2551 = vmatpush1.msra.mxu0 %v2212
      %2552 = vmatprep.subr.mxu0 %v1159
      %2553 = vmatpush1.msra.mxu0 %v1157
      %2554 = vmatprep.subr.mxu0 0.0
      %2555 = vmatpush2.msra.mxu0 0.0
      %2556 = vmatprep.subr.mxu0 0.0
      %2557 = vmatpush2.msra.mxu0 0.0
      %2558 = vmatprep.subr.mxu0 0.0
      %2559 = vmatpush2.msra.mxu0 0.0
      %2560 = vmatprep.subr.mxu0 0.0
      %2561 = vmatpush2.msra.mxu0 0.0
      %2562 = vmatprep.subr.mxu0 0.0
      %2563 = vmatpush2.msra.mxu0 0.0
      %2564 = vmatprep.subr.mxu0 0.0
      %2565 = vmatpush2.msra.mxu0 0.0
      %2566 = vmatprep.subr.mxu0 0.0
      %2567 = vmatpush2.msra.mxu0 0.0
      %2568 = vmatprep.subr.mxu0 0.0
      %2569 = vmatpush2.msra.mxu0 0.0
      %2570 = vmatprep.subr.mxu0 0.0
      %2571 = vmatpush2.msra.mxu0 0.0
      %2572 = vmatprep.subr.mxu0 0.0
      %2573 = vmatpush2.msra.mxu0 0.0
      %2574 = vmatprep.subr.mxu0 0.0
      %2575 = vmatpush2.msra.mxu0 0.0
      %2576 = vmatprep.subr.mxu0 0.0
      %2577 = vmatpush2.msra.mxu0 0.0
      %2578 = vmatprep.subr.mxu0 0.0
      %2579 = vmatpush2.msra.mxu0 0.0
      %2580 = vmatprep.subr.mxu0 0.0
      %2581 = vmatpush2.msra.mxu0 0.0
      %2582 = vmatprep.subr.mxu0 0.0
      %2583 = vmatpush2.msra.mxu0 0.0
      %2584 = vmatprep.subr.mxu0 0.0
      %2585 = vmatpush2.msra.mxu0 0.0
      %2586 = vmatprep.mubr.f32.mxu0 0.0
      %2587 = vmatmul.mubr.f32.gmra.mxu0 %v2121
      %v2588 = vpop.f32.mrf.mxu0
      %v2589 = vadd.f32 0.0, %v2588
      %v2590 = vpop.f32.mrf.mxu0
      %v2591 = vadd.f32 0.0, %v2590
      %2592 = vmatprep.mubr.f32.mxu0 0.0
      %2593 = vmatmul.mubr.f32.gmra.mxu0 %v2124
      %v2594 = vpop.f32.mrf.mxu0
      %v2595 = vadd.f32 0.0, %v2594
      %v2596 = vpop.f32.mrf.mxu0
      %v2597 = vadd.f32 0.0, %v2596
      %2598 = vmatprep.mubr.f32.mxu0 0.0
      %2599 = vmatmul.mubr.f32.gmra.mxu0 %v2127
      %v2600 = vpop.f32.mrf.mxu0
      %v2601 = vadd.f32 0.0, %v2600
      %v2602 = vpop.f32.mrf.mxu0
      %v2603 = vadd.f32 0.0, %v2602
      %2604 = vmatprep.mubr.f32.mxu0 0.0
      %2605 = vmatmul.mubr.f32.gmra.mxu0 %v2130
      %v2606 = vpop.f32.mrf.mxu0
      %v2607 = vadd.f32 0.0, %v2606
      %v2608 = vpop.f32.mrf.mxu0
      %v2609 = vadd.f32 0.0, %v2608
      %2610 = vmatprep.mubr.f32.mxu0 0.0
      %2611 = vmatmul.mubr.f32.gmra.mxu0 %v2133
      %v2612 = vpop.f32.mrf.mxu0
      %v2613 = vadd.f32 0.0, %v2612
      %v2614 = vpop.f32.mrf.mxu0
      %v2615 = vadd.f32 0.0, %v2614
      %2616 = vmatprep.mubr.f32.mxu0 0.0
      %2617 = vmatmul.mubr.f32.gmra.mxu0 %v2136
      %v2618 = vpop.f32.mrf.mxu0
      %v2619 = vadd.f32 0.0, %v2618
      %v2620 = vpop.f32.mrf.mxu0
      %v2621 = vadd.f32 0.0, %v2620
      %2622 = vmatprep.mubr.f32.mxu0 0.0
      %2623 = vmatmul.mubr.f32.gmra.mxu0 %v2139
      %v2624 = vpop.f32.mrf.mxu0
      %v2625 = vadd.f32 0.0, %v2624
      %v2626 = vpop.f32.mrf.mxu0
      %v2627 = vadd.f32 0.0, %v2626
      %2628 = vmatprep.mubr.f32.mxu0 0.0
      %2629 = vmatmul.mubr.f32.gmra.mxu0 %v2142
      %v2630 = vpop.f32.mrf.mxu0
      %v2631 = vadd.f32 0.0, %v2630
      %v2632 = vpop.f32.mrf.mxu0
      %v2633 = vadd.f32 0.0, %v2632
      %2634 = vmatprep.mubr.f32.mxu0 0.0
      %2635 = vmatmul.mubr.f32.gmra.mxu0 %v2145
      %v2636 = vpop.f32.mrf.mxu0
      %v2637 = vadd.f32 0.0, %v2636
      %v2638 = vpop.f32.mrf.mxu0
      %v2639 = vadd.f32 0.0, %v2638
      %2640 = vmatprep.mubr.f32.mxu0 0.0
      %2641 = vmatmul.mubr.f32.gmra.mxu0 %v2148
      %v2642 = vpop.f32.mrf.mxu0
      %v2643 = vadd.f32 0.0, %v2642
      %v2644 = vpop.f32.mrf.mxu0
      %v2645 = vadd.f32 0.0, %v2644
      %2646 = vmatprep.mubr.f32.mxu0 0.0
      %2647 = vmatmul.mubr.f32.gmra.mxu0 %v2151
      %v2648 = vpop.f32.mrf.mxu0
      %v2649 = vadd.f32 0.0, %v2648
      %v2650 = vpop.f32.mrf.mxu0
      %v2651 = vadd.f32 0.0, %v2650
      %2652 = vmatprep.mubr.f32.mxu0 0.0
      %2653 = vmatmul.mubr.f32.gmra.mxu0 %v2154
      %v2654 = vpop.f32.mrf.mxu0
      %v2655 = vadd.f32 0.0, %v2654
      %v2656 = vpop.f32.mrf.mxu0
      %v2657 = vadd.f32 0.0, %v2656
      %2658 = vmatprep.mubr.f32.mxu0 0.0
      %2659 = vmatmul.mubr.f32.gmra.mxu0 %v2157
      %v2660 = vpop.f32.mrf.mxu0
      %v2661 = vadd.f32 0.0, %v2660
      %v2662 = vpop.f32.mrf.mxu0
      %v2663 = vadd.f32 0.0, %v2662
      %2664 = vmatprep.mubr.f32.mxu0 0.0
      %2665 = vmatmul.mubr.f32.gmra.mxu0 %v2160
      %v2666 = vpop.f32.mrf.mxu0
      %v2667 = vadd.f32 0.0, %v2666
      %v2668 = vpop.f32.mrf.mxu0
      %v2669 = vadd.f32 0.0, %v2668
      %2670 = vmatprep.mubr.f32.mxu0 0.0
      %2671 = vmatmul.mubr.f32.gmra.mxu0 %v2163
      %v2672 = vpop.f32.mrf.mxu0
      %v2673 = vadd.f32 0.0, %v2672
      %v2674 = vpop.f32.mrf.mxu0
      %v2675 = vadd.f32 0.0, %v2674
      %2676 = vmatprep.mubr.f32.mxu0 0.0
      %2677 = vmatmul.mubr.f32.gmra.mxu0 %v2166
      %v2678 = vpop.f32.mrf.mxu0
      %v2679 = vadd.f32 0.0, %v2678
      %v2680 = vpop.f32.mrf.mxu0
      %v2681 = vadd.f32 0.0, %v2680
      %2682 = vmatprep.mubr.f32.mxu0 0.0
      %2683 = vmatmul.mubr.f32.gmra.mxu0 %v2169
      %v2684 = vpop.f32.mrf.mxu0
      %v2685 = vadd.f32 0.0, %v2684
      %v2686 = vpop.f32.mrf.mxu0
      %v2687 = vadd.f32 0.0, %v2686
      %2688 = vmatprep.mubr.f32.mxu0 0.0
      %2689 = vmatmul.mubr.f32.gmra.mxu0 %v2172
      %v2690 = vpop.f32.mrf.mxu0
      %v2691 = vadd.f32 0.0, %v2690
      %v2692 = vpop.f32.mrf.mxu0
      %v2693 = vadd.f32 0.0, %v2692
      %2694 = vmatprep.mubr.f32.mxu0 0.0
      %2695 = vmatmul.mubr.f32.gmra.mxu0 %v2175
      %v2696 = vpop.f32.mrf.mxu0
      %v2697 = vadd.f32 0.0, %v2696
      %v2698 = vpop.f32.mrf.mxu0
      %v2699 = vadd.f32 0.0, %v2698
      %2700 = vmatprep.mubr.f32.mxu0 0.0
      %2701 = vmatmul.mubr.f32.gmra.mxu0 %v2178
      %v2702 = vpop.f32.mrf.mxu0
      %v2703 = vadd.f32 0.0, %v2702
      %v2704 = vpop.f32.mrf.mxu0
      %v2705 = vadd.f32 0.0, %v2704
      %2706 = vmatprep.mubr.f32.mxu0 0.0
      %2707 = vmatmul.mubr.f32.gmra.mxu0 %v2181
      %v2708 = vpop.f32.mrf.mxu0
      %v2709 = vadd.f32 0.0, %v2708
      %v2710 = vpop.f32.mrf.mxu0
      %v2711 = vadd.f32 0.0, %v2710
      %2712 = vmatprep.mubr.f32.mxu0 0.0
      %2713 = vmatmul.mubr.f32.gmra.mxu0 %v2184
      %v2714 = vpop.f32.mrf.mxu0
      %v2715 = vadd.f32 0.0, %v2714
      %v2716 = vpop.f32.mrf.mxu0
      %v2717 = vadd.f32 0.0, %v2716
      %2718 = vmatprep.mubr.f32.mxu0 0.0
      %2719 = vmatmul.mubr.f32.gmra.mxu0 %v2187
      %v2720 = vpop.f32.mrf.mxu0
      %v2721 = vadd.f32 0.0, %v2720
      %v2722 = vpop.f32.mrf.mxu0
      %v2723 = vadd.f32 0.0, %v2722
      %2724 = vmatprep.mubr.f32.mxu0 0.0
      %2725 = vmatmul.mubr.f32.gmra.mxu0 %v2190
      %v2726 = vpop.f32.mrf.mxu0
      %v2727 = vadd.f32 0.0, %v2726
      %v2728 = vpop.f32.mrf.mxu0
      %v2729 = vadd.f32 0.0, %v2728
      %2730 = vmatprep.mubr.f32.mxu0 0.0
      %2731 = vmatmul.mubr.f32.gmra.mxu0 %v2193
      %v2732 = vpop.f32.mrf.mxu0
      %v2733 = vadd.f32 0.0, %v2732
      %v2734 = vpop.f32.mrf.mxu0
      %v2735 = vadd.f32 0.0, %v2734
      %2736 = vmatprep.mubr.f32.mxu0 0.0
      %2737 = vmatmul.mubr.f32.gmra.mxu0 %v2196
      %v2738 = vpop.f32.mrf.mxu0
      %v2739 = vadd.f32 0.0, %v2738
      %v2740 = vpop.f32.mrf.mxu0
      %v2741 = vadd.f32 0.0, %v2740
      %2742 = vmatprep.mubr.f32.mxu0 0.0
      %2743 = vmatmul.mubr.f32.gmra.mxu0 %v2199
      %v2744 = vpop.f32.mrf.mxu0
      %v2745 = vadd.f32 0.0, %v2744
      %v2746 = vpop.f32.mrf.mxu0
      %v2747 = vadd.f32 0.0, %v2746
      %2748 = vmatprep.mubr.f32.mxu0 0.0
      %2749 = vmatmul.mubr.f32.gmra.mxu0 %v2202
      %v2750 = vpop.f32.mrf.mxu0
      %v2751 = vadd.f32 0.0, %v2750
      %v2752 = vpop.f32.mrf.mxu0
      %v2753 = vadd.f32 0.0, %v2752
      %2754 = vdwg.mxu0
      %2755 = vmatprep.subr.mxu0 0.0
      %2756 = vmatpush1.msra.mxu0 0.0
      %2757 = vmatprep.subr.mxu0 0.0
      %2758 = vmatpush1.msra.mxu0 0.0
      %2759 = vmatprep.subr.mxu0 0.0
      %2760 = vmatpush1.msra.mxu0 0.0
      %2761 = vmatprep.subr.mxu0 0.0
      %2762 = vmatpush1.msra.mxu0 0.0
      %2763 = vmatprep.subr.mxu0 0.0
      %2764 = vmatpush1.msra.mxu0 0.0
      %2765 = vmatprep.subr.mxu0 0.0
      %2766 = vmatpush1.msra.mxu0 0.0
      %2767 = vmatprep.subr.mxu0 0.0
      %2768 = vmatpush1.msra.mxu0 0.0
      %2769 = vmatprep.subr.mxu0 0.0
      %2770 = vmatpush1.msra.mxu0 0.0
      %2771 = vmatprep.subr.mxu0 0.0
      %2772 = vmatpush1.msra.mxu0 0.0
      %2773 = vmatprep.subr.mxu0 0.0
      %2774 = vmatpush1.msra.mxu0 0.0
      %2775 = vmatprep.subr.mxu0 0.0
      %2776 = vmatpush1.msra.mxu0 0.0
      %2777 = vmatprep.subr.mxu0 0.0
      %2778 = vmatpush1.msra.mxu0 0.0
      %2779 = vmatprep.subr.mxu0 0.0
      %2780 = vmatpush1.msra.mxu0 0.0
      %2781 = vmatprep.subr.mxu0 0.0
      %2782 = vmatpush1.msra.mxu0 0.0
      %2783 = vmatprep.subr.mxu0 %v2221
      %2784 = vmatpush1.msra.mxu0 %v2218
      %2785 = vmatprep.subr.mxu0 %v1236
      %2786 = vmatpush1.msra.mxu0 %v1234
      %2787 = vmatprep.subr.mxu0 0.0
      %2788 = vmatpush2.msra.mxu0 0.0
      %2789 = vmatprep.subr.mxu0 0.0
      %2790 = vmatpush2.msra.mxu0 0.0
      %2791 = vmatprep.subr.mxu0 0.0
      %2792 = vmatpush2.msra.mxu0 0.0
      %2793 = vmatprep.subr.mxu0 0.0
      %2794 = vmatpush2.msra.mxu0 0.0
      %2795 = vmatprep.subr.mxu0 0.0
      %2796 = vmatpush2.msra.mxu0 0.0
      %2797 = vmatprep.subr.mxu0 0.0
      %2798 = vmatpush2.msra.mxu0 0.0
      %2799 = vmatprep.subr.mxu0 0.0
      %2800 = vmatpush2.msra.mxu0 0.0
      %2801 = vmatprep.subr.mxu0 0.0
      %2802 = vmatpush2.msra.mxu0 0.0
      %2803 = vmatprep.subr.mxu0 0.0
      %2804 = vmatpush2.msra.mxu0 0.0
      %2805 = vmatprep.subr.mxu0 0.0
      %2806 = vmatpush2.msra.mxu0 0.0
      %2807 = vmatprep.subr.mxu0 0.0
      %2808 = vmatpush2.msra.mxu0 0.0
      %2809 = vmatprep.subr.mxu0 0.0
      %2810 = vmatpush2.msra.mxu0 0.0
      %2811 = vmatprep.subr.mxu0 0.0
      %2812 = vmatpush2.msra.mxu0 0.0
      %2813 = vmatprep.subr.mxu0 0.0
      %2814 = vmatpush2.msra.mxu0 0.0
      %2815 = vmatprep.subr.mxu0 0.0
      %2816 = vmatpush2.msra.mxu0 0.0
      %2817 = vmatprep.subr.mxu0 0.0
      %2818 = vmatpush2.msra.mxu0 0.0
      %2819 = vmatprep.mubr.f32.mxu0 0.0
      %2820 = vmatmul.mubr.f32.gmra.mxu0 %v2121
      %v2821 = vpop.f32.mrf.mxu0
      %v2822 = vadd.f32 0.0, %v2821
      %v2823 = vpop.f32.mrf.mxu0
      %v2824 = vadd.f32 0.0, %v2823
      %2825 = vmatprep.mubr.f32.mxu0 0.0
      %2826 = vmatmul.mubr.f32.gmra.mxu0 %v2124
      %v2827 = vpop.f32.mrf.mxu0
      %v2828 = vadd.f32 0.0, %v2827
      %v2829 = vpop.f32.mrf.mxu0
      %v2830 = vadd.f32 0.0, %v2829
      %2831 = vmatprep.mubr.f32.mxu0 0.0
      %2832 = vmatmul.mubr.f32.gmra.mxu0 %v2127
      %v2833 = vpop.f32.mrf.mxu0
      %v2834 = vadd.f32 0.0, %v2833
      %v2835 = vpop.f32.mrf.mxu0
      %v2836 = vadd.f32 0.0, %v2835
      %2837 = vmatprep.mubr.f32.mxu0 0.0
      %2838 = vmatmul.mubr.f32.gmra.mxu0 %v2130
      %v2839 = vpop.f32.mrf.mxu0
      %v2840 = vadd.f32 0.0, %v2839
      %v2841 = vpop.f32.mrf.mxu0
      %v2842 = vadd.f32 0.0, %v2841
      %2843 = vmatprep.mubr.f32.mxu0 0.0
      %2844 = vmatmul.mubr.f32.gmra.mxu0 %v2133
      %v2845 = vpop.f32.mrf.mxu0
      %v2846 = vadd.f32 0.0, %v2845
      %v2847 = vpop.f32.mrf.mxu0
      %v2848 = vadd.f32 0.0, %v2847
      %2849 = vmatprep.mubr.f32.mxu0 0.0
      %2850 = vmatmul.mubr.f32.gmra.mxu0 %v2136
      %v2851 = vpop.f32.mrf.mxu0
      %v2852 = vadd.f32 0.0, %v2851
      %v2853 = vpop.f32.mrf.mxu0
      %v2854 = vadd.f32 0.0, %v2853
      %2855 = vmatprep.mubr.f32.mxu0 0.0
      %2856 = vmatmul.mubr.f32.gmra.mxu0 %v2139
      %v2857 = vpop.f32.mrf.mxu0
      %v2858 = vadd.f32 0.0, %v2857
      %v2859 = vpop.f32.mrf.mxu0
      %v2860 = vadd.f32 0.0, %v2859
      %2861 = vmatprep.mubr.f32.mxu0 0.0
      %2862 = vmatmul.mubr.f32.gmra.mxu0 %v2142
      %v2863 = vpop.f32.mrf.mxu0
      %v2864 = vadd.f32 0.0, %v2863
      %v2865 = vpop.f32.mrf.mxu0
      %v2866 = vadd.f32 0.0, %v2865
      %2867 = vmatprep.mubr.f32.mxu0 0.0
      %2868 = vmatmul.mubr.f32.gmra.mxu0 %v2145
      %v2869 = vpop.f32.mrf.mxu0
      %v2870 = vadd.f32 0.0, %v2869
      %v2871 = vpop.f32.mrf.mxu0
      %v2872 = vadd.f32 0.0, %v2871
      %2873 = vmatprep.mubr.f32.mxu0 0.0
      %2874 = vmatmul.mubr.f32.gmra.mxu0 %v2148
      %v2875 = vpop.f32.mrf.mxu0
      %v2876 = vadd.f32 0.0, %v2875
      %v2877 = vpop.f32.mrf.mxu0
      %v2878 = vadd.f32 0.0, %v2877
      %2879 = vmatprep.mubr.f32.mxu0 0.0
      %2880 = vmatmul.mubr.f32.gmra.mxu0 %v2151
      %v2881 = vpop.f32.mrf.mxu0
      %v2882 = vadd.f32 0.0, %v2881
      %v2883 = vpop.f32.mrf.mxu0
      %v2884 = vadd.f32 0.0, %v2883
      %2885 = vmatprep.mubr.f32.mxu0 0.0
      %2886 = vmatmul.mubr.f32.gmra.mxu0 %v2154
      %v2887 = vpop.f32.mrf.mxu0
      %v2888 = vadd.f32 0.0, %v2887
      %v2889 = vpop.f32.mrf.mxu0
      %v2890 = vadd.f32 0.0, %v2889
      %2891 = vmatprep.mubr.f32.mxu0 0.0
      %2892 = vmatmul.mubr.f32.gmra.mxu0 %v2157
      %v2893 = vpop.f32.mrf.mxu0
      %v2894 = vadd.f32 0.0, %v2893
      %v2895 = vpop.f32.mrf.mxu0
      %v2896 = vadd.f32 0.0, %v2895
      %2897 = vmatprep.mubr.f32.mxu0 0.0
      %2898 = vmatmul.mubr.f32.gmra.mxu0 %v2160
      %v2899 = vpop.f32.mrf.mxu0
      %v2900 = vadd.f32 0.0, %v2899
      %v2901 = vpop.f32.mrf.mxu0
      %v2902 = vadd.f32 0.0, %v2901
      %2903 = vmatprep.mubr.f32.mxu0 0.0
      %2904 = vmatmul.mubr.f32.gmra.mxu0 %v2163
      %v2905 = vpop.f32.mrf.mxu0
      %v2906 = vadd.f32 0.0, %v2905
      %v2907 = vpop.f32.mrf.mxu0
      %v2908 = vadd.f32 0.0, %v2907
      %2909 = vmatprep.mubr.f32.mxu0 0.0
      %2910 = vmatmul.mubr.f32.gmra.mxu0 %v2166
      %v2911 = vpop.f32.mrf.mxu0
      %v2912 = vadd.f32 0.0, %v2911
      %v2913 = vpop.f32.mrf.mxu0
      %v2914 = vadd.f32 0.0, %v2913
      %2915 = vmatprep.mubr.f32.mxu0 0.0
      %2916 = vmatmul.mubr.f32.gmra.mxu0 %v2169
      %v2917 = vpop.f32.mrf.mxu0
      %v2918 = vadd.f32 0.0, %v2917
      %v2919 = vpop.f32.mrf.mxu0
      %v2920 = vadd.f32 0.0, %v2919
      %2921 = vmatprep.mubr.f32.mxu0 0.0
      %2922 = vmatmul.mubr.f32.gmra.mxu0 %v2172
      %v2923 = vpop.f32.mrf.mxu0
      %v2924 = vadd.f32 0.0, %v2923
      %v2925 = vpop.f32.mrf.mxu0
      %v2926 = vadd.f32 0.0, %v2925
      %2927 = vmatprep.mubr.f32.mxu0 0.0
      %2928 = vmatmul.mubr.f32.gmra.mxu0 %v2175
      %v2929 = vpop.f32.mrf.mxu0
      %v2930 = vadd.f32 0.0, %v2929
      %v2931 = vpop.f32.mrf.mxu0
      %v2932 = vadd.f32 0.0, %v2931
      %2933 = vmatprep.mubr.f32.mxu0 0.0
      %2934 = vmatmul.mubr.f32.gmra.mxu0 %v2178
      %v2935 = vpop.f32.mrf.mxu0
      %v2936 = vadd.f32 0.0, %v2935
      %v2937 = vpop.f32.mrf.mxu0
      %v2938 = vadd.f32 0.0, %v2937
      %2939 = vmatprep.mubr.f32.mxu0 0.0
      %2940 = vmatmul.mubr.f32.gmra.mxu0 %v2181
      %v2941 = vpop.f32.mrf.mxu0
      %v2942 = vadd.f32 0.0, %v2941
      %v2943 = vpop.f32.mrf.mxu0
      %v2944 = vadd.f32 0.0, %v2943
      %2945 = vmatprep.mubr.f32.mxu0 0.0
      %2946 = vmatmul.mubr.f32.gmra.mxu0 %v2184
      %v2947 = vpop.f32.mrf.mxu0
      %v2948 = vadd.f32 0.0, %v2947
      %v2949 = vpop.f32.mrf.mxu0
      %v2950 = vadd.f32 0.0, %v2949
      %2951 = vmatprep.mubr.f32.mxu0 0.0
      %2952 = vmatmul.mubr.f32.gmra.mxu0 %v2187
      %v2953 = vpop.f32.mrf.mxu0
      %v2954 = vadd.f32 0.0, %v2953
      %v2955 = vpop.f32.mrf.mxu0
      %v2956 = vadd.f32 0.0, %v2955
      %2957 = vmatprep.mubr.f32.mxu0 0.0
      %2958 = vmatmul.mubr.f32.gmra.mxu0 %v2190
      %v2959 = vpop.f32.mrf.mxu0
      %v2960 = vadd.f32 0.0, %v2959
      %v2961 = vpop.f32.mrf.mxu0
      %v2962 = vadd.f32 0.0, %v2961
      %2963 = vmatprep.mubr.f32.mxu0 0.0
      %2964 = vmatmul.mubr.f32.gmra.mxu0 %v2193
      %v2965 = vpop.f32.mrf.mxu0
      %v2966 = vadd.f32 0.0, %v2965
      %v2967 = vpop.f32.mrf.mxu0
      %v2968 = vadd.f32 0.0, %v2967
      %2969 = vmatprep.mubr.f32.mxu0 0.0
      %2970 = vmatmul.mubr.f32.gmra.mxu0 %v2196
      %v2971 = vpop.f32.mrf.mxu0
      %v2972 = vadd.f32 0.0, %v2971
      %v2973 = vpop.f32.mrf.mxu0
      %v2974 = vadd.f32 0.0, %v2973
      %2975 = vmatprep.mubr.f32.mxu0 0.0
      %2976 = vmatmul.mubr.f32.gmra.mxu0 %v2199
      %v2977 = vpop.f32.mrf.mxu0
      %v2978 = vadd.f32 0.0, %v2977
      %v2979 = vpop.f32.mrf.mxu0
      %v2980 = vadd.f32 0.0, %v2979
      %2981 = vmatprep.mubr.f32.mxu0 0.0
      %2982 = vmatmul.mubr.f32.gmra.mxu0 %v2202
      %v2983 = vpop.f32.mrf.mxu0
      %v2984 = vadd.f32 0.0, %v2983
      %v2985 = vpop.f32.mrf.mxu0
      %v2986 = vadd.f32 0.0, %v2985
      %2987 = vdwg.mxu0
      %2988 = vmatprep.subr.mxu0 0.0
      %2989 = vmatpush1.msra.mxu0 0.0
      %2990 = vmatprep.subr.mxu0 0.0
      %2991 = vmatpush1.msra.mxu0 0.0
      %2992 = vmatprep.subr.mxu0 0.0
      %2993 = vmatpush1.msra.mxu0 0.0
      %2994 = vmatprep.subr.mxu0 0.0
      %2995 = vmatpush1.msra.mxu0 0.0
      %2996 = vmatprep.subr.mxu0 0.0
      %2997 = vmatpush1.msra.mxu0 0.0
      %2998 = vmatprep.subr.mxu0 0.0
      %2999 = vmatpush1.msra.mxu0 0.0
      %3000 = vmatprep.subr.mxu0 0.0
      %3001 = vmatpush1.msra.mxu0 0.0
      %3002 = vmatprep.subr.mxu0 0.0
      %3003 = vmatpush1.msra.mxu0 0.0
      %3004 = vmatprep.subr.mxu0 0.0
      %3005 = vmatpush1.msra.mxu0 0.0
      %3006 = vmatprep.subr.mxu0 0.0
      %3007 = vmatpush1.msra.mxu0 0.0
      %3008 = vmatprep.subr.mxu0 0.0
      %3009 = vmatpush1.msra.mxu0 0.0
      %3010 = vmatprep.subr.mxu0 0.0
      %3011 = vmatpush1.msra.mxu0 0.0
      %3012 = vmatprep.subr.mxu0 0.0
      %3013 = vmatpush1.msra.mxu0 0.0
      %3014 = vmatprep.subr.mxu0 0.0
      %3015 = vmatpush1.msra.mxu0 0.0
      %3016 = vmatprep.subr.mxu0 %v2227
      %3017 = vmatpush1.msra.mxu0 %v2224
      %3018 = vmatprep.subr.mxu0 %v1313
      %3019 = vmatpush1.msra.mxu0 %v1311
      %3020 = vmatprep.subr.mxu0 0.0
      %3021 = vmatpush2.msra.mxu0 0.0
      %3022 = vmatprep.subr.mxu0 0.0
      %3023 = vmatpush2.msra.mxu0 0.0
      %3024 = vmatprep.subr.mxu0 0.0
      %3025 = vmatpush2.msra.mxu0 0.0
      %3026 = vmatprep.subr.mxu0 0.0
      %3027 = vmatpush2.msra.mxu0 0.0
      %3028 = vmatprep.subr.mxu0 0.0
      %3029 = vmatpush2.msra.mxu0 0.0
      %3030 = vmatprep.subr.mxu0 0.0
      %3031 = vmatpush2.msra.mxu0 0.0
      %3032 = vmatprep.subr.mxu0 0.0
      %3033 = vmatpush2.msra.mxu0 0.0
      %3034 = vmatprep.subr.mxu0 0.0
      %3035 = vmatpush2.msra.mxu0 0.0
      %3036 = vmatprep.subr.mxu0 0.0
      %3037 = vmatpush2.msra.mxu0 0.0
      %3038 = vmatprep.subr.mxu0 0.0
      %3039 = vmatpush2.msra.mxu0 0.0
      %3040 = vmatprep.subr.mxu0 0.0
      %3041 = vmatpush2.msra.mxu0 0.0
      %3042 = vmatprep.subr.mxu0 0.0
      %3043 = vmatpush2.msra.mxu0 0.0
      %3044 = vmatprep.subr.mxu0 0.0
      %3045 = vmatpush2.msra.mxu0 0.0
      %3046 = vmatprep.subr.mxu0 0.0
      %3047 = vmatpush2.msra.mxu0 0.0
      %3048 = vmatprep.subr.mxu0 0.0
      %3049 = vmatpush2.msra.mxu0 0.0
      %3050 = vmatprep.subr.mxu0 0.0
      %3051 = vmatpush2.msra.mxu0 0.0
      %3052 = vmatprep.mubr.f32.mxu0 0.0
      %3053 = vmatmul.mubr.f32.gmra.mxu0 %v2121
      %v3054 = vpop.f32.mrf.mxu0
      %v3055 = vadd.f32 0.0, %v3054
      %v3056 = vpop.f32.mrf.mxu0
      %v3057 = vadd.f32 0.0, %v3056
      %3058 = vmatprep.mubr.f32.mxu0 0.0
      %3059 = vmatmul.mubr.f32.gmra.mxu0 %v2124
      %v3060 = vpop.f32.mrf.mxu0
      %v3061 = vadd.f32 0.0, %v3060
      %v3062 = vpop.f32.mrf.mxu0
      %v3063 = vadd.f32 0.0, %v3062
      %3064 = vmatprep.mubr.f32.mxu0 0.0
      %3065 = vmatmul.mubr.f32.gmra.mxu0 %v2127
      %v3066 = vpop.f32.mrf.mxu0
      %v3067 = vadd.f32 0.0, %v3066
      %v3068 = vpop.f32.mrf.mxu0
      %v3069 = vadd.f32 0.0, %v3068
      %3070 = vmatprep.mubr.f32.mxu0 0.0
      %3071 = vmatmul.mubr.f32.gmra.mxu0 %v2130
      %v3072 = vpop.f32.mrf.mxu0
      %v3073 = vadd.f32 0.0, %v3072
      %v3074 = vpop.f32.mrf.mxu0
      %v3075 = vadd.f32 0.0, %v3074
      %3076 = vmatprep.mubr.f32.mxu0 0.0
      %3077 = vmatmul.mubr.f32.gmra.mxu0 %v2133
      %v3078 = vpop.f32.mrf.mxu0
      %v3079 = vadd.f32 0.0, %v3078
      %v3080 = vpop.f32.mrf.mxu0
      %v3081 = vadd.f32 0.0, %v3080
      %3082 = vmatprep.mubr.f32.mxu0 0.0
      %3083 = vmatmul.mubr.f32.gmra.mxu0 %v2136
      %v3084 = vpop.f32.mrf.mxu0
      %v3085 = vadd.f32 0.0, %v3084
      %v3086 = vpop.f32.mrf.mxu0
      %v3087 = vadd.f32 0.0, %v3086
      %3088 = vmatprep.mubr.f32.mxu0 0.0
      %3089 = vmatmul.mubr.f32.gmra.mxu0 %v2139
      %v3090 = vpop.f32.mrf.mxu0
      %v3091 = vadd.f32 0.0, %v3090
      %v3092 = vpop.f32.mrf.mxu0
      %v3093 = vadd.f32 0.0, %v3092
      %3094 = vmatprep.mubr.f32.mxu0 0.0
      %3095 = vmatmul.mubr.f32.gmra.mxu0 %v2142
      %v3096 = vpop.f32.mrf.mxu0
      %v3097 = vadd.f32 0.0, %v3096
      %v3098 = vpop.f32.mrf.mxu0
      %v3099 = vadd.f32 0.0, %v3098
      %3100 = vmatprep.mubr.f32.mxu0 0.0
      %3101 = vmatmul.mubr.f32.gmra.mxu0 %v2145
      %v3102 = vpop.f32.mrf.mxu0
      %v3103 = vadd.f32 0.0, %v3102
      %v3104 = vpop.f32.mrf.mxu0
      %v3105 = vadd.f32 0.0, %v3104
      %3106 = vmatprep.mubr.f32.mxu0 0.0
      %3107 = vmatmul.mubr.f32.gmra.mxu0 %v2148
      %v3108 = vpop.f32.mrf.mxu0
      %v3109 = vadd.f32 0.0, %v3108
      %v3110 = vpop.f32.mrf.mxu0
      %v3111 = vadd.f32 0.0, %v3110
      %3112 = vmatprep.mubr.f32.mxu0 0.0
      %3113 = vmatmul.mubr.f32.gmra.mxu0 %v2151
      %v3114 = vpop.f32.mrf.mxu0
      %v3115 = vadd.f32 0.0, %v3114
      %v3116 = vpop.f32.mrf.mxu0
      %v3117 = vadd.f32 0.0, %v3116
      %3118 = vmatprep.mubr.f32.mxu0 0.0
      %3119 = vmatmul.mubr.f32.gmra.mxu0 %v2154
      %v3120 = vpop.f32.mrf.mxu0
      %v3121 = vadd.f32 0.0, %v3120
      %v3122 = vpop.f32.mrf.mxu0
      %v3123 = vadd.f32 0.0, %v3122
      %3124 = vmatprep.mubr.f32.mxu0 0.0
      %3125 = vmatmul.mubr.f32.gmra.mxu0 %v2157
      %v3126 = vpop.f32.mrf.mxu0
      %v3127 = vadd.f32 0.0, %v3126
      %v3128 = vpop.f32.mrf.mxu0
      %v3129 = vadd.f32 0.0, %v3128
      %3130 = vmatprep.mubr.f32.mxu0 0.0
      %3131 = vmatmul.mubr.f32.gmra.mxu0 %v2160
      %v3132 = vpop.f32.mrf.mxu0
      %v3133 = vadd.f32 0.0, %v3132
      %v3134 = vpop.f32.mrf.mxu0
      %v3135 = vadd.f32 0.0, %v3134
      %3136 = vmatprep.mubr.f32.mxu0 0.0
      %3137 = vmatmul.mubr.f32.gmra.mxu0 %v2163
      %v3138 = vpop.f32.mrf.mxu0
      %v3139 = vadd.f32 0.0, %v3138
      %v3140 = vpop.f32.mrf.mxu0
      %v3141 = vadd.f32 0.0, %v3140
      %3142 = vmatprep.mubr.f32.mxu0 0.0
      %3143 = vmatmul.mubr.f32.gmra.mxu0 %v2166
      %v3144 = vpop.f32.mrf.mxu0
      %v3145 = vadd.f32 0.0, %v3144
      %v3146 = vpop.f32.mrf.mxu0
      %v3147 = vadd.f32 0.0, %v3146
      %3148 = vmatprep.mubr.f32.mxu0 0.0
      %3149 = vmatmul.mubr.f32.gmra.mxu0 %v2169
      %v3150 = vpop.f32.mrf.mxu0
      %v3151 = vadd.f32 0.0, %v3150
      %v3152 = vpop.f32.mrf.mxu0
      %v3153 = vadd.f32 0.0, %v3152
      %3154 = vmatprep.mubr.f32.mxu0 0.0
      %3155 = vmatmul.mubr.f32.gmra.mxu0 %v2172
      %v3156 = vpop.f32.mrf.mxu0
      %v3157 = vadd.f32 0.0, %v3156
      %v3158 = vpop.f32.mrf.mxu0
      %v3159 = vadd.f32 0.0, %v3158
      %3160 = vmatprep.mubr.f32.mxu0 0.0
      %3161 = vmatmul.mubr.f32.gmra.mxu0 %v2175
      %v3162 = vpop.f32.mrf.mxu0
      %v3163 = vadd.f32 0.0, %v3162
      %v3164 = vpop.f32.mrf.mxu0
      %v3165 = vadd.f32 0.0, %v3164
      %3166 = vmatprep.mubr.f32.mxu0 0.0
      %3167 = vmatmul.mubr.f32.gmra.mxu0 %v2178
      %v3168 = vpop.f32.mrf.mxu0
      %v3169 = vadd.f32 0.0, %v3168
      %v3170 = vpop.f32.mrf.mxu0
      %v3171 = vadd.f32 0.0, %v3170
      %3172 = vmatprep.mubr.f32.mxu0 0.0
      %3173 = vmatmul.mubr.f32.gmra.mxu0 %v2181
      %v3174 = vpop.f32.mrf.mxu0
      %v3175 = vadd.f32 0.0, %v3174
      %v3176 = vpop.f32.mrf.mxu0
      %v3177 = vadd.f32 0.0, %v3176
      %3178 = vmatprep.mubr.f32.mxu0 0.0
      %3179 = vmatmul.mubr.f32.gmra.mxu0 %v2184
      %v3180 = vpop.f32.mrf.mxu0
      %v3181 = vadd.f32 0.0, %v3180
      %v3182 = vpop.f32.mrf.mxu0
      %v3183 = vadd.f32 0.0, %v3182
      %3184 = vmatprep.mubr.f32.mxu0 0.0
      %3185 = vmatmul.mubr.f32.gmra.mxu0 %v2187
      %v3186 = vpop.f32.mrf.mxu0
      %v3187 = vadd.f32 0.0, %v3186
      %v3188 = vpop.f32.mrf.mxu0
      %v3189 = vadd.f32 0.0, %v3188
      %3190 = vmatprep.mubr.f32.mxu0 0.0
      %3191 = vmatmul.mubr.f32.gmra.mxu0 %v2190
      %v3192 = vpop.f32.mrf.mxu0
      %v3193 = vadd.f32 0.0, %v3192
      %v3194 = vpop.f32.mrf.mxu0
      %v3195 = vadd.f32 0.0, %v3194
      %3196 = vmatprep.mubr.f32.mxu0 0.0
      %3197 = vmatmul.mubr.f32.gmra.mxu0 %v2193
      %v3198 = vpop.f32.mrf.mxu0
      %v3199 = vadd.f32 0.0, %v3198
      %v3200 = vpop.f32.mrf.mxu0
      %v3201 = vadd.f32 0.0, %v3200
      %3202 = vmatprep.mubr.f32.mxu0 0.0
      %3203 = vmatmul.mubr.f32.gmra.mxu0 %v2196
      %v3204 = vpop.f32.mrf.mxu0
      %v3205 = vadd.f32 0.0, %v3204
      %v3206 = vpop.f32.mrf.mxu0
      %v3207 = vadd.f32 0.0, %v3206
      %3208 = vmatprep.mubr.f32.mxu0 0.0
      %3209 = vmatmul.mubr.f32.gmra.mxu0 %v2199
      %v3210 = vpop.f32.mrf.mxu0
      %v3211 = vadd.f32 0.0, %v3210
      %v3212 = vpop.f32.mrf.mxu0
      %v3213 = vadd.f32 0.0, %v3212
      %3214 = vmatprep.mubr.f32.mxu0 0.0
      %3215 = vmatmul.mubr.f32.gmra.mxu0 %v2202
      %v3216 = vpop.f32.mrf.mxu0
      %v3217 = vadd.f32 0.0, %v3216
      %v3218 = vpop.f32.mrf.mxu0
      %v3219 = vadd.f32 0.0, %v3218
      %3220 = vdwg.mxu0
      %3221 = vmatprep.subr.mxu0 0.0
      %3222 = vmatpush1.msra.mxu0 0.0
      %3223 = vmatprep.subr.mxu0 0.0
      %3224 = vmatpush1.msra.mxu0 0.0
      %3225 = vmatprep.subr.mxu0 0.0
      %3226 = vmatpush1.msra.mxu0 0.0
      %3227 = vmatprep.subr.mxu0 0.0
      %3228 = vmatpush1.msra.mxu0 0.0
      %3229 = vmatprep.subr.mxu0 0.0
      %3230 = vmatpush1.msra.mxu0 0.0
      %3231 = vmatprep.subr.mxu0 0.0
      %3232 = vmatpush1.msra.mxu0 0.0
      %3233 = vmatprep.subr.mxu0 0.0
      %3234 = vmatpush1.msra.mxu0 0.0
      %3235 = vmatprep.subr.mxu0 0.0
      %3236 = vmatpush1.msra.mxu0 0.0
      %3237 = vmatprep.subr.mxu0 0.0
      %3238 = vmatpush1.msra.mxu0 0.0
      %3239 = vmatprep.subr.mxu0 0.0
      %3240 = vmatpush1.msra.mxu0 0.0
      %3241 = vmatprep.subr.mxu0 0.0
      %3242 = vmatpush1.msra.mxu0 0.0
      %3243 = vmatprep.subr.mxu0 0.0
      %3244 = vmatpush1.msra.mxu0 0.0
      %3245 = vmatprep.subr.mxu0 0.0
      %3246 = vmatpush1.msra.mxu0 0.0
      %3247 = vmatprep.subr.mxu0 0.0
      %3248 = vmatpush1.msra.mxu0 0.0
      %3249 = vmatprep.subr.mxu0 %v2233
      %3250 = vmatpush1.msra.mxu0 %v2230
      %3251 = vmatprep.subr.mxu0 %v1390
      %3252 = vmatpush1.msra.mxu0 %v1388
      %3253 = vmatprep.subr.mxu0 0.0
      %3254 = vmatpush2.msra.mxu0 0.0
      %3255 = vmatprep.subr.mxu0 0.0
      %3256 = vmatpush2.msra.mxu0 0.0
      %3257 = vmatprep.subr.mxu0 0.0
      %3258 = vmatpush2.msra.mxu0 0.0
      %3259 = vmatprep.subr.mxu0 0.0
      %3260 = vmatpush2.msra.mxu0 0.0
      %3261 = vmatprep.subr.mxu0 0.0
      %3262 = vmatpush2.msra.mxu0 0.0
      %3263 = vmatprep.subr.mxu0 0.0
      %3264 = vmatpush2.msra.mxu0 0.0
      %3265 = vmatprep.subr.mxu0 0.0
      %3266 = vmatpush2.msra.mxu0 0.0
      %3267 = vmatprep.subr.mxu0 0.0
      %3268 = vmatpush2.msra.mxu0 0.0
      %3269 = vmatprep.subr.mxu0 0.0
      %3270 = vmatpush2.msra.mxu0 0.0
      %3271 = vmatprep.subr.mxu0 0.0
      %3272 = vmatpush2.msra.mxu0 0.0
      %3273 = vmatprep.subr.mxu0 0.0
      %3274 = vmatpush2.msra.mxu0 0.0
      %3275 = vmatprep.subr.mxu0 0.0
      %3276 = vmatpush2.msra.mxu0 0.0
      %3277 = vmatprep.subr.mxu0 0.0
      %3278 = vmatpush2.msra.mxu0 0.0
      %3279 = vmatprep.subr.mxu0 0.0
      %3280 = vmatpush2.msra.mxu0 0.0
      %3281 = vmatprep.subr.mxu0 0.0
      %3282 = vmatpush2.msra.mxu0 0.0
      %3283 = vmatprep.subr.mxu0 0.0
      %3284 = vmatpush2.msra.mxu0 0.0
      %3285 = vmatprep.mubr.f32.mxu0 0.0
      %3286 = vmatmul.mubr.f32.gmra.mxu0 %v2121
      %v3287 = vpop.f32.mrf.mxu0
      %v3288 = vadd.f32 0.0, %v3287
      %v3289 = vpop.f32.mrf.mxu0
      %v3290 = vadd.f32 0.0, %v3289
      %3291 = vmatprep.mubr.f32.mxu0 0.0
      %3292 = vmatmul.mubr.f32.gmra.mxu0 %v2124
      %v3293 = vpop.f32.mrf.mxu0
      %v3294 = vadd.f32 0.0, %v3293
      %v3295 = vpop.f32.mrf.mxu0
      %v3296 = vadd.f32 0.0, %v3295
      %3297 = vmatprep.mubr.f32.mxu0 0.0
      %3298 = vmatmul.mubr.f32.gmra.mxu0 %v2127
      %v3299 = vpop.f32.mrf.mxu0
      %v3300 = vadd.f32 0.0, %v3299
      %v3301 = vpop.f32.mrf.mxu0
      %v3302 = vadd.f32 0.0, %v3301
      %3303 = vmatprep.mubr.f32.mxu0 0.0
      %3304 = vmatmul.mubr.f32.gmra.mxu0 %v2130
      %v3305 = vpop.f32.mrf.mxu0
      %v3306 = vadd.f32 0.0, %v3305
      %v3307 = vpop.f32.mrf.mxu0
      %v3308 = vadd.f32 0.0, %v3307
      %3309 = vmatprep.mubr.f32.mxu0 0.0
      %3310 = vmatmul.mubr.f32.gmra.mxu0 %v2133
      %v3311 = vpop.f32.mrf.mxu0
      %v3312 = vadd.f32 0.0, %v3311
      %v3313 = vpop.f32.mrf.mxu0
      %v3314 = vadd.f32 0.0, %v3313
      %3315 = vmatprep.mubr.f32.mxu0 0.0
      %3316 = vmatmul.mubr.f32.gmra.mxu0 %v2136
      %v3317 = vpop.f32.mrf.mxu0
      %v3318 = vadd.f32 0.0, %v3317
      %v3319 = vpop.f32.mrf.mxu0
      %v3320 = vadd.f32 0.0, %v3319
      %3321 = vmatprep.mubr.f32.mxu0 0.0
      %3322 = vmatmul.mubr.f32.gmra.mxu0 %v2139
      %v3323 = vpop.f32.mrf.mxu0
      %v3324 = vadd.f32 0.0, %v3323
      %v3325 = vpop.f32.mrf.mxu0
      %v3326 = vadd.f32 0.0, %v3325
      %3327 = vmatprep.mubr.f32.mxu0 0.0
      %3328 = vmatmul.mubr.f32.gmra.mxu0 %v2142
      %v3329 = vpop.f32.mrf.mxu0
      %v3330 = vadd.f32 0.0, %v3329
      %v3331 = vpop.f32.mrf.mxu0
      %v3332 = vadd.f32 0.0, %v3331
      %3333 = vmatprep.mubr.f32.mxu0 0.0
      %3334 = vmatmul.mubr.f32.gmra.mxu0 %v2145
      %v3335 = vpop.f32.mrf.mxu0
      %v3336 = vadd.f32 0.0, %v3335
      %v3337 = vpop.f32.mrf.mxu0
      %v3338 = vadd.f32 0.0, %v3337
      %3339 = vmatprep.mubr.f32.mxu0 0.0
      %3340 = vmatmul.mubr.f32.gmra.mxu0 %v2148
      %v3341 = vpop.f32.mrf.mxu0
      %v3342 = vadd.f32 0.0, %v3341
      %v3343 = vpop.f32.mrf.mxu0
      %v3344 = vadd.f32 0.0, %v3343
      %3345 = vmatprep.mubr.f32.mxu0 0.0
      %3346 = vmatmul.mubr.f32.gmra.mxu0 %v2151
      %v3347 = vpop.f32.mrf.mxu0
      %v3348 = vadd.f32 0.0, %v3347
      %v3349 = vpop.f32.mrf.mxu0
      %v3350 = vadd.f32 0.0, %v3349
      %3351 = vmatprep.mubr.f32.mxu0 0.0
      %3352 = vmatmul.mubr.f32.gmra.mxu0 %v2154
      %v3353 = vpop.f32.mrf.mxu0
      %v3354 = vadd.f32 0.0, %v3353
      %v3355 = vpop.f32.mrf.mxu0
      %v3356 = vadd.f32 0.0, %v3355
      %3357 = vmatprep.mubr.f32.mxu0 0.0
      %3358 = vmatmul.mubr.f32.gmra.mxu0 %v2157
      %v3359 = vpop.f32.mrf.mxu0
      %v3360 = vadd.f32 0.0, %v3359
      %v3361 = vpop.f32.mrf.mxu0
      %v3362 = vadd.f32 0.0, %v3361
      %3363 = vmatprep.mubr.f32.mxu0 0.0
      %3364 = vmatmul.mubr.f32.gmra.mxu0 %v2160
      %v3365 = vpop.f32.mrf.mxu0
      %v3366 = vadd.f32 0.0, %v3365
      %v3367 = vpop.f32.mrf.mxu0
      %v3368 = vadd.f32 0.0, %v3367
      %3369 = vmatprep.mubr.f32.mxu0 0.0
      %3370 = vmatmul.mubr.f32.gmra.mxu0 %v2163
      %v3371 = vpop.f32.mrf.mxu0
      %v3372 = vadd.f32 0.0, %v3371
      %v3373 = vpop.f32.mrf.mxu0
      %v3374 = vadd.f32 0.0, %v3373
      %3375 = vmatprep.mubr.f32.mxu0 0.0
      %3376 = vmatmul.mubr.f32.gmra.mxu0 %v2166
      %v3377 = vpop.f32.mrf.mxu0
      %v3378 = vadd.f32 0.0, %v3377
      %v3379 = vpop.f32.mrf.mxu0
      %v3380 = vadd.f32 0.0, %v3379
      %3381 = vmatprep.mubr.f32.mxu0 0.0
      %3382 = vmatmul.mubr.f32.gmra.mxu0 %v2169
      %v3383 = vpop.f32.mrf.mxu0
      %v3384 = vadd.f32 0.0, %v3383
      %v3385 = vpop.f32.mrf.mxu0
      %v3386 = vadd.f32 0.0, %v3385
      %3387 = vmatprep.mubr.f32.mxu0 0.0
      %3388 = vmatmul.mubr.f32.gmra.mxu0 %v2172
      %v3389 = vpop.f32.mrf.mxu0
      %v3390 = vadd.f32 0.0, %v3389
      %v3391 = vpop.f32.mrf.mxu0
      %v3392 = vadd.f32 0.0, %v3391
      %3393 = vmatprep.mubr.f32.mxu0 0.0
      %3394 = vmatmul.mubr.f32.gmra.mxu0 %v2175
      %v3395 = vpop.f32.mrf.mxu0
      %v3396 = vadd.f32 0.0, %v3395
      %v3397 = vpop.f32.mrf.mxu0
      %v3398 = vadd.f32 0.0, %v3397
      %3399 = vmatprep.mubr.f32.mxu0 0.0
      %3400 = vmatmul.mubr.f32.gmra.mxu0 %v2178
      %v3401 = vpop.f32.mrf.mxu0
      %v3402 = vadd.f32 0.0, %v3401
      %v3403 = vpop.f32.mrf.mxu0
      %v3404 = vadd.f32 0.0, %v3403
      %3405 = vmatprep.mubr.f32.mxu0 0.0
      %3406 = vmatmul.mubr.f32.gmra.mxu0 %v2181
      %v3407 = vpop.f32.mrf.mxu0
      %v3408 = vadd.f32 0.0, %v3407
      %v3409 = vpop.f32.mrf.mxu0
      %v3410 = vadd.f32 0.0, %v3409
      %3411 = vmatprep.mubr.f32.mxu0 0.0
      %3412 = vmatmul.mubr.f32.gmra.mxu0 %v2184
      %v3413 = vpop.f32.mrf.mxu0
      %v3414 = vadd.f32 0.0, %v3413
      %v3415 = vpop.f32.mrf.mxu0
      %v3416 = vadd.f32 0.0, %v3415
      %3417 = vmatprep.mubr.f32.mxu0 0.0
      %3418 = vmatmul.mubr.f32.gmra.mxu0 %v2187
      %v3419 = vpop.f32.mrf.mxu0
      %v3420 = vadd.f32 0.0, %v3419
      %v3421 = vpop.f32.mrf.mxu0
      %v3422 = vadd.f32 0.0, %v3421
      %3423 = vmatprep.mubr.f32.mxu0 0.0
      %3424 = vmatmul.mubr.f32.gmra.mxu0 %v2190
      %v3425 = vpop.f32.mrf.mxu0
      %v3426 = vadd.f32 0.0, %v3425
      %v3427 = vpop.f32.mrf.mxu0
      %v3428 = vadd.f32 0.0, %v3427
      %3429 = vmatprep.mubr.f32.mxu0 0.0
      %3430 = vmatmul.mubr.f32.gmra.mxu0 %v2193
      %v3431 = vpop.f32.mrf.mxu0
      %v3432 = vadd.f32 0.0, %v3431
      %v3433 = vpop.f32.mrf.mxu0
      %v3434 = vadd.f32 0.0, %v3433
      %3435 = vmatprep.mubr.f32.mxu0 0.0
      %3436 = vmatmul.mubr.f32.gmra.mxu0 %v2196
      %v3437 = vpop.f32.mrf.mxu0
      %v3438 = vadd.f32 0.0, %v3437
      %v3439 = vpop.f32.mrf.mxu0
      %v3440 = vadd.f32 0.0, %v3439
      %3441 = vmatprep.mubr.f32.mxu0 0.0
      %3442 = vmatmul.mubr.f32.gmra.mxu0 %v2199
      %v3443 = vpop.f32.mrf.mxu0
      %v3444 = vadd.f32 0.0, %v3443
      %v3445 = vpop.f32.mrf.mxu0
      %v3446 = vadd.f32 0.0, %v3445
      %3447 = vmatprep.mubr.f32.mxu0 0.0
      %3448 = vmatmul.mubr.f32.gmra.mxu0 %v2202
      %v3449 = vpop.f32.mrf.mxu0
      %v3450 = vadd.f32 0.0, %v3449
      %v3451 = vpop.f32.mrf.mxu0
      %v3452 = vadd.f32 0.0, %v3451
      %3453 = vdwg.mxu0
      %3454 = vmatprep.subr.mxu0 0.0
      %3455 = vmatpush1.msra.mxu0 0.0
      %3456 = vmatprep.subr.mxu0 0.0
      %3457 = vmatpush1.msra.mxu0 0.0
      %3458 = vmatprep.subr.mxu0 0.0
      %3459 = vmatpush1.msra.mxu0 0.0
      %3460 = vmatprep.subr.mxu0 0.0
      %3461 = vmatpush1.msra.mxu0 0.0
      %3462 = vmatprep.subr.mxu0 0.0
      %3463 = vmatpush1.msra.mxu0 0.0
      %3464 = vmatprep.subr.mxu0 0.0
      %3465 = vmatpush1.msra.mxu0 0.0
      %3466 = vmatprep.subr.mxu0 0.0
      %3467 = vmatpush1.msra.mxu0 0.0
      %3468 = vmatprep.subr.mxu0 0.0
      %3469 = vmatpush1.msra.mxu0 0.0
      %3470 = vmatprep.subr.mxu0 0.0
      %3471 = vmatpush1.msra.mxu0 0.0
      %3472 = vmatprep.subr.mxu0 0.0
      %3473 = vmatpush1.msra.mxu0 0.0
      %3474 = vmatprep.subr.mxu0 0.0
      %3475 = vmatpush1.msra.mxu0 0.0
      %3476 = vmatprep.subr.mxu0 0.0
      %3477 = vmatpush1.msra.mxu0 0.0
      %3478 = vmatprep.subr.mxu0 0.0
      %3479 = vmatpush1.msra.mxu0 0.0
      %3480 = vmatprep.subr.mxu0 0.0
      %3481 = vmatpush1.msra.mxu0 0.0
      %3482 = vmatprep.subr.mxu0 %v2239
      %3483 = vmatpush1.msra.mxu0 %v2236
      %3484 = vmatprep.subr.mxu0 %v1467
      %3485 = vmatpush1.msra.mxu0 %v1465
      %3486 = vmatprep.subr.mxu0 0.0
      %3487 = vmatpush2.msra.mxu0 0.0
      %3488 = vmatprep.subr.mxu0 0.0
      %3489 = vmatpush2.msra.mxu0 0.0
      %3490 = vmatprep.subr.mxu0 0.0
      %3491 = vmatpush2.msra.mxu0 0.0
      %3492 = vmatprep.subr.mxu0 0.0
      %3493 = vmatpush2.msra.mxu0 0.0
      %3494 = vmatprep.subr.mxu0 0.0
      %3495 = vmatpush2.msra.mxu0 0.0
      %3496 = vmatprep.subr.mxu0 0.0
      %3497 = vmatpush2.msra.mxu0 0.0
      %3498 = vmatprep.subr.mxu0 0.0
      %3499 = vmatpush2.msra.mxu0 0.0
      %3500 = vmatprep.subr.mxu0 0.0
      %3501 = vmatpush2.msra.mxu0 0.0
      %3502 = vmatprep.subr.mxu0 0.0
      %3503 = vmatpush2.msra.mxu0 0.0
      %3504 = vmatprep.subr.mxu0 0.0
      %3505 = vmatpush2.msra.mxu0 0.0
      %3506 = vmatprep.subr.mxu0 0.0
      %3507 = vmatpush2.msra.mxu0 0.0
      %3508 = vmatprep.subr.mxu0 0.0
      %3509 = vmatpush2.msra.mxu0 0.0
      %3510 = vmatprep.subr.mxu0 0.0
      %3511 = vmatpush2.msra.mxu0 0.0
      %3512 = vmatprep.subr.mxu0 0.0
      %3513 = vmatpush2.msra.mxu0 0.0
      %3514 = vmatprep.subr.mxu0 0.0
      %3515 = vmatpush2.msra.mxu0 0.0
      %3516 = vmatprep.subr.mxu0 0.0
      %3517 = vmatpush2.msra.mxu0 0.0
      %3518 = vmatprep.mubr.f32.mxu0 0.0
      %3519 = vmatmul.mubr.f32.gmra.mxu0 %v2121
      %v3520 = vpop.f32.mrf.mxu0
      %v3521 = vadd.f32 0.0, %v3520
      %v3522 = vpop.f32.mrf.mxu0
      %v3523 = vadd.f32 0.0, %v3522
      %3524 = vmatprep.mubr.f32.mxu0 0.0
      %3525 = vmatmul.mubr.f32.gmra.mxu0 %v2124
      %v3526 = vpop.f32.mrf.mxu0
      %v3527 = vadd.f32 0.0, %v3526
      %v3528 = vpop.f32.mrf.mxu0
      %v3529 = vadd.f32 0.0, %v3528
      %3530 = vmatprep.mubr.f32.mxu0 0.0
      %3531 = vmatmul.mubr.f32.gmra.mxu0 %v2127
      %v3532 = vpop.f32.mrf.mxu0
      %v3533 = vadd.f32 0.0, %v3532
      %v3534 = vpop.f32.mrf.mxu0
      %v3535 = vadd.f32 0.0, %v3534
      %3536 = vmatprep.mubr.f32.mxu0 0.0
      %3537 = vmatmul.mubr.f32.gmra.mxu0 %v2130
      %v3538 = vpop.f32.mrf.mxu0
      %v3539 = vadd.f32 0.0, %v3538
      %v3540 = vpop.f32.mrf.mxu0
      %v3541 = vadd.f32 0.0, %v3540
      %3542 = vmatprep.mubr.f32.mxu0 0.0
      %3543 = vmatmul.mubr.f32.gmra.mxu0 %v2133
      %v3544 = vpop.f32.mrf.mxu0
      %v3545 = vadd.f32 0.0, %v3544
      %v3546 = vpop.f32.mrf.mxu0
      %v3547 = vadd.f32 0.0, %v3546
      %3548 = vmatprep.mubr.f32.mxu0 0.0
      %3549 = vmatmul.mubr.f32.gmra.mxu0 %v2136
      %v3550 = vpop.f32.mrf.mxu0
      %v3551 = vadd.f32 0.0, %v3550
      %v3552 = vpop.f32.mrf.mxu0
      %v3553 = vadd.f32 0.0, %v3552
      %3554 = vmatprep.mubr.f32.mxu0 0.0
      %3555 = vmatmul.mubr.f32.gmra.mxu0 %v2139
      %v3556 = vpop.f32.mrf.mxu0
      %v3557 = vadd.f32 0.0, %v3556
      %v3558 = vpop.f32.mrf.mxu0
      %v3559 = vadd.f32 0.0, %v3558
      %3560 = vmatprep.mubr.f32.mxu0 0.0
      %3561 = vmatmul.mubr.f32.gmra.mxu0 %v2142
      %v3562 = vpop.f32.mrf.mxu0
      %v3563 = vadd.f32 0.0, %v3562
      %v3564 = vpop.f32.mrf.mxu0
      %v3565 = vadd.f32 0.0, %v3564
      %3566 = vmatprep.mubr.f32.mxu0 0.0
      %3567 = vmatmul.mubr.f32.gmra.mxu0 %v2145
      %v3568 = vpop.f32.mrf.mxu0
      %v3569 = vadd.f32 0.0, %v3568
      %v3570 = vpop.f32.mrf.mxu0
      %v3571 = vadd.f32 0.0, %v3570
      %3572 = vmatprep.mubr.f32.mxu0 0.0
      %3573 = vmatmul.mubr.f32.gmra.mxu0 %v2148
      %v3574 = vpop.f32.mrf.mxu0
      %v3575 = vadd.f32 0.0, %v3574
      %v3576 = vpop.f32.mrf.mxu0
      %v3577 = vadd.f32 0.0, %v3576
      %3578 = vmatprep.mubr.f32.mxu0 0.0
      %3579 = vmatmul.mubr.f32.gmra.mxu0 %v2151
      %v3580 = vpop.f32.mrf.mxu0
      %v3581 = vadd.f32 0.0, %v3580
      %v3582 = vpop.f32.mrf.mxu0
      %v3583 = vadd.f32 0.0, %v3582
      %3584 = vmatprep.mubr.f32.mxu0 0.0
      %3585 = vmatmul.mubr.f32.gmra.mxu0 %v2154
      %v3586 = vpop.f32.mrf.mxu0
      %v3587 = vadd.f32 0.0, %v3586
      %v3588 = vpop.f32.mrf.mxu0
      %v3589 = vadd.f32 0.0, %v3588
      %3590 = vmatprep.mubr.f32.mxu0 0.0
      %3591 = vmatmul.mubr.f32.gmra.mxu0 %v2157
      %v3592 = vpop.f32.mrf.mxu0
      %v3593 = vadd.f32 0.0, %v3592
      %v3594 = vpop.f32.mrf.mxu0
      %v3595 = vadd.f32 0.0, %v3594
      %3596 = vmatprep.mubr.f32.mxu0 0.0
      %3597 = vmatmul.mubr.f32.gmra.mxu0 %v2160
      %v3598 = vpop.f32.mrf.mxu0
      %v3599 = vadd.f32 0.0, %v3598
      %v3600 = vpop.f32.mrf.mxu0
      %v3601 = vadd.f32 0.0, %v3600
      %3602 = vmatprep.mubr.f32.mxu0 0.0
      %3603 = vmatmul.mubr.f32.gmra.mxu0 %v2163
      %v3604 = vpop.f32.mrf.mxu0
      %v3605 = vadd.f32 0.0, %v3604
      %v3606 = vpop.f32.mrf.mxu0
      %v3607 = vadd.f32 0.0, %v3606
      %3608 = vmatprep.mubr.f32.mxu0 0.0
      %3609 = vmatmul.mubr.f32.gmra.mxu0 %v2166
      %v3610 = vpop.f32.mrf.mxu0
      %v3611 = vadd.f32 0.0, %v3610
      %v3612 = vpop.f32.mrf.mxu0
      %v3613 = vadd.f32 0.0, %v3612
      %3614 = vmatprep.mubr.f32.mxu0 0.0
      %3615 = vmatmul.mubr.f32.gmra.mxu0 %v2169
      %v3616 = vpop.f32.mrf.mxu0
      %v3617 = vadd.f32 0.0, %v3616
      %v3618 = vpop.f32.mrf.mxu0
      %v3619 = vadd.f32 0.0, %v3618
      %3620 = vmatprep.mubr.f32.mxu0 0.0
      %3621 = vmatmul.mubr.f32.gmra.mxu0 %v2172
      %v3622 = vpop.f32.mrf.mxu0
      %v3623 = vadd.f32 0.0, %v3622
      %v3624 = vpop.f32.mrf.mxu0
      %v3625 = vadd.f32 0.0, %v3624
      %3626 = vmatprep.mubr.f32.mxu0 0.0
      %3627 = vmatmul.mubr.f32.gmra.mxu0 %v2175
      %v3628 = vpop.f32.mrf.mxu0
      %v3629 = vadd.f32 0.0, %v3628
      %v3630 = vpop.f32.mrf.mxu0
      %v3631 = vadd.f32 0.0, %v3630
      %3632 = vmatprep.mubr.f32.mxu0 0.0
      %3633 = vmatmul.mubr.f32.gmra.mxu0 %v2178
      %v3634 = vpop.f32.mrf.mxu0
      %v3635 = vadd.f32 0.0, %v3634
      %v3636 = vpop.f32.mrf.mxu0
      %v3637 = vadd.f32 0.0, %v3636
      %3638 = vmatprep.mubr.f32.mxu0 0.0
      %3639 = vmatmul.mubr.f32.gmra.mxu0 %v2181
      %v3640 = vpop.f32.mrf.mxu0
      %v3641 = vadd.f32 0.0, %v3640
      %v3642 = vpop.f32.mrf.mxu0
      %v3643 = vadd.f32 0.0, %v3642
      %3644 = vmatprep.mubr.f32.mxu0 0.0
      %3645 = vmatmul.mubr.f32.gmra.mxu0 %v2184
      %v3646 = vpop.f32.mrf.mxu0
      %v3647 = vadd.f32 0.0, %v3646
      %v3648 = vpop.f32.mrf.mxu0
      %v3649 = vadd.f32 0.0, %v3648
      %3650 = vmatprep.mubr.f32.mxu0 0.0
      %3651 = vmatmul.mubr.f32.gmra.mxu0 %v2187
      %v3652 = vpop.f32.mrf.mxu0
      %v3653 = vadd.f32 0.0, %v3652
      %v3654 = vpop.f32.mrf.mxu0
      %v3655 = vadd.f32 0.0, %v3654
      %3656 = vmatprep.mubr.f32.mxu0 0.0
      %3657 = vmatmul.mubr.f32.gmra.mxu0 %v2190
      %v3658 = vpop.f32.mrf.mxu0
      %v3659 = vadd.f32 0.0, %v3658
      %v3660 = vpop.f32.mrf.mxu0
      %v3661 = vadd.f32 0.0, %v3660
      %3662 = vmatprep.mubr.f32.mxu0 0.0
      %3663 = vmatmul.mubr.f32.gmra.mxu0 %v2193
      %v3664 = vpop.f32.mrf.mxu0
      %v3665 = vadd.f32 0.0, %v3664
      %v3666 = vpop.f32.mrf.mxu0
      %v3667 = vadd.f32 0.0, %v3666
      %3668 = vmatprep.mubr.f32.mxu0 0.0
      %3669 = vmatmul.mubr.f32.gmra.mxu0 %v2196
      %v3670 = vpop.f32.mrf.mxu0
      %v3671 = vadd.f32 0.0, %v3670
      %v3672 = vpop.f32.mrf.mxu0
      %v3673 = vadd.f32 0.0, %v3672
      %3674 = vmatprep.mubr.f32.mxu0 0.0
      %3675 = vmatmul.mubr.f32.gmra.mxu0 %v2199
      %v3676 = vpop.f32.mrf.mxu0
      %v3677 = vadd.f32 0.0, %v3676
      %v3678 = vpop.f32.mrf.mxu0
      %v3679 = vadd.f32 0.0, %v3678
      %3680 = vmatprep.mubr.f32.mxu0 0.0
      %3681 = vmatmul.mubr.f32.gmra.mxu0 %v2202
      %v3682 = vpop.f32.mrf.mxu0
      %v3683 = vadd.f32 0.0, %v3682
      %v3684 = vpop.f32.mrf.mxu0
      %v3685 = vadd.f32 0.0, %v3684
      %3686 = vdwg.mxu0
      %3687 = vmatprep.subr.mxu0 0.0
      %3688 = vmatpush1.msra.mxu0 0.0
      %3689 = vmatprep.subr.mxu0 0.0
      %3690 = vmatpush1.msra.mxu0 0.0
      %3691 = vmatprep.subr.mxu0 0.0
      %3692 = vmatpush1.msra.mxu0 0.0
      %3693 = vmatprep.subr.mxu0 0.0
      %3694 = vmatpush1.msra.mxu0 0.0
      %3695 = vmatprep.subr.mxu0 0.0
      %3696 = vmatpush1.msra.mxu0 0.0
      %3697 = vmatprep.subr.mxu0 0.0
      %3698 = vmatpush1.msra.mxu0 0.0
      %3699 = vmatprep.subr.mxu0 0.0
      %3700 = vmatpush1.msra.mxu0 0.0
      %3701 = vmatprep.subr.mxu0 0.0
      %3702 = vmatpush1.msra.mxu0 0.0
      %3703 = vmatprep.subr.mxu0 0.0
      %3704 = vmatpush1.msra.mxu0 0.0
      %3705 = vmatprep.subr.mxu0 0.0
      %3706 = vmatpush1.msra.mxu0 0.0
      %3707 = vmatprep.subr.mxu0 0.0
      %3708 = vmatpush1.msra.mxu0 0.0
      %3709 = vmatprep.subr.mxu0 0.0
      %3710 = vmatpush1.msra.mxu0 0.0
      %3711 = vmatprep.subr.mxu0 0.0
      %3712 = vmatpush1.msra.mxu0 0.0
      %3713 = vmatprep.subr.mxu0 0.0
      %3714 = vmatpush1.msra.mxu0 0.0
      %3715 = vmatprep.subr.mxu0 %v2245
      %3716 = vmatpush1.msra.mxu0 %v2242
      %3717 = vmatprep.subr.mxu0 %v1544
      %3718 = vmatpush1.msra.mxu0 %v1542
      %3719 = vmatprep.subr.mxu0 0.0
      %3720 = vmatpush2.msra.mxu0 0.0
      %3721 = vmatprep.subr.mxu0 0.0
      %3722 = vmatpush2.msra.mxu0 0.0
      %3723 = vmatprep.subr.mxu0 0.0
      %3724 = vmatpush2.msra.mxu0 0.0
      %3725 = vmatprep.subr.mxu0 0.0
      %3726 = vmatpush2.msra.mxu0 0.0
      %3727 = vmatprep.subr.mxu0 0.0
      %3728 = vmatpush2.msra.mxu0 0.0
      %3729 = vmatprep.subr.mxu0 0.0
      %3730 = vmatpush2.msra.mxu0 0.0
      %3731 = vmatprep.subr.mxu0 0.0
      %3732 = vmatpush2.msra.mxu0 0.0
      %3733 = vmatprep.subr.mxu0 0.0
      %3734 = vmatpush2.msra.mxu0 0.0
      %3735 = vmatprep.subr.mxu0 0.0
      %3736 = vmatpush2.msra.mxu0 0.0
      %3737 = vmatprep.subr.mxu0 0.0
      %3738 = vmatpush2.msra.mxu0 0.0
      %3739 = vmatprep.subr.mxu0 0.0
      %3740 = vmatpush2.msra.mxu0 0.0
      %3741 = vmatprep.subr.mxu0 0.0
      %3742 = vmatpush2.msra.mxu0 0.0
      %3743 = vmatprep.subr.mxu0 0.0
      %3744 = vmatpush2.msra.mxu0 0.0
      %3745 = vmatprep.subr.mxu0 0.0
      %3746 = vmatpush2.msra.mxu0 0.0
      %3747 = vmatprep.subr.mxu0 0.0
      %3748 = vmatpush2.msra.mxu0 0.0
      %3749 = vmatprep.subr.mxu0 0.0
      %3750 = vmatpush2.msra.mxu0 0.0
      %3751 = vmatprep.mubr.f32.mxu0 0.0
      %3752 = vmatmul.mubr.f32.gmra.mxu0 %v2121
      %v3753 = vpop.f32.mrf.mxu0
      %v3754 = vadd.f32 0.0, %v3753
      %v3755 = vpop.f32.mrf.mxu0
      %v3756 = vadd.f32 0.0, %v3755
      %3757 = vmatprep.mubr.f32.mxu0 0.0
      %3758 = vmatmul.mubr.f32.gmra.mxu0 %v2124
      %v3759 = vpop.f32.mrf.mxu0
      %v3760 = vadd.f32 0.0, %v3759
      %v3761 = vpop.f32.mrf.mxu0
      %v3762 = vadd.f32 0.0, %v3761
      %3763 = vmatprep.mubr.f32.mxu0 0.0
      %3764 = vmatmul.mubr.f32.gmra.mxu0 %v2127
      %v3765 = vpop.f32.mrf.mxu0
      %v3766 = vadd.f32 0.0, %v3765
      %v3767 = vpop.f32.mrf.mxu0
      %v3768 = vadd.f32 0.0, %v3767
      %3769 = vmatprep.mubr.f32.mxu0 0.0
      %3770 = vmatmul.mubr.f32.gmra.mxu0 %v2130
      %v3771 = vpop.f32.mrf.mxu0
      %v3772 = vadd.f32 0.0, %v3771
      %v3773 = vpop.f32.mrf.mxu0
      %v3774 = vadd.f32 0.0, %v3773
      %3775 = vmatprep.mubr.f32.mxu0 0.0
      %3776 = vmatmul.mubr.f32.gmra.mxu0 %v2133
      %v3777 = vpop.f32.mrf.mxu0
      %v3778 = vadd.f32 0.0, %v3777
      %v3779 = vpop.f32.mrf.mxu0
      %v3780 = vadd.f32 0.0, %v3779
      %3781 = vmatprep.mubr.f32.mxu0 0.0
      %3782 = vmatmul.mubr.f32.gmra.mxu0 %v2136
      %v3783 = vpop.f32.mrf.mxu0
      %v3784 = vadd.f32 0.0, %v3783
      %v3785 = vpop.f32.mrf.mxu0
      %v3786 = vadd.f32 0.0, %v3785
      %3787 = vmatprep.mubr.f32.mxu0 0.0
      %3788 = vmatmul.mubr.f32.gmra.mxu0 %v2139
      %v3789 = vpop.f32.mrf.mxu0
      %v3790 = vadd.f32 0.0, %v3789
      %v3791 = vpop.f32.mrf.mxu0
      %v3792 = vadd.f32 0.0, %v3791
      %3793 = vmatprep.mubr.f32.mxu0 0.0
      %3794 = vmatmul.mubr.f32.gmra.mxu0 %v2142
      %v3795 = vpop.f32.mrf.mxu0
      %v3796 = vadd.f32 0.0, %v3795
      %v3797 = vpop.f32.mrf.mxu0
      %v3798 = vadd.f32 0.0, %v3797
      %3799 = vmatprep.mubr.f32.mxu0 0.0
      %3800 = vmatmul.mubr.f32.gmra.mxu0 %v2145
      %v3801 = vpop.f32.mrf.mxu0
      %v3802 = vadd.f32 0.0, %v3801
      %v3803 = vpop.f32.mrf.mxu0
      %v3804 = vadd.f32 0.0, %v3803
      %3805 = vmatprep.mubr.f32.mxu0 0.0
      %3806 = vmatmul.mubr.f32.gmra.mxu0 %v2148
      %v3807 = vpop.f32.mrf.mxu0
      %v3808 = vadd.f32 0.0, %v3807
      %v3809 = vpop.f32.mrf.mxu0
      %v3810 = vadd.f32 0.0, %v3809
      %3811 = vmatprep.mubr.f32.mxu0 0.0
      %3812 = vmatmul.mubr.f32.gmra.mxu0 %v2151
      %v3813 = vpop.f32.mrf.mxu0
      %v3814 = vadd.f32 0.0, %v3813
      %v3815 = vpop.f32.mrf.mxu0
      %v3816 = vadd.f32 0.0, %v3815
      %3817 = vmatprep.mubr.f32.mxu0 0.0
      %3818 = vmatmul.mubr.f32.gmra.mxu0 %v2154
      %v3819 = vpop.f32.mrf.mxu0
      %v3820 = vadd.f32 0.0, %v3819
      %v3821 = vpop.f32.mrf.mxu0
      %v3822 = vadd.f32 0.0, %v3821
      %3823 = vmatprep.mubr.f32.mxu0 0.0
      %3824 = vmatmul.mubr.f32.gmra.mxu0 %v2157
      %v3825 = vpop.f32.mrf.mxu0
      %v3826 = vadd.f32 0.0, %v3825
      %v3827 = vpop.f32.mrf.mxu0
      %v3828 = vadd.f32 0.0, %v3827
      %3829 = vmatprep.mubr.f32.mxu0 0.0
      %3830 = vmatmul.mubr.f32.gmra.mxu0 %v2160
      %v3831 = vpop.f32.mrf.mxu0
      %v3832 = vadd.f32 0.0, %v3831
      %v3833 = vpop.f32.mrf.mxu0
      %v3834 = vadd.f32 0.0, %v3833
      %3835 = vmatprep.mubr.f32.mxu0 0.0
      %3836 = vmatmul.mubr.f32.gmra.mxu0 %v2163
      %v3837 = vpop.f32.mrf.mxu0
      %v3838 = vadd.f32 0.0, %v3837
      %v3839 = vpop.f32.mrf.mxu0
      %v3840 = vadd.f32 0.0, %v3839
      %3841 = vmatprep.mubr.f32.mxu0 0.0
      %3842 = vmatmul.mubr.f32.gmra.mxu0 %v2166
      %v3843 = vpop.f32.mrf.mxu0
      %v3844 = vadd.f32 0.0, %v3843
      %v3845 = vpop.f32.mrf.mxu0
      %v3846 = vadd.f32 0.0, %v3845
      %3847 = vmatprep.mubr.f32.mxu0 0.0
      %3848 = vmatmul.mubr.f32.gmra.mxu0 %v2169
      %v3849 = vpop.f32.mrf.mxu0
      %v3850 = vadd.f32 0.0, %v3849
      %v3851 = vpop.f32.mrf.mxu0
      %v3852 = vadd.f32 0.0, %v3851
      %3853 = vmatprep.mubr.f32.mxu0 0.0
      %3854 = vmatmul.mubr.f32.gmra.mxu0 %v2172
      %v3855 = vpop.f32.mrf.mxu0
      %v3856 = vadd.f32 0.0, %v3855
      %v3857 = vpop.f32.mrf.mxu0
      %v3858 = vadd.f32 0.0, %v3857
      %3859 = vmatprep.mubr.f32.mxu0 0.0
      %3860 = vmatmul.mubr.f32.gmra.mxu0 %v2175
      %v3861 = vpop.f32.mrf.mxu0
      %v3862 = vadd.f32 0.0, %v3861
      %v3863 = vpop.f32.mrf.mxu0
      %v3864 = vadd.f32 0.0, %v3863
      %3865 = vmatprep.mubr.f32.mxu0 0.0
      %3866 = vmatmul.mubr.f32.gmra.mxu0 %v2178
      %v3867 = vpop.f32.mrf.mxu0
      %v3868 = vadd.f32 0.0, %v3867
      %v3869 = vpop.f32.mrf.mxu0
      %v3870 = vadd.f32 0.0, %v3869
      %3871 = vmatprep.mubr.f32.mxu0 0.0
      %3872 = vmatmul.mubr.f32.gmra.mxu0 %v2181
      %v3873 = vpop.f32.mrf.mxu0
      %v3874 = vadd.f32 0.0, %v3873
      %v3875 = vpop.f32.mrf.mxu0
      %v3876 = vadd.f32 0.0, %v3875
      %3877 = vmatprep.mubr.f32.mxu0 0.0
      %3878 = vmatmul.mubr.f32.gmra.mxu0 %v2184
      %v3879 = vpop.f32.mrf.mxu0
      %v3880 = vadd.f32 0.0, %v3879
      %v3881 = vpop.f32.mrf.mxu0
      %v3882 = vadd.f32 0.0, %v3881
      %3883 = vmatprep.mubr.f32.mxu0 0.0
      %3884 = vmatmul.mubr.f32.gmra.mxu0 %v2187
      %v3885 = vpop.f32.mrf.mxu0
      %v3886 = vadd.f32 0.0, %v3885
      %v3887 = vpop.f32.mrf.mxu0
      %v3888 = vadd.f32 0.0, %v3887
      %3889 = vmatprep.mubr.f32.mxu0 0.0
      %3890 = vmatmul.mubr.f32.gmra.mxu0 %v2190
      %v3891 = vpop.f32.mrf.mxu0
      %v3892 = vadd.f32 0.0, %v3891
      %v3893 = vpop.f32.mrf.mxu0
      %v3894 = vadd.f32 0.0, %v3893
      %3895 = vmatprep.mubr.f32.mxu0 0.0
      %3896 = vmatmul.mubr.f32.gmra.mxu0 %v2193
      %v3897 = vpop.f32.mrf.mxu0
      %v3898 = vadd.f32 0.0, %v3897
      %v3899 = vpop.f32.mrf.mxu0
      %v3900 = vadd.f32 0.0, %v3899
      %3901 = vmatprep.mubr.f32.mxu0 0.0
      %3902 = vmatmul.mubr.f32.gmra.mxu0 %v2196
      %v3903 = vpop.f32.mrf.mxu0
      %v3904 = vadd.f32 0.0, %v3903
      %v3905 = vpop.f32.mrf.mxu0
      %v3906 = vadd.f32 0.0, %v3905
      %3907 = vmatprep.mubr.f32.mxu0 0.0
      %3908 = vmatmul.mubr.f32.gmra.mxu0 %v2199
      %v3909 = vpop.f32.mrf.mxu0
      %v3910 = vadd.f32 0.0, %v3909
      %v3911 = vpop.f32.mrf.mxu0
      %v3912 = vadd.f32 0.0, %v3911
      %3913 = vmatprep.mubr.f32.mxu0 0.0
      %3914 = vmatmul.mubr.f32.gmra.mxu0 %v2202
      %v3915 = vpop.f32.mrf.mxu0
      %v3916 = vadd.f32 0.0, %v3915
      %v3917 = vpop.f32.mrf.mxu0
      %v3918 = vadd.f32 0.0, %v3917
      %3919 = vdwg.mxu0
      %3920 = vmatprep.subr.mxu0 0.0
      %3921 = vmatpush1.msra.mxu0 0.0
      %3922 = vmatprep.subr.mxu0 0.0
      %3923 = vmatpush1.msra.mxu0 0.0
      %3924 = vmatprep.subr.mxu0 0.0
      %3925 = vmatpush1.msra.mxu0 0.0
      %3926 = vmatprep.subr.mxu0 0.0
      %3927 = vmatpush1.msra.mxu0 0.0
      %3928 = vmatprep.subr.mxu0 0.0
      %3929 = vmatpush1.msra.mxu0 0.0
      %3930 = vmatprep.subr.mxu0 0.0
      %3931 = vmatpush1.msra.mxu0 0.0
      %3932 = vmatprep.subr.mxu0 0.0
      %3933 = vmatpush1.msra.mxu0 0.0
      %3934 = vmatprep.subr.mxu0 0.0
      %3935 = vmatpush1.msra.mxu0 0.0
      %3936 = vmatprep.subr.mxu0 0.0
      %3937 = vmatpush1.msra.mxu0 0.0
      %3938 = vmatprep.subr.mxu0 0.0
      %3939 = vmatpush1.msra.mxu0 0.0
      %3940 = vmatprep.subr.mxu0 0.0
      %3941 = vmatpush1.msra.mxu0 0.0
      %3942 = vmatprep.subr.mxu0 0.0
      %3943 = vmatpush1.msra.mxu0 0.0
      %3944 = vmatprep.subr.mxu0 0.0
      %3945 = vmatpush1.msra.mxu0 0.0
      %3946 = vmatprep.subr.mxu0 0.0
      %3947 = vmatpush1.msra.mxu0 0.0
      %3948 = vmatprep.subr.mxu0 %v2251
      %3949 = vmatpush1.msra.mxu0 %v2248
      %3950 = vmatprep.subr.mxu0 %v1621
      %3951 = vmatpush1.msra.mxu0 %v1619
      %3952 = vmatprep.subr.mxu0 0.0
      %3953 = vmatpush2.msra.mxu0 0.0
      %3954 = vmatprep.subr.mxu0 0.0
      %3955 = vmatpush2.msra.mxu0 0.0
      %3956 = vmatprep.subr.mxu0 0.0
      %3957 = vmatpush2.msra.mxu0 0.0
      %3958 = vmatprep.subr.mxu0 0.0
      %3959 = vmatpush2.msra.mxu0 0.0
      %3960 = vmatprep.subr.mxu0 0.0
      %3961 = vmatpush2.msra.mxu0 0.0
      %3962 = vmatprep.subr.mxu0 0.0
      %3963 = vmatpush2.msra.mxu0 0.0
      %3964 = vmatprep.subr.mxu0 0.0
      %3965 = vmatpush2.msra.mxu0 0.0
      %3966 = vmatprep.subr.mxu0 0.0
      %3967 = vmatpush2.msra.mxu0 0.0
      %3968 = vmatprep.subr.mxu0 0.0
      %3969 = vmatpush2.msra.mxu0 0.0
      %3970 = vmatprep.subr.mxu0 0.0
      %3971 = vmatpush2.msra.mxu0 0.0
      %3972 = vmatprep.subr.mxu0 0.0
      %3973 = vmatpush2.msra.mxu0 0.0
      %3974 = vmatprep.subr.mxu0 0.0
      %3975 = vmatpush2.msra.mxu0 0.0
      %3976 = vmatprep.subr.mxu0 0.0
      %3977 = vmatpush2.msra.mxu0 0.0
      %3978 = vmatprep.subr.mxu0 0.0
      %3979 = vmatpush2.msra.mxu0 0.0
      %3980 = vmatprep.subr.mxu0 0.0
      %3981 = vmatpush2.msra.mxu0 0.0
      %3982 = vmatprep.subr.mxu0 0.0
      %3983 = vmatpush2.msra.mxu0 0.0
      %3984 = vmatprep.mubr.f32.mxu0 0.0
      %3985 = vmatmul.mubr.f32.gmra.mxu0 %v2121
      %v3986 = vpop.f32.mrf.mxu0
      %v3987 = vadd.f32 0.0, %v3986
      %v3988 = vpop.f32.mrf.mxu0
      %v3989 = vadd.f32 0.0, %v3988
      %3990 = vmatprep.mubr.f32.mxu0 0.0
      %3991 = vmatmul.mubr.f32.gmra.mxu0 %v2124
      %v3992 = vpop.f32.mrf.mxu0
      %v3993 = vadd.f32 0.0, %v3992
      %v3994 = vpop.f32.mrf.mxu0
      %v3995 = vadd.f32 0.0, %v3994
      %3996 = vmatprep.mubr.f32.mxu0 0.0
      %3997 = vmatmul.mubr.f32.gmra.mxu0 %v2127
      %v3998 = vpop.f32.mrf.mxu0
      %v3999 = vadd.f32 0.0, %v3998
      %v4000 = vpop.f32.mrf.mxu0
      %v4001 = vadd.f32 0.0, %v4000
      %4002 = vmatprep.mubr.f32.mxu0 0.0
      %4003 = vmatmul.mubr.f32.gmra.mxu0 %v2130
      %v4004 = vpop.f32.mrf.mxu0
      %v4005 = vadd.f32 0.0, %v4004
      %v4006 = vpop.f32.mrf.mxu0
      %v4007 = vadd.f32 0.0, %v4006
      %4008 = vmatprep.mubr.f32.mxu0 0.0
      %4009 = vmatmul.mubr.f32.gmra.mxu0 %v2133
      %v4010 = vpop.f32.mrf.mxu0
      %v4011 = vadd.f32 0.0, %v4010
      %v4012 = vpop.f32.mrf.mxu0
      %v4013 = vadd.f32 0.0, %v4012
      %4014 = vmatprep.mubr.f32.mxu0 0.0
      %4015 = vmatmul.mubr.f32.gmra.mxu0 %v2136
      %v4016 = vpop.f32.mrf.mxu0
      %v4017 = vadd.f32 0.0, %v4016
      %v4018 = vpop.f32.mrf.mxu0
      %v4019 = vadd.f32 0.0, %v4018
      %4020 = vmatprep.mubr.f32.mxu0 0.0
      %4021 = vmatmul.mubr.f32.gmra.mxu0 %v2139
      %v4022 = vpop.f32.mrf.mxu0
      %v4023 = vadd.f32 0.0, %v4022
      %v4024 = vpop.f32.mrf.mxu0
      %v4025 = vadd.f32 0.0, %v4024
      %4026 = vmatprep.mubr.f32.mxu0 0.0
      %4027 = vmatmul.mubr.f32.gmra.mxu0 %v2142
      %v4028 = vpop.f32.mrf.mxu0
      %v4029 = vadd.f32 0.0, %v4028
      %v4030 = vpop.f32.mrf.mxu0
      %v4031 = vadd.f32 0.0, %v4030
      %4032 = vmatprep.mubr.f32.mxu0 0.0
      %4033 = vmatmul.mubr.f32.gmra.mxu0 %v2145
      %v4034 = vpop.f32.mrf.mxu0
      %v4035 = vadd.f32 0.0, %v4034
      %v4036 = vpop.f32.mrf.mxu0
      %v4037 = vadd.f32 0.0, %v4036
      %4038 = vmatprep.mubr.f32.mxu0 0.0
      %4039 = vmatmul.mubr.f32.gmra.mxu0 %v2148
      %v4040 = vpop.f32.mrf.mxu0
      %v4041 = vadd.f32 0.0, %v4040
      %v4042 = vpop.f32.mrf.mxu0
      %v4043 = vadd.f32 0.0, %v4042
      %4044 = vmatprep.mubr.f32.mxu0 0.0
      %4045 = vmatmul.mubr.f32.gmra.mxu0 %v2151
      %v4046 = vpop.f32.mrf.mxu0
      %v4047 = vadd.f32 0.0, %v4046
      %v4048 = vpop.f32.mrf.mxu0
      %v4049 = vadd.f32 0.0, %v4048
      %4050 = vmatprep.mubr.f32.mxu0 0.0
      %4051 = vmatmul.mubr.f32.gmra.mxu0 %v2154
      %v4052 = vpop.f32.mrf.mxu0
      %v4053 = vadd.f32 0.0, %v4052
      %v4054 = vpop.f32.mrf.mxu0
      %v4055 = vadd.f32 0.0, %v4054
      %4056 = vmatprep.mubr.f32.mxu0 0.0
      %4057 = vmatmul.mubr.f32.gmra.mxu0 %v2157
      %v4058 = vpop.f32.mrf.mxu0
      %v4059 = vadd.f32 0.0, %v4058
      %v4060 = vpop.f32.mrf.mxu0
      %v4061 = vadd.f32 0.0, %v4060
      %4062 = vmatprep.mubr.f32.mxu0 0.0
      %4063 = vmatmul.mubr.f32.gmra.mxu0 %v2160
      %v4064 = vpop.f32.mrf.mxu0
      %v4065 = vadd.f32 0.0, %v4064
      %v4066 = vpop.f32.mrf.mxu0
      %v4067 = vadd.f32 0.0, %v4066
      %4068 = vmatprep.mubr.f32.mxu0 0.0
      %4069 = vmatmul.mubr.f32.gmra.mxu0 %v2163
      %v4070 = vpop.f32.mrf.mxu0
      %v4071 = vadd.f32 0.0, %v4070
      %v4072 = vpop.f32.mrf.mxu0
      %v4073 = vadd.f32 0.0, %v4072
      %4074 = vmatprep.mubr.f32.mxu0 0.0
      %4075 = vmatmul.mubr.f32.gmra.mxu0 %v2166
      %v4076 = vpop.f32.mrf.mxu0
      %v4077 = vadd.f32 0.0, %v4076
      %v4078 = vpop.f32.mrf.mxu0
      %v4079 = vadd.f32 0.0, %v4078
      %4080 = vmatprep.mubr.f32.mxu0 0.0
      %4081 = vmatmul.mubr.f32.gmra.mxu0 %v2169
      %v4082 = vpop.f32.mrf.mxu0
      %v4083 = vadd.f32 0.0, %v4082
      %v4084 = vpop.f32.mrf.mxu0
      %v4085 = vadd.f32 0.0, %v4084
      %4086 = vmatprep.mubr.f32.mxu0 0.0
      %4087 = vmatmul.mubr.f32.gmra.mxu0 %v2172
      %v4088 = vpop.f32.mrf.mxu0
      %v4089 = vadd.f32 0.0, %v4088
      %v4090 = vpop.f32.mrf.mxu0
      %v4091 = vadd.f32 0.0, %v4090
      %4092 = vmatprep.mubr.f32.mxu0 0.0
      %4093 = vmatmul.mubr.f32.gmra.mxu0 %v2175
      %v4094 = vpop.f32.mrf.mxu0
      %v4095 = vadd.f32 0.0, %v4094
      %v4096 = vpop.f32.mrf.mxu0
      %v4097 = vadd.f32 0.0, %v4096
      %4098 = vmatprep.mubr.f32.mxu0 0.0
      %4099 = vmatmul.mubr.f32.gmra.mxu0 %v2178
      %v4100 = vpop.f32.mrf.mxu0
      %v4101 = vadd.f32 0.0, %v4100
      %v4102 = vpop.f32.mrf.mxu0
      %v4103 = vadd.f32 0.0, %v4102
      %4104 = vmatprep.mubr.f32.mxu0 0.0
      %4105 = vmatmul.mubr.f32.gmra.mxu0 %v2181
      %v4106 = vpop.f32.mrf.mxu0
      %v4107 = vadd.f32 0.0, %v4106
      %v4108 = vpop.f32.mrf.mxu0
      %v4109 = vadd.f32 0.0, %v4108
      %4110 = vmatprep.mubr.f32.mxu0 0.0
      %4111 = vmatmul.mubr.f32.gmra.mxu0 %v2184
      %v4112 = vpop.f32.mrf.mxu0
      %v4113 = vadd.f32 0.0, %v4112
      %v4114 = vpop.f32.mrf.mxu0
      %v4115 = vadd.f32 0.0, %v4114
      %4116 = vmatprep.mubr.f32.mxu0 0.0
      %4117 = vmatmul.mubr.f32.gmra.mxu0 %v2187
      %v4118 = vpop.f32.mrf.mxu0
      %v4119 = vadd.f32 0.0, %v4118
      %v4120 = vpop.f32.mrf.mxu0
      %v4121 = vadd.f32 0.0, %v4120
      %4122 = vmatprep.mubr.f32.mxu0 0.0
      %4123 = vmatmul.mubr.f32.gmra.mxu0 %v2190
      %v4124 = vpop.f32.mrf.mxu0
      %v4125 = vadd.f32 0.0, %v4124
      %v4126 = vpop.f32.mrf.mxu0
      %v4127 = vadd.f32 0.0, %v4126
      %4128 = vmatprep.mubr.f32.mxu0 0.0
      %4129 = vmatmul.mubr.f32.gmra.mxu0 %v2193
      %v4130 = vpop.f32.mrf.mxu0
      %v4131 = vadd.f32 0.0, %v4130
      %v4132 = vpop.f32.mrf.mxu0
      %v4133 = vadd.f32 0.0, %v4132
      %4134 = vmatprep.mubr.f32.mxu0 0.0
      %4135 = vmatmul.mubr.f32.gmra.mxu0 %v2196
      %v4136 = vpop.f32.mrf.mxu0
      %v4137 = vadd.f32 0.0, %v4136
      %v4138 = vpop.f32.mrf.mxu0
      %v4139 = vadd.f32 0.0, %v4138
      %4140 = vmatprep.mubr.f32.mxu0 0.0
      %4141 = vmatmul.mubr.f32.gmra.mxu0 %v2199
      %v4142 = vpop.f32.mrf.mxu0
      %v4143 = vadd.f32 0.0, %v4142
      %v4144 = vpop.f32.mrf.mxu0
      %v4145 = vadd.f32 0.0, %v4144
      %4146 = vmatprep.mubr.f32.mxu0 0.0
      %4147 = vmatmul.mubr.f32.gmra.mxu0 %v2202
      %v4148 = vpop.f32.mrf.mxu0
      %v4149 = vadd.f32 0.0, %v4148
      %v4150 = vpop.f32.mrf.mxu0
      %v4151 = vadd.f32 0.0, %v4150
      %4152 = vdwg.mxu0
      %4153 = vmatprep.subr.mxu0 0.0
      %4154 = vmatpush1.msra.mxu0 0.0
      %4155 = vmatprep.subr.mxu0 0.0
      %4156 = vmatpush1.msra.mxu0 0.0
      %4157 = vmatprep.subr.mxu0 0.0
      %4158 = vmatpush1.msra.mxu0 0.0
      %4159 = vmatprep.subr.mxu0 0.0
      %4160 = vmatpush1.msra.mxu0 0.0
      %4161 = vmatprep.subr.mxu0 0.0
      %4162 = vmatpush1.msra.mxu0 0.0
      %4163 = vmatprep.subr.mxu0 0.0
      %4164 = vmatpush1.msra.mxu0 0.0
      %4165 = vmatprep.subr.mxu0 0.0
      %4166 = vmatpush1.msra.mxu0 0.0
      %4167 = vmatprep.subr.mxu0 0.0
      %4168 = vmatpush1.msra.mxu0 0.0
      %4169 = vmatprep.subr.mxu0 0.0
      %4170 = vmatpush1.msra.mxu0 0.0
      %4171 = vmatprep.subr.mxu0 0.0
      %4172 = vmatpush1.msra.mxu0 0.0
      %4173 = vmatprep.subr.mxu0 0.0
      %4174 = vmatpush1.msra.mxu0 0.0
      %4175 = vmatprep.subr.mxu0 0.0
      %4176 = vmatpush1.msra.mxu0 0.0
      %4177 = vmatprep.subr.mxu0 0.0
      %4178 = vmatpush1.msra.mxu0 0.0
      %4179 = vmatprep.subr.mxu0 0.0
      %4180 = vmatpush1.msra.mxu0 0.0
      %4181 = vmatprep.subr.mxu0 %v2257
      %4182 = vmatpush1.msra.mxu0 %v2254
      %4183 = vmatprep.subr.mxu0 %v1698
      %4184 = vmatpush1.msra.mxu0 %v1696
      %4185 = vmatprep.subr.mxu0 0.0
      %4186 = vmatpush2.msra.mxu0 0.0
      %4187 = vmatprep.subr.mxu0 0.0
      %4188 = vmatpush2.msra.mxu0 0.0
      %4189 = vmatprep.subr.mxu0 0.0
      %4190 = vmatpush2.msra.mxu0 0.0
      %4191 = vmatprep.subr.mxu0 0.0
      %4192 = vmatpush2.msra.mxu0 0.0
      %4193 = vmatprep.subr.mxu0 0.0
      %4194 = vmatpush2.msra.mxu0 0.0
      %4195 = vmatprep.subr.mxu0 0.0
      %4196 = vmatpush2.msra.mxu0 0.0
      %4197 = vmatprep.subr.mxu0 0.0
      %4198 = vmatpush2.msra.mxu0 0.0
      %4199 = vmatprep.subr.mxu0 0.0
      %4200 = vmatpush2.msra.mxu0 0.0
      %4201 = vmatprep.subr.mxu0 0.0
      %4202 = vmatpush2.msra.mxu0 0.0
      %4203 = vmatprep.subr.mxu0 0.0
      %4204 = vmatpush2.msra.mxu0 0.0
      %4205 = vmatprep.subr.mxu0 0.0
      %4206 = vmatpush2.msra.mxu0 0.0
      %4207 = vmatprep.subr.mxu0 0.0
      %4208 = vmatpush2.msra.mxu0 0.0
      %4209 = vmatprep.subr.mxu0 0.0
      %4210 = vmatpush2.msra.mxu0 0.0
      %4211 = vmatprep.subr.mxu0 0.0
      %4212 = vmatpush2.msra.mxu0 0.0
      %4213 = vmatprep.subr.mxu0 0.0
      %4214 = vmatpush2.msra.mxu0 0.0
      %4215 = vmatprep.subr.mxu0 0.0
      %4216 = vmatpush2.msra.mxu0 0.0
      %4217 = vmatprep.mubr.f32.mxu0 0.0
      %4218 = vmatmul.mubr.f32.gmra.mxu0 %v2121
      %v4219 = vpop.f32.mrf.mxu0
      %v4220 = vadd.f32 0.0, %v4219
      %v4221 = vpop.f32.mrf.mxu0
      %v4222 = vadd.f32 0.0, %v4221
      %4223 = vmatprep.mubr.f32.mxu0 0.0
      %4224 = vmatmul.mubr.f32.gmra.mxu0 %v2124
      %v4225 = vpop.f32.mrf.mxu0
      %v4226 = vadd.f32 0.0, %v4225
      %v4227 = vpop.f32.mrf.mxu0
      %v4228 = vadd.f32 0.0, %v4227
      %4229 = vmatprep.mubr.f32.mxu0 0.0
      %4230 = vmatmul.mubr.f32.gmra.mxu0 %v2127
      %v4231 = vpop.f32.mrf.mxu0
      %v4232 = vadd.f32 0.0, %v4231
      %v4233 = vpop.f32.mrf.mxu0
      %v4234 = vadd.f32 0.0, %v4233
      %4235 = vmatprep.mubr.f32.mxu0 0.0
      %4236 = vmatmul.mubr.f32.gmra.mxu0 %v2130
      %v4237 = vpop.f32.mrf.mxu0
      %v4238 = vadd.f32 0.0, %v4237
      %v4239 = vpop.f32.mrf.mxu0
      %v4240 = vadd.f32 0.0, %v4239
      %4241 = vmatprep.mubr.f32.mxu0 0.0
      %4242 = vmatmul.mubr.f32.gmra.mxu0 %v2133
      %v4243 = vpop.f32.mrf.mxu0
      %v4244 = vadd.f32 0.0, %v4243
      %v4245 = vpop.f32.mrf.mxu0
      %v4246 = vadd.f32 0.0, %v4245
      %4247 = vmatprep.mubr.f32.mxu0 0.0
      %4248 = vmatmul.mubr.f32.gmra.mxu0 %v2136
      %v4249 = vpop.f32.mrf.mxu0
      %v4250 = vadd.f32 0.0, %v4249
      %v4251 = vpop.f32.mrf.mxu0
      %v4252 = vadd.f32 0.0, %v4251
      %4253 = vmatprep.mubr.f32.mxu0 0.0
      %4254 = vmatmul.mubr.f32.gmra.mxu0 %v2139
      %v4255 = vpop.f32.mrf.mxu0
      %v4256 = vadd.f32 0.0, %v4255
      %v4257 = vpop.f32.mrf.mxu0
      %v4258 = vadd.f32 0.0, %v4257
      %4259 = vmatprep.mubr.f32.mxu0 0.0
      %4260 = vmatmul.mubr.f32.gmra.mxu0 %v2142
      %v4261 = vpop.f32.mrf.mxu0
      %v4262 = vadd.f32 0.0, %v4261
      %v4263 = vpop.f32.mrf.mxu0
      %v4264 = vadd.f32 0.0, %v4263
      %4265 = vmatprep.mubr.f32.mxu0 0.0
      %4266 = vmatmul.mubr.f32.gmra.mxu0 %v2145
      %v4267 = vpop.f32.mrf.mxu0
      %v4268 = vadd.f32 0.0, %v4267
      %v4269 = vpop.f32.mrf.mxu0
      %v4270 = vadd.f32 0.0, %v4269
      %4271 = vmatprep.mubr.f32.mxu0 0.0
      %4272 = vmatmul.mubr.f32.gmra.mxu0 %v2148
      %v4273 = vpop.f32.mrf.mxu0
      %v4274 = vadd.f32 0.0, %v4273
      %v4275 = vpop.f32.mrf.mxu0
      %v4276 = vadd.f32 0.0, %v4275
      %4277 = vmatprep.mubr.f32.mxu0 0.0
      %4278 = vmatmul.mubr.f32.gmra.mxu0 %v2151
      %v4279 = vpop.f32.mrf.mxu0
      %v4280 = vadd.f32 0.0, %v4279
      %v4281 = vpop.f32.mrf.mxu0
      %v4282 = vadd.f32 0.0, %v4281
      %4283 = vmatprep.mubr.f32.mxu0 0.0
      %4284 = vmatmul.mubr.f32.gmra.mxu0 %v2154
      %v4285 = vpop.f32.mrf.mxu0
      %v4286 = vadd.f32 0.0, %v4285
      %v4287 = vpop.f32.mrf.mxu0
      %v4288 = vadd.f32 0.0, %v4287
      %4289 = vmatprep.mubr.f32.mxu0 0.0
      %4290 = vmatmul.mubr.f32.gmra.mxu0 %v2157
      %v4291 = vpop.f32.mrf.mxu0
      %v4292 = vadd.f32 0.0, %v4291
      %v4293 = vpop.f32.mrf.mxu0
      %v4294 = vadd.f32 0.0, %v4293
      %4295 = vmatprep.mubr.f32.mxu0 0.0
      %4296 = vmatmul.mubr.f32.gmra.mxu0 %v2160
      %v4297 = vpop.f32.mrf.mxu0
      %v4298 = vadd.f32 0.0, %v4297
      %v4299 = vpop.f32.mrf.mxu0
      %v4300 = vadd.f32 0.0, %v4299
      %4301 = vmatprep.mubr.f32.mxu0 0.0
      %4302 = vmatmul.mubr.f32.gmra.mxu0 %v2163
      %v4303 = vpop.f32.mrf.mxu0
      %v4304 = vadd.f32 0.0, %v4303
      %v4305 = vpop.f32.mrf.mxu0
      %v4306 = vadd.f32 0.0, %v4305
      %4307 = vmatprep.mubr.f32.mxu0 0.0
      %4308 = vmatmul.mubr.f32.gmra.mxu0 %v2166
      %v4309 = vpop.f32.mrf.mxu0
      %v4310 = vadd.f32 0.0, %v4309
      %v4311 = vpop.f32.mrf.mxu0
      %v4312 = vadd.f32 0.0, %v4311
      %4313 = vmatprep.mubr.f32.mxu0 0.0
      %4314 = vmatmul.mubr.f32.gmra.mxu0 %v2169
      %v4315 = vpop.f32.mrf.mxu0
      %v4316 = vadd.f32 0.0, %v4315
      %v4317 = vpop.f32.mrf.mxu0
      %v4318 = vadd.f32 0.0, %v4317
      %4319 = vmatprep.mubr.f32.mxu0 0.0
      %4320 = vmatmul.mubr.f32.gmra.mxu0 %v2172
      %v4321 = vpop.f32.mrf.mxu0
      %v4322 = vadd.f32 0.0, %v4321
      %v4323 = vpop.f32.mrf.mxu0
      %v4324 = vadd.f32 0.0, %v4323
      %4325 = vmatprep.mubr.f32.mxu0 0.0
      %4326 = vmatmul.mubr.f32.gmra.mxu0 %v2175
      %v4327 = vpop.f32.mrf.mxu0
      %v4328 = vadd.f32 0.0, %v4327
      %v4329 = vpop.f32.mrf.mxu0
      %v4330 = vadd.f32 0.0, %v4329
      %4331 = vmatprep.mubr.f32.mxu0 0.0
      %4332 = vmatmul.mubr.f32.gmra.mxu0 %v2178
      %v4333 = vpop.f32.mrf.mxu0
      %v4334 = vadd.f32 0.0, %v4333
      %v4335 = vpop.f32.mrf.mxu0
      %v4336 = vadd.f32 0.0, %v4335
      %4337 = vmatprep.mubr.f32.mxu0 0.0
      %4338 = vmatmul.mubr.f32.gmra.mxu0 %v2181
      %v4339 = vpop.f32.mrf.mxu0
      %v4340 = vadd.f32 0.0, %v4339
      %v4341 = vpop.f32.mrf.mxu0
      %v4342 = vadd.f32 0.0, %v4341
      %4343 = vmatprep.mubr.f32.mxu0 0.0
      %4344 = vmatmul.mubr.f32.gmra.mxu0 %v2184
      %v4345 = vpop.f32.mrf.mxu0
      %v4346 = vadd.f32 0.0, %v4345
      %v4347 = vpop.f32.mrf.mxu0
      %v4348 = vadd.f32 0.0, %v4347
      %4349 = vmatprep.mubr.f32.mxu0 0.0
      %4350 = vmatmul.mubr.f32.gmra.mxu0 %v2187
      %v4351 = vpop.f32.mrf.mxu0
      %v4352 = vadd.f32 0.0, %v4351
      %v4353 = vpop.f32.mrf.mxu0
      %v4354 = vadd.f32 0.0, %v4353
      %4355 = vmatprep.mubr.f32.mxu0 0.0
      %4356 = vmatmul.mubr.f32.gmra.mxu0 %v2190
      %v4357 = vpop.f32.mrf.mxu0
      %v4358 = vadd.f32 0.0, %v4357
      %v4359 = vpop.f32.mrf.mxu0
      %v4360 = vadd.f32 0.0, %v4359
      %4361 = vmatprep.mubr.f32.mxu0 0.0
      %4362 = vmatmul.mubr.f32.gmra.mxu0 %v2193
      %v4363 = vpop.f32.mrf.mxu0
      %v4364 = vadd.f32 0.0, %v4363
      %v4365 = vpop.f32.mrf.mxu0
      %v4366 = vadd.f32 0.0, %v4365
      %4367 = vmatprep.mubr.f32.mxu0 0.0
      %4368 = vmatmul.mubr.f32.gmra.mxu0 %v2196
      %v4369 = vpop.f32.mrf.mxu0
      %v4370 = vadd.f32 0.0, %v4369
      %v4371 = vpop.f32.mrf.mxu0
      %v4372 = vadd.f32 0.0, %v4371
      %4373 = vmatprep.mubr.f32.mxu0 0.0
      %4374 = vmatmul.mubr.f32.gmra.mxu0 %v2199
      %v4375 = vpop.f32.mrf.mxu0
      %v4376 = vadd.f32 0.0, %v4375
      %v4377 = vpop.f32.mrf.mxu0
      %v4378 = vadd.f32 0.0, %v4377
      %4379 = vmatprep.mubr.f32.mxu0 0.0
      %4380 = vmatmul.mubr.f32.gmra.mxu0 %v2202
      %v4381 = vpop.f32.mrf.mxu0
      %v4382 = vadd.f32 0.0, %v4381
      %v4383 = vpop.f32.mrf.mxu0
      %v4384 = vadd.f32 0.0, %v4383
      %4385 = vdwg.mxu0
      %4386 = vmatprep.subr.mxu0 0.0
      %4387 = vmatpush1.msra.mxu0 0.0
      %4388 = vmatprep.subr.mxu0 0.0
      %4389 = vmatpush1.msra.mxu0 0.0
      %4390 = vmatprep.subr.mxu0 0.0
      %4391 = vmatpush1.msra.mxu0 0.0
      %4392 = vmatprep.subr.mxu0 0.0
      %4393 = vmatpush1.msra.mxu0 0.0
      %4394 = vmatprep.subr.mxu0 0.0
      %4395 = vmatpush1.msra.mxu0 0.0
      %4396 = vmatprep.subr.mxu0 0.0
      %4397 = vmatpush1.msra.mxu0 0.0
      %4398 = vmatprep.subr.mxu0 0.0
      %4399 = vmatpush1.msra.mxu0 0.0
      %4400 = vmatprep.subr.mxu0 0.0
      %4401 = vmatpush1.msra.mxu0 0.0
      %4402 = vmatprep.subr.mxu0 0.0
      %4403 = vmatpush1.msra.mxu0 0.0
      %4404 = vmatprep.subr.mxu0 0.0
      %4405 = vmatpush1.msra.mxu0 0.0
      %4406 = vmatprep.subr.mxu0 0.0
      %4407 = vmatpush1.msra.mxu0 0.0
      %4408 = vmatprep.subr.mxu0 0.0
      %4409 = vmatpush1.msra.mxu0 0.0
      %4410 = vmatprep.subr.mxu0 0.0
      %4411 = vmatpush1.msra.mxu0 0.0
      %4412 = vmatprep.subr.mxu0 0.0
      %4413 = vmatpush1.msra.mxu0 0.0
      %4414 = vmatprep.subr.mxu0 %v2263
      %4415 = vmatpush1.msra.mxu0 %v2260
      %4416 = vmatprep.subr.mxu0 %v1775
      %4417 = vmatpush1.msra.mxu0 %v1773
      %4418 = vmatprep.subr.mxu0 0.0
      %4419 = vmatpush2.msra.mxu0 0.0
      %4420 = vmatprep.subr.mxu0 0.0
      %4421 = vmatpush2.msra.mxu0 0.0
      %4422 = vmatprep.subr.mxu0 0.0
      %4423 = vmatpush2.msra.mxu0 0.0
      %4424 = vmatprep.subr.mxu0 0.0
      %4425 = vmatpush2.msra.mxu0 0.0
      %4426 = vmatprep.subr.mxu0 0.0
      %4427 = vmatpush2.msra.mxu0 0.0
      %4428 = vmatprep.subr.mxu0 0.0
      %4429 = vmatpush2.msra.mxu0 0.0
      %4430 = vmatprep.subr.mxu0 0.0
      %4431 = vmatpush2.msra.mxu0 0.0
      %4432 = vmatprep.subr.mxu0 0.0
      %4433 = vmatpush2.msra.mxu0 0.0
      %4434 = vmatprep.subr.mxu0 0.0
      %4435 = vmatpush2.msra.mxu0 0.0
      %4436 = vmatprep.subr.mxu0 0.0
      %4437 = vmatpush2.msra.mxu0 0.0
      %4438 = vmatprep.subr.mxu0 0.0
      %4439 = vmatpush2.msra.mxu0 0.0
      %4440 = vmatprep.subr.mxu0 0.0
      %4441 = vmatpush2.msra.mxu0 0.0
      %4442 = vmatprep.subr.mxu0 0.0
      %4443 = vmatpush2.msra.mxu0 0.0
      %4444 = vmatprep.subr.mxu0 0.0
      %4445 = vmatpush2.msra.mxu0 0.0
      %4446 = vmatprep.subr.mxu0 0.0
      %4447 = vmatpush2.msra.mxu0 0.0
      %4448 = vmatprep.subr.mxu0 0.0
      %4449 = vmatpush2.msra.mxu0 0.0
      %4450 = vmatprep.mubr.f32.mxu0 0.0
      %4451 = vmatmul.mubr.f32.gmra.mxu0 %v2121
      %v4452 = vpop.f32.mrf.mxu0
      %v4453 = vadd.f32 0.0, %v4452
      %v4454 = vpop.f32.mrf.mxu0
      %v4455 = vadd.f32 0.0, %v4454
      %4456 = vmatprep.mubr.f32.mxu0 0.0
      %4457 = vmatmul.mubr.f32.gmra.mxu0 %v2124
      %v4458 = vpop.f32.mrf.mxu0
      %v4459 = vadd.f32 0.0, %v4458
      %v4460 = vpop.f32.mrf.mxu0
      %v4461 = vadd.f32 0.0, %v4460
      %4462 = vmatprep.mubr.f32.mxu0 0.0
      %4463 = vmatmul.mubr.f32.gmra.mxu0 %v2127
      %v4464 = vpop.f32.mrf.mxu0
      %v4465 = vadd.f32 0.0, %v4464
      %v4466 = vpop.f32.mrf.mxu0
      %v4467 = vadd.f32 0.0, %v4466
      %4468 = vmatprep.mubr.f32.mxu0 0.0
      %4469 = vmatmul.mubr.f32.gmra.mxu0 %v2130
      %v4470 = vpop.f32.mrf.mxu0
      %v4471 = vadd.f32 0.0, %v4470
      %v4472 = vpop.f32.mrf.mxu0
      %v4473 = vadd.f32 0.0, %v4472
      %4474 = vmatprep.mubr.f32.mxu0 0.0
      %4475 = vmatmul.mubr.f32.gmra.mxu0 %v2133
      %v4476 = vpop.f32.mrf.mxu0
      %v4477 = vadd.f32 0.0, %v4476
      %v4478 = vpop.f32.mrf.mxu0
      %v4479 = vadd.f32 0.0, %v4478
      %4480 = vmatprep.mubr.f32.mxu0 0.0
      %4481 = vmatmul.mubr.f32.gmra.mxu0 %v2136
      %v4482 = vpop.f32.mrf.mxu0
      %v4483 = vadd.f32 0.0, %v4482
      %v4484 = vpop.f32.mrf.mxu0
      %v4485 = vadd.f32 0.0, %v4484
      %4486 = vmatprep.mubr.f32.mxu0 0.0
      %4487 = vmatmul.mubr.f32.gmra.mxu0 %v2139
      %v4488 = vpop.f32.mrf.mxu0
      %v4489 = vadd.f32 0.0, %v4488
      %v4490 = vpop.f32.mrf.mxu0
      %v4491 = vadd.f32 0.0, %v4490
      %4492 = vmatprep.mubr.f32.mxu0 0.0
      %4493 = vmatmul.mubr.f32.gmra.mxu0 %v2142
      %v4494 = vpop.f32.mrf.mxu0
      %v4495 = vadd.f32 0.0, %v4494
      %v4496 = vpop.f32.mrf.mxu0
      %v4497 = vadd.f32 0.0, %v4496
      %4498 = vmatprep.mubr.f32.mxu0 0.0
      %4499 = vmatmul.mubr.f32.gmra.mxu0 %v2145
      %v4500 = vpop.f32.mrf.mxu0
      %v4501 = vadd.f32 0.0, %v4500
      %v4502 = vpop.f32.mrf.mxu0
      %v4503 = vadd.f32 0.0, %v4502
      %4504 = vmatprep.mubr.f32.mxu0 0.0
      %4505 = vmatmul.mubr.f32.gmra.mxu0 %v2148
      %v4506 = vpop.f32.mrf.mxu0
      %v4507 = vadd.f32 0.0, %v4506
      %v4508 = vpop.f32.mrf.mxu0
      %v4509 = vadd.f32 0.0, %v4508
      %4510 = vmatprep.mubr.f32.mxu0 0.0
      %4511 = vmatmul.mubr.f32.gmra.mxu0 %v2151
      %v4512 = vpop.f32.mrf.mxu0
      %v4513 = vadd.f32 0.0, %v4512
      %v4514 = vpop.f32.mrf.mxu0
      %v4515 = vadd.f32 0.0, %v4514
      %4516 = vmatprep.mubr.f32.mxu0 0.0
      %4517 = vmatmul.mubr.f32.gmra.mxu0 %v2154
      %v4518 = vpop.f32.mrf.mxu0
      %v4519 = vadd.f32 0.0, %v4518
      %v4520 = vpop.f32.mrf.mxu0
      %v4521 = vadd.f32 0.0, %v4520
      %4522 = vmatprep.mubr.f32.mxu0 0.0
      %4523 = vmatmul.mubr.f32.gmra.mxu0 %v2157
      %v4524 = vpop.f32.mrf.mxu0
      %v4525 = vadd.f32 0.0, %v4524
      %v4526 = vpop.f32.mrf.mxu0
      %v4527 = vadd.f32 0.0, %v4526
      %4528 = vmatprep.mubr.f32.mxu0 0.0
      %4529 = vmatmul.mubr.f32.gmra.mxu0 %v2160
      %v4530 = vpop.f32.mrf.mxu0
      %v4531 = vadd.f32 0.0, %v4530
      %v4532 = vpop.f32.mrf.mxu0
      %v4533 = vadd.f32 0.0, %v4532
      %4534 = vmatprep.mubr.f32.mxu0 0.0
      %4535 = vmatmul.mubr.f32.gmra.mxu0 %v2163
      %v4536 = vpop.f32.mrf.mxu0
      %v4537 = vadd.f32 0.0, %v4536
      %v4538 = vpop.f32.mrf.mxu0
      %v4539 = vadd.f32 0.0, %v4538
      %4540 = vmatprep.mubr.f32.mxu0 0.0
      %4541 = vmatmul.mubr.f32.gmra.mxu0 %v2166
      %v4542 = vpop.f32.mrf.mxu0
      %v4543 = vadd.f32 0.0, %v4542
      %v4544 = vpop.f32.mrf.mxu0
      %v4545 = vadd.f32 0.0, %v4544
      %4546 = vmatprep.mubr.f32.mxu0 0.0
      %4547 = vmatmul.mubr.f32.gmra.mxu0 %v2169
      %v4548 = vpop.f32.mrf.mxu0
      %v4549 = vadd.f32 0.0, %v4548
      %v4550 = vpop.f32.mrf.mxu0
      %v4551 = vadd.f32 0.0, %v4550
      %4552 = vmatprep.mubr.f32.mxu0 0.0
      %4553 = vmatmul.mubr.f32.gmra.mxu0 %v2172
      %v4554 = vpop.f32.mrf.mxu0
      %v4555 = vadd.f32 0.0, %v4554
      %v4556 = vpop.f32.mrf.mxu0
      %v4557 = vadd.f32 0.0, %v4556
      %4558 = vmatprep.mubr.f32.mxu0 0.0
      %4559 = vmatmul.mubr.f32.gmra.mxu0 %v2175
      %v4560 = vpop.f32.mrf.mxu0
      %v4561 = vadd.f32 0.0, %v4560
      %v4562 = vpop.f32.mrf.mxu0
      %v4563 = vadd.f32 0.0, %v4562
      %4564 = vmatprep.mubr.f32.mxu0 0.0
      %4565 = vmatmul.mubr.f32.gmra.mxu0 %v2178
      %v4566 = vpop.f32.mrf.mxu0
      %v4567 = vadd.f32 0.0, %v4566
      %v4568 = vpop.f32.mrf.mxu0
      %v4569 = vadd.f32 0.0, %v4568
      %4570 = vmatprep.mubr.f32.mxu0 0.0
      %4571 = vmatmul.mubr.f32.gmra.mxu0 %v2181
      %v4572 = vpop.f32.mrf.mxu0
      %v4573 = vadd.f32 0.0, %v4572
      %v4574 = vpop.f32.mrf.mxu0
      %v4575 = vadd.f32 0.0, %v4574
      %4576 = vmatprep.mubr.f32.mxu0 0.0
      %4577 = vmatmul.mubr.f32.gmra.mxu0 %v2184
      %v4578 = vpop.f32.mrf.mxu0
      %v4579 = vadd.f32 0.0, %v4578
      %v4580 = vpop.f32.mrf.mxu0
      %v4581 = vadd.f32 0.0, %v4580
      %4582 = vmatprep.mubr.f32.mxu0 0.0
      %4583 = vmatmul.mubr.f32.gmra.mxu0 %v2187
      %v4584 = vpop.f32.mrf.mxu0
      %v4585 = vadd.f32 0.0, %v4584
      %v4586 = vpop.f32.mrf.mxu0
      %v4587 = vadd.f32 0.0, %v4586
      %4588 = vmatprep.mubr.f32.mxu0 0.0
      %4589 = vmatmul.mubr.f32.gmra.mxu0 %v2190
      %v4590 = vpop.f32.mrf.mxu0
      %v4591 = vadd.f32 0.0, %v4590
      %v4592 = vpop.f32.mrf.mxu0
      %v4593 = vadd.f32 0.0, %v4592
      %4594 = vmatprep.mubr.f32.mxu0 0.0
      %4595 = vmatmul.mubr.f32.gmra.mxu0 %v2193
      %v4596 = vpop.f32.mrf.mxu0
      %v4597 = vadd.f32 0.0, %v4596
      %v4598 = vpop.f32.mrf.mxu0
      %v4599 = vadd.f32 0.0, %v4598
      %4600 = vmatprep.mubr.f32.mxu0 0.0
      %4601 = vmatmul.mubr.f32.gmra.mxu0 %v2196
      %v4602 = vpop.f32.mrf.mxu0
      %v4603 = vadd.f32 0.0, %v4602
      %v4604 = vpop.f32.mrf.mxu0
      %v4605 = vadd.f32 0.0, %v4604
      %4606 = vmatprep.mubr.f32.mxu0 0.0
      %4607 = vmatmul.mubr.f32.gmra.mxu0 %v2199
      %v4608 = vpop.f32.mrf.mxu0
      %v4609 = vadd.f32 0.0, %v4608
      %v4610 = vpop.f32.mrf.mxu0
      %v4611 = vadd.f32 0.0, %v4610
      %4612 = vmatprep.mubr.f32.mxu0 0.0
      %4613 = vmatmul.mubr.f32.gmra.mxu0 %v2202
      %v4614 = vpop.f32.mrf.mxu0
      %v4615 = vadd.f32 0.0, %v4614
      %v4616 = vpop.f32.mrf.mxu0
      %v4617 = vadd.f32 0.0, %v4616
      %4618 = vdwg.mxu0
      %4619 = vmatprep.subr.mxu0 0.0
      %4620 = vmatpush1.msra.mxu0 0.0
      %4621 = vmatprep.subr.mxu0 0.0
      %4622 = vmatpush1.msra.mxu0 0.0
      %4623 = vmatprep.subr.mxu0 0.0
      %4624 = vmatpush1.msra.mxu0 0.0
      %4625 = vmatprep.subr.mxu0 0.0
      %4626 = vmatpush1.msra.mxu0 0.0
      %4627 = vmatprep.subr.mxu0 0.0
      %4628 = vmatpush1.msra.mxu0 0.0
      %4629 = vmatprep.subr.mxu0 0.0
      %4630 = vmatpush1.msra.mxu0 0.0
      %4631 = vmatprep.subr.mxu0 0.0
      %4632 = vmatpush1.msra.mxu0 0.0
      %4633 = vmatprep.subr.mxu0 0.0
      %4634 = vmatpush1.msra.mxu0 0.0
      %4635 = vmatprep.subr.mxu0 0.0
      %4636 = vmatpush1.msra.mxu0 0.0
      %4637 = vmatprep.subr.mxu0 0.0
      %4638 = vmatpush1.msra.mxu0 0.0
      %4639 = vmatprep.subr.mxu0 0.0
      %4640 = vmatpush1.msra.mxu0 0.0
      %4641 = vmatprep.subr.mxu0 0.0
      %4642 = vmatpush1.msra.mxu0 0.0
      %4643 = vmatprep.subr.mxu0 0.0
      %4644 = vmatpush1.msra.mxu0 0.0
      %4645 = vmatprep.subr.mxu0 0.0
      %4646 = vmatpush1.msra.mxu0 0.0
      %4647 = vmatprep.subr.mxu0 %v2269
      %4648 = vmatpush1.msra.mxu0 %v2266
      %4649 = vmatprep.subr.mxu0 %v1852
      %4650 = vmatpush1.msra.mxu0 %v1850
      %4651 = vmatprep.subr.mxu0 0.0
      %4652 = vmatpush2.msra.mxu0 0.0
      %4653 = vmatprep.subr.mxu0 0.0
      %4654 = vmatpush2.msra.mxu0 0.0
      %4655 = vmatprep.subr.mxu0 0.0
      %4656 = vmatpush2.msra.mxu0 0.0
      %4657 = vmatprep.subr.mxu0 0.0
      %4658 = vmatpush2.msra.mxu0 0.0
      %4659 = vmatprep.subr.mxu0 0.0
      %4660 = vmatpush2.msra.mxu0 0.0
      %4661 = vmatprep.subr.mxu0 0.0
      %4662 = vmatpush2.msra.mxu0 0.0
      %4663 = vmatprep.subr.mxu0 0.0
      %4664 = vmatpush2.msra.mxu0 0.0
      %4665 = vmatprep.subr.mxu0 0.0
      %4666 = vmatpush2.msra.mxu0 0.0
      %4667 = vmatprep.subr.mxu0 0.0
      %4668 = vmatpush2.msra.mxu0 0.0
      %4669 = vmatprep.subr.mxu0 0.0
      %4670 = vmatpush2.msra.mxu0 0.0
      %4671 = vmatprep.subr.mxu0 0.0
      %4672 = vmatpush2.msra.mxu0 0.0
      %4673 = vmatprep.subr.mxu0 0.0
      %4674 = vmatpush2.msra.mxu0 0.0
      %4675 = vmatprep.subr.mxu0 0.0
      %4676 = vmatpush2.msra.mxu0 0.0
      %4677 = vmatprep.subr.mxu0 0.0
      %4678 = vmatpush2.msra.mxu0 0.0
      %4679 = vmatprep.subr.mxu0 0.0
      %4680 = vmatpush2.msra.mxu0 0.0
      %4681 = vmatprep.subr.mxu0 0.0
      %4682 = vmatpush2.msra.mxu0 0.0
      %4683 = vmatprep.mubr.f32.mxu0 0.0
      %4684 = vmatmul.mubr.f32.gmra.mxu0 %v2121
      %v4685 = vpop.f32.mrf.mxu0
      %v4686 = vadd.f32 0.0, %v4685
      %v4687 = vpop.f32.mrf.mxu0
      %v4688 = vadd.f32 0.0, %v4687
      %4689 = vmatprep.mubr.f32.mxu0 0.0
      %4690 = vmatmul.mubr.f32.gmra.mxu0 %v2124
      %v4691 = vpop.f32.mrf.mxu0
      %v4692 = vadd.f32 0.0, %v4691
      %v4693 = vpop.f32.mrf.mxu0
      %v4694 = vadd.f32 0.0, %v4693
      %4695 = vmatprep.mubr.f32.mxu0 0.0
      %4696 = vmatmul.mubr.f32.gmra.mxu0 %v2127
      %v4697 = vpop.f32.mrf.mxu0
      %v4698 = vadd.f32 0.0, %v4697
      %v4699 = vpop.f32.mrf.mxu0
      %v4700 = vadd.f32 0.0, %v4699
      %4701 = vmatprep.mubr.f32.mxu0 0.0
      %4702 = vmatmul.mubr.f32.gmra.mxu0 %v2130
      %v4703 = vpop.f32.mrf.mxu0
      %v4704 = vadd.f32 0.0, %v4703
      %v4705 = vpop.f32.mrf.mxu0
      %v4706 = vadd.f32 0.0, %v4705
      %4707 = vmatprep.mubr.f32.mxu0 0.0
      %4708 = vmatmul.mubr.f32.gmra.mxu0 %v2133
      %v4709 = vpop.f32.mrf.mxu0
      %v4710 = vadd.f32 0.0, %v4709
      %v4711 = vpop.f32.mrf.mxu0
      %v4712 = vadd.f32 0.0, %v4711
      %4713 = vmatprep.mubr.f32.mxu0 0.0
      %4714 = vmatmul.mubr.f32.gmra.mxu0 %v2136
      %v4715 = vpop.f32.mrf.mxu0
      %v4716 = vadd.f32 0.0, %v4715
      %v4717 = vpop.f32.mrf.mxu0
      %v4718 = vadd.f32 0.0, %v4717
      %4719 = vmatprep.mubr.f32.mxu0 0.0
      %4720 = vmatmul.mubr.f32.gmra.mxu0 %v2139
      %v4721 = vpop.f32.mrf.mxu0
      %v4722 = vadd.f32 0.0, %v4721
      %v4723 = vpop.f32.mrf.mxu0
      %v4724 = vadd.f32 0.0, %v4723
      %4725 = vmatprep.mubr.f32.mxu0 0.0
      %4726 = vmatmul.mubr.f32.gmra.mxu0 %v2142
      %v4727 = vpop.f32.mrf.mxu0
      %v4728 = vadd.f32 0.0, %v4727
      %v4729 = vpop.f32.mrf.mxu0
      %v4730 = vadd.f32 0.0, %v4729
      %4731 = vmatprep.mubr.f32.mxu0 0.0
      %4732 = vmatmul.mubr.f32.gmra.mxu0 %v2145
      %v4733 = vpop.f32.mrf.mxu0
      %v4734 = vadd.f32 0.0, %v4733
      %v4735 = vpop.f32.mrf.mxu0
      %v4736 = vadd.f32 0.0, %v4735
      %4737 = vmatprep.mubr.f32.mxu0 0.0
      %4738 = vmatmul.mubr.f32.gmra.mxu0 %v2148
      %v4739 = vpop.f32.mrf.mxu0
      %v4740 = vadd.f32 0.0, %v4739
      %v4741 = vpop.f32.mrf.mxu0
      %v4742 = vadd.f32 0.0, %v4741
      %4743 = vmatprep.mubr.f32.mxu0 0.0
      %4744 = vmatmul.mubr.f32.gmra.mxu0 %v2151
      %v4745 = vpop.f32.mrf.mxu0
      %v4746 = vadd.f32 0.0, %v4745
      %v4747 = vpop.f32.mrf.mxu0
      %v4748 = vadd.f32 0.0, %v4747
      %4749 = vmatprep.mubr.f32.mxu0 0.0
      %4750 = vmatmul.mubr.f32.gmra.mxu0 %v2154
      %v4751 = vpop.f32.mrf.mxu0
      %v4752 = vadd.f32 0.0, %v4751
      %v4753 = vpop.f32.mrf.mxu0
      %v4754 = vadd.f32 0.0, %v4753
      %4755 = vmatprep.mubr.f32.mxu0 0.0
      %4756 = vmatmul.mubr.f32.gmra.mxu0 %v2157
      %v4757 = vpop.f32.mrf.mxu0
      %v4758 = vadd.f32 0.0, %v4757
      %v4759 = vpop.f32.mrf.mxu0
      %v4760 = vadd.f32 0.0, %v4759
      %4761 = vmatprep.mubr.f32.mxu0 0.0
      %4762 = vmatmul.mubr.f32.gmra.mxu0 %v2160
      %v4763 = vpop.f32.mrf.mxu0
      %v4764 = vadd.f32 0.0, %v4763
      %v4765 = vpop.f32.mrf.mxu0
      %v4766 = vadd.f32 0.0, %v4765
      %4767 = vmatprep.mubr.f32.mxu0 0.0
      %4768 = vmatmul.mubr.f32.gmra.mxu0 %v2163
      %v4769 = vpop.f32.mrf.mxu0
      %v4770 = vadd.f32 0.0, %v4769
      %v4771 = vpop.f32.mrf.mxu0
      %v4772 = vadd.f32 0.0, %v4771
      %4773 = vmatprep.mubr.f32.mxu0 0.0
      %4774 = vmatmul.mubr.f32.gmra.mxu0 %v2166
      %v4775 = vpop.f32.mrf.mxu0
      %v4776 = vadd.f32 0.0, %v4775
      %v4777 = vpop.f32.mrf.mxu0
      %v4778 = vadd.f32 0.0, %v4777
      %4779 = vmatprep.mubr.f32.mxu0 0.0
      %4780 = vmatmul.mubr.f32.gmra.mxu0 %v2169
      %v4781 = vpop.f32.mrf.mxu0
      %v4782 = vadd.f32 0.0, %v4781
      %v4783 = vpop.f32.mrf.mxu0
      %v4784 = vadd.f32 0.0, %v4783
      %4785 = vmatprep.mubr.f32.mxu0 0.0
      %4786 = vmatmul.mubr.f32.gmra.mxu0 %v2172
      %v4787 = vpop.f32.mrf.mxu0
      %v4788 = vadd.f32 0.0, %v4787
      %v4789 = vpop.f32.mrf.mxu0
      %v4790 = vadd.f32 0.0, %v4789
      %4791 = vmatprep.mubr.f32.mxu0 0.0
      %4792 = vmatmul.mubr.f32.gmra.mxu0 %v2175
      %v4793 = vpop.f32.mrf.mxu0
      %v4794 = vadd.f32 0.0, %v4793
      %v4795 = vpop.f32.mrf.mxu0
      %v4796 = vadd.f32 0.0, %v4795
      %4797 = vmatprep.mubr.f32.mxu0 0.0
      %4798 = vmatmul.mubr.f32.gmra.mxu0 %v2178
      %v4799 = vpop.f32.mrf.mxu0
      %v4800 = vadd.f32 0.0, %v4799
      %v4801 = vpop.f32.mrf.mxu0
      %v4802 = vadd.f32 0.0, %v4801
      %4803 = vmatprep.mubr.f32.mxu0 0.0
      %4804 = vmatmul.mubr.f32.gmra.mxu0 %v2181
      %v4805 = vpop.f32.mrf.mxu0
      %v4806 = vadd.f32 0.0, %v4805
      %v4807 = vpop.f32.mrf.mxu0
      %v4808 = vadd.f32 0.0, %v4807
      %4809 = vmatprep.mubr.f32.mxu0 0.0
      %4810 = vmatmul.mubr.f32.gmra.mxu0 %v2184
      %v4811 = vpop.f32.mrf.mxu0
      %v4812 = vadd.f32 0.0, %v4811
      %v4813 = vpop.f32.mrf.mxu0
      %v4814 = vadd.f32 0.0, %v4813
      %4815 = vmatprep.mubr.f32.mxu0 0.0
      %4816 = vmatmul.mubr.f32.gmra.mxu0 %v2187
      %v4817 = vpop.f32.mrf.mxu0
      %v4818 = vadd.f32 0.0, %v4817
      %v4819 = vpop.f32.mrf.mxu0
      %v4820 = vadd.f32 0.0, %v4819
      %4821 = vmatprep.mubr.f32.mxu0 0.0
      %4822 = vmatmul.mubr.f32.gmra.mxu0 %v2190
      %v4823 = vpop.f32.mrf.mxu0
      %v4824 = vadd.f32 0.0, %v4823
      %v4825 = vpop.f32.mrf.mxu0
      %v4826 = vadd.f32 0.0, %v4825
      %4827 = vmatprep.mubr.f32.mxu0 0.0
      %4828 = vmatmul.mubr.f32.gmra.mxu0 %v2193
      %v4829 = vpop.f32.mrf.mxu0
      %v4830 = vadd.f32 0.0, %v4829
      %v4831 = vpop.f32.mrf.mxu0
      %v4832 = vadd.f32 0.0, %v4831
      %4833 = vmatprep.mubr.f32.mxu0 0.0
      %4834 = vmatmul.mubr.f32.gmra.mxu0 %v2196
      %v4835 = vpop.f32.mrf.mxu0
      %v4836 = vadd.f32 0.0, %v4835
      %v4837 = vpop.f32.mrf.mxu0
      %v4838 = vadd.f32 0.0, %v4837
      %4839 = vmatprep.mubr.f32.mxu0 0.0
      %4840 = vmatmul.mubr.f32.gmra.mxu0 %v2199
      %v4841 = vpop.f32.mrf.mxu0
      %v4842 = vadd.f32 0.0, %v4841
      %v4843 = vpop.f32.mrf.mxu0
      %v4844 = vadd.f32 0.0, %v4843
      %4845 = vmatprep.mubr.f32.mxu0 0.0
      %4846 = vmatmul.mubr.f32.gmra.mxu0 %v2202
      %v4847 = vpop.f32.mrf.mxu0
      %v4848 = vadd.f32 0.0, %v4847
      %v4849 = vpop.f32.mrf.mxu0
      %v4850 = vadd.f32 0.0, %v4849
      %4851 = vdwg.mxu0
      %4852 = vmatprep.subr.mxu0 0.0
      %4853 = vmatpush1.msra.mxu0 0.0
      %4854 = vmatprep.subr.mxu0 0.0
      %4855 = vmatpush1.msra.mxu0 0.0
      %4856 = vmatprep.subr.mxu0 0.0
      %4857 = vmatpush1.msra.mxu0 0.0
      %4858 = vmatprep.subr.mxu0 0.0
      %4859 = vmatpush1.msra.mxu0 0.0
      %4860 = vmatprep.subr.mxu0 0.0
      %4861 = vmatpush1.msra.mxu0 0.0
      %4862 = vmatprep.subr.mxu0 0.0
      %4863 = vmatpush1.msra.mxu0 0.0
      %4864 = vmatprep.subr.mxu0 0.0
      %4865 = vmatpush1.msra.mxu0 0.0
      %4866 = vmatprep.subr.mxu0 0.0
      %4867 = vmatpush1.msra.mxu0 0.0
      %4868 = vmatprep.subr.mxu0 0.0
      %4869 = vmatpush1.msra.mxu0 0.0
      %4870 = vmatprep.subr.mxu0 0.0
      %4871 = vmatpush1.msra.mxu0 0.0
      %4872 = vmatprep.subr.mxu0 0.0
      %4873 = vmatpush1.msra.mxu0 0.0
      %4874 = vmatprep.subr.mxu0 0.0
      %4875 = vmatpush1.msra.mxu0 0.0
      %4876 = vmatprep.subr.mxu0 0.0
      %4877 = vmatpush1.msra.mxu0 0.0
      %4878 = vmatprep.subr.mxu0 0.0
      %4879 = vmatpush1.msra.mxu0 0.0
      %4880 = vmatprep.subr.mxu0 %v2275
      %4881 = vmatpush1.msra.mxu0 %v2272
      %4882 = vmatprep.subr.mxu0 %v1929
      %4883 = vmatpush1.msra.mxu0 %v1927
      %4884 = vmatprep.subr.mxu0 0.0
      %4885 = vmatpush2.msra.mxu0 0.0
      %4886 = vmatprep.subr.mxu0 0.0
      %4887 = vmatpush2.msra.mxu0 0.0
      %4888 = vmatprep.subr.mxu0 0.0
      %4889 = vmatpush2.msra.mxu0 0.0
      %4890 = vmatprep.subr.mxu0 0.0
      %4891 = vmatpush2.msra.mxu0 0.0
      %4892 = vmatprep.subr.mxu0 0.0
      %4893 = vmatpush2.msra.mxu0 0.0
      %4894 = vmatprep.subr.mxu0 0.0
      %4895 = vmatpush2.msra.mxu0 0.0
      %4896 = vmatprep.subr.mxu0 0.0
      %4897 = vmatpush2.msra.mxu0 0.0
      %4898 = vmatprep.subr.mxu0 0.0
      %4899 = vmatpush2.msra.mxu0 0.0
      %4900 = vmatprep.subr.mxu0 0.0
      %4901 = vmatpush2.msra.mxu0 0.0
      %4902 = vmatprep.subr.mxu0 0.0
      %4903 = vmatpush2.msra.mxu0 0.0
      %4904 = vmatprep.subr.mxu0 0.0
      %4905 = vmatpush2.msra.mxu0 0.0
      %4906 = vmatprep.subr.mxu0 0.0
      %4907 = vmatpush2.msra.mxu0 0.0
      %4908 = vmatprep.subr.mxu0 0.0
      %4909 = vmatpush2.msra.mxu0 0.0
      %4910 = vmatprep.subr.mxu0 0.0
      %4911 = vmatpush2.msra.mxu0 0.0
      %4912 = vmatprep.subr.mxu0 0.0
      %4913 = vmatpush2.msra.mxu0 0.0
      %4914 = vmatprep.subr.mxu0 0.0
      %4915 = vmatpush2.msra.mxu0 0.0
      %4916 = vmatprep.mubr.f32.mxu0 0.0
      %4917 = vmatmul.mubr.f32.gmra.mxu0 %v2121
      %v4918 = vpop.f32.mrf.mxu0
      %v4919 = vadd.f32 0.0, %v4918
      %v4920 = vpop.f32.mrf.mxu0
      %v4921 = vadd.f32 0.0, %v4920
      %4922 = vmatprep.mubr.f32.mxu0 0.0
      %4923 = vmatmul.mubr.f32.gmra.mxu0 %v2124
      %v4924 = vpop.f32.mrf.mxu0
      %v4925 = vadd.f32 0.0, %v4924
      %v4926 = vpop.f32.mrf.mxu0
      %v4927 = vadd.f32 0.0, %v4926
      %4928 = vmatprep.mubr.f32.mxu0 0.0
      %4929 = vmatmul.mubr.f32.gmra.mxu0 %v2127
      %v4930 = vpop.f32.mrf.mxu0
      %v4931 = vadd.f32 0.0, %v4930
      %v4932 = vpop.f32.mrf.mxu0
      %v4933 = vadd.f32 0.0, %v4932
      %4934 = vmatprep.mubr.f32.mxu0 0.0
      %4935 = vmatmul.mubr.f32.gmra.mxu0 %v2130
      %v4936 = vpop.f32.mrf.mxu0
      %v4937 = vadd.f32 0.0, %v4936
      %v4938 = vpop.f32.mrf.mxu0
      %v4939 = vadd.f32 0.0, %v4938
      %4940 = vmatprep.mubr.f32.mxu0 0.0
      %4941 = vmatmul.mubr.f32.gmra.mxu0 %v2133
      %v4942 = vpop.f32.mrf.mxu0
      %v4943 = vadd.f32 0.0, %v4942
      %v4944 = vpop.f32.mrf.mxu0
      %v4945 = vadd.f32 0.0, %v4944
      %4946 = vmatprep.mubr.f32.mxu0 0.0
      %4947 = vmatmul.mubr.f32.gmra.mxu0 %v2136
      %v4948 = vpop.f32.mrf.mxu0
      %v4949 = vadd.f32 0.0, %v4948
      %v4950 = vpop.f32.mrf.mxu0
      %v4951 = vadd.f32 0.0, %v4950
      %4952 = vmatprep.mubr.f32.mxu0 0.0
      %4953 = vmatmul.mubr.f32.gmra.mxu0 %v2139
      %v4954 = vpop.f32.mrf.mxu0
      %v4955 = vadd.f32 0.0, %v4954
      %v4956 = vpop.f32.mrf.mxu0
      %v4957 = vadd.f32 0.0, %v4956
      %4958 = vmatprep.mubr.f32.mxu0 0.0
      %4959 = vmatmul.mubr.f32.gmra.mxu0 %v2142
      %v4960 = vpop.f32.mrf.mxu0
      %v4961 = vadd.f32 0.0, %v4960
      %v4962 = vpop.f32.mrf.mxu0
      %v4963 = vadd.f32 0.0, %v4962
      %4964 = vmatprep.mubr.f32.mxu0 0.0
      %4965 = vmatmul.mubr.f32.gmra.mxu0 %v2145
      %v4966 = vpop.f32.mrf.mxu0
      %v4967 = vadd.f32 0.0, %v4966
      %v4968 = vpop.f32.mrf.mxu0
      %v4969 = vadd.f32 0.0, %v4968
      %4970 = vmatprep.mubr.f32.mxu0 0.0
      %4971 = vmatmul.mubr.f32.gmra.mxu0 %v2148
      %v4972 = vpop.f32.mrf.mxu0
      %v4973 = vadd.f32 0.0, %v4972
      %v4974 = vpop.f32.mrf.mxu0
      %v4975 = vadd.f32 0.0, %v4974
      %4976 = vmatprep.mubr.f32.mxu0 0.0
      %4977 = vmatmul.mubr.f32.gmra.mxu0 %v2151
      %v4978 = vpop.f32.mrf.mxu0
      %v4979 = vadd.f32 0.0, %v4978
      %v4980 = vpop.f32.mrf.mxu0
      %v4981 = vadd.f32 0.0, %v4980
      %4982 = vmatprep.mubr.f32.mxu0 0.0
      %4983 = vmatmul.mubr.f32.gmra.mxu0 %v2154
      %v4984 = vpop.f32.mrf.mxu0
      %v4985 = vadd.f32 0.0, %v4984
      %v4986 = vpop.f32.mrf.mxu0
      %v4987 = vadd.f32 0.0, %v4986
      %4988 = vmatprep.mubr.f32.mxu0 0.0
      %4989 = vmatmul.mubr.f32.gmra.mxu0 %v2157
      %v4990 = vpop.f32.mrf.mxu0
      %v4991 = vadd.f32 0.0, %v4990
      %v4992 = vpop.f32.mrf.mxu0
      %v4993 = vadd.f32 0.0, %v4992
      %4994 = vmatprep.mubr.f32.mxu0 0.0
      %4995 = vmatmul.mubr.f32.gmra.mxu0 %v2160
      %v4996 = vpop.f32.mrf.mxu0
      %v4997 = vadd.f32 0.0, %v4996
      %v4998 = vpop.f32.mrf.mxu0
      %v4999 = vadd.f32 0.0, %v4998
      %5000 = vmatprep.mubr.f32.mxu0 0.0
      %5001 = vmatmul.mubr.f32.gmra.mxu0 %v2163
      %v5002 = vpop.f32.mrf.mxu0
      %v5003 = vadd.f32 0.0, %v5002
      %v5004 = vpop.f32.mrf.mxu0
      %v5005 = vadd.f32 0.0, %v5004
      %5006 = vmatprep.mubr.f32.mxu0 0.0
      %5007 = vmatmul.mubr.f32.gmra.mxu0 %v2166
      %v5008 = vpop.f32.mrf.mxu0
      %v5009 = vadd.f32 0.0, %v5008
      %v5010 = vpop.f32.mrf.mxu0
      %v5011 = vadd.f32 0.0, %v5010
      %5012 = vmatprep.mubr.f32.mxu0 0.0
      %5013 = vmatmul.mubr.f32.gmra.mxu0 %v2169
      %v5014 = vpop.f32.mrf.mxu0
      %v5015 = vadd.f32 0.0, %v5014
      %v5016 = vpop.f32.mrf.mxu0
      %v5017 = vadd.f32 0.0, %v5016
      %5018 = vmatprep.mubr.f32.mxu0 0.0
      %5019 = vmatmul.mubr.f32.gmra.mxu0 %v2172
      %v5020 = vpop.f32.mrf.mxu0
      %v5021 = vadd.f32 0.0, %v5020
      %v5022 = vpop.f32.mrf.mxu0
      %v5023 = vadd.f32 0.0, %v5022
      %5024 = vmatprep.mubr.f32.mxu0 0.0
      %5025 = vmatmul.mubr.f32.gmra.mxu0 %v2175
      %v5026 = vpop.f32.mrf.mxu0
      %v5027 = vadd.f32 0.0, %v5026
      %v5028 = vpop.f32.mrf.mxu0
      %v5029 = vadd.f32 0.0, %v5028
      %5030 = vmatprep.mubr.f32.mxu0 0.0
      %5031 = vmatmul.mubr.f32.gmra.mxu0 %v2178
      %v5032 = vpop.f32.mrf.mxu0
      %v5033 = vadd.f32 0.0, %v5032
      %v5034 = vpop.f32.mrf.mxu0
      %v5035 = vadd.f32 0.0, %v5034
      %5036 = vmatprep.mubr.f32.mxu0 0.0
      %5037 = vmatmul.mubr.f32.gmra.mxu0 %v2181
      %v5038 = vpop.f32.mrf.mxu0
      %v5039 = vadd.f32 0.0, %v5038
      %v5040 = vpop.f32.mrf.mxu0
      %v5041 = vadd.f32 0.0, %v5040
      %5042 = vmatprep.mubr.f32.mxu0 0.0
      %5043 = vmatmul.mubr.f32.gmra.mxu0 %v2184
      %v5044 = vpop.f32.mrf.mxu0
      %v5045 = vadd.f32 0.0, %v5044
      %v5046 = vpop.f32.mrf.mxu0
      %v5047 = vadd.f32 0.0, %v5046
      %5048 = vmatprep.mubr.f32.mxu0 0.0
      %5049 = vmatmul.mubr.f32.gmra.mxu0 %v2187
      %v5050 = vpop.f32.mrf.mxu0
      %v5051 = vadd.f32 0.0, %v5050
      %v5052 = vpop.f32.mrf.mxu0
      %v5053 = vadd.f32 0.0, %v5052
      %5054 = vmatprep.mubr.f32.mxu0 0.0
      %5055 = vmatmul.mubr.f32.gmra.mxu0 %v2190
      %v5056 = vpop.f32.mrf.mxu0
      %v5057 = vadd.f32 0.0, %v5056
      %v5058 = vpop.f32.mrf.mxu0
      %v5059 = vadd.f32 0.0, %v5058
      %5060 = vmatprep.mubr.f32.mxu0 0.0
      %5061 = vmatmul.mubr.f32.gmra.mxu0 %v2193
      %v5062 = vpop.f32.mrf.mxu0
      %v5063 = vadd.f32 0.0, %v5062
      %v5064 = vpop.f32.mrf.mxu0
      %v5065 = vadd.f32 0.0, %v5064
      %5066 = vmatprep.mubr.f32.mxu0 0.0
      %5067 = vmatmul.mubr.f32.gmra.mxu0 %v2196
      %v5068 = vpop.f32.mrf.mxu0
      %v5069 = vadd.f32 0.0, %v5068
      %v5070 = vpop.f32.mrf.mxu0
      %v5071 = vadd.f32 0.0, %v5070
      %5072 = vmatprep.mubr.f32.mxu0 0.0
      %5073 = vmatmul.mubr.f32.gmra.mxu0 %v2199
      %v5074 = vpop.f32.mrf.mxu0
      %v5075 = vadd.f32 0.0, %v5074
      %v5076 = vpop.f32.mrf.mxu0
      %v5077 = vadd.f32 0.0, %v5076
      %5078 = vmatprep.mubr.f32.mxu0 0.0
      %5079 = vmatmul.mubr.f32.gmra.mxu0 %v2202
      %v5080 = vpop.f32.mrf.mxu0
      %v5081 = vadd.f32 0.0, %v5080
      %v5082 = vpop.f32.mrf.mxu0
      %v5083 = vadd.f32 0.0, %v5082
      %5084 = vdwg.mxu0
      %5085 = vmatprep.subr.mxu0 0.0
      %5086 = vmatpush1.msra.mxu0 0.0
      %5087 = vmatprep.subr.mxu0 0.0
      %5088 = vmatpush1.msra.mxu0 0.0
      %5089 = vmatprep.subr.mxu0 0.0
      %5090 = vmatpush1.msra.mxu0 0.0
      %5091 = vmatprep.subr.mxu0 0.0
      %5092 = vmatpush1.msra.mxu0 0.0
      %5093 = vmatprep.subr.mxu0 0.0
      %5094 = vmatpush1.msra.mxu0 0.0
      %5095 = vmatprep.subr.mxu0 0.0
      %5096 = vmatpush1.msra.mxu0 0.0
      %5097 = vmatprep.subr.mxu0 0.0
      %5098 = vmatpush1.msra.mxu0 0.0
      %5099 = vmatprep.subr.mxu0 0.0
      %5100 = vmatpush1.msra.mxu0 0.0
      %5101 = vmatprep.subr.mxu0 0.0
      %5102 = vmatpush1.msra.mxu0 0.0
      %5103 = vmatprep.subr.mxu0 0.0
      %5104 = vmatpush1.msra.mxu0 0.0
      %5105 = vmatprep.subr.mxu0 0.0
      %5106 = vmatpush1.msra.mxu0 0.0
      %5107 = vmatprep.subr.mxu0 0.0
      %5108 = vmatpush1.msra.mxu0 0.0
      %5109 = vmatprep.subr.mxu0 0.0
      %5110 = vmatpush1.msra.mxu0 0.0
      %5111 = vmatprep.subr.mxu0 0.0
      %5112 = vmatpush1.msra.mxu0 0.0
      %5113 = vmatprep.subr.mxu0 %v2281
      %5114 = vmatpush1.msra.mxu0 %v2278
      %5115 = vmatprep.subr.mxu0 %v2006
      %5116 = vmatpush1.msra.mxu0 %v2004
      %5117 = vmatprep.subr.mxu0 0.0
      %5118 = vmatpush2.msra.mxu0 0.0
      %5119 = vmatprep.subr.mxu0 0.0
      %5120 = vmatpush2.msra.mxu0 0.0
      %5121 = vmatprep.subr.mxu0 0.0
      %5122 = vmatpush2.msra.mxu0 0.0
      %5123 = vmatprep.subr.mxu0 0.0
      %5124 = vmatpush2.msra.mxu0 0.0
      %5125 = vmatprep.subr.mxu0 0.0
      %5126 = vmatpush2.msra.mxu0 0.0
      %5127 = vmatprep.subr.mxu0 0.0
      %5128 = vmatpush2.msra.mxu0 0.0
      %5129 = vmatprep.subr.mxu0 0.0
      %5130 = vmatpush2.msra.mxu0 0.0
      %5131 = vmatprep.subr.mxu0 0.0
      %5132 = vmatpush2.msra.mxu0 0.0
      %5133 = vmatprep.subr.mxu0 0.0
      %5134 = vmatpush2.msra.mxu0 0.0
      %5135 = vmatprep.subr.mxu0 0.0
      %5136 = vmatpush2.msra.mxu0 0.0
      %5137 = vmatprep.subr.mxu0 0.0
      %5138 = vmatpush2.msra.mxu0 0.0
      %5139 = vmatprep.subr.mxu0 0.0
      %5140 = vmatpush2.msra.mxu0 0.0
      %5141 = vmatprep.subr.mxu0 0.0
      %5142 = vmatpush2.msra.mxu0 0.0
      %5143 = vmatprep.subr.mxu0 0.0
      %5144 = vmatpush2.msra.mxu0 0.0
      %5145 = vmatprep.subr.mxu0 0.0
      %5146 = vmatpush2.msra.mxu0 0.0
      %5147 = vmatprep.subr.mxu0 0.0
      %5148 = vmatpush2.msra.mxu0 0.0
      %5149 = vmatprep.mubr.f32.mxu0 0.0
      %5150 = vmatmul.mubr.f32.gmra.mxu0 %v2121
      %v5151 = vpop.f32.mrf.mxu0
      %v5152 = vadd.f32 0.0, %v5151
      %v5153 = vpop.f32.mrf.mxu0
      %v5154 = vadd.f32 0.0, %v5153
      %5155 = vmatprep.mubr.f32.mxu0 0.0
      %5156 = vmatmul.mubr.f32.gmra.mxu0 %v2124
      %v5157 = vpop.f32.mrf.mxu0
      %v5158 = vadd.f32 0.0, %v5157
      %v5159 = vpop.f32.mrf.mxu0
      %v5160 = vadd.f32 0.0, %v5159
      %5161 = vmatprep.mubr.f32.mxu0 0.0
      %5162 = vmatmul.mubr.f32.gmra.mxu0 %v2127
      %v5163 = vpop.f32.mrf.mxu0
      %v5164 = vadd.f32 0.0, %v5163
      %v5165 = vpop.f32.mrf.mxu0
      %v5166 = vadd.f32 0.0, %v5165
      %5167 = vmatprep.mubr.f32.mxu0 0.0
      %5168 = vmatmul.mubr.f32.gmra.mxu0 %v2130
      %v5169 = vpop.f32.mrf.mxu0
      %v5170 = vadd.f32 0.0, %v5169
      %v5171 = vpop.f32.mrf.mxu0
      %v5172 = vadd.f32 0.0, %v5171
      %5173 = vmatprep.mubr.f32.mxu0 0.0
      %5174 = vmatmul.mubr.f32.gmra.mxu0 %v2133
      %v5175 = vpop.f32.mrf.mxu0
      %v5176 = vadd.f32 0.0, %v5175
      %v5177 = vpop.f32.mrf.mxu0
      %v5178 = vadd.f32 0.0, %v5177
      %5179 = vmatprep.mubr.f32.mxu0 0.0
      %5180 = vmatmul.mubr.f32.gmra.mxu0 %v2136
      %v5181 = vpop.f32.mrf.mxu0
      %v5182 = vadd.f32 0.0, %v5181
      %v5183 = vpop.f32.mrf.mxu0
      %v5184 = vadd.f32 0.0, %v5183
      %5185 = vmatprep.mubr.f32.mxu0 0.0
      %5186 = vmatmul.mubr.f32.gmra.mxu0 %v2139
      %v5187 = vpop.f32.mrf.mxu0
      %v5188 = vadd.f32 0.0, %v5187
      %v5189 = vpop.f32.mrf.mxu0
      %v5190 = vadd.f32 0.0, %v5189
      %5191 = vmatprep.mubr.f32.mxu0 0.0
      %5192 = vmatmul.mubr.f32.gmra.mxu0 %v2142
      %v5193 = vpop.f32.mrf.mxu0
      %v5194 = vadd.f32 0.0, %v5193
      %v5195 = vpop.f32.mrf.mxu0
      %v5196 = vadd.f32 0.0, %v5195
      %5197 = vmatprep.mubr.f32.mxu0 0.0
      %5198 = vmatmul.mubr.f32.gmra.mxu0 %v2145
      %v5199 = vpop.f32.mrf.mxu0
      %v5200 = vadd.f32 0.0, %v5199
      %v5201 = vpop.f32.mrf.mxu0
      %v5202 = vadd.f32 0.0, %v5201
      %5203 = vmatprep.mubr.f32.mxu0 0.0
      %5204 = vmatmul.mubr.f32.gmra.mxu0 %v2148
      %v5205 = vpop.f32.mrf.mxu0
      %v5206 = vadd.f32 0.0, %v5205
      %v5207 = vpop.f32.mrf.mxu0
      %v5208 = vadd.f32 0.0, %v5207
      %5209 = vmatprep.mubr.f32.mxu0 0.0
      %5210 = vmatmul.mubr.f32.gmra.mxu0 %v2151
      %v5211 = vpop.f32.mrf.mxu0
      %v5212 = vadd.f32 0.0, %v5211
      %v5213 = vpop.f32.mrf.mxu0
      %v5214 = vadd.f32 0.0, %v5213
      %5215 = vmatprep.mubr.f32.mxu0 0.0
      %5216 = vmatmul.mubr.f32.gmra.mxu0 %v2154
      %v5217 = vpop.f32.mrf.mxu0
      %v5218 = vadd.f32 0.0, %v5217
      %v5219 = vpop.f32.mrf.mxu0
      %v5220 = vadd.f32 0.0, %v5219
      %5221 = vmatprep.mubr.f32.mxu0 0.0
      %5222 = vmatmul.mubr.f32.gmra.mxu0 %v2157
      %v5223 = vpop.f32.mrf.mxu0
      %v5224 = vadd.f32 0.0, %v5223
      %v5225 = vpop.f32.mrf.mxu0
      %v5226 = vadd.f32 0.0, %v5225
      %5227 = vmatprep.mubr.f32.mxu0 0.0
      %5228 = vmatmul.mubr.f32.gmra.mxu0 %v2160
      %v5229 = vpop.f32.mrf.mxu0
      %v5230 = vadd.f32 0.0, %v5229
      %v5231 = vpop.f32.mrf.mxu0
      %v5232 = vadd.f32 0.0, %v5231
      %5233 = vmatprep.mubr.f32.mxu0 0.0
      %5234 = vmatmul.mubr.f32.gmra.mxu0 %v2163
      %v5235 = vpop.f32.mrf.mxu0
      %v5236 = vadd.f32 0.0, %v5235
      %v5237 = vpop.f32.mrf.mxu0
      %v5238 = vadd.f32 0.0, %v5237
      %5239 = vmatprep.mubr.f32.mxu0 0.0
      %5240 = vmatmul.mubr.f32.gmra.mxu0 %v2166
      %v5241 = vpop.f32.mrf.mxu0
      %v5242 = vadd.f32 0.0, %v5241
      %v5243 = vpop.f32.mrf.mxu0
      %v5244 = vadd.f32 0.0, %v5243
      %5245 = vmatprep.mubr.f32.mxu0 0.0
      %5246 = vmatmul.mubr.f32.gmra.mxu0 %v2169
      %v5247 = vpop.f32.mrf.mxu0
      %v5248 = vadd.f32 0.0, %v5247
      %v5249 = vpop.f32.mrf.mxu0
      %v5250 = vadd.f32 0.0, %v5249
      %5251 = vmatprep.mubr.f32.mxu0 0.0
      %5252 = vmatmul.mubr.f32.gmra.mxu0 %v2172
      %v5253 = vpop.f32.mrf.mxu0
      %v5254 = vadd.f32 0.0, %v5253
      %v5255 = vpop.f32.mrf.mxu0
      %v5256 = vadd.f32 0.0, %v5255
      %5257 = vmatprep.mubr.f32.mxu0 0.0
      %5258 = vmatmul.mubr.f32.gmra.mxu0 %v2175
      %v5259 = vpop.f32.mrf.mxu0
      %v5260 = vadd.f32 0.0, %v5259
      %v5261 = vpop.f32.mrf.mxu0
      %v5262 = vadd.f32 0.0, %v5261
      %5263 = vmatprep.mubr.f32.mxu0 0.0
      %5264 = vmatmul.mubr.f32.gmra.mxu0 %v2178
      %v5265 = vpop.f32.mrf.mxu0
      %v5266 = vadd.f32 0.0, %v5265
      %v5267 = vpop.f32.mrf.mxu0
      %v5268 = vadd.f32 0.0, %v5267
      %5269 = vmatprep.mubr.f32.mxu0 0.0
      %5270 = vmatmul.mubr.f32.gmra.mxu0 %v2181
      %v5271 = vpop.f32.mrf.mxu0
      %v5272 = vadd.f32 0.0, %v5271
      %v5273 = vpop.f32.mrf.mxu0
      %v5274 = vadd.f32 0.0, %v5273
      %5275 = vmatprep.mubr.f32.mxu0 0.0
      %5276 = vmatmul.mubr.f32.gmra.mxu0 %v2184
      %v5277 = vpop.f32.mrf.mxu0
      %v5278 = vadd.f32 0.0, %v5277
      %v5279 = vpop.f32.mrf.mxu0
      %v5280 = vadd.f32 0.0, %v5279
      %5281 = vmatprep.mubr.f32.mxu0 0.0
      %5282 = vmatmul.mubr.f32.gmra.mxu0 %v2187
      %v5283 = vpop.f32.mrf.mxu0
      %v5284 = vadd.f32 0.0, %v5283
      %v5285 = vpop.f32.mrf.mxu0
      %v5286 = vadd.f32 0.0, %v5285
      %5287 = vmatprep.mubr.f32.mxu0 0.0
      %5288 = vmatmul.mubr.f32.gmra.mxu0 %v2190
      %v5289 = vpop.f32.mrf.mxu0
      %v5290 = vadd.f32 0.0, %v5289
      %v5291 = vpop.f32.mrf.mxu0
      %v5292 = vadd.f32 0.0, %v5291
      %5293 = vmatprep.mubr.f32.mxu0 0.0
      %5294 = vmatmul.mubr.f32.gmra.mxu0 %v2193
      %v5295 = vpop.f32.mrf.mxu0
      %v5296 = vadd.f32 0.0, %v5295
      %v5297 = vpop.f32.mrf.mxu0
      %v5298 = vadd.f32 0.0, %v5297
      %5299 = vmatprep.mubr.f32.mxu0 0.0
      %5300 = vmatmul.mubr.f32.gmra.mxu0 %v2196
      %v5301 = vpop.f32.mrf.mxu0
      %v5302 = vadd.f32 0.0, %v5301
      %v5303 = vpop.f32.mrf.mxu0
      %v5304 = vadd.f32 0.0, %v5303
      %5305 = vmatprep.mubr.f32.mxu0 0.0
      %5306 = vmatmul.mubr.f32.gmra.mxu0 %v2199
      %v5307 = vpop.f32.mrf.mxu0
      %v5308 = vadd.f32 0.0, %v5307
      %v5309 = vpop.f32.mrf.mxu0
      %v5310 = vadd.f32 0.0, %v5309
      %5311 = vmatprep.mubr.f32.mxu0 0.0
      %5312 = vmatmul.mubr.f32.gmra.mxu0 %v2202
      %v5313 = vpop.f32.mrf.mxu0
      %v5314 = vadd.f32 0.0, %v5313
      %v5315 = vpop.f32.mrf.mxu0
      %v5316 = vadd.f32 0.0, %v5315
      %5317 = vdwg.mxu0
      %5318 = vmatprep.subr.mxu0 0.0
      %5319 = vmatpush1.msra.mxu0 0.0
      %5320 = vmatprep.subr.mxu0 0.0
      %5321 = vmatpush1.msra.mxu0 0.0
      %5322 = vmatprep.subr.mxu0 0.0
      %5323 = vmatpush1.msra.mxu0 0.0
      %5324 = vmatprep.subr.mxu0 0.0
      %5325 = vmatpush1.msra.mxu0 0.0
      %5326 = vmatprep.subr.mxu0 0.0
      %5327 = vmatpush1.msra.mxu0 0.0
      %5328 = vmatprep.subr.mxu0 0.0
      %5329 = vmatpush1.msra.mxu0 0.0
      %5330 = vmatprep.subr.mxu0 0.0
      %5331 = vmatpush1.msra.mxu0 0.0
      %5332 = vmatprep.subr.mxu0 0.0
      %5333 = vmatpush1.msra.mxu0 0.0
      %5334 = vmatprep.subr.mxu0 0.0
      %5335 = vmatpush1.msra.mxu0 0.0
      %5336 = vmatprep.subr.mxu0 0.0
      %5337 = vmatpush1.msra.mxu0 0.0
      %5338 = vmatprep.subr.mxu0 0.0
      %5339 = vmatpush1.msra.mxu0 0.0
      %5340 = vmatprep.subr.mxu0 0.0
      %5341 = vmatpush1.msra.mxu0 0.0
      %5342 = vmatprep.subr.mxu0 0.0
      %5343 = vmatpush1.msra.mxu0 0.0
      %5344 = vmatprep.subr.mxu0 0.0
      %5345 = vmatpush1.msra.mxu0 0.0
      %5346 = vmatprep.subr.mxu0 %v2287
      %5347 = vmatpush1.msra.mxu0 %v2284
      %5348 = vmatprep.subr.mxu0 %v2083
      %5349 = vmatpush1.msra.mxu0 %v2081
      %5350 = vmatprep.subr.mxu0 0.0
      %5351 = vmatpush2.msra.mxu0 0.0
      %5352 = vmatprep.subr.mxu0 0.0
      %5353 = vmatpush2.msra.mxu0 0.0
      %5354 = vmatprep.subr.mxu0 0.0
      %5355 = vmatpush2.msra.mxu0 0.0
      %5356 = vmatprep.subr.mxu0 0.0
      %5357 = vmatpush2.msra.mxu0 0.0
      %5358 = vmatprep.subr.mxu0 0.0
      %5359 = vmatpush2.msra.mxu0 0.0
      %5360 = vmatprep.subr.mxu0 0.0
      %5361 = vmatpush2.msra.mxu0 0.0
      %5362 = vmatprep.subr.mxu0 0.0
      %5363 = vmatpush2.msra.mxu0 0.0
      %5364 = vmatprep.subr.mxu0 0.0
      %5365 = vmatpush2.msra.mxu0 0.0
      %5366 = vmatprep.subr.mxu0 0.0
      %5367 = vmatpush2.msra.mxu0 0.0
      %5368 = vmatprep.subr.mxu0 0.0
      %5369 = vmatpush2.msra.mxu0 0.0
      %5370 = vmatprep.subr.mxu0 0.0
      %5371 = vmatpush2.msra.mxu0 0.0
      %5372 = vmatprep.subr.mxu0 0.0
      %5373 = vmatpush2.msra.mxu0 0.0
      %5374 = vmatprep.subr.mxu0 0.0
      %5375 = vmatpush2.msra.mxu0 0.0
      %5376 = vmatprep.subr.mxu0 0.0
      %5377 = vmatpush2.msra.mxu0 0.0
      %5378 = vmatprep.subr.mxu0 0.0
      %5379 = vmatpush2.msra.mxu0 0.0
      %5380 = vmatprep.subr.mxu0 0.0
      %5381 = vmatpush2.msra.mxu0 0.0
      %5382 = vmatprep.mubr.f32.mxu0 0.0
      %5383 = vmatmul.mubr.f32.gmra.mxu0 %v2121
      %v5384 = vpop.f32.mrf.mxu0
      %v5385 = vadd.f32 0.0, %v5384
      %v5386 = vpop.f32.mrf.mxu0
      %v5387 = vadd.f32 0.0, %v5386
      %5388 = vmatprep.mubr.f32.mxu0 0.0
      %5389 = vmatmul.mubr.f32.gmra.mxu0 %v2124
      %v5390 = vpop.f32.mrf.mxu0
      %v5391 = vadd.f32 0.0, %v5390
      %v5392 = vpop.f32.mrf.mxu0
      %v5393 = vadd.f32 0.0, %v5392
      %5394 = vmatprep.mubr.f32.mxu0 0.0
      %5395 = vmatmul.mubr.f32.gmra.mxu0 %v2127
      %v5396 = vpop.f32.mrf.mxu0
      %v5397 = vadd.f32 0.0, %v5396
      %v5398 = vpop.f32.mrf.mxu0
      %v5399 = vadd.f32 0.0, %v5398
      %5400 = vmatprep.mubr.f32.mxu0 0.0
      %5401 = vmatmul.mubr.f32.gmra.mxu0 %v2130
      %v5402 = vpop.f32.mrf.mxu0
      %v5403 = vadd.f32 0.0, %v5402
      %v5404 = vpop.f32.mrf.mxu0
      %v5405 = vadd.f32 0.0, %v5404
      %5406 = vmatprep.mubr.f32.mxu0 0.0
      %5407 = vmatmul.mubr.f32.gmra.mxu0 %v2133
      %v5408 = vpop.f32.mrf.mxu0
      %v5409 = vadd.f32 0.0, %v5408
      %v5410 = vpop.f32.mrf.mxu0
      %v5411 = vadd.f32 0.0, %v5410
      %5412 = vmatprep.mubr.f32.mxu0 0.0
      %5413 = vmatmul.mubr.f32.gmra.mxu0 %v2136
      %v5414 = vpop.f32.mrf.mxu0
      %v5415 = vadd.f32 0.0, %v5414
      %v5416 = vpop.f32.mrf.mxu0
      %v5417 = vadd.f32 0.0, %v5416
      %5418 = vmatprep.mubr.f32.mxu0 0.0
      %5419 = vmatmul.mubr.f32.gmra.mxu0 %v2139
      %v5420 = vpop.f32.mrf.mxu0
      %v5421 = vadd.f32 0.0, %v5420
      %v5422 = vpop.f32.mrf.mxu0
      %v5423 = vadd.f32 0.0, %v5422
      %5424 = vmatprep.mubr.f32.mxu0 0.0
      %5425 = vmatmul.mubr.f32.gmra.mxu0 %v2142
      %v5426 = vpop.f32.mrf.mxu0
      %v5427 = vadd.f32 0.0, %v5426
      %v5428 = vpop.f32.mrf.mxu0
      %v5429 = vadd.f32 0.0, %v5428
      %5430 = vmatprep.mubr.f32.mxu0 0.0
      %5431 = vmatmul.mubr.f32.gmra.mxu0 %v2145
      %v5432 = vpop.f32.mrf.mxu0
      %v5433 = vadd.f32 0.0, %v5432
      %v5434 = vpop.f32.mrf.mxu0
      %v5435 = vadd.f32 0.0, %v5434
      %5436 = vmatprep.mubr.f32.mxu0 0.0
      %5437 = vmatmul.mubr.f32.gmra.mxu0 %v2148
      %v5438 = vpop.f32.mrf.mxu0
      %v5439 = vadd.f32 0.0, %v5438
      %v5440 = vpop.f32.mrf.mxu0
      %v5441 = vadd.f32 0.0, %v5440
      %5442 = vmatprep.mubr.f32.mxu0 0.0
      %5443 = vmatmul.mubr.f32.gmra.mxu0 %v2151
      %v5444 = vpop.f32.mrf.mxu0
      %v5445 = vadd.f32 0.0, %v5444
      %v5446 = vpop.f32.mrf.mxu0
      %v5447 = vadd.f32 0.0, %v5446
      %5448 = vmatprep.mubr.f32.mxu0 0.0
      %5449 = vmatmul.mubr.f32.gmra.mxu0 %v2154
      %v5450 = vpop.f32.mrf.mxu0
      %v5451 = vadd.f32 0.0, %v5450
      %v5452 = vpop.f32.mrf.mxu0
      %v5453 = vadd.f32 0.0, %v5452
      %5454 = vmatprep.mubr.f32.mxu0 0.0
      %5455 = vmatmul.mubr.f32.gmra.mxu0 %v2157
      %v5456 = vpop.f32.mrf.mxu0
      %v5457 = vadd.f32 0.0, %v5456
      %v5458 = vpop.f32.mrf.mxu0
      %v5459 = vadd.f32 0.0, %v5458
      %5460 = vmatprep.mubr.f32.mxu0 0.0
      %5461 = vmatmul.mubr.f32.gmra.mxu0 %v2160
      %v5462 = vpop.f32.mrf.mxu0
      %v5463 = vadd.f32 0.0, %v5462
      %v5464 = vpop.f32.mrf.mxu0
      %v5465 = vadd.f32 0.0, %v5464
      %5466 = vmatprep.mubr.f32.mxu0 0.0
      %5467 = vmatmul.mubr.f32.gmra.mxu0 %v2163
      %v5468 = vpop.f32.mrf.mxu0
      %v5469 = vadd.f32 0.0, %v5468
      %v5470 = vpop.f32.mrf.mxu0
      %v5471 = vadd.f32 0.0, %v5470
      %5472 = vmatprep.mubr.f32.mxu0 0.0
      %5473 = vmatmul.mubr.f32.gmra.mxu0 %v2166
      %v5474 = vpop.f32.mrf.mxu0
      %v5475 = vadd.f32 0.0, %v5474
      %v5476 = vpop.f32.mrf.mxu0
      %v5477 = vadd.f32 0.0, %v5476
      %5478 = vmatprep.mubr.f32.mxu0 0.0
      %5479 = vmatmul.mubr.f32.gmra.mxu0 %v2169
      %v5480 = vpop.f32.mrf.mxu0
      %v5481 = vadd.f32 0.0, %v5480
      %v5482 = vpop.f32.mrf.mxu0
      %v5483 = vadd.f32 0.0, %v5482
      %5484 = vmatprep.mubr.f32.mxu0 0.0
      %5485 = vmatmul.mubr.f32.gmra.mxu0 %v2172
      %v5486 = vpop.f32.mrf.mxu0
      %v5487 = vadd.f32 0.0, %v5486
      %v5488 = vpop.f32.mrf.mxu0
      %v5489 = vadd.f32 0.0, %v5488
      %5490 = vmatprep.mubr.f32.mxu0 0.0
      %5491 = vmatmul.mubr.f32.gmra.mxu0 %v2175
      %v5492 = vpop.f32.mrf.mxu0
      %v5493 = vadd.f32 0.0, %v5492
      %v5494 = vpop.f32.mrf.mxu0
      %v5495 = vadd.f32 0.0, %v5494
      %5496 = vmatprep.mubr.f32.mxu0 0.0
      %5497 = vmatmul.mubr.f32.gmra.mxu0 %v2178
      %v5498 = vpop.f32.mrf.mxu0
      %v5499 = vadd.f32 0.0, %v5498
      %v5500 = vpop.f32.mrf.mxu0
      %v5501 = vadd.f32 0.0, %v5500
      %5502 = vmatprep.mubr.f32.mxu0 0.0
      %5503 = vmatmul.mubr.f32.gmra.mxu0 %v2181
      %v5504 = vpop.f32.mrf.mxu0
      %v5505 = vadd.f32 0.0, %v5504
      %v5506 = vpop.f32.mrf.mxu0
      %v5507 = vadd.f32 0.0, %v5506
      %5508 = vmatprep.mubr.f32.mxu0 0.0
      %5509 = vmatmul.mubr.f32.gmra.mxu0 %v2184
      %v5510 = vpop.f32.mrf.mxu0
      %v5511 = vadd.f32 0.0, %v5510
      %v5512 = vpop.f32.mrf.mxu0
      %v5513 = vadd.f32 0.0, %v5512
      %5514 = vmatprep.mubr.f32.mxu0 0.0
      %5515 = vmatmul.mubr.f32.gmra.mxu0 %v2187
      %v5516 = vpop.f32.mrf.mxu0
      %v5517 = vadd.f32 0.0, %v5516
      %v5518 = vpop.f32.mrf.mxu0
      %v5519 = vadd.f32 0.0, %v5518
      %5520 = vmatprep.mubr.f32.mxu0 0.0
      %5521 = vmatmul.mubr.f32.gmra.mxu0 %v2190
      %v5522 = vpop.f32.mrf.mxu0
      %v5523 = vadd.f32 0.0, %v5522
      %v5524 = vpop.f32.mrf.mxu0
      %v5525 = vadd.f32 0.0, %v5524
      %5526 = vmatprep.mubr.f32.mxu0 0.0
      %5527 = vmatmul.mubr.f32.gmra.mxu0 %v2193
      %v5528 = vpop.f32.mrf.mxu0
      %v5529 = vadd.f32 0.0, %v5528
      %v5530 = vpop.f32.mrf.mxu0
      %v5531 = vadd.f32 0.0, %v5530
      %5532 = vmatprep.mubr.f32.mxu0 0.0
      %5533 = vmatmul.mubr.f32.gmra.mxu0 %v2196
      %v5534 = vpop.f32.mrf.mxu0
      %v5535 = vadd.f32 0.0, %v5534
      %v5536 = vpop.f32.mrf.mxu0
      %v5537 = vadd.f32 0.0, %v5536
      %5538 = vmatprep.mubr.f32.mxu0 0.0
      %5539 = vmatmul.mubr.f32.gmra.mxu0 %v2199
      %v5540 = vpop.f32.mrf.mxu0
      %v5541 = vadd.f32 0.0, %v5540
      %v5542 = vpop.f32.mrf.mxu0
      %v5543 = vadd.f32 0.0, %v5542
      %5544 = vmatprep.mubr.f32.mxu0 0.0
      %5545 = vmatmul.mubr.f32.gmra.mxu0 %v2202
      %v5546 = vpop.f32.mrf.mxu0
      %v5547 = vadd.f32 0.0, %v5546
      %v5548 = vpop.f32.mrf.mxu0
      %v5549 = vadd.f32 0.0, %v5548
      %5550 = vdwg.mxu0
      %5551 = vst [vmem:[%s216] sm:$0xff] %v2356
      %5552 = vst [vmem:[%s216 + $0x8] sm:$0xff] %v2358
      %5553 = vst [vmem:[%s216 + $0x10] sm:$0xff] %v2589
      %5554 = vst [vmem:[%s216 + $0x18] sm:$0xff] %v2591
      %5555 = vst [vmem:[%s216 + $0x20] sm:$0xff] %v2822
      %5556 = vst [vmem:[%s216 + $0x28] sm:$0xff] %v2824
      %5557 = vst [vmem:[%s216 + $0x30] sm:$0xff] %v3055
      %5558 = vst [vmem:[%s216 + $0x38] sm:$0xff] %v3057
      %5559 = vst [vmem:[%s216 + $0x40] sm:$0xff] %v3288
      %5560 = vst [vmem:[%s216 + $0x48] sm:$0xff] %v3290
      %5561 = vst [vmem:[%s216 + $0x50] sm:$0xff] %v3521
      %5562 = vst [vmem:[%s216 + $0x58] sm:$0xff] %v3523
      %5563 = vst [vmem:[%s216 + $0x60] sm:$0xff] %v3754
      %5564 = vst [vmem:[%s216 + $0x68] sm:$0xff] %v3756
      %5565 = vst [vmem:[%s216 + $0x70] sm:$0xff] %v3987
      %5566 = vst [vmem:[%s216 + $0x78] sm:$0xff] %v3989
      %5567 = vst [vmem:[%s216 + $0x80] sm:$0xff] %v4220
      %5568 = vst [vmem:[%s216 + $0x88] sm:$0xff] %v4222
      %5569 = vst [vmem:[%s216 + $0x90] sm:$0xff] %v4453
      %5570 = vst [vmem:[%s216 + $0x98] sm:$0xff] %v4455
      %5571 = vst [vmem:[%s216 + $0xa0] sm:$0xff] %v4686
      %5572 = vst [vmem:[%s216 + $0xa8] sm:$0xff] %v4688
      %5573 = vst [vmem:[%s216 + $0xb0] sm:$0xff] %v4919
      %5574 = vst [vmem:[%s216 + $0xb8] sm:$0xff] %v4921
      %5575 = vst [vmem:[%s216 + $0xc0] sm:$0xff] %v5152
      %5576 = vst [vmem:[%s216 + $0xc8] sm:$0xff] %v5154
      %5577 = vst [vmem:[%s216 + $0xd0] sm:$0xff] %v5385
      %5578 = vst [vmem:[%s216 + $0xd8] sm:$0xff] %v5387
      %5579 = vst [vmem:[%s216 + $0xe0] sm:$0xff] %v2362
      %5580 = vst [vmem:[%s216 + $0xe8] sm:$0xff] %v2364
      %5581 = vst [vmem:[%s216 + $0xf0] sm:$0xff] %v2595
      %5582 = vst [vmem:[%s216 + $0xf8] sm:$0xff] %v2597
      %5583 = vst [vmem:[%s216 + $0x100] sm:$0xff] %v2828
      %5584 = vst [vmem:[%s216 + $0x108] sm:$0xff] %v2830
      %5585 = vst [vmem:[%s216 + $0x110] sm:$0xff] %v3061
      %5586 = vst [vmem:[%s216 + $0x118] sm:$0xff] %v3063
      %5587 = vst [vmem:[%s216 + $0x120] sm:$0xff] %v3294
      %5588 = vst [vmem:[%s216 + $0x128] sm:$0xff] %v3296
      %5589 = vst [vmem:[%s216 + $0x130] sm:$0xff] %v3527
      %5590 = vst [vmem:[%s216 + $0x138] sm:$0xff] %v3529
      %5591 = vst [vmem:[%s216 + $0x140] sm:$0xff] %v3760
      %5592 = vst [vmem:[%s216 + $0x148] sm:$0xff] %v3762
      %5593 = vst [vmem:[%s216 + $0x150] sm:$0xff] %v3993
      %5594 = vst [vmem:[%s216 + $0x158] sm:$0xff] %v3995
      %5595 = vst [vmem:[%s216 + $0x160] sm:$0xff] %v4226
      %5596 = vst [vmem:[%s216 + $0x168] sm:$0xff] %v4228
      %5597 = vst [vmem:[%s216 + $0x170] sm:$0xff] %v4459
      %5598 = vst [vmem:[%s216 + $0x178] sm:$0xff] %v4461
      %5599 = vst [vmem:[%s216 + $0x180] sm:$0xff] %v4692
      %5600 = vst [vmem:[%s216 + $0x188] sm:$0xff] %v4694
      %5601 = vst [vmem:[%s216 + $0x190] sm:$0xff] %v4925
      %5602 = vst [vmem:[%s216 + $0x198] sm:$0xff] %v4927
      %5603 = vst [vmem:[%s216 + $0x1a0] sm:$0xff] %v5158
      %5604 = vst [vmem:[%s216 + $0x1a8] sm:$0xff] %v5160
      %5605 = vst [vmem:[%s216 + $0x1b0] sm:$0xff] %v5391
      %5606 = vst [vmem:[%s216 + $0x1b8] sm:$0xff] %v5393
      %5607 = vst [vmem:[%s216 + $0x1c0] sm:$0xff] %v2368
      %5608 = vst [vmem:[%s216 + $0x1c8] sm:$0xff] %v2370
      %5609 = vst [vmem:[%s216 + $0x1d0] sm:$0xff] %v2601
      %5610 = vst [vmem:[%s216 + $0x1d8] sm:$0xff] %v2603
      %5611 = vst [vmem:[%s216 + $0x1e0] sm:$0xff] %v2834
      %5612 = vst [vmem:[%s216 + $0x1e8] sm:$0xff] %v2836
      %5613 = vst [vmem:[%s216 + $0x1f0] sm:$0xff] %v3067
      %5614 = vst [vmem:[%s216 + $0x1f8] sm:$0xff] %v3069
      %5615 = vst [vmem:[%s216 + $0x200] sm:$0xff] %v3300
      %5616 = vst [vmem:[%s216 + $0x208] sm:$0xff] %v3302
      %5617 = vst [vmem:[%s216 + $0x210] sm:$0xff] %v3533
      %5618 = vst [vmem:[%s216 + $0x218] sm:$0xff] %v3535
      %5619 = vst [vmem:[%s216 + $0x220] sm:$0xff] %v3766
      %5620 = vst [vmem:[%s216 + $0x228] sm:$0xff] %v3768
      %5621 = vst [vmem:[%s216 + $0x230] sm:$0xff] %v3999
      %5622 = vst [vmem:[%s216 + $0x238] sm:$0xff] %v4001
      %5623 = vst [vmem:[%s216 + $0x240] sm:$0xff] %v4232
      %5624 = vst [vmem:[%s216 + $0x248] sm:$0xff] %v4234
      %5625 = vst [vmem:[%s216 + $0x250] sm:$0xff] %v4465
      %5626 = vst [vmem:[%s216 + $0x258] sm:$0xff] %v4467
      %5627 = vst [vmem:[%s216 + $0x260] sm:$0xff] %v4698
      %5628 = vst [vmem:[%s216 + $0x268] sm:$0xff] %v4700
      %5629 = vst [vmem:[%s216 + $0x270] sm:$0xff] %v4931
      %5630 = vst [vmem:[%s216 + $0x278] sm:$0xff] %v4933
      %5631 = vst [vmem:[%s216 + $0x280] sm:$0xff] %v5164
      %5632 = vst [vmem:[%s216 + $0x288] sm:$0xff] %v5166
      %5633 = vst [vmem:[%s216 + $0x290] sm:$0xff] %v5397
      %5634 = vst [vmem:[%s216 + $0x298] sm:$0xff] %v5399
      %5635 = vst [vmem:[%s216 + $0x2a0] sm:$0xff] %v2374
      %5636 = vst [vmem:[%s216 + $0x2a8] sm:$0xff] %v2376
      %5637 = vst [vmem:[%s216 + $0x2b0] sm:$0xff] %v2607
      %5638 = vst [vmem:[%s216 + $0x2b8] sm:$0xff] %v2609
      %5639 = vst [vmem:[%s216 + $0x2c0] sm:$0xff] %v2840
      %5640 = vst [vmem:[%s216 + $0x2c8] sm:$0xff] %v2842
      %5641 = vst [vmem:[%s216 + $0x2d0] sm:$0xff] %v3073
      %5642 = vst [vmem:[%s216 + $0x2d8] sm:$0xff] %v3075
      %5643 = vst [vmem:[%s216 + $0x2e0] sm:$0xff] %v3306
      %5644 = vst [vmem:[%s216 + $0x2e8] sm:$0xff] %v3308
      %5645 = vst [vmem:[%s216 + $0x2f0] sm:$0xff] %v3539
      %5646 = vst [vmem:[%s216 + $0x2f8] sm:$0xff] %v3541
      %5647 = vst [vmem:[%s216 + $0x300] sm:$0xff] %v3772
      %5648 = vst [vmem:[%s216 + $0x308] sm:$0xff] %v3774
      %5649 = vst [vmem:[%s216 + $0x310] sm:$0xff] %v4005
      %5650 = vst [vmem:[%s216 + $0x318] sm:$0xff] %v4007
      %5651 = vst [vmem:[%s216 + $0x320] sm:$0xff] %v4238
      %5652 = vst [vmem:[%s216 + $0x328] sm:$0xff] %v4240
      %5653 = vst [vmem:[%s216 + $0x330] sm:$0xff] %v4471
      %5654 = vst [vmem:[%s216 + $0x338] sm:$0xff] %v4473
      %5655 = vst [vmem:[%s216 + $0x340] sm:$0xff] %v4704
      %5656 = vst [vmem:[%s216 + $0x348] sm:$0xff] %v4706
      %5657 = vst [vmem:[%s216 + $0x350] sm:$0xff] %v4937
      %5658 = vst [vmem:[%s216 + $0x358] sm:$0xff] %v4939
      %5659 = vst [vmem:[%s216 + $0x360] sm:$0xff] %v5170
      %5660 = vst [vmem:[%s216 + $0x368] sm:$0xff] %v5172
      %5661 = vst [vmem:[%s216 + $0x370] sm:$0xff] %v5403
      %5662 = vst [vmem:[%s216 + $0x378] sm:$0xff] %v5405
      %5663 = vst [vmem:[%s216 + $0x380] sm:$0xff] %v2380
      %5664 = vst [vmem:[%s216 + $0x388] sm:$0xff] %v2382
      %5665 = vst [vmem:[%s216 + $0x390] sm:$0xff] %v2613
      %5666 = vst [vmem:[%s216 + $0x398] sm:$0xff] %v2615
      %5667 = vst [vmem:[%s216 + $0x3a0] sm:$0xff] %v2846
      %5668 = vst [vmem:[%s216 + $0x3a8] sm:$0xff] %v2848
      %5669 = vst [vmem:[%s216 + $0x3b0] sm:$0xff] %v3079
      %5670 = vst [vmem:[%s216 + $0x3b8] sm:$0xff] %v3081
      %5671 = vst [vmem:[%s216 + $0x3c0] sm:$0xff] %v3312
      %5672 = vst [vmem:[%s216 + $0x3c8] sm:$0xff] %v3314
      %5673 = vst [vmem:[%s216 + $0x3d0] sm:$0xff] %v3545
      %5674 = vst [vmem:[%s216 + $0x3d8] sm:$0xff] %v3547
      %5675 = vst [vmem:[%s216 + $0x3e0] sm:$0xff] %v3778
      %5676 = vst [vmem:[%s216 + $0x3e8] sm:$0xff] %v3780
      %5677 = vst [vmem:[%s216 + $0x3f0] sm:$0xff] %v4011
      %5678 = vst [vmem:[%s216 + $0x3f8] sm:$0xff] %v4013
      %5679 = vst [vmem:[%s216 + $0x400] sm:$0xff] %v4244
      %5680 = vst [vmem:[%s216 + $0x408] sm:$0xff] %v4246
      %5681 = vst [vmem:[%s216 + $0x410] sm:$0xff] %v4477
      %5682 = vst [vmem:[%s216 + $0x418] sm:$0xff] %v4479
      %5683 = vst [vmem:[%s216 + $0x420] sm:$0xff] %v4710
      %5684 = vst [vmem:[%s216 + $0x428] sm:$0xff] %v4712
      %5685 = vst [vmem:[%s216 + $0x430] sm:$0xff] %v4943
      %5686 = vst [vmem:[%s216 + $0x438] sm:$0xff] %v4945
      %5687 = vst [vmem:[%s216 + $0x440] sm:$0xff] %v5176
      %5688 = vst [vmem:[%s216 + $0x448] sm:$0xff] %v5178
      %5689 = vst [vmem:[%s216 + $0x450] sm:$0xff] %v5409
      %5690 = vst [vmem:[%s216 + $0x458] sm:$0xff] %v5411
      %5691 = vst [vmem:[%s216 + $0x460] sm:$0xff] %v2386
      %5692 = vst [vmem:[%s216 + $0x468] sm:$0xff] %v2388
      %5693 = vst [vmem:[%s216 + $0x470] sm:$0xff] %v2619
      %5694 = vst [vmem:[%s216 + $0x478] sm:$0xff] %v2621
      %5695 = vst [vmem:[%s216 + $0x480] sm:$0xff] %v2852
      %5696 = vst [vmem:[%s216 + $0x488] sm:$0xff] %v2854
      %5697 = vst [vmem:[%s216 + $0x490] sm:$0xff] %v3085
      %5698 = vst [vmem:[%s216 + $0x498] sm:$0xff] %v3087
      %5699 = vst [vmem:[%s216 + $0x4a0] sm:$0xff] %v3318
      %5700 = vst [vmem:[%s216 + $0x4a8] sm:$0xff] %v3320
      %5701 = vst [vmem:[%s216 + $0x4b0] sm:$0xff] %v3551
      %5702 = vst [vmem:[%s216 + $0x4b8] sm:$0xff] %v3553
      %5703 = vst [vmem:[%s216 + $0x4c0] sm:$0xff] %v3784
      %5704 = vst [vmem:[%s216 + $0x4c8] sm:$0xff] %v3786
      %5705 = vst [vmem:[%s216 + $0x4d0] sm:$0xff] %v4017
      %5706 = vst [vmem:[%s216 + $0x4d8] sm:$0xff] %v4019
      %5707 = vst [vmem:[%s216 + $0x4e0] sm:$0xff] %v4250
      %5708 = vst [vmem:[%s216 + $0x4e8] sm:$0xff] %v4252
      %5709 = vst [vmem:[%s216 + $0x4f0] sm:$0xff] %v4483
      %5710 = vst [vmem:[%s216 + $0x4f8] sm:$0xff] %v4485
      %5711 = vst [vmem:[%s216 + $0x500] sm:$0xff] %v4716
      %5712 = vst [vmem:[%s216 + $0x508] sm:$0xff] %v4718
      %5713 = vst [vmem:[%s216 + $0x510] sm:$0xff] %v4949
      %5714 = vst [vmem:[%s216 + $0x518] sm:$0xff] %v4951
      %5715 = vst [vmem:[%s216 + $0x520] sm:$0xff] %v5182
      %5716 = vst [vmem:[%s216 + $0x528] sm:$0xff] %v5184
      %5717 = vst [vmem:[%s216 + $0x530] sm:$0xff] %v5415
      %5718 = vst [vmem:[%s216 + $0x538] sm:$0xff] %v5417
      %5719 = vst [vmem:[%s216 + $0x540] sm:$0xff] %v2392
      %5720 = vst [vmem:[%s216 + $0x548] sm:$0xff] %v2394
      %5721 = vst [vmem:[%s216 + $0x550] sm:$0xff] %v2625
      %5722 = vst [vmem:[%s216 + $0x558] sm:$0xff] %v2627
      %5723 = vst [vmem:[%s216 + $0x560] sm:$0xff] %v2858
      %5724 = vst [vmem:[%s216 + $0x568] sm:$0xff] %v2860
      %5725 = vst [vmem:[%s216 + $0x570] sm:$0xff] %v3091
      %5726 = vst [vmem:[%s216 + $0x578] sm:$0xff] %v3093
      %5727 = vst [vmem:[%s216 + $0x580] sm:$0xff] %v3324
      %5728 = vst [vmem:[%s216 + $0x588] sm:$0xff] %v3326
      %5729 = vst [vmem:[%s216 + $0x590] sm:$0xff] %v3557
      %5730 = vst [vmem:[%s216 + $0x598] sm:$0xff] %v3559
      %5731 = vst [vmem:[%s216 + $0x5a0] sm:$0xff] %v3790
      %5732 = vst [vmem:[%s216 + $0x5a8] sm:$0xff] %v3792
      %5733 = vst [vmem:[%s216 + $0x5b0] sm:$0xff] %v4023
      %5734 = vst [vmem:[%s216 + $0x5b8] sm:$0xff] %v4025
      %5735 = vst [vmem:[%s216 + $0x5c0] sm:$0xff] %v4256
      %5736 = vst [vmem:[%s216 + $0x5c8] sm:$0xff] %v4258
      %5737 = vst [vmem:[%s216 + $0x5d0] sm:$0xff] %v4489
      %5738 = vst [vmem:[%s216 + $0x5d8] sm:$0xff] %v4491
      %5739 = vst [vmem:[%s216 + $0x5e0] sm:$0xff] %v4722
      %5740 = vst [vmem:[%s216 + $0x5e8] sm:$0xff] %v4724
      %5741 = vst [vmem:[%s216 + $0x5f0] sm:$0xff] %v4955
      %5742 = vst [vmem:[%s216 + $0x5f8] sm:$0xff] %v4957
      %5743 = vst [vmem:[%s216 + $0x600] sm:$0xff] %v5188
      %5744 = vst [vmem:[%s216 + $0x608] sm:$0xff] %v5190
      %5745 = vst [vmem:[%s216 + $0x610] sm:$0xff] %v5421
      %5746 = vst [vmem:[%s216 + $0x618] sm:$0xff] %v5423
      %5747 = vst [vmem:[%s216 + $0x620] sm:$0xff] %v2398
      %5748 = vst [vmem:[%s216 + $0x628] sm:$0xff] %v2400
      %5749 = vst [vmem:[%s216 + $0x630] sm:$0xff] %v2631
      %5750 = vst [vmem:[%s216 + $0x638] sm:$0xff] %v2633
      %5751 = vst [vmem:[%s216 + $0x640] sm:$0xff] %v2864
      %5752 = vst [vmem:[%s216 + $0x648] sm:$0xff] %v2866
      %5753 = vst [vmem:[%s216 + $0x650] sm:$0xff] %v3097
      %5754 = vst [vmem:[%s216 + $0x658] sm:$0xff] %v3099
      %5755 = vst [vmem:[%s216 + $0x660] sm:$0xff] %v3330
      %5756 = vst [vmem:[%s216 + $0x668] sm:$0xff] %v3332
      %5757 = vst [vmem:[%s216 + $0x670] sm:$0xff] %v3563
      %5758 = vst [vmem:[%s216 + $0x678] sm:$0xff] %v3565
      %5759 = vst [vmem:[%s216 + $0x680] sm:$0xff] %v3796
      %5760 = vst [vmem:[%s216 + $0x688] sm:$0xff] %v3798
      %5761 = vst [vmem:[%s216 + $0x690] sm:$0xff] %v4029
      %5762 = vst [vmem:[%s216 + $0x698] sm:$0xff] %v4031
      %5763 = vst [vmem:[%s216 + $0x6a0] sm:$0xff] %v4262
      %5764 = vst [vmem:[%s216 + $0x6a8] sm:$0xff] %v4264
      %5765 = vst [vmem:[%s216 + $0x6b0] sm:$0xff] %v4495
      %5766 = vst [vmem:[%s216 + $0x6b8] sm:$0xff] %v4497
      %5767 = vst [vmem:[%s216 + $0x6c0] sm:$0xff] %v4728
      %5768 = vst [vmem:[%s216 + $0x6c8] sm:$0xff] %v4730
      %5769 = vst [vmem:[%s216 + $0x6d0] sm:$0xff] %v4961
      %5770 = vst [vmem:[%s216 + $0x6d8] sm:$0xff] %v4963
      %5771 = vst [vmem:[%s216 + $0x6e0] sm:$0xff] %v5194
      %5772 = vst [vmem:[%s216 + $0x6e8] sm:$0xff] %v5196
      %5773 = vst [vmem:[%s216 + $0x6f0] sm:$0xff] %v5427
      %5774 = vst [vmem:[%s216 + $0x6f8] sm:$0xff] %v5429
      %5775 = vst [vmem:[%s216 + $0x700] sm:$0xff] %v2404
      %5776 = vst [vmem:[%s216 + $0x708] sm:$0xff] %v2406
      %5777 = vst [vmem:[%s216 + $0x710] sm:$0xff] %v2637
      %5778 = vst [vmem:[%s216 + $0x718] sm:$0xff] %v2639
      %5779 = vst [vmem:[%s216 + $0x720] sm:$0xff] %v2870
      %5780 = vst [vmem:[%s216 + $0x728] sm:$0xff] %v2872
      %5781 = vst [vmem:[%s216 + $0x730] sm:$0xff] %v3103
      %5782 = vst [vmem:[%s216 + $0x738] sm:$0xff] %v3105
      %5783 = vst [vmem:[%s216 + $0x740] sm:$0xff] %v3336
      %5784 = vst [vmem:[%s216 + $0x748] sm:$0xff] %v3338
      %5785 = vst [vmem:[%s216 + $0x750] sm:$0xff] %v3569
      %5786 = vst [vmem:[%s216 + $0x758] sm:$0xff] %v3571
      %5787 = vst [vmem:[%s216 + $0x760] sm:$0xff] %v3802
      %5788 = vst [vmem:[%s216 + $0x768] sm:$0xff] %v3804
      %5789 = vst [vmem:[%s216 + $0x770] sm:$0xff] %v4035
      %5790 = vst [vmem:[%s216 + $0x778] sm:$0xff] %v4037
      %5791 = vst [vmem:[%s216 + $0x780] sm:$0xff] %v4268
      %5792 = vst [vmem:[%s216 + $0x788] sm:$0xff] %v4270
      %5793 = vst [vmem:[%s216 + $0x790] sm:$0xff] %v4501
      %5794 = vst [vmem:[%s216 + $0x798] sm:$0xff] %v4503
      %5795 = vst [vmem:[%s216 + $0x7a0] sm:$0xff] %v4734
      %5796 = vst [vmem:[%s216 + $0x7a8] sm:$0xff] %v4736
      %5797 = vst [vmem:[%s216 + $0x7b0] sm:$0xff] %v4967
      %5798 = vst [vmem:[%s216 + $0x7b8] sm:$0xff] %v4969
      %5799 = vst [vmem:[%s216 + $0x7c0] sm:$0xff] %v5200
      %5800 = vst [vmem:[%s216 + $0x7c8] sm:$0xff] %v5202
      %5801 = vst [vmem:[%s216 + $0x7d0] sm:$0xff] %v5433
      %5802 = vst [vmem:[%s216 + $0x7d8] sm:$0xff] %v5435
      %5803 = vst [vmem:[%s216 + $0x7e0] sm:$0xff] %v2410
      %5804 = vst [vmem:[%s216 + $0x7e8] sm:$0xff] %v2412
      %5805 = vst [vmem:[%s216 + $0x7f0] sm:$0xff] %v2643
      %5806 = vst [vmem:[%s216 + $0x7f8] sm:$0xff] %v2645
      %5807 = vst [vmem:[%s216 + $0x800] sm:$0xff] %v2876
      %5808 = vst [vmem:[%s216 + $0x808] sm:$0xff] %v2878
      %5809 = vst [vmem:[%s216 + $0x810] sm:$0xff] %v3109
      %5810 = vst [vmem:[%s216 + $0x818] sm:$0xff] %v3111
      %5811 = vst [vmem:[%s216 + $0x820] sm:$0xff] %v3342
      %5812 = vst [vmem:[%s216 + $0x828] sm:$0xff] %v3344
      %5813 = vst [vmem:[%s216 + $0x830] sm:$0xff] %v3575
      %5814 = vst [vmem:[%s216 + $0x838] sm:$0xff] %v3577
      %5815 = vst [vmem:[%s216 + $0x840] sm:$0xff] %v3808
      %5816 = vst [vmem:[%s216 + $0x848] sm:$0xff] %v3810
      %5817 = vst [vmem:[%s216 + $0x850] sm:$0xff] %v4041
      %5818 = vst [vmem:[%s216 + $0x858] sm:$0xff] %v4043
      %5819 = vst [vmem:[%s216 + $0x860] sm:$0xff] %v4274
      %5820 = vst [vmem:[%s216 + $0x868] sm:$0xff] %v4276
      %5821 = vst [vmem:[%s216 + $0x870] sm:$0xff] %v4507
      %5822 = vst [vmem:[%s216 + $0x878] sm:$0xff] %v4509
      %5823 = vst [vmem:[%s216 + $0x880] sm:$0xff] %v4740
      %5824 = vst [vmem:[%s216 + $0x888] sm:$0xff] %v4742
      %5825 = vst [vmem:[%s216 + $0x890] sm:$0xff] %v4973
      %5826 = vst [vmem:[%s216 + $0x898] sm:$0xff] %v4975
      %5827 = vst [vmem:[%s216 + $0x8a0] sm:$0xff] %v5206
      %5828 = vst [vmem:[%s216 + $0x8a8] sm:$0xff] %v5208
      %5829 = vst [vmem:[%s216 + $0x8b0] sm:$0xff] %v5439
      %5830 = vst [vmem:[%s216 + $0x8b8] sm:$0xff] %v5441
      %5831 = vst [vmem:[%s216 + $0x8c0] sm:$0xff] %v2416
      %5832 = vst [vmem:[%s216 + $0x8c8] sm:$0xff] %v2418
      %5833 = vst [vmem:[%s216 + $0x8d0] sm:$0xff] %v2649
      %5834 = vst [vmem:[%s216 + $0x8d8] sm:$0xff] %v2651
      %5835 = vst [vmem:[%s216 + $0x8e0] sm:$0xff] %v2882
      %5836 = vst [vmem:[%s216 + $0x8e8] sm:$0xff] %v2884
      %5837 = vst [vmem:[%s216 + $0x8f0] sm:$0xff] %v3115
      %5838 = vst [vmem:[%s216 + $0x8f8] sm:$0xff] %v3117
      %5839 = vst [vmem:[%s216 + $0x900] sm:$0xff] %v3348
      %5840 = vst [vmem:[%s216 + $0x908] sm:$0xff] %v3350
      %5841 = vst [vmem:[%s216 + $0x910] sm:$0xff] %v3581
      %5842 = vst [vmem:[%s216 + $0x918] sm:$0xff] %v3583
      %5843 = vst [vmem:[%s216 + $0x920] sm:$0xff] %v3814
      %5844 = vst [vmem:[%s216 + $0x928] sm:$0xff] %v3816
      %5845 = vst [vmem:[%s216 + $0x930] sm:$0xff] %v4047
      %5846 = vst [vmem:[%s216 + $0x938] sm:$0xff] %v4049
      %5847 = vst [vmem:[%s216 + $0x940] sm:$0xff] %v4280
      %5848 = vst [vmem:[%s216 + $0x948] sm:$0xff] %v4282
      %5849 = vst [vmem:[%s216 + $0x950] sm:$0xff] %v4513
      %5850 = vst [vmem:[%s216 + $0x958] sm:$0xff] %v4515
      %5851 = vst [vmem:[%s216 + $0x960] sm:$0xff] %v4746
      %5852 = vst [vmem:[%s216 + $0x968] sm:$0xff] %v4748
      %5853 = vst [vmem:[%s216 + $0x970] sm:$0xff] %v4979
      %5854 = vst [vmem:[%s216 + $0x978] sm:$0xff] %v4981
      %5855 = vst [vmem:[%s216 + $0x980] sm:$0xff] %v5212
      %5856 = vst [vmem:[%s216 + $0x988] sm:$0xff] %v5214
      %5857 = vst [vmem:[%s216 + $0x990] sm:$0xff] %v5445
      %5858 = vst [vmem:[%s216 + $0x998] sm:$0xff] %v5447
      %5859 = vst [vmem:[%s216 + $0x9a0] sm:$0xff] %v2422
      %5860 = vst [vmem:[%s216 + $0x9a8] sm:$0xff] %v2424
      %5861 = vst [vmem:[%s216 + $0x9b0] sm:$0xff] %v2655
      %5862 = vst [vmem:[%s216 + $0x9b8] sm:$0xff] %v2657
      %5863 = vst [vmem:[%s216 + $0x9c0] sm:$0xff] %v2888
      %5864 = vst [vmem:[%s216 + $0x9c8] sm:$0xff] %v2890
      %5865 = vst [vmem:[%s216 + $0x9d0] sm:$0xff] %v3121
      %5866 = vst [vmem:[%s216 + $0x9d8] sm:$0xff] %v3123
      %5867 = vst [vmem:[%s216 + $0x9e0] sm:$0xff] %v3354
      %5868 = vst [vmem:[%s216 + $0x9e8] sm:$0xff] %v3356
      %5869 = vst [vmem:[%s216 + $0x9f0] sm:$0xff] %v3587
      %5870 = vst [vmem:[%s216 + $0x9f8] sm:$0xff] %v3589
      %5871 = vst [vmem:[%s216 + $0xa00] sm:$0xff] %v3820
      %5872 = vst [vmem:[%s216 + $0xa08] sm:$0xff] %v3822
      %5873 = vst [vmem:[%s216 + $0xa10] sm:$0xff] %v4053
      %5874 = vst [vmem:[%s216 + $0xa18] sm:$0xff] %v4055
      %5875 = vst [vmem:[%s216 + $0xa20] sm:$0xff] %v4286
      %5876 = vst [vmem:[%s216 + $0xa28] sm:$0xff] %v4288
      %5877 = vst [vmem:[%s216 + $0xa30] sm:$0xff] %v4519
      %5878 = vst [vmem:[%s216 + $0xa38] sm:$0xff] %v4521
      %5879 = vst [vmem:[%s216 + $0xa40] sm:$0xff] %v4752
      %5880 = vst [vmem:[%s216 + $0xa48] sm:$0xff] %v4754
      %5881 = vst [vmem:[%s216 + $0xa50] sm:$0xff] %v4985
      %5882 = vst [vmem:[%s216 + $0xa58] sm:$0xff] %v4987
      %5883 = vst [vmem:[%s216 + $0xa60] sm:$0xff] %v5218
      %5884 = vst [vmem:[%s216 + $0xa68] sm:$0xff] %v5220
      %5885 = vst [vmem:[%s216 + $0xa70] sm:$0xff] %v5451
      %5886 = vst [vmem:[%s216 + $0xa78] sm:$0xff] %v5453
      %5887 = vst [vmem:[%s216 + $0xa80] sm:$0xff] %v2428
      %5888 = vst [vmem:[%s216 + $0xa88] sm:$0xff] %v2430
      %5889 = vst [vmem:[%s216 + $0xa90] sm:$0xff] %v2661
      %5890 = vst [vmem:[%s216 + $0xa98] sm:$0xff] %v2663
      %5891 = vst [vmem:[%s216 + $0xaa0] sm:$0xff] %v2894
      %5892 = vst [vmem:[%s216 + $0xaa8] sm:$0xff] %v2896
      %5893 = vst [vmem:[%s216 + $0xab0] sm:$0xff] %v3127
      %5894 = vst [vmem:[%s216 + $0xab8] sm:$0xff] %v3129
      %5895 = vst [vmem:[%s216 + $0xac0] sm:$0xff] %v3360
      %5896 = vst [vmem:[%s216 + $0xac8] sm:$0xff] %v3362
      %5897 = vst [vmem:[%s216 + $0xad0] sm:$0xff] %v3593
      %5898 = vst [vmem:[%s216 + $0xad8] sm:$0xff] %v3595
      %5899 = vst [vmem:[%s216 + $0xae0] sm:$0xff] %v3826
      %5900 = vst [vmem:[%s216 + $0xae8] sm:$0xff] %v3828
      %5901 = vst [vmem:[%s216 + $0xaf0] sm:$0xff] %v4059
      %5902 = vst [vmem:[%s216 + $0xaf8] sm:$0xff] %v4061
      %5903 = vst [vmem:[%s216 + $0xb00] sm:$0xff] %v4292
      %5904 = vst [vmem:[%s216 + $0xb08] sm:$0xff] %v4294
      %5905 = vst [vmem:[%s216 + $0xb10] sm:$0xff] %v4525
      %5906 = vst [vmem:[%s216 + $0xb18] sm:$0xff] %v4527
      %5907 = vst [vmem:[%s216 + $0xb20] sm:$0xff] %v4758
      %5908 = vst [vmem:[%s216 + $0xb28] sm:$0xff] %v4760
      %5909 = vst [vmem:[%s216 + $0xb30] sm:$0xff] %v4991
      %5910 = vst [vmem:[%s216 + $0xb38] sm:$0xff] %v4993
      %5911 = vst [vmem:[%s216 + $0xb40] sm:$0xff] %v5224
      %5912 = vst [vmem:[%s216 + $0xb48] sm:$0xff] %v5226
      %5913 = vst [vmem:[%s216 + $0xb50] sm:$0xff] %v5457
      %5914 = vst [vmem:[%s216 + $0xb58] sm:$0xff] %v5459
      %5915 = vst [vmem:[%s216 + $0xb60] sm:$0xff] %v2434
      %5916 = vst [vmem:[%s216 + $0xb68] sm:$0xff] %v2436
      %5917 = vst [vmem:[%s216 + $0xb70] sm:$0xff] %v2667
      %5918 = vst [vmem:[%s216 + $0xb78] sm:$0xff] %v2669
      %5919 = vst [vmem:[%s216 + $0xb80] sm:$0xff] %v2900
      %5920 = vst [vmem:[%s216 + $0xb88] sm:$0xff] %v2902
      %5921 = vst [vmem:[%s216 + $0xb90] sm:$0xff] %v3133
      %5922 = vst [vmem:[%s216 + $0xb98] sm:$0xff] %v3135
      %5923 = vst [vmem:[%s216 + $0xba0] sm:$0xff] %v3366
      %5924 = vst [vmem:[%s216 + $0xba8] sm:$0xff] %v3368
      %5925 = vst [vmem:[%s216 + $0xbb0] sm:$0xff] %v3599
      %5926 = vst [vmem:[%s216 + $0xbb8] sm:$0xff] %v3601
      %5927 = vst [vmem:[%s216 + $0xbc0] sm:$0xff] %v3832
      %5928 = vst [vmem:[%s216 + $0xbc8] sm:$0xff] %v3834
      %5929 = vst [vmem:[%s216 + $0xbd0] sm:$0xff] %v4065
      %5930 = vst [vmem:[%s216 + $0xbd8] sm:$0xff] %v4067
      %5931 = vst [vmem:[%s216 + $0xbe0] sm:$0xff] %v4298
      %5932 = vst [vmem:[%s216 + $0xbe8] sm:$0xff] %v4300
      %5933 = vst [vmem:[%s216 + $0xbf0] sm:$0xff] %v4531
      %5934 = vst [vmem:[%s216 + $0xbf8] sm:$0xff] %v4533
      %5935 = vst [vmem:[%s216 + $0xc00] sm:$0xff] %v4764
      %5936 = vst [vmem:[%s216 + $0xc08] sm:$0xff] %v4766
      %5937 = vst [vmem:[%s216 + $0xc10] sm:$0xff] %v4997
      %5938 = vst [vmem:[%s216 + $0xc18] sm:$0xff] %v4999
      %5939 = vst [vmem:[%s216 + $0xc20] sm:$0xff] %v5230
      %5940 = vst [vmem:[%s216 + $0xc28] sm:$0xff] %v5232
      %5941 = vst [vmem:[%s216 + $0xc30] sm:$0xff] %v5463
      %5942 = vst [vmem:[%s216 + $0xc38] sm:$0xff] %v5465
      %5943 = vst [vmem:[%s216 + $0xc40] sm:$0xff] %v2440
      %5944 = vst [vmem:[%s216 + $0xc48] sm:$0xff] %v2442
      %5945 = vst [vmem:[%s216 + $0xc50] sm:$0xff] %v2673
      %5946 = vst [vmem:[%s216 + $0xc58] sm:$0xff] %v2675
      %5947 = vst [vmem:[%s216 + $0xc60] sm:$0xff] %v2906
      %5948 = vst [vmem:[%s216 + $0xc68] sm:$0xff] %v2908
      %5949 = vst [vmem:[%s216 + $0xc70] sm:$0xff] %v3139
      %5950 = vst [vmem:[%s216 + $0xc78] sm:$0xff] %v3141
      %5951 = vst [vmem:[%s216 + $0xc80] sm:$0xff] %v3372
      %5952 = vst [vmem:[%s216 + $0xc88] sm:$0xff] %v3374
      %5953 = vst [vmem:[%s216 + $0xc90] sm:$0xff] %v3605
      %5954 = vst [vmem:[%s216 + $0xc98] sm:$0xff] %v3607
      %5955 = vst [vmem:[%s216 + $0xca0] sm:$0xff] %v3838
      %5956 = vst [vmem:[%s216 + $0xca8] sm:$0xff] %v3840
      %5957 = vst [vmem:[%s216 + $0xcb0] sm:$0xff] %v4071
      %5958 = vst [vmem:[%s216 + $0xcb8] sm:$0xff] %v4073
      %5959 = vst [vmem:[%s216 + $0xcc0] sm:$0xff] %v4304
      %5960 = vst [vmem:[%s216 + $0xcc8] sm:$0xff] %v4306
      %5961 = vst [vmem:[%s216 + $0xcd0] sm:$0xff] %v4537
      %5962 = vst [vmem:[%s216 + $0xcd8] sm:$0xff] %v4539
      %5963 = vst [vmem:[%s216 + $0xce0] sm:$0xff] %v4770
      %5964 = vst [vmem:[%s216 + $0xce8] sm:$0xff] %v4772
      %5965 = vst [vmem:[%s216 + $0xcf0] sm:$0xff] %v5003
      %5966 = vst [vmem:[%s216 + $0xcf8] sm:$0xff] %v5005
      %5967 = vst [vmem:[%s216 + $0xd00] sm:$0xff] %v5236
      %5968 = vst [vmem:[%s216 + $0xd08] sm:$0xff] %v5238
      %5969 = vst [vmem:[%s216 + $0xd10] sm:$0xff] %v5469
      %5970 = vst [vmem:[%s216 + $0xd18] sm:$0xff] %v5471
      %5971 = vst [vmem:[%s216 + $0xd20] sm:$0xff] %v2446
      %5972 = vst [vmem:[%s216 + $0xd28] sm:$0xff] %v2448
      %5973 = vst [vmem:[%s216 + $0xd30] sm:$0xff] %v2679
      %5974 = vst [vmem:[%s216 + $0xd38] sm:$0xff] %v2681
      %5975 = vst [vmem:[%s216 + $0xd40] sm:$0xff] %v2912
      %5976 = vst [vmem:[%s216 + $0xd48] sm:$0xff] %v2914
      %5977 = vst [vmem:[%s216 + $0xd50] sm:$0xff] %v3145
      %5978 = vst [vmem:[%s216 + $0xd58] sm:$0xff] %v3147
      %5979 = vst [vmem:[%s216 + $0xd60] sm:$0xff] %v3378
      %5980 = vst [vmem:[%s216 + $0xd68] sm:$0xff] %v3380
      %5981 = vst [vmem:[%s216 + $0xd70] sm:$0xff] %v3611
      %5982 = vst [vmem:[%s216 + $0xd78] sm:$0xff] %v3613
      %5983 = vst [vmem:[%s216 + $0xd80] sm:$0xff] %v3844
      %5984 = vst [vmem:[%s216 + $0xd88] sm:$0xff] %v3846
      %5985 = vst [vmem:[%s216 + $0xd90] sm:$0xff] %v4077
      %5986 = vst [vmem:[%s216 + $0xd98] sm:$0xff] %v4079
      %5987 = vst [vmem:[%s216 + $0xda0] sm:$0xff] %v4310
      %5988 = vst [vmem:[%s216 + $0xda8] sm:$0xff] %v4312
      %5989 = vst [vmem:[%s216 + $0xdb0] sm:$0xff] %v4543
      %5990 = vst [vmem:[%s216 + $0xdb8] sm:$0xff] %v4545
      %5991 = vst [vmem:[%s216 + $0xdc0] sm:$0xff] %v4776
      %5992 = vst [vmem:[%s216 + $0xdc8] sm:$0xff] %v4778
      %5993 = vst [vmem:[%s216 + $0xdd0] sm:$0xff] %v5009
      %5994 = vst [vmem:[%s216 + $0xdd8] sm:$0xff] %v5011
      %5995 = vst [vmem:[%s216 + $0xde0] sm:$0xff] %v5242
      %5996 = vst [vmem:[%s216 + $0xde8] sm:$0xff] %v5244
      %5997 = vst [vmem:[%s216 + $0xdf0] sm:$0xff] %v5475
      %5998 = vst [vmem:[%s216 + $0xdf8] sm:$0xff] %v5477
      %5999 = vst [vmem:[%s216 + $0xe00] sm:$0xff] %v2452
      %6000 = vst [vmem:[%s216 + $0xe08] sm:$0xff] %v2454
      %6001 = vst [vmem:[%s216 + $0xe10] sm:$0xff] %v2685
      %6002 = vst [vmem:[%s216 + $0xe18] sm:$0xff] %v2687
      %6003 = vst [vmem:[%s216 + $0xe20] sm:$0xff] %v2918
      %6004 = vst [vmem:[%s216 + $0xe28] sm:$0xff] %v2920
      %6005 = vst [vmem:[%s216 + $0xe30] sm:$0xff] %v3151
      %6006 = vst [vmem:[%s216 + $0xe38] sm:$0xff] %v3153
      %6007 = vst [vmem:[%s216 + $0xe40] sm:$0xff] %v3384
      %6008 = vst [vmem:[%s216 + $0xe48] sm:$0xff] %v3386
      %6009 = vst [vmem:[%s216 + $0xe50] sm:$0xff] %v3617
      %6010 = vst [vmem:[%s216 + $0xe58] sm:$0xff] %v3619
      %6011 = vst [vmem:[%s216 + $0xe60] sm:$0xff] %v3850
      %6012 = vst [vmem:[%s216 + $0xe68] sm:$0xff] %v3852
      %6013 = vst [vmem:[%s216 + $0xe70] sm:$0xff] %v4083
      %6014 = vst [vmem:[%s216 + $0xe78] sm:$0xff] %v4085
      %6015 = vst [vmem:[%s216 + $0xe80] sm:$0xff] %v4316
      %6016 = vst [vmem:[%s216 + $0xe88] sm:$0xff] %v4318
      %6017 = vst [vmem:[%s216 + $0xe90] sm:$0xff] %v4549
      %6018 = vst [vmem:[%s216 + $0xe98] sm:$0xff] %v4551
      %6019 = vst [vmem:[%s216 + $0xea0] sm:$0xff] %v4782
      %6020 = vst [vmem:[%s216 + $0xea8] sm:$0xff] %v4784
      %6021 = vst [vmem:[%s216 + $0xeb0] sm:$0xff] %v5015
      %6022 = vst [vmem:[%s216 + $0xeb8] sm:$0xff] %v5017
      %6023 = vst [vmem:[%s216 + $0xec0] sm:$0xff] %v5248
      %6024 = vst [vmem:[%s216 + $0xec8] sm:$0xff] %v5250
      %6025 = vst [vmem:[%s216 + $0xed0] sm:$0xff] %v5481
      %6026 = vst [vmem:[%s216 + $0xed8] sm:$0xff] %v5483
      %6027 = vst [vmem:[%s216 + $0xee0] sm:$0xff] %v2458
      %6028 = vst [vmem:[%s216 + $0xee8] sm:$0xff] %v2460
      %6029 = vst [vmem:[%s216 + $0xef0] sm:$0xff] %v2691
      %6030 = vst [vmem:[%s216 + $0xef8] sm:$0xff] %v2693
      %6031 = vst [vmem:[%s216 + $0xf00] sm:$0xff] %v2924
      %6032 = vst [vmem:[%s216 + $0xf08] sm:$0xff] %v2926
      %6033 = vst [vmem:[%s216 + $0xf10] sm:$0xff] %v3157
      %6034 = vst [vmem:[%s216 + $0xf18] sm:$0xff] %v3159
      %6035 = vst [vmem:[%s216 + $0xf20] sm:$0xff] %v3390
      %6036 = vst [vmem:[%s216 + $0xf28] sm:$0xff] %v3392
      %6037 = vst [vmem:[%s216 + $0xf30] sm:$0xff] %v3623
      %6038 = vst [vmem:[%s216 + $0xf38] sm:$0xff] %v3625
      %6039 = vst [vmem:[%s216 + $0xf40] sm:$0xff] %v3856
      %6040 = vst [vmem:[%s216 + $0xf48] sm:$0xff] %v3858
      %6041 = vst [vmem:[%s216 + $0xf50] sm:$0xff] %v4089
      %6042 = vst [vmem:[%s216 + $0xf58] sm:$0xff] %v4091
      %6043 = vst [vmem:[%s216 + $0xf60] sm:$0xff] %v4322
      %6044 = vst [vmem:[%s216 + $0xf68] sm:$0xff] %v4324
      %6045 = vst [vmem:[%s216 + $0xf70] sm:$0xff] %v4555
      %6046 = vst [vmem:[%s216 + $0xf78] sm:$0xff] %v4557
      %6047 = vst [vmem:[%s216 + $0xf80] sm:$0xff] %v4788
      %6048 = vst [vmem:[%s216 + $0xf88] sm:$0xff] %v4790
      %6049 = vst [vmem:[%s216 + $0xf90] sm:$0xff] %v5021
      %6050 = vst [vmem:[%s216 + $0xf98] sm:$0xff] %v5023
      %6051 = vst [vmem:[%s216 + $0xfa0] sm:$0xff] %v5254
      %6052 = vst [vmem:[%s216 + $0xfa8] sm:$0xff] %v5256
      %6053 = vst [vmem:[%s216 + $0xfb0] sm:$0xff] %v5487
      %6054 = vst [vmem:[%s216 + $0xfb8] sm:$0xff] %v5489
      %6055 = vst [vmem:[%s216 + $0xfc0] sm:$0xff] %v2464
      %6056 = vst [vmem:[%s216 + $0xfc8] sm:$0xff] %v2466
      %6057 = vst [vmem:[%s216 + $0xfd0] sm:$0xff] %v2697
      %6058 = vst [vmem:[%s216 + $0xfd8] sm:$0xff] %v2699
      %6059 = vst [vmem:[%s216 + $0xfe0] sm:$0xff] %v2930
      %6060 = vst [vmem:[%s216 + $0xfe8] sm:$0xff] %v2932
      %6061 = vst [vmem:[%s216 + $0xff0] sm:$0xff] %v3163
      %6062 = vst [vmem:[%s216 + $0xff8] sm:$0xff] %v3165
      %6063 = vst [vmem:[%s216 + $0x1000] sm:$0xff] %v3396
      %6064 = vst [vmem:[%s216 + $0x1008] sm:$0xff] %v3398
      %6065 = vst [vmem:[%s216 + $0x1010] sm:$0xff] %v3629
      %6066 = vst [vmem:[%s216 + $0x1018] sm:$0xff] %v3631
      %6067 = vst [vmem:[%s216 + $0x1020] sm:$0xff] %v3862
      %6068 = vst [vmem:[%s216 + $0x1028] sm:$0xff] %v3864
      %6069 = vst [vmem:[%s216 + $0x1030] sm:$0xff] %v4095
      %6070 = vst [vmem:[%s216 + $0x1038] sm:$0xff] %v4097
      %6071 = vst [vmem:[%s216 + $0x1040] sm:$0xff] %v4328
      %6072 = vst [vmem:[%s216 + $0x1048] sm:$0xff] %v4330
      %6073 = vst [vmem:[%s216 + $0x1050] sm:$0xff] %v4561
      %6074 = vst [vmem:[%s216 + $0x1058] sm:$0xff] %v4563
      %6075 = vst [vmem:[%s216 + $0x1060] sm:$0xff] %v4794
      %6076 = vst [vmem:[%s216 + $0x1068] sm:$0xff] %v4796
      %6077 = vst [vmem:[%s216 + $0x1070] sm:$0xff] %v5027
      %6078 = vst [vmem:[%s216 + $0x1078] sm:$0xff] %v5029
      %6079 = vst [vmem:[%s216 + $0x1080] sm:$0xff] %v5260
      %6080 = vst [vmem:[%s216 + $0x1088] sm:$0xff] %v5262
      %6081 = vst [vmem:[%s216 + $0x1090] sm:$0xff] %v5493
      %6082 = vst [vmem:[%s216 + $0x1098] sm:$0xff] %v5495
      %6083 = vst [vmem:[%s216 + $0x10a0] sm:$0xff] %v2470
      %6084 = vst [vmem:[%s216 + $0x10a8] sm:$0xff] %v2472
      %6085 = vst [vmem:[%s216 + $0x10b0] sm:$0xff] %v2703
      %6086 = vst [vmem:[%s216 + $0x10b8] sm:$0xff] %v2705
      %6087 = vst [vmem:[%s216 + $0x10c0] sm:$0xff] %v2936
      %6088 = vst [vmem:[%s216 + $0x10c8] sm:$0xff] %v2938
      %6089 = vst [vmem:[%s216 + $0x10d0] sm:$0xff] %v3169
      %6090 = vst [vmem:[%s216 + $0x10d8] sm:$0xff] %v3171
      %6091 = vst [vmem:[%s216 + $0x10e0] sm:$0xff] %v3402
      %6092 = vst [vmem:[%s216 + $0x10e8] sm:$0xff] %v3404
      %6093 = vst [vmem:[%s216 + $0x10f0] sm:$0xff] %v3635
      %6094 = vst [vmem:[%s216 + $0x10f8] sm:$0xff] %v3637
      %6095 = vst [vmem:[%s216 + $0x1100] sm:$0xff] %v3868
      %6096 = vst [vmem:[%s216 + $0x1108] sm:$0xff] %v3870
      %6097 = vst [vmem:[%s216 + $0x1110] sm:$0xff] %v4101
      %6098 = vst [vmem:[%s216 + $0x1118] sm:$0xff] %v4103
      %6099 = vst [vmem:[%s216 + $0x1120] sm:$0xff] %v4334
      %6100 = vst [vmem:[%s216 + $0x1128] sm:$0xff] %v4336
      %6101 = vst [vmem:[%s216 + $0x1130] sm:$0xff] %v4567
      %6102 = vst [vmem:[%s216 + $0x1138] sm:$0xff] %v4569
      %6103 = vst [vmem:[%s216 + $0x1140] sm:$0xff] %v4800
      %6104 = vst [vmem:[%s216 + $0x1148] sm:$0xff] %v4802
      %6105 = vst [vmem:[%s216 + $0x1150] sm:$0xff] %v5033
      %6106 = vst [vmem:[%s216 + $0x1158] sm:$0xff] %v5035
      %6107 = vst [vmem:[%s216 + $0x1160] sm:$0xff] %v5266
      %6108 = vst [vmem:[%s216 + $0x1168] sm:$0xff] %v5268
      %6109 = vst [vmem:[%s216 + $0x1170] sm:$0xff] %v5499
      %6110 = vst [vmem:[%s216 + $0x1178] sm:$0xff] %v5501
      %6111 = vst [vmem:[%s216 + $0x1180] sm:$0xff] %v2476
      %6112 = vst [vmem:[%s216 + $0x1188] sm:$0xff] %v2478
      %6113 = vst [vmem:[%s216 + $0x1190] sm:$0xff] %v2709
      %6114 = vst [vmem:[%s216 + $0x1198] sm:$0xff] %v2711
      %6115 = vst [vmem:[%s216 + $0x11a0] sm:$0xff] %v2942
      %6116 = vst [vmem:[%s216 + $0x11a8] sm:$0xff] %v2944
      %6117 = vst [vmem:[%s216 + $0x11b0] sm:$0xff] %v3175
      %6118 = vst [vmem:[%s216 + $0x11b8] sm:$0xff] %v3177
      %6119 = vst [vmem:[%s216 + $0x11c0] sm:$0xff] %v3408
      %6120 = vst [vmem:[%s216 + $0x11c8] sm:$0xff] %v3410
      %6121 = vst [vmem:[%s216 + $0x11d0] sm:$0xff] %v3641
      %6122 = vst [vmem:[%s216 + $0x11d8] sm:$0xff] %v3643
      %6123 = vst [vmem:[%s216 + $0x11e0] sm:$0xff] %v3874
      %6124 = vst [vmem:[%s216 + $0x11e8] sm:$0xff] %v3876
      %6125 = vst [vmem:[%s216 + $0x11f0] sm:$0xff] %v4107
      %6126 = vst [vmem:[%s216 + $0x11f8] sm:$0xff] %v4109
      %6127 = vst [vmem:[%s216 + $0x1200] sm:$0xff] %v4340
      %6128 = vst [vmem:[%s216 + $0x1208] sm:$0xff] %v4342
      %6129 = vst [vmem:[%s216 + $0x1210] sm:$0xff] %v4573
      %6130 = vst [vmem:[%s216 + $0x1218] sm:$0xff] %v4575
      %6131 = vst [vmem:[%s216 + $0x1220] sm:$0xff] %v4806
      %6132 = vst [vmem:[%s216 + $0x1228] sm:$0xff] %v4808
      %6133 = vst [vmem:[%s216 + $0x1230] sm:$0xff] %v5039
      %6134 = vst [vmem:[%s216 + $0x1238] sm:$0xff] %v5041
      %6135 = vst [vmem:[%s216 + $0x1240] sm:$0xff] %v5272
      %6136 = vst [vmem:[%s216 + $0x1248] sm:$0xff] %v5274
      %6137 = vst [vmem:[%s216 + $0x1250] sm:$0xff] %v5505
      %6138 = vst [vmem:[%s216 + $0x1258] sm:$0xff] %v5507
      %6139 = vst [vmem:[%s216 + $0x1260] sm:$0xff] %v2482
      %6140 = vst [vmem:[%s216 + $0x1268] sm:$0xff] %v2484
      %6141 = vst [vmem:[%s216 + $0x1270] sm:$0xff] %v2715
      %6142 = vst [vmem:[%s216 + $0x1278] sm:$0xff] %v2717
      %6143 = vst [vmem:[%s216 + $0x1280] sm:$0xff] %v2948
      %6144 = vst [vmem:[%s216 + $0x1288] sm:$0xff] %v2950
      %6145 = vst [vmem:[%s216 + $0x1290] sm:$0xff] %v3181
      %6146 = vst [vmem:[%s216 + $0x1298] sm:$0xff] %v3183
      %6147 = vst [vmem:[%s216 + $0x12a0] sm:$0xff] %v3414
      %6148 = vst [vmem:[%s216 + $0x12a8] sm:$0xff] %v3416
      %6149 = vst [vmem:[%s216 + $0x12b0] sm:$0xff] %v3647
      %6150 = vst [vmem:[%s216 + $0x12b8] sm:$0xff] %v3649
      %6151 = vst [vmem:[%s216 + $0x12c0] sm:$0xff] %v3880
      %6152 = vst [vmem:[%s216 + $0x12c8] sm:$0xff] %v3882
      %6153 = vst [vmem:[%s216 + $0x12d0] sm:$0xff] %v4113
      %6154 = vst [vmem:[%s216 + $0x12d8] sm:$0xff] %v4115
      %6155 = vst [vmem:[%s216 + $0x12e0] sm:$0xff] %v4346
      %6156 = vst [vmem:[%s216 + $0x12e8] sm:$0xff] %v4348
      %6157 = vst [vmem:[%s216 + $0x12f0] sm:$0xff] %v4579
      %6158 = vst [vmem:[%s216 + $0x12f8] sm:$0xff] %v4581
      %6159 = vst [vmem:[%s216 + $0x1300] sm:$0xff] %v4812
      %6160 = vst [vmem:[%s216 + $0x1308] sm:$0xff] %v4814
      %6161 = vst [vmem:[%s216 + $0x1310] sm:$0xff] %v5045
      %6162 = vst [vmem:[%s216 + $0x1318] sm:$0xff] %v5047
      %6163 = vst [vmem:[%s216 + $0x1320] sm:$0xff] %v5278
      %6164 = vst [vmem:[%s216 + $0x1328] sm:$0xff] %v5280
      %6165 = vst [vmem:[%s216 + $0x1330] sm:$0xff] %v5511
      %6166 = vst [vmem:[%s216 + $0x1338] sm:$0xff] %v5513
      %6167 = vst [vmem:[%s216 + $0x1340] sm:$0xff] %v2488
      %6168 = vst [vmem:[%s216 + $0x1348] sm:$0xff] %v2490
      %6169 = vst [vmem:[%s216 + $0x1350] sm:$0xff] %v2721
      %6170 = vst [vmem:[%s216 + $0x1358] sm:$0xff] %v2723
      %6171 = vst [vmem:[%s216 + $0x1360] sm:$0xff] %v2954
      %6172 = vst [vmem:[%s216 + $0x1368] sm:$0xff] %v2956
      %6173 = vst [vmem:[%s216 + $0x1370] sm:$0xff] %v3187
      %6174 = vst [vmem:[%s216 + $0x1378] sm:$0xff] %v3189
      %6175 = vst [vmem:[%s216 + $0x1380] sm:$0xff] %v3420
      %6176 = vst [vmem:[%s216 + $0x1388] sm:$0xff] %v3422
      %6177 = vst [vmem:[%s216 + $0x1390] sm:$0xff] %v3653
      %6178 = vst [vmem:[%s216 + $0x1398] sm:$0xff] %v3655
      %6179 = vst [vmem:[%s216 + $0x13a0] sm:$0xff] %v3886
      %6180 = vst [vmem:[%s216 + $0x13a8] sm:$0xff] %v3888
      %6181 = vst [vmem:[%s216 + $0x13b0] sm:$0xff] %v4119
      %6182 = vst [vmem:[%s216 + $0x13b8] sm:$0xff] %v4121
      %6183 = vst [vmem:[%s216 + $0x13c0] sm:$0xff] %v4352
      %6184 = vst [vmem:[%s216 + $0x13c8] sm:$0xff] %v4354
      %6185 = vst [vmem:[%s216 + $0x13d0] sm:$0xff] %v4585
      %6186 = vst [vmem:[%s216 + $0x13d8] sm:$0xff] %v4587
      %6187 = vst [vmem:[%s216 + $0x13e0] sm:$0xff] %v4818
      %6188 = vst [vmem:[%s216 + $0x13e8] sm:$0xff] %v4820
      %6189 = vst [vmem:[%s216 + $0x13f0] sm:$0xff] %v5051
      %6190 = vst [vmem:[%s216 + $0x13f8] sm:$0xff] %v5053
      %6191 = vst [vmem:[%s216 + $0x1400] sm:$0xff] %v5284
      %6192 = vst [vmem:[%s216 + $0x1408] sm:$0xff] %v5286
      %6193 = vst [vmem:[%s216 + $0x1410] sm:$0xff] %v5517
      %6194 = vst [vmem:[%s216 + $0x1418] sm:$0xff] %v5519
      %6195 = vst [vmem:[%s216 + $0x1420] sm:$0xff] %v2494
      %6196 = vst [vmem:[%s216 + $0x1428] sm:$0xff] %v2496
      %6197 = vst [vmem:[%s216 + $0x1430] sm:$0xff] %v2727
      %6198 = vst [vmem:[%s216 + $0x1438] sm:$0xff] %v2729
      %6199 = vst [vmem:[%s216 + $0x1440] sm:$0xff] %v2960
      %6200 = vst [vmem:[%s216 + $0x1448] sm:$0xff] %v2962
      %6201 = vst [vmem:[%s216 + $0x1450] sm:$0xff] %v3193
      %6202 = vst [vmem:[%s216 + $0x1458] sm:$0xff] %v3195
      %6203 = vst [vmem:[%s216 + $0x1460] sm:$0xff] %v3426
      %6204 = vst [vmem:[%s216 + $0x1468] sm:$0xff] %v3428
      %6205 = vst [vmem:[%s216 + $0x1470] sm:$0xff] %v3659
      %6206 = vst [vmem:[%s216 + $0x1478] sm:$0xff] %v3661
      %6207 = vst [vmem:[%s216 + $0x1480] sm:$0xff] %v3892
      %6208 = vst [vmem:[%s216 + $0x1488] sm:$0xff] %v3894
      %6209 = vst [vmem:[%s216 + $0x1490] sm:$0xff] %v4125
      %6210 = vst [vmem:[%s216 + $0x1498] sm:$0xff] %v4127
      %6211 = vst [vmem:[%s216 + $0x14a0] sm:$0xff] %v4358
      %6212 = vst [vmem:[%s216 + $0x14a8] sm:$0xff] %v4360
      %6213 = vst [vmem:[%s216 + $0x14b0] sm:$0xff] %v4591
      %6214 = vst [vmem:[%s216 + $0x14b8] sm:$0xff] %v4593
      %6215 = vst [vmem:[%s216 + $0x14c0] sm:$0xff] %v4824
      %6216 = vst [vmem:[%s216 + $0x14c8] sm:$0xff] %v4826
      %6217 = vst [vmem:[%s216 + $0x14d0] sm:$0xff] %v5057
      %6218 = vst [vmem:[%s216 + $0x14d8] sm:$0xff] %v5059
      %6219 = vst [vmem:[%s216 + $0x14e0] sm:$0xff] %v5290
      %6220 = vst [vmem:[%s216 + $0x14e8] sm:$0xff] %v5292
      %6221 = vst [vmem:[%s216 + $0x14f0] sm:$0xff] %v5523
      %6222 = vst [vmem:[%s216 + $0x14f8] sm:$0xff] %v5525
      %6223 = vst [vmem:[%s216 + $0x1500] sm:$0xff] %v2500
      %6224 = vst [vmem:[%s216 + $0x1508] sm:$0xff] %v2502
      %6225 = vst [vmem:[%s216 + $0x1510] sm:$0xff] %v2733
      %6226 = vst [vmem:[%s216 + $0x1518] sm:$0xff] %v2735
      %6227 = vst [vmem:[%s216 + $0x1520] sm:$0xff] %v2966
      %6228 = vst [vmem:[%s216 + $0x1528] sm:$0xff] %v2968
      %6229 = vst [vmem:[%s216 + $0x1530] sm:$0xff] %v3199
      %6230 = vst [vmem:[%s216 + $0x1538] sm:$0xff] %v3201
      %6231 = vst [vmem:[%s216 + $0x1540] sm:$0xff] %v3432
      %6232 = vst [vmem:[%s216 + $0x1548] sm:$0xff] %v3434
      %6233 = vst [vmem:[%s216 + $0x1550] sm:$0xff] %v3665
      %6234 = vst [vmem:[%s216 + $0x1558] sm:$0xff] %v3667
      %6235 = vst [vmem:[%s216 + $0x1560] sm:$0xff] %v3898
      %6236 = vst [vmem:[%s216 + $0x1568] sm:$0xff] %v3900
      %6237 = vst [vmem:[%s216 + $0x1570] sm:$0xff] %v4131
      %6238 = vst [vmem:[%s216 + $0x1578] sm:$0xff] %v4133
      %6239 = vst [vmem:[%s216 + $0x1580] sm:$0xff] %v4364
      %6240 = vst [vmem:[%s216 + $0x1588] sm:$0xff] %v4366
      %6241 = vst [vmem:[%s216 + $0x1590] sm:$0xff] %v4597
      %6242 = vst [vmem:[%s216 + $0x1598] sm:$0xff] %v4599
      %6243 = vst [vmem:[%s216 + $0x15a0] sm:$0xff] %v4830
      %6244 = vst [vmem:[%s216 + $0x15a8] sm:$0xff] %v4832
      %6245 = vst [vmem:[%s216 + $0x15b0] sm:$0xff] %v5063
      %6246 = vst [vmem:[%s216 + $0x15b8] sm:$0xff] %v5065
      %6247 = vst [vmem:[%s216 + $0x15c0] sm:$0xff] %v5296
      %6248 = vst [vmem:[%s216 + $0x15c8] sm:$0xff] %v5298
      %6249 = vst [vmem:[%s216 + $0x15d0] sm:$0xff] %v5529
      %6250 = vst [vmem:[%s216 + $0x15d8] sm:$0xff] %v5531
      %6251 = vst [vmem:[%s216 + $0x15e0] sm:$0xff] %v2506
      %6252 = vst [vmem:[%s216 + $0x15e8] sm:$0xff] %v2508
      %6253 = vst [vmem:[%s216 + $0x15f0] sm:$0xff] %v2739
      %6254 = vst [vmem:[%s216 + $0x15f8] sm:$0xff] %v2741
      %6255 = vst [vmem:[%s216 + $0x1600] sm:$0xff] %v2972
      %6256 = vst [vmem:[%s216 + $0x1608] sm:$0xff] %v2974
      %6257 = vst [vmem:[%s216 + $0x1610] sm:$0xff] %v3205
      %6258 = vst [vmem:[%s216 + $0x1618] sm:$0xff] %v3207
      %6259 = vst [vmem:[%s216 + $0x1620] sm:$0xff] %v3438
      %6260 = vst [vmem:[%s216 + $0x1628] sm:$0xff] %v3440
      %6261 = vst [vmem:[%s216 + $0x1630] sm:$0xff] %v3671
      %6262 = vst [vmem:[%s216 + $0x1638] sm:$0xff] %v3673
      %6263 = vst [vmem:[%s216 + $0x1640] sm:$0xff] %v3904
      %6264 = vst [vmem:[%s216 + $0x1648] sm:$0xff] %v3906
      %6265 = vst [vmem:[%s216 + $0x1650] sm:$0xff] %v4137
      %6266 = vst [vmem:[%s216 + $0x1658] sm:$0xff] %v4139
      %6267 = vst [vmem:[%s216 + $0x1660] sm:$0xff] %v4370
      %6268 = vst [vmem:[%s216 + $0x1668] sm:$0xff] %v4372
      %6269 = vst [vmem:[%s216 + $0x1670] sm:$0xff] %v4603
      %6270 = vst [vmem:[%s216 + $0x1678] sm:$0xff] %v4605
      %6271 = vst [vmem:[%s216 + $0x1680] sm:$0xff] %v4836
      %6272 = vst [vmem:[%s216 + $0x1688] sm:$0xff] %v4838
      %6273 = vst [vmem:[%s216 + $0x1690] sm:$0xff] %v5069
      %6274 = vst [vmem:[%s216 + $0x1698] sm:$0xff] %v5071
      %6275 = vst [vmem:[%s216 + $0x16a0] sm:$0xff] %v5302
      %6276 = vst [vmem:[%s216 + $0x16a8] sm:$0xff] %v5304
      %6277 = vst [vmem:[%s216 + $0x16b0] sm:$0xff] %v5535
      %6278 = vst [vmem:[%s216 + $0x16b8] sm:$0xff] %v5537
      %6279 = vst [vmem:[%s216 + $0x16c0] sm:$0xff] %v2512
      %6280 = vst [vmem:[%s216 + $0x16c8] sm:$0xff] %v2514
      %6281 = vst [vmem:[%s216 + $0x16d0] sm:$0xff] %v2745
      %6282 = vst [vmem:[%s216 + $0x16d8] sm:$0xff] %v2747
      %6283 = vst [vmem:[%s216 + $0x16e0] sm:$0xff] %v2978
      %6284 = vst [vmem:[%s216 + $0x16e8] sm:$0xff] %v2980
      %6285 = vst [vmem:[%s216 + $0x16f0] sm:$0xff] %v3211
      %6286 = vst [vmem:[%s216 + $0x16f8] sm:$0xff] %v3213
      %6287 = vst [vmem:[%s216 + $0x1700] sm:$0xff] %v3444
      %6288 = vst [vmem:[%s216 + $0x1708] sm:$0xff] %v3446
      %6289 = vst [vmem:[%s216 + $0x1710] sm:$0xff] %v3677
      %6290 = vst [vmem:[%s216 + $0x1718] sm:$0xff] %v3679
      %6291 = vst [vmem:[%s216 + $0x1720] sm:$0xff] %v3910
      %6292 = vst [vmem:[%s216 + $0x1728] sm:$0xff] %v3912
      %6293 = vst [vmem:[%s216 + $0x1730] sm:$0xff] %v4143
      %6294 = vst [vmem:[%s216 + $0x1738] sm:$0xff] %v4145
      %6295 = vst [vmem:[%s216 + $0x1740] sm:$0xff] %v4376
      %6296 = vst [vmem:[%s216 + $0x1748] sm:$0xff] %v4378
      %6297 = vst [vmem:[%s216 + $0x1750] sm:$0xff] %v4609
      %6298 = vst [vmem:[%s216 + $0x1758] sm:$0xff] %v4611
      %6299 = vst [vmem:[%s216 + $0x1760] sm:$0xff] %v4842
      %6300 = vst [vmem:[%s216 + $0x1768] sm:$0xff] %v4844
      %6301 = vst [vmem:[%s216 + $0x1770] sm:$0xff] %v5075
      %6302 = vst [vmem:[%s216 + $0x1778] sm:$0xff] %v5077
      %6303 = vst [vmem:[%s216 + $0x1780] sm:$0xff] %v5308
      %6304 = vst [vmem:[%s216 + $0x1788] sm:$0xff] %v5310
      %6305 = vst [vmem:[%s216 + $0x1790] sm:$0xff] %v5541
      %6306 = vst [vmem:[%s216 + $0x1798] sm:$0xff] %v5543
      %6307 = vst [vmem:[%s216 + $0x17a0] sm:$0xff] %v2518
      %6308 = vst [vmem:[%s216 + $0x17a8] sm:$0xff] %v2520
      %6309 = vst [vmem:[%s216 + $0x17b0] sm:$0xff] %v2751
      %6310 = vst [vmem:[%s216 + $0x17b8] sm:$0xff] %v2753
      %6311 = vst [vmem:[%s216 + $0x17c0] sm:$0xff] %v2984
      %6312 = vst [vmem:[%s216 + $0x17c8] sm:$0xff] %v2986
      %6313 = vst [vmem:[%s216 + $0x17d0] sm:$0xff] %v3217
      %6314 = vst [vmem:[%s216 + $0x17d8] sm:$0xff] %v3219
      %6315 = vst [vmem:[%s216 + $0x17e0] sm:$0xff] %v3450
      %6316 = vst [vmem:[%s216 + $0x17e8] sm:$0xff] %v3452
      %6317 = vst [vmem:[%s216 + $0x17f0] sm:$0xff] %v3683
      %6318 = vst [vmem:[%s216 + $0x17f8] sm:$0xff] %v3685
      %6319 = vst [vmem:[%s216 + $0x1800] sm:$0xff] %v3916
      %6320 = vst [vmem:[%s216 + $0x1808] sm:$0xff] %v3918
      %6321 = vst [vmem:[%s216 + $0x1810] sm:$0xff] %v4149
      %6322 = vst [vmem:[%s216 + $0x1818] sm:$0xff] %v4151
      %6323 = vst [vmem:[%s216 + $0x1820] sm:$0xff] %v4382
      %6324 = vst [vmem:[%s216 + $0x1828] sm:$0xff] %v4384
      %6325 = vst [vmem:[%s216 + $0x1830] sm:$0xff] %v4615
      %6326 = vst [vmem:[%s216 + $0x1838] sm:$0xff] %v4617
      %6327 = vst [vmem:[%s216 + $0x1840] sm:$0xff] %v4848
      %6328 = vst [vmem:[%s216 + $0x1848] sm:$0xff] %v4850
      %6329 = vst [vmem:[%s216 + $0x1850] sm:$0xff] %v5081
      %6330 = vst [vmem:[%s216 + $0x1858] sm:$0xff] %v5083
      %6331 = vst [vmem:[%s216 + $0x1860] sm:$0xff] %v5314
      %6332 = vst [vmem:[%s216 + $0x1868] sm:$0xff] %v5316
      %6333 = vst [vmem:[%s216 + $0x1870] sm:$0xff] %v5547
      %6334 = vst [vmem:[%s216 + $0x1878] sm:$0xff] %v5549
      %s6335 = smul.u32 28, %s19
      %p6336 = scmp.lt.s32.totalorder %s18, 1
      %s6337 = scalar_select %p6336, %s18, 1
      %p6338 = scmp.lt.s32.totalorder %s6335, 27
      %s6339 = scalar_select %p6338, %s6335, 27
      %s6340 = smul.addr %s6339, 28
      %s6341 = smul.addr %s6337, 784
      %s6342 = sadd.s32 %s6340, %s6341
      %s6343 = smul.addr %s6342, 8
      %s6344 = scalar_lea.vmem %s3, %s6343
      // Predicated region
      $region33: #{acmf_forward.3} parent=31 // pred_check
        %p6345 = pneg %p119
      $region34: #{acmf_forward.3} parent=31 // pred_check_branch
        %6347 = sbr.rel (%p6345) target = $region36
      $region35: #{acmf_forward.3} parent=31 // pred_region
        %s6348 = smul.u32 28, %s19
      $region36: #{acmf_forward.3} parent=31 // pred_fallthru
        _
    $region32: #{acmf_forward.3} parent=5 // pred_fallthru
      _
    %p6349 = scmp.le.s32.totalorder 2, %s9
    // Predicated region
    $region37: #{acmf_forward.3} parent=5 // pred_check
      %p6350 = pneg %p6349
    $region38: #{acmf_forward.3} parent=5 // pred_check_branch
      %6352 = sbr.rel (%p6350) target = $region40
    $region39: #{acmf_forward.3} parent=5 // pred_region
      %s6353 = ssub.s32 %s9, 2
      // Predicated region
      $region41: #{acmf_forward.3} parent=39 // pred_check
        %p6354 = pneg %p125
      $region42: #{acmf_forward.3} parent=39 // pred_check_branch
        %6356 = sbr.rel (%p6354) target = $region44
      $region43: #{acmf_forward.3} parent=39 // pred_region
        %s6357 = smul.u32 28, %s21
        %p6358 = scmp.lt.s32.totalorder %s20, 1
        %s6359 = scalar_select %p6358, %s20, 1
        %p6360 = scmp.lt.s32.totalorder %s6357, 27
        %s6361 = scalar_select %p6360, %s6357, 27
        %s6362 = smul.addr %s6361, 28
        %s6363 = smul.addr %s6359, 784
        %s6364 = sadd.s32 %s6362, %s6363
        %s6365 = smul.addr %s6364, 8
        %s6366 = scalar_lea.vmem %s3, %s6365
      $region44: #{acmf_forward.3} parent=39 // pred_fallthru
        _
    $region40: #{acmf_forward.3} parent=5 // pred_fallthru
      _
  $region6: #{acmf_forward.3} parent=0 // loop_footer
    %s13 = sadd.s32 1, %s9
  $region7: #{acmf_forward.3} parent=0 // loop_footer_branch
    %8 = sbr.rel target = $region3
  $region8: #{acmf_forward.3} parent=0 // loop_exit
    _

</llo_original>
